<compile_context>
chip_gen: v7x
topology: tpu7x:2x2x1
jax: 0.10.0
libtpu: 0.0.40
codegen_flags: <defaults>
</compile_context>

<pallas_src>
import functools
import math

import jax
import jax.numpy as jnp
from jax.experimental import pallas as pl
from jax.experimental.pallas import tpu as pltpu


# ----------------------------------------------------------------------------
# Global knobs
# ----------------------------------------------------------------------------
_MXU_DTYPE = jnp.bfloat16          # MXU operand dtype (accumulation is f32)
_TM_LIN = 512                      # row tile for generic linear / layernorm
_TM_MLP = 256                      # row tile for fused LN+MLP (3x hidden live)
_TL_FINAL = 512                    # row tile (over T*H*W) for final LN+pool
_VMEM_LIMIT = 32 * 1024 * 1024     # raised scoped-VMEM cap (safe on v5e/v6e/v7x)


def _row_tiling(m, tm_max):
    """Row tile + padded row count.  Single block when m <= tm_max."""
    if m <= tm_max:
        return m, m
    n = (m + tm_max - 1) // tm_max
    return tm_max, n * tm_max


def _pad_rows(x2d, mp):
    m = x2d.shape[0]
    if mp == m:
        return x2d
    return jnp.pad(x2d, ((0, mp - m), (0, 0)))


def _mosaic_params(semantics):
    return pltpu.CompilerParams(dimension_semantics=semantics,
                                vmem_limit_bytes=_VMEM_LIMIT)


# ----------------------------------------------------------------------------
# In-kernel math helpers
# ----------------------------------------------------------------------------
def _erf_f32(x):
    # Abramowitz & Stegun 7.1.26 rational approximation of erf (abs err ~1e-7
    # before the approx reciprocal; ~1e-4 after, well below the bf16 matmul
    # noise).  The reciprocal rides the EUP slot (approx=True), exp likewise.
    a1, a2, a3, a4, a5 = 0.254829592, -0.284496736, 1.421413741, -1.453152027, 1.061405429
    p = 0.3275911
    z = jnp.abs(x)
    t = pl.reciprocal(1.0 + p * z, approx=True)
    poly = ((((a5 * t + a4) * t + a3) * t + a2) * t + a1) * t
    y = 1.0 - poly * jnp.exp(-z * z)
    return jnp.where(x < 0.0, -y, y)


def _gelu_exact(x):
    return 0.5 * x * (1.0 + _erf_f32(x * 0.7071067811865476))


# ----------------------------------------------------------------------------
# Pallas kernels
# ----------------------------------------------------------------------------
def _linear_kernel(x_ref, w_ref, b_ref, *rest, activation, has_residual):
    if has_residual:
        r_ref, o_ref = rest
    else:
        (o_ref,) = rest
    y = jnp.dot(x_ref[...].astype(_MXU_DTYPE), w_ref[...].astype(_MXU_DTYPE),
                preferred_element_type=jnp.float32)
    y = y + b_ref[...].astype(jnp.float32)
    if activation == "gelu":
        y = _gelu_exact(y)
    if has_residual:
        y = y + r_ref[...].astype(jnp.float32)
    o_ref[...] = y.astype(o_ref.dtype)


def linear(x2d, w, b, activation=None, residual=None):
    """y = act(x2d @ w + b) (+ residual).  Row-tiled, weights VMEM-resident."""
    m, k = x2d.shape
    k2, n = w.shape
    assert k == k2, (k, k2)
    tm, mp = _row_tiling(m, _TM_LIN)
    args = [_pad_rows(x2d, mp), w, b.reshape(1, n)]
    in_specs = [pl.BlockSpec((tm, k), lambda i: (i, 0)),
                pl.BlockSpec((k, n), lambda i: (0, 0)),
                pl.BlockSpec((1, n), lambda i: (0, 0))]
    if residual is not None:
        args.append(_pad_rows(residual, mp))
        in_specs.append(pl.BlockSpec((tm, n), lambda i: (i, 0)))
    kern = functools.partial(_linear_kernel, activation=activation,
                             has_residual=residual is not None)
    y = pl.pallas_call(
        kern,
        out_shape=jax.ShapeDtypeStruct((mp, n), x2d.dtype),
        grid=(mp // tm,),
        in_specs=in_specs,
        out_specs=pl.BlockSpec((tm, n), lambda i: (i, 0)),
        compiler_params=_mosaic_params(("parallel",)),
    )(*args)
    return y if mp == m else y[:m]


def linear_nd(x, w, b, activation=None, residual=None):
    shp = x.shape
    r2 = None if residual is None else residual.reshape(-1, w.shape[1])
    y = linear(x.reshape(-1, shp[-1]), w, b, activation, residual=r2)
    return y.reshape(shp[:-1] + (w.shape[1],))


def _layernorm_kernel(x_ref, g_ref, b_ref, o_ref, *, eps):
    x = x_ref[...].astype(jnp.float32)
    mu = jnp.mean(x, axis=-1, keepdims=True)
    xc = x - mu
    var = jnp.mean(xc * xc, axis=-1, keepdims=True)
    y = xc * jax.lax.rsqrt(var + eps)
    o_ref[...] = (y * g_ref[...].astype(jnp.float32)
                  + b_ref[...].astype(jnp.float32)).astype(o_ref.dtype)


def layernorm(x2d, g, b, eps=1e-5):
    m, c = x2d.shape
    tm, mp = _row_tiling(m, _TM_LIN)
    y = pl.pallas_call(
        functools.partial(_layernorm_kernel, eps=eps),
        out_shape=jax.ShapeDtypeStruct((mp, c), x2d.dtype),
        grid=(mp // tm,),
        in_specs=[pl.BlockSpec((tm, c), lambda i: (i, 0)),
                  pl.BlockSpec((1, c), lambda i: (0, 0)),
                  pl.BlockSpec((1, c), lambda i: (0, 0))],
        out_specs=pl.BlockSpec((tm, c), lambda i: (i, 0)),
        compiler_params=_mosaic_params(("parallel",)),
    )(_pad_rows(x2d, mp), g.reshape(1, c), b.reshape(1, c))
    return y if mp == m else y[:m]


def layernorm_nd(x, g, b):
    shp = x.shape
    return layernorm(x.reshape(-1, shp[-1]), g, b).reshape(shp)


def _ln_mlp_kernel(x_ref, g_ref, b_ref, w1_ref, b1_ref, w2_ref, b2_ref, o_ref, *, eps):
    # out = x + fc2(gelu(fc1(layernorm(x)))); the 3x hidden never leaves VMEM.
    x = x_ref[...].astype(jnp.float32)
    mu = jnp.mean(x, axis=-1, keepdims=True)
    xc = x - mu
    var = jnp.mean(xc * xc, axis=-1, keepdims=True)
    xn = xc * jax.lax.rsqrt(var + eps)
    xn = xn * g_ref[...].astype(jnp.float32) + b_ref[...].astype(jnp.float32)
    h = jnp.dot(xn.astype(_MXU_DTYPE), w1_ref[...].astype(_MXU_DTYPE),
                preferred_element_type=jnp.float32) + b1_ref[...].astype(jnp.float32)
    h = _gelu_exact(h)
    y = jnp.dot(h.astype(_MXU_DTYPE), w2_ref[...].astype(_MXU_DTYPE),
                preferred_element_type=jnp.float32) + b2_ref[...].astype(jnp.float32)
    o_ref[...] = (x + y).astype(o_ref.dtype)


def ln_mlp_nd(x, g, b, mp_params, eps=1e-5):
    shp = x.shape
    c = shp[-1]
    hd = mp_params["fc1_w"].shape[1]
    x2 = x.reshape(-1, c)
    m = x2.shape[0]
    tm, mpad = _row_tiling(m, _TM_MLP)
    y = pl.pallas_call(
        functools.partial(_ln_mlp_kernel, eps=eps),
        out_shape=jax.ShapeDtypeStruct((mpad, c), x.dtype),
        grid=(mpad // tm,),
        in_specs=[pl.BlockSpec((tm, c), lambda i: (i, 0)),
                  pl.BlockSpec((1, c), lambda i: (0, 0)),
                  pl.BlockSpec((1, c), lambda i: (0, 0)),
                  pl.BlockSpec((c, hd), lambda i: (0, 0)),
                  pl.BlockSpec((1, hd), lambda i: (0, 0)),
                  pl.BlockSpec((hd, c), lambda i: (0, 0)),
                  pl.BlockSpec((1, c), lambda i: (0, 0))],
        out_specs=pl.BlockSpec((tm, c), lambda i: (i, 0)),
        compiler_params=_mosaic_params(("parallel",)),
    )(_pad_rows(x2, mpad), g.reshape(1, c), b.reshape(1, c),
      mp_params["fc1_w"], mp_params["fc1_b"].reshape(1, hd),
      mp_params["fc2_w"], mp_params["fc2_b"].reshape(1, c))
    y = y if mpad == m else y[:m]
    return y.reshape(shp)


def _conv2_kernel(y_ref, wt_ref, b_ref, o_ref, *, H):
    # One (b,t) slice per grid step: 3 row-shifted matmuls against the
    # block-Toeplitz weight (kw taps folded in) -> (H, W*Cout) output slab.
    acc = None
    for kh in range(3):
        part = jnp.dot(y_ref[0, kh:kh + H, :].astype(_MXU_DTYPE),
                       wt_ref[kh].astype(_MXU_DTYPE),
                       preferred_element_type=jnp.float32)
        acc = part if acc is None else acc + part
    o_ref[0] = (acc + b_ref[...].astype(jnp.float32)).astype(o_ref.dtype)


def _conv2_toeplitz(w2, W):
    # w2: (3, 3, Cin, Cout) -> (3, (W+2)*Cin, W*Cout) block-Toeplitz over kw.
    _, _, cin, cout = w2.shape
    rows = []
    for kh in range(3):
        cols = []
        for w in range(W):
            blocks = []
            if w > 0:
                blocks.append(jnp.zeros((w * cin, cout), w2.dtype))
            blocks.extend([w2[kh, 0], w2[kh, 1], w2[kh, 2]])
            if W - 1 - w > 0:
                blocks.append(jnp.zeros(((W - 1 - w) * cin, cout), w2.dtype))
            cols.append(jnp.concatenate(blocks, axis=0))
        rows.append(jnp.concatenate(cols, axis=1))
    return jnp.stack(rows, axis=0)


def _final_kernel(x_ref, g_ref, b_ref, hw_ref, hb_ref, pooled_ref, logits_ref,
                  acc_ref, *, eps, total_l, need_mask):
    li = pl.program_id(0)

    @pl.when(li == 0)
    def _():
        acc_ref[...] = jnp.zeros_like(acc_ref)

    x = x_ref[...].astype(jnp.float32)               # (B, TL, C)
    mu = jnp.mean(x, axis=-1, keepdims=True)
    xc = x - mu
    var = jnp.mean(xc * xc, axis=-1, keepdims=True)
    xn = xc * jax.lax.rsqrt(var + eps)
    xn = xn * g_ref[...].astype(jnp.float32) + b_ref[...].astype(jnp.float32)
    if need_mask:
        tl, c = xn.shape[1], xn.shape[2]
        row = li * tl + jax.lax.broadcasted_iota(jnp.int32, (tl, c), 0)
        xn = jnp.where(row < total_l, xn, 0.0)
    acc_ref[...] += jnp.sum(xn, axis=1)              # (B, C)

    @pl.when(li == pl.num_programs(0) - 1)
    def _():
        pooled = acc_ref[...] * (1.0 / float(total_l))
        pooled_ref[...] = pooled.astype(pooled_ref.dtype)
        logits = jnp.dot(pooled.astype(_MXU_DTYPE), hw_ref[...].astype(_MXU_DTYPE),
                         preferred_element_type=jnp.float32)
        logits_ref[...] = (logits + hb_ref[...].astype(jnp.float32)).astype(logits_ref.dtype)


def final_norm_pool_head(x3, g, b, hw, hb, eps=1e-5):
    """Fused LayerNorm -> mean over tokens -> classifier head."""
    B, L, C = x3.shape
    N = hw.shape[1]
    tl, lp = _row_tiling(L, _TL_FINAL)
    if lp != L:
        x3 = jnp.pad(x3, ((0, 0), (0, lp - L), (0, 0)))
    kern = functools.partial(_final_kernel, eps=eps, total_l=L, need_mask=(lp != L))
    pooled, logits = pl.pallas_call(
        kern,
        out_shape=(jax.ShapeDtypeStruct((B, C), x3.dtype),
                   jax.ShapeDtypeStruct((B, N), x3.dtype)),
        grid=(lp // tl,),
        in_specs=[pl.BlockSpec((B, tl, C), lambda i: (0, i, 0)),
                  pl.BlockSpec((1, C), lambda i: (0, 0)),
                  pl.BlockSpec((1, C), lambda i: (0, 0)),
                  pl.BlockSpec((C, N), lambda i: (0, 0)),
                  pl.BlockSpec((1, N), lambda i: (0, 0))],
        out_specs=(pl.BlockSpec((B, C), lambda i: (0, 0)),
                   pl.BlockSpec((B, N), lambda i: (0, 0))),
        scratch_shapes=[pltpu.VMEM((B, C), jnp.float32)],
        compiler_params=_mosaic_params(("arbitrary",)),
    )(x3, g.reshape(1, C), b.reshape(1, C), hw, hb.reshape(1, N))
    return pooled, logits


# ----------------------------------------------------------------------------
# Model pieces (glue = reshapes/permutes; compute = Pallas calls above)
# ----------------------------------------------------------------------------
def patch_embed(x, p):
    # x: (B, T, H, W, 1)  ==  torch NCDHW (B,1,T,H,W) channels-last
    B, T, H, W, _ = x.shape
    # proj1: Conv3d(1 -> E/2, kernel (3,1,1), pad (1,0,0)); BN folded, GELU fused.
    xt = jnp.pad(x[..., 0], ((0, 0), (1, 1), (0, 0), (0, 0)))
    cols1 = jnp.stack([xt[:, 0:T], xt[:, 1:T + 1], xt[:, 2:T + 2]], axis=-1)  # (B,T,H,W,3)
    y = linear_nd(cols1, p["conv1_w"], p["conv1_b"], activation="gelu")       # (B,T,H,W,E/2)
    cin = y.shape[-1]
    cout = p["conv2_w"].shape[-1]
    # proj2: Conv3d(E/2 -> E, kernel (1,3,3), pad (0,1,1)); no 9x im2col in HBM:
    # pad spatially once, fold kw taps into a block-Toeplitz weight, loop kh in-kernel.
    yp = jnp.pad(y, ((0, 0), (0, 0), (1, 1), (1, 1), (0, 0)))
    yp = yp.reshape(B * T, H + 2, (W + 2) * cin)
    wt = _conv2_toeplitz(p["conv2_w"], W)                                     # (3,(W+2)Cin,W*Cout)
    bt = jnp.tile(p["conv2_b"], W).reshape(1, W * cout)
    out = pl.pallas_call(
        functools.partial(_conv2_kernel, H=H),
        out_shape=jax.ShapeDtypeStruct((B * T, H, W * cout), x.dtype),
        grid=(B * T,),
        in_specs=[pl.BlockSpec((1, H + 2, (W + 2) * cin), lambda i: (i, 0, 0)),
                  pl.BlockSpec(wt.shape, lambda i: (0, 0, 0)),
                  pl.BlockSpec((1, W * cout), lambda i: (0, 0))],
        out_specs=pl.BlockSpec((1, H, W * cout), lambda i: (i, 0, 0)),
        compiler_params=_mosaic_params(("parallel",)),
    )(yp, wt, bt)
    return out.reshape(B, T, H, W, cout)


def spe_fc(x_ln, res, p, segment_dim):
    B, T, H, W, C = x_ln.shape
    S = C // segment_dim
    # TODO(synk): fold these segment permutations into the linear's BlockSpec
    # index_map so the matmul reads the (B,T,H,W,C) layout directly.
    t = x_ln.reshape(B, T, H, W, segment_dim, S)
    t = jnp.transpose(t, (0, 4, 2, 3, 1, 5)).reshape(B, segment_dim, H, W, T * S)
    t = linear_nd(t, p["mlp_t_w"], p["mlp_t_b"])
    t = t.reshape(B, segment_dim, H, W, T, S)
    t = jnp.transpose(t, (0, 4, 2, 3, 1, 5)).reshape(B, T, H, W, C)
    return linear_nd(t, p["proj_w"], p["proj_b"], residual=res)   # residual fused


def spa_fc(x_ln, res, p, segment_dim, tmp):
    B, T, H, W, C = x_ln.shape
    S = C // segment_dim
    HWt = H * W // tmp
    # h path
    h = jnp.swapaxes(x_ln, 3, 2)
    h = h.reshape(B, T, HWt, tmp, segment_dim, S)
    h = jnp.transpose(h, (0, 1, 2, 4, 3, 5)).reshape(B, T, HWt, segment_dim, tmp * S)
    h = linear_nd(h, p["mlp_h_w"], p["mlp_h_b"])
    h = h.reshape(B, T, HWt, segment_dim, tmp, S)
    h = jnp.transpose(h, (0, 1, 2, 4, 3, 5)).reshape(B, T, W, H, C)
    h = jnp.swapaxes(h, 3, 2)
    # w path
    w = x_ln.reshape(B, T, HWt, tmp, segment_dim, S)
    w = jnp.transpose(w, (0, 1, 2, 4, 3, 5)).reshape(B, T, HWt, segment_dim, tmp * S)
    w = linear_nd(w, p["mlp_w_w"], p["mlp_w_b"])
    w = w.reshape(B, T, HWt, segment_dim, tmp, S)
    w = jnp.transpose(w, (0, 1, 2, 4, 3, 5)).reshape(B, T, H, W, C)
    # c path
    c = linear_nd(x_ln, p["mlp_c_w"], p["mlp_c_b"])
    # reweight: (B,C)->(B,C/4)->(B,3C) with B rows only -> plain JAX (launch
    # overhead + fully masked stores would dominate a Pallas call here).
    a = (h + w + c).mean(axis=(1, 2, 3))                       # (B, C)
    a = jax.nn.gelu(a @ p["rw_fc1_w"] + p["rw_fc1_b"], approximate=False)
    a = a @ p["rw_fc2_w"] + p["rw_fc2_b"]                      # (B, 3C)
    a = jnp.transpose(a.reshape(B, C, 3), (2, 0, 1))           # (3, B, C)
    a = jax.nn.softmax(a, axis=0)[:, :, None, None, None, :]   # (3, B, 1, 1, 1, C)
    out = h * a[0] + w * a[1] + c * a[2]
    return linear_nd(out, p["proj_w"], p["proj_b"], residual=res)   # residual fused


def permutator_block(x, p, segment_dim, tmp):
    # DropPath / Dropout are identity in eval; skip_lam = 1.0
    xs = spe_fc(layernorm_nd(x, p["s_norm1_g"], p["s_norm1_b"]), x, p["s_fc"], segment_dim)
    x2 = spa_fc(layernorm_nd(xs, p["norm1_g"], p["norm1_b"]), xs, p["fc"], segment_dim, tmp)
    return ln_mlp_nd(x2, p["norm2_g"], p["norm2_b"], p["mlp"])   # LN+MLP+residual fused


def ssmlp_forward(x_bhw, params, segment_dim, tmp):
    # x_bhw: (B, BAND, H, W)   (torch input before .view(B,1,BAND,H,W))
    x = x_bhw[..., None]                                   # (B, T, H, W, 1)
    x = patch_embed(x, params["patch_embed"])              # (B, T, H, W, E)
    for bp in params["blocks"]:
        x = permutator_block(x, bp, segment_dim, tmp)
    B, T, H, W, C = x.shape
    x3 = x.reshape(B, T * H * W, C)
    pooled, logits = final_norm_pool_head(
        x3, params["norm_g"], params["norm_b"], params["head_w"], params["head_b"])
    return pooled, logits


# ----------------------------------------------------------------------------
# Deterministic parameter init (shapes follow the torch module __init__)
# ----------------------------------------------------------------------------
def init_params(key, *, band, patch, num_classes, layers, embed_dims, segment_dim):
    E = embed_dims
    S = E // segment_dim
    dim_t = band * S          # Spe_FC.mlp_t
    dim_hw = patch * S        # Spa_FC.mlp_h / mlp_w
    hidden = int(E * 3)       # PermutatorBlock Mlp hidden (mlp_ratio = 3)
    eps = 1e-5

    keys = iter(jax.random.split(key, 8 + layers * 16))

    def tn(shape):
        return (0.02 * jax.random.truncated_normal(next(keys), -2.0, 2.0, shape)).astype(jnp.float32)

    def tnw(shape):           # matmul weights used inside Pallas MXU kernels
        return tn(shape).astype(_MXU_DTYPE)

    zeros = lambda n: jnp.zeros((n,), jnp.float32)
    ones = lambda n: jnp.ones((n,), jnp.float32)

    # PatchEmbed: fold eval-mode BatchNorm3d (gamma=1, beta=0, mean=0, var=1)
    bn_scale = jnp.float32(1.0 / math.sqrt(1.0 + eps))
    c1 = tn((E // 2, 1, 3, 1, 1))                                    # torch Conv3d weight layout
    conv1_w = (jnp.transpose(c1[:, 0, :, 0, 0], (1, 0)) * bn_scale).astype(_MXU_DTYPE)  # (3, E/2)
    conv1_b = zeros(E // 2)
    c2 = tn((E, E // 2, 1, 3, 3))
    conv2_w = (jnp.transpose(c2[:, :, 0], (2, 3, 1, 0)) * bn_scale).astype(_MXU_DTYPE)  # (3,3,E/2,E)
    conv2_b = zeros(E)
    pe = dict(conv1_w=conv1_w, conv1_b=conv1_b, conv2_w=conv2_w, conv2_b=conv2_b)

    blocks = []
    for _ in range(layers):
        blocks.append(dict(
            s_norm1_g=ones(E), s_norm1_b=zeros(E),
            norm1_g=ones(E), norm1_b=zeros(E),
            norm2_g=ones(E), norm2_b=zeros(E),
            s_fc=dict(mlp_t_w=tnw((dim_t, dim_t)), mlp_t_b=zeros(dim_t),
                      proj_w=tnw((E, E)), proj_b=zeros(E)),
            fc=dict(mlp_h_w=tnw((dim_hw, dim_hw)), mlp_h_b=zeros(dim_hw),
                    mlp_w_w=tnw((dim_hw, dim_hw)), mlp_w_b=zeros(dim_hw),
                    mlp_c_w=tnw((E, E)), mlp_c_b=zeros(E),
                    rw_fc1_w=tn((E, E // 4)), rw_fc1_b=zeros(E // 4),
                    rw_fc2_w=tn((E // 4, 3 * E)), rw_fc2_b=zeros(3 * E),
                    proj_w=tnw((E, E)), proj_b=zeros(E)),
            mlp=dict(fc1_w=tnw((E, hidden)), fc1_b=zeros(hidden),
                     fc2_w=tnw((hidden, E)), fc2_b=zeros(E)),
        ))

    return dict(patch_embed=pe, blocks=blocks,
                norm_g=ones(E), norm_b=zeros(E),
                head_w=tnw((E, num_classes)), head_b=zeros(num_classes))


# ----------------------------------------------------------------------------
if __name__ == "__main__":
    # SSMLP(Patch=4, BAND=8, CLASSES_NUM=5, layers=2, embed_dims=16, segment_dim=4)
    B, BAND, H, W = 2, 8, 4, 4
    PATCH, CLASSES, LAYERS, EMBED, SEG = 4, 5, 2, 16, 4

    key = jax.random.PRNGKey(0)
    kx, kp = jax.random.split(key)
    x = jax.random.normal(kx, (B, BAND, H, W), jnp.float32)
    params = init_params(kp, band=BAND, patch=PATCH, num_classes=CLASSES,
                         layers=LAYERS, embed_dims=EMBED, segment_dim=SEG)

    fwd = jax.jit(functools.partial(ssmlp_forward, segment_dim=SEG, tmp=PATCH))
    pooled, logits = fwd(x, params)
    jax.block_until_ready((pooled, logits))

    assert pooled.shape == (B, EMBED), pooled.shape
    assert logits.shape == (B, CLASSES), logits.shape
    assert bool(jnp.all(jnp.isfinite(pooled))) and bool(jnp.all(jnp.isfinite(logits)))
    print("KERNEL_OK")
</pallas_src>

<mosaic_0001>
module attributes {stable_mosaic.version = 11 : i64} {
  func.func @_conv2_kernel(%arg0: i32, %arg1: memref<1x6x48xf32, #tpu.memory_space<vmem>>, %arg2: memref<3x48x64xbf16, #tpu.memory_space<vmem>>, %arg3: memref<1x64xf32, #tpu.memory_space<vmem>>, %arg4: memref<1x4x64xf32, #tpu.memory_space<vmem>>) attributes {dimension_semantics = [#tpu.dimension_semantics<parallel>], iteration_bounds = array<i64: 16>, scalar_prefetch = 0 : i64, scratch_operands = 0 : i64, tpu.core_type = #tpu.core_type<tc>, window_params = [{transform_indices = @transform_0, window_bounds = array<i64: 1, 6, 48>}, {pipeline_mode = #tpu.pipeline_mode<synchronous>, transform_indices = @transform_1, window_bounds = array<i64: 3, 48, 64>}, {pipeline_mode = #tpu.pipeline_mode<synchronous>, transform_indices = @transform_2, window_bounds = array<i64: 1, 64>}, {transform_indices = @transform_3, window_bounds = array<i64: 1, 4, 64>}]} {
    %c0 = arith.constant 0 : index
    %c0_0 = arith.constant 0 : index
    %c0_1 = arith.constant 0 : index
    %0 = vector.load %arg1[%c0, %c0_0, %c0_1] : memref<1x6x48xf32, #tpu.memory_space<vmem>>, vector<1x4x48xf32>
    %1 = vector.shape_cast %0 : vector<1x4x48xf32> to vector<4x48xf32>
    %2 = arith.truncf %1 : vector<4x48xf32> to vector<4x48xbf16>
    %c0_2 = arith.constant 0 : index
    %c0_3 = arith.constant 0 : index
    %c0_4 = arith.constant 0 : index
    %3 = vector.load %arg2[%c0_2, %c0_3, %c0_4] : memref<3x48x64xbf16, #tpu.memory_space<vmem>>, vector<1x48x64xbf16>
    %4 = vector.shape_cast %3 : vector<1x48x64xbf16> to vector<48x64xbf16>
    %cst = arith.constant dense<0.000000e+00> : vector<4x64xf32>
    %5 = tpu.matmul %2, %4, %cst {dimension_numbers = #tpu.dot_dimension_numbers<[1], [0], [0], [1], [0, 0, 1, 1], [], []>} : vector<4x48xbf16>, vector<48x64xbf16>, vector<4x64xf32> -> vector<4x64xf32>
    %c0_5 = arith.constant 0 : index
    %c1 = arith.constant 1 : index
    %c0_6 = arith.constant 0 : index
    %6 = vector.load %arg1[%c0_5, %c1, %c0_6] : memref<1x6x48xf32, #tpu.memory_space<vmem>>, vector<1x4x48xf32>
    %7 = vector.shape_cast %6 : vector<1x4x48xf32> to vector<4x48xf32>
    %8 = arith.truncf %7 : vector<4x48xf32> to vector<4x48xbf16>
    %c1_7 = arith.constant 1 : index
    %c0_8 = arith.constant 0 : index
    %c0_9 = arith.constant 0 : index
    %9 = vector.load %arg2[%c1_7, %c0_8, %c0_9] : memref<3x48x64xbf16, #tpu.memory_space<vmem>>, vector<1x48x64xbf16>
    %10 = vector.shape_cast %9 : vector<1x48x64xbf16> to vector<48x64xbf16>
    %cst_10 = arith.constant dense<0.000000e+00> : vector<4x64xf32>
    %11 = tpu.matmul %8, %10, %cst_10 {dimension_numbers = #tpu.dot_dimension_numbers<[1], [0], [0], [1], [0, 0, 1, 1], [], []>} : vector<4x48xbf16>, vector<48x64xbf16>, vector<4x64xf32> -> vector<4x64xf32>
    %12 = arith.addf %5, %11 : vector<4x64xf32>
    %c0_11 = arith.constant 0 : index
    %c2 = arith.constant 2 : index
    %c0_12 = arith.constant 0 : index
    %13 = vector.load %arg1[%c0_11, %c2, %c0_12] : memref<1x6x48xf32, #tpu.memory_space<vmem>>, vector<1x4x48xf32>
    %14 = vector.shape_cast %13 : vector<1x4x48xf32> to vector<4x48xf32>
    %15 = arith.truncf %14 : vector<4x48xf32> to vector<4x48xbf16>
    %c2_13 = arith.constant 2 : index
    %c0_14 = arith.constant 0 : index
    %c0_15 = arith.constant 0 : index
    %16 = vector.load %arg2[%c2_13, %c0_14, %c0_15] : memref<3x48x64xbf16, #tpu.memory_space<vmem>>, vector<1x48x64xbf16>
    %17 = vector.shape_cast %16 : vector<1x48x64xbf16> to vector<48x64xbf16>
    %cst_16 = arith.constant dense<0.000000e+00> : vector<4x64xf32>
    %18 = tpu.matmul %15, %17, %cst_16 {dimension_numbers = #tpu.dot_dimension_numbers<[1], [0], [0], [1], [0, 0, 1, 1], [], []>} : vector<4x48xbf16>, vector<48x64xbf16>, vector<4x64xf32> -> vector<4x64xf32>
    %19 = arith.addf %12, %18 : vector<4x64xf32>
    %c0_17 = arith.constant 0 : index
    %c0_18 = arith.constant 0 : index
    %20 = vector.load %arg3[%c0_17, %c0_18] : memref<1x64xf32, #tpu.memory_space<vmem>>, vector<1x64xf32>
    %21 = vector.broadcast %20 : vector<1x64xf32> to vector<4x64xf32>
    %22 = arith.addf %19, %21 : vector<4x64xf32>
    %c0_19 = arith.constant 0 : index
    %c0_20 = arith.constant 0 : index
    %c0_21 = arith.constant 0 : index
    %23 = vector.load %arg4[%c0_19, %c0_20, %c0_21] : memref<1x4x64xf32, #tpu.memory_space<vmem>>, vector<1x4x64xf32>
    %24 = vector.shape_cast %23 : vector<1x4x64xf32> to vector<4x64xf32>
    %25 = vector.shape_cast %22 : vector<4x64xf32> to vector<1x4x64xf32>
    tpu.vector_store %arg4[%c0_19, %c0_20, %c0_21], %25 {strides = array<i32>} : memref<1x4x64xf32, #tpu.memory_space<vmem>>, vector<1x4x64xf32>,
    return
  }
  func.func @transform_0(%arg0: i32) -> (i32, i32, i32) {
    %c0_i32 = arith.constant 0 : i32
    %c0_i32_0 = arith.constant 0 : i32
    %c0_i32_1 = arith.constant 0 : i32
    return %arg0, %c0_i32, %c0_i32_0 : i32, i32, i32
  }
  func.func @transform_1(%arg0: i32) -> (i32, i32, i32) {
    %c0_i32 = arith.constant 0 : i32
    %c0_i32_0 = arith.constant 0 : i32
    %c0_i32_1 = arith.constant 0 : i32
    %c0_i32_2 = arith.constant 0 : i32
    return %c0_i32, %c0_i32_0, %c0_i32_1 : i32, i32, i32
  }
  func.func @transform_2(%arg0: i32) -> (i32, i32) {
    %c0_i32 = arith.constant 0 : i32
    %c0_i32_0 = arith.constant 0 : i32
    %c0_i32_1 = arith.constant 0 : i32
    return %c0_i32, %c0_i32_0 : i32, i32
  }
  func.func @transform_3(%arg0: i32) -> (i32, i32, i32) {
    %c0_i32 = arith.constant 0 : i32
    %c0_i32_0 = arith.constant 0 : i32
    %c0_i32_1 = arith.constant 0 : i32
    return %arg0, %c0_i32, %c0_i32_0 : i32, i32, i32
  }
}

module attributes {stable_mosaic.version = 11 : i64} {
  func.func @_linear_kernel(%arg0: i32, %arg1: memref<256x3xf32, #tpu.memory_space<vmem>>, %arg2: memref<3x8xbf16, #tpu.memory_space<vmem>>, %arg3: memref<1x8xf32, #tpu.memory_space<vmem>>, %arg4: memref<256x8xf32, #tpu.memory_space<vmem>>) attributes {dimension_semantics = [#tpu.dimension_semantics<parallel>], iteration_bounds = array<i64: 1>, scalar_prefetch = 0 : i64, scratch_operands = 0 : i64, tpu.core_type = #tpu.core_type<tc>, window_params = [{transform_indices = @transform_0, window_bounds = array<i64: 256, 3>}, {pipeline_mode = #tpu.pipeline_mode<synchronous>, transform_indices = @transform_1, window_bounds = array<i64: 3, 8>}, {pipeline_mode = #tpu.pipeline_mode<synchronous>, transform_indices = @transform_2, window_bounds = array<i64: 1, 8>}, {transform_indices = @transform_3, window_bounds = array<i64: 256, 8>}]} {
    %c0 = arith.constant 0 : index
    %c0_0 = arith.constant 0 : index
    %0 = vector.load %arg1[%c0, %c0_0] : memref<256x3xf32, #tpu.memory_space<vmem>>, vector<256x3xf32>
    %1 = arith.truncf %0 : vector<256x3xf32> to vector<256x3xbf16>
    %c0_1 = arith.constant 0 : index
    %c0_2 = arith.constant 0 : index
    %2 = vector.load %arg2[%c0_1, %c0_2] : memref<3x8xbf16, #tpu.memory_space<vmem>>, vector<3x8xbf16>
    %cst = arith.constant dense<0.000000e+00> : vector<256x8xf32>
    %3 = tpu.matmul %1, %2, %cst {dimension_numbers = #tpu.dot_dimension_numbers<[1], [0], [0], [1], [0, 0, 1, 1], [], []>} : vector<256x3xbf16>, vector<3x8xbf16>, vector<256x8xf32> -> vector<256x8xf32>
    %c0_3 = arith.constant 0 : index
    %c0_4 = arith.constant 0 : index
    %4 = vector.load %arg3[%c0_3, %c0_4] : memref<1x8xf32, #tpu.memory_space<vmem>>, vector<1x8xf32>
    %5 = vector.broadcast %4 : vector<1x8xf32> to vector<256x8xf32>
    %6 = arith.addf %3, %5 : vector<256x8xf32>
    %cst_5 = arith.constant 5.000000e-01 : f32
    %7 = vector.broadcast %cst_5 : f32 to vector<256x8xf32>
    %8 = arith.mulf %7, %6 : vector<256x8xf32>
    %cst_6 = arith.constant 0.707106769 : f32
    %9 = vector.broadcast %cst_6 : f32 to vector<256x8xf32>
    %10 = arith.mulf %6, %9 : vector<256x8xf32>
    %11 = math.absf %10 : vector<256x8xf32>
    %cst_7 = arith.constant 0.327591091 : f32
    %12 = vector.broadcast %cst_7 : f32 to vector<256x8xf32>
    %13 = arith.mulf %12, %11 : vector<256x8xf32>
    %cst_8 = arith.constant 1.000000e+00 : f32
    %14 = vector.broadcast %cst_8 : f32 to vector<256x8xf32>
    %15 = arith.addf %14, %13 : vector<256x8xf32>
    %16 = tpu.reciprocal %15 {approx = true} : vector<256x8xf32> -> vector<256x8xf32>
    %cst_9 = arith.constant 1.06140542 : f32
    %17 = vector.broadcast %cst_9 : f32 to vector<256x8xf32>
    %18 = arith.mulf %17, %16 : vector<256x8xf32>
    %cst_10 = arith.constant -1.45315206 : f32
    %19 = vector.broadcast %cst_10 : f32 to vector<256x8xf32>
    %20 = arith.addf %18, %19 : vector<256x8xf32>
    %21 = arith.mulf %20, %16 : vector<256x8xf32>
    %cst_11 = arith.constant 1.42141378 : f32
    %22 = vector.broadcast %cst_11 : f32 to vector<256x8xf32>
    %23 = arith.addf %21, %22 : vector<256x8xf32>
    %24 = arith.mulf %23, %16 : vector<256x8xf32>
    %cst_12 = arith.constant -0.284496725 : f32
    %25 = vector.broadcast %cst_12 : f32 to vector<256x8xf32>
    %26 = arith.addf %24, %25 : vector<256x8xf32>
    %27 = arith.mulf %26, %16 : vector<256x8xf32>
    %cst_13 = arith.constant 0.254829586 : f32
    %28 = vector.broadcast %cst_13 : f32 to vector<256x8xf32>
    %29 = arith.addf %27, %28 : vector<256x8xf32>
    %30 = arith.mulf %29, %16 : vector<256x8xf32>
    %cst_14 = arith.constant 0.000000e+00 : f32
    %31 = vector.broadcast %cst_14 : f32 to vector<256x8xf32>
    %32 = arith.subf %31, %11 : vector<256x8xf32>
    %33 = arith.mulf %32, %11 : vector<256x8xf32>
    %34 = math.exp %33 : vector<256x8xf32>
    %35 = arith.mulf %30, %34 : vector<256x8xf32>
    %cst_15 = arith.constant 1.000000e+00 : f32
    %36 = vector.broadcast %cst_15 : f32 to vector<256x8xf32>
    %37 = arith.subf %36, %35 : vector<256x8xf32>
    %cst_16 = arith.constant 0.000000e+00 : f32
    %38 = vector.broadcast %cst_16 : f32 to vector<256x8xf32>
    %39 = arith.cmpf olt, %10, %38 : vector<256x8xf32>
    %cst_17 = arith.constant 0.000000e+00 : f32
    %40 = vector.broadcast %cst_17 : f32 to vector<256x8xf32>
    %41 = arith.subf %40, %37 : vector<256x8xf32>
    %42 = arith.select %39, %41, %37 : vector<256x8xi1>, vector<256x8xf32>
    %cst_18 = arith.constant 1.000000e+00 : f32
    %43 = vector.broadcast %cst_18 : f32 to vector<256x8xf32>
    %44 = arith.addf %43, %42 : vector<256x8xf32>
    %45 = arith.mulf %8, %44 : vector<256x8xf32>
    %c0_19 = arith.constant 0 : index
    %c0_20 = arith.constant 0 : index
    %46 = vector.load %arg4[%c0_19, %c0_20] : memref<256x8xf32, #tpu.memory_space<vmem>>, vector<256x8xf32>
    tpu.vector_store %arg4[%c0_19, %c0_20], %45 {strides = array<i32>} : memref<256x8xf32, #tpu.memory_space<vmem>>, vector<256x8xf32>,
    return
  }
  func.func @transform_0(%arg0: i32) -> (i32, i32) {
    %c0_i32 = arith.constant 0 : i32
    %c0_i32_0 = arith.constant 0 : i32
    return %arg0, %c0_i32 : i32, i32
  }
  func.func @transform_1(%arg0: i32) -> (i32, i32) {
    %c0_i32 = arith.constant 0 : i32
    %c0_i32_0 = arith.constant 0 : i32
    %c0_i32_1 = arith.constant 0 : i32
    return %c0_i32, %c0_i32_0 : i32, i32
  }
  func.func @transform_2(%arg0: i32) -> (i32, i32) {
    %c0_i32 = arith.constant 0 : i32
    %c0_i32_0 = arith.constant 0 : i32
    %c0_i32_1 = arith.constant 0 : i32
    return %c0_i32, %c0_i32_0 : i32, i32
  }
  func.func @transform_3(%arg0: i32) -> (i32, i32) {
    %c0_i32 = arith.constant 0 : i32
    %c0_i32_0 = arith.constant 0 : i32
    return %arg0, %c0_i32 : i32, i32
  }
}

module attributes {stable_mosaic.version = 11 : i64} {
  func.func @_layernorm_kernel(%arg0: i32, %arg1: memref<256x16xf32, #tpu.memory_space<vmem>>, %arg2: memref<1x16xf32, #tpu.memory_space<vmem>>, %arg3: memref<1x16xf32, #tpu.memory_space<vmem>>, %arg4: memref<256x16xf32, #tpu.memory_space<vmem>>) attributes {dimension_semantics = [#tpu.dimension_semantics<parallel>], iteration_bounds = array<i64: 1>, scalar_prefetch = 0 : i64, scratch_operands = 0 : i64, tpu.core_type = #tpu.core_type<tc>, window_params = [{transform_indices = @transform_0, window_bounds = array<i64: 256, 16>}, {pipeline_mode = #tpu.pipeline_mode<synchronous>, transform_indices = @transform_1, window_bounds = array<i64: 1, 16>}, {pipeline_mode = #tpu.pipeline_mode<synchronous>, transform_indices = @transform_2, window_bounds = array<i64: 1, 16>}, {transform_indices = @transform_3, window_bounds = array<i64: 256, 16>}]} {
    %c0 = arith.constant 0 : index
    %c0_0 = arith.constant 0 : index
    %0 = vector.load %arg1[%c0, %c0_0] : memref<256x16xf32, #tpu.memory_space<vmem>>, vector<256x16xf32>
    %cst = arith.constant dense<0.000000e+00> : vector<256xf32>
    %1 = vector.multi_reduction <add>, %0, %cst [1] : vector<256x16xf32> to vector<256xf32>
    %2 = vector.shape_cast %1 : vector<256xf32> to vector<256x1xf32>
    %cst_1 = arith.constant 1.600000e+01 : f32
    %3 = vector.broadcast %cst_1 : f32 to vector<256x1xf32>
    %4 = arith.divf %2, %3 : vector<256x1xf32>
    %5 = vector.broadcast %4 : vector<256x1xf32> to vector<256x16xf32>
    %6 = arith.subf %0, %5 : vector<256x16xf32>
    %7 = arith.mulf %6, %6 : vector<256x16xf32>
    %cst_2 = arith.constant dense<0.000000e+00> : vector<256xf32>
    %8 = vector.multi_reduction <add>, %7, %cst_2 [1] : vector<256x16xf32> to vector<256xf32>
    %9 = vector.shape_cast %8 : vector<256xf32> to vector<256x1xf32>
    %cst_3 = arith.constant 1.600000e+01 : f32
    %10 = vector.broadcast %cst_3 : f32 to vector<256x1xf32>
    %11 = arith.divf %9, %10 : vector<256x1xf32>
    %cst_4 = arith.constant 9.99999974E-6 : f32
    %12 = vector.broadcast %cst_4 : f32 to vector<256x1xf32>
    %13 = arith.addf %11, %12 : vector<256x1xf32>
    %14 = math.rsqrt %13 : vector<256x1xf32>
    %15 = vector.broadcast %14 : vector<256x1xf32> to vector<256x16xf32>
    %16 = arith.mulf %6, %15 : vector<256x16xf32>
    %c0_5 = arith.constant 0 : index
    %c0_6 = arith.constant 0 : index
    %17 = vector.load %arg2[%c0_5, %c0_6] : memref<1x16xf32, #tpu.memory_space<vmem>>, vector<1x16xf32>
    %18 = vector.broadcast %17 : vector<1x16xf32> to vector<256x16xf32>
    %19 = arith.mulf %16, %18 : vector<256x16xf32>
    %c0_7 = arith.constant 0 : index
    %c0_8 = arith.constant 0 : index
    %20 = vector.load %arg3[%c0_7, %c0_8] : memref<1x16xf32, #tpu.memory_space<vmem>>, vector<1x16xf32>
    %21 = vector.broadcast %20 : vector<1x16xf32> to vector<256x16xf32>
    %22 = arith.addf %19, %21 : vector<256x16xf32>
    %c0_9 = arith.constant 0 : index
    %c0_10 = arith.constant 0 : index
    %23 = vector.load %arg4[%c0_9, %c0_10] : memref<256x16xf32, #tpu.memory_space<vmem>>, vector<256x16xf32>
    tpu.vector_store %arg4[%c0_9, %c0_10], %22 {strides = array<i32>} : memref<256x16xf32, #tpu.memory_space<vmem>>, vector<256x16xf32>,
    return
  }
  func.func @transform_0(%arg0: i32) -> (i32, i32) {
    %c0_i32 = arith.constant 0 : i32
    %c0_i32_0 = arith.constant 0 : i32
    return %arg0, %c0_i32 : i32, i32
  }
  func.func @transform_1(%arg0: i32) -> (i32, i32) {
    %c0_i32 = arith.constant 0 : i32
    %c0_i32_0 = arith.constant 0 : i32
    %c0_i32_1 = arith.constant 0 : i32
    return %c0_i32, %c0_i32_0 : i32, i32
  }
  func.func @transform_2(%arg0: i32) -> (i32, i32) {
    %c0_i32 = arith.constant 0 : i32
    %c0_i32_0 = arith.constant 0 : i32
    %c0_i32_1 = arith.constant 0 : i32
    return %c0_i32, %c0_i32_0 : i32, i32
  }
  func.func @transform_3(%arg0: i32) -> (i32, i32) {
    %c0_i32 = arith.constant 0 : i32
    %c0_i32_0 = arith.constant 0 : i32
    return %arg0, %c0_i32 : i32, i32
  }
}

module attributes {stable_mosaic.version = 11 : i64} {
  func.func @_linear_kernel(%arg0: i32, %arg1: memref<128x32xf32, #tpu.memory_space<vmem>>, %arg2: memref<32x32xbf16, #tpu.memory_space<vmem>>, %arg3: memref<1x32xf32, #tpu.memory_space<vmem>>, %arg4: memref<128x32xf32, #tpu.memory_space<vmem>>) attributes {dimension_semantics = [#tpu.dimension_semantics<parallel>], iteration_bounds = array<i64: 1>, scalar_prefetch = 0 : i64, scratch_operands = 0 : i64, tpu.core_type = #tpu.core_type<tc>, window_params = [{transform_indices = @transform_0, window_bounds = array<i64: 128, 32>}, {pipeline_mode = #tpu.pipeline_mode<synchronous>, transform_indices = @transform_1, window_bounds = array<i64: 32, 32>}, {pipeline_mode = #tpu.pipeline_mode<synchronous>, transform_indices = @transform_2, window_bounds = array<i64: 1, 32>}, {transform_indices = @transform_3, window_bounds = array<i64: 128, 32>}]} {
    %c0 = arith.constant 0 : index
    %c0_0 = arith.constant 0 : index
    %0 = vector.load %arg1[%c0, %c0_0] : memref<128x32xf32, #tpu.memory_space<vmem>>, vector<128x32xf32>
    %1 = arith.truncf %0 : vector<128x32xf32> to vector<128x32xbf16>
    %c0_1 = arith.constant 0 : index
    %c0_2 = arith.constant 0 : index
    %2 = vector.load %arg2[%c0_1, %c0_2] : memref<32x32xbf16, #tpu.memory_space<vmem>>, vector<32x32xbf16>
    %cst = arith.constant dense<0.000000e+00> : vector<128x32xf32>
    %3 = tpu.matmul %1, %2, %cst {dimension_numbers = #tpu.dot_dimension_numbers<[1], [0], [0], [1], [0, 0, 1, 1], [], []>} : vector<128x32xbf16>, vector<32x32xbf16>, vector<128x32xf32> -> vector<128x32xf32>
    %c0_3 = arith.constant 0 : index
    %c0_4 = arith.constant 0 : index
    %4 = vector.load %arg3[%c0_3, %c0_4] : memref<1x32xf32, #tpu.memory_space<vmem>>, vector<1x32xf32>
    %5 = vector.broadcast %4 : vector<1x32xf32> to vector<128x32xf32>
    %6 = arith.addf %3, %5 : vector<128x32xf32>
    %c0_5 = arith.constant 0 : index
    %c0_6 = arith.constant 0 : index
    %7 = vector.load %arg4[%c0_5, %c0_6] : memref<128x32xf32, #tpu.memory_space<vmem>>, vector<128x32xf32>
    tpu.vector_store %arg4[%c0_5, %c0_6], %6 {strides = array<i32>} : memref<128x32xf32, #tpu.memory_space<vmem>>, vector<128x32xf32>,
    return
  }
  func.func @transform_0(%arg0: i32) -> (i32, i32) {
    %c0_i32 = arith.constant 0 : i32
    %c0_i32_0 = arith.constant 0 : i32
    return %arg0, %c0_i32 : i32, i32
  }
  func.func @transform_1(%arg0: i32) -> (i32, i32) {
    %c0_i32 = arith.constant 0 : i32
    %c0_i32_0 = arith.constant 0 : i32
    %c0_i32_1 = arith.constant 0 : i32
    return %c0_i32, %c0_i32_0 : i32, i32
  }
  func.func @transform_2(%arg0: i32) -> (i32, i32) {
    %c0_i32 = arith.constant 0 : i32
    %c0_i32_0 = arith.constant 0 : i32
    %c0_i32_1 = arith.constant 0 : i32
    return %c0_i32, %c0_i32_0 : i32, i32
  }
  func.func @transform_3(%arg0: i32) -> (i32, i32) {
    %c0_i32 = arith.constant 0 : i32
    %c0_i32_0 = arith.constant 0 : i32
    return %arg0, %c0_i32 : i32, i32
  }
}

module attributes {stable_mosaic.version = 11 : i64} {
  func.func @_linear_kernel(%arg0: i32, %arg1: memref<256x16xf32, #tpu.memory_space<vmem>>, %arg2: memref<16x16xbf16, #tpu.memory_space<vmem>>, %arg3: memref<1x16xf32, #tpu.memory_space<vmem>>, %arg4: memref<256x16xf32, #tpu.memory_space<vmem>>, %arg5: memref<256x16xf32, #tpu.memory_space<vmem>>) attributes {dimension_semantics = [#tpu.dimension_semantics<parallel>], iteration_bounds = array<i64: 1>, scalar_prefetch = 0 : i64, scratch_operands = 0 : i64, tpu.core_type = #tpu.core_type<tc>, window_params = [{transform_indices = @transform_0, window_bounds = array<i64: 256, 16>}, {pipeline_mode = #tpu.pipeline_mode<synchronous>, transform_indices = @transform_1, window_bounds = array<i64: 16, 16>}, {pipeline_mode = #tpu.pipeline_mode<synchronous>, transform_indices = @transform_2, window_bounds = array<i64: 1, 16>}, {transform_indices = @transform_3, window_bounds = array<i64: 256, 16>}, {transform_indices = @transform_4, window_bounds = array<i64: 256, 16>}]} {
    %c0 = arith.constant 0 : index
    %c0_0 = arith.constant 0 : index
    %0 = vector.load %arg1[%c0, %c0_0] : memref<256x16xf32, #tpu.memory_space<vmem>>, vector<256x16xf32>
    %1 = arith.truncf %0 : vector<256x16xf32> to vector<256x16xbf16>
    %c0_1 = arith.constant 0 : index
    %c0_2 = arith.constant 0 : index
    %2 = vector.load %arg2[%c0_1, %c0_2] : memref<16x16xbf16, #tpu.memory_space<vmem>>, vector<16x16xbf16>
    %cst = arith.constant dense<0.000000e+00> : vector<256x16xf32>
    %3 = tpu.matmul %1, %2, %cst {dimension_numbers = #tpu.dot_dimension_numbers<[1], [0], [0], [1], [0, 0, 1, 1], [], []>} : vector<256x16xbf16>, vector<16x16xbf16>, vector<256x16xf32> -> vector<256x16xf32>
    %c0_3 = arith.constant 0 : index
    %c0_4 = arith.constant 0 : index
    %4 = vector.load %arg3[%c0_3, %c0_4] : memref<1x16xf32, #tpu.memory_space<vmem>>, vector<1x16xf32>
    %5 = vector.broadcast %4 : vector<1x16xf32> to vector<256x16xf32>
    %6 = arith.addf %3, %5 : vector<256x16xf32>
    %c0_5 = arith.constant 0 : index
    %c0_6 = arith.constant 0 : index
    %7 = vector.load %arg4[%c0_5, %c0_6] : memref<256x16xf32, #tpu.memory_space<vmem>>, vector<256x16xf32>
    %8 = arith.addf %6, %7 : vector<256x16xf32>
    %c0_7 = arith.constant 0 : index
    %c0_8 = arith.constant 0 : index
    %9 = vector.load %arg5[%c0_7, %c0_8] : memref<256x16xf32, #tpu.memory_space<vmem>>, vector<256x16xf32>
    tpu.vector_store %arg5[%c0_7, %c0_8], %8 {strides = array<i32>} : memref<256x16xf32, #tpu.memory_space<vmem>>, vector<256x16xf32>,
    return
  }
  func.func @transform_0(%arg0: i32) -> (i32, i32) {
    %c0_i32 = arith.constant 0 : i32
    %c0_i32_0 = arith.constant 0 : i32
    return %arg0, %c0_i32 : i32, i32
  }
  func.func @transform_1(%arg0: i32) -> (i32, i32) {
    %c0_i32 = arith.constant 0 : i32
    %c0_i32_0 = arith.constant 0 : i32
    %c0_i32_1 = arith.constant 0 : i32
    return %c0_i32, %c0_i32_0 : i32, i32
  }
  func.func @transform_2(%arg0: i32) -> (i32, i32) {
    %c0_i32 = arith.constant 0 : i32
    %c0_i32_0 = arith.constant 0 : i32
    %c0_i32_1 = arith.constant 0 : i32
    return %c0_i32, %c0_i32_0 : i32, i32
  }
  func.func @transform_3(%arg0: i32) -> (i32, i32) {
    %c0_i32 = arith.constant 0 : i32
    %c0_i32_0 = arith.constant 0 : i32
    return %arg0, %c0_i32 : i32, i32
  }
  func.func @transform_4(%arg0: i32) -> (i32, i32) {
    %c0_i32 = arith.constant 0 : i32
    %c0_i32_0 = arith.constant 0 : i32
    return %arg0, %c0_i32 : i32, i32
  }
}

module attributes {stable_mosaic.version = 11 : i64} {
  func.func @_linear_kernel(%arg0: i32, %arg1: memref<256x16xf32, #tpu.memory_space<vmem>>, %arg2: memref<16x16xbf16, #tpu.memory_space<vmem>>, %arg3: memref<1x16xf32, #tpu.memory_space<vmem>>, %arg4: memref<256x16xf32, #tpu.memory_space<vmem>>) attributes {dimension_semantics = [#tpu.dimension_semantics<parallel>], iteration_bounds = array<i64: 1>, scalar_prefetch = 0 : i64, scratch_operands = 0 : i64, tpu.core_type = #tpu.core_type<tc>, window_params = [{transform_indices = @transform_0, window_bounds = array<i64: 256, 16>}, {pipeline_mode = #tpu.pipeline_mode<synchronous>, transform_indices = @transform_1, window_bounds = array<i64: 16, 16>}, {pipeline_mode = #tpu.pipeline_mode<synchronous>, transform_indices = @transform_2, window_bounds = array<i64: 1, 16>}, {transform_indices = @transform_3, window_bounds = array<i64: 256, 16>}]} {
    %c0 = arith.constant 0 : index
    %c0_0 = arith.constant 0 : index
    %0 = vector.load %arg1[%c0, %c0_0] : memref<256x16xf32, #tpu.memory_space<vmem>>, vector<256x16xf32>
    %1 = arith.truncf %0 : vector<256x16xf32> to vector<256x16xbf16>
    %c0_1 = arith.constant 0 : index
    %c0_2 = arith.constant 0 : index
    %2 = vector.load %arg2[%c0_1, %c0_2] : memref<16x16xbf16, #tpu.memory_space<vmem>>, vector<16x16xbf16>
    %cst = arith.constant dense<0.000000e+00> : vector<256x16xf32>
    %3 = tpu.matmul %1, %2, %cst {dimension_numbers = #tpu.dot_dimension_numbers<[1], [0], [0], [1], [0, 0, 1, 1], [], []>} : vector<256x16xbf16>, vector<16x16xbf16>, vector<256x16xf32> -> vector<256x16xf32>
    %c0_3 = arith.constant 0 : index
    %c0_4 = arith.constant 0 : index
    %4 = vector.load %arg3[%c0_3, %c0_4] : memref<1x16xf32, #tpu.memory_space<vmem>>, vector<1x16xf32>
    %5 = vector.broadcast %4 : vector<1x16xf32> to vector<256x16xf32>
    %6 = arith.addf %3, %5 : vector<256x16xf32>
    %c0_5 = arith.constant 0 : index
    %c0_6 = arith.constant 0 : index
    %7 = vector.load %arg4[%c0_5, %c0_6] : memref<256x16xf32, #tpu.memory_space<vmem>>, vector<256x16xf32>
    tpu.vector_store %arg4[%c0_5, %c0_6], %6 {strides = array<i32>} : memref<256x16xf32, #tpu.memory_space<vmem>>, vector<256x16xf32>,
    return
  }
  func.func @transform_0(%arg0: i32) -> (i32, i32) {
    %c0_i32 = arith.constant 0 : i32
    %c0_i32_0 = arith.constant 0 : i32
    return %arg0, %c0_i32 : i32, i32
  }
  func.func @transform_1(%arg0: i32) -> (i32, i32) {
    %c0_i32 = arith.constant 0 : i32
    %c0_i32_0 = arith.constant 0 : i32
    %c0_i32_1 = arith.constant 0 : i32
    return %c0_i32, %c0_i32_0 : i32, i32
  }
  func.func @transform_2(%arg0: i32) -> (i32, i32) {
    %c0_i32 = arith.constant 0 : i32
    %c0_i32_0 = arith.constant 0 : i32
    %c0_i32_1 = arith.constant 0 : i32
    return %c0_i32, %c0_i32_0 : i32, i32
  }
  func.func @transform_3(%arg0: i32) -> (i32, i32) {
    %c0_i32 = arith.constant 0 : i32
    %c0_i32_0 = arith.constant 0 : i32
    return %arg0, %c0_i32 : i32, i32
  }
}

module attributes {stable_mosaic.version = 11 : i64} {
  func.func @_ln_mlp_kernel(%arg0: i32, %arg1: memref<256x16xf32, #tpu.memory_space<vmem>>, %arg2: memref<1x16xf32, #tpu.memory_space<vmem>>, %arg3: memref<1x16xf32, #tpu.memory_space<vmem>>, %arg4: memref<16x48xbf16, #tpu.memory_space<vmem>>, %arg5: memref<1x48xf32, #tpu.memory_space<vmem>>, %arg6: memref<48x16xbf16, #tpu.memory_space<vmem>>, %arg7: memref<1x16xf32, #tpu.memory_space<vmem>>, %arg8: memref<256x16xf32, #tpu.memory_space<vmem>>) attributes {dimension_semantics = [#tpu.dimension_semantics<parallel>], iteration_bounds = array<i64: 1>, scalar_prefetch = 0 : i64, scratch_operands = 0 : i64, tpu.core_type = #tpu.core_type<tc>, window_params = [{transform_indices = @transform_0, window_bounds = array<i64: 256, 16>}, {pipeline_mode = #tpu.pipeline_mode<synchronous>, transform_indices = @transform_1, window_bounds = array<i64: 1, 16>}, {pipeline_mode = #tpu.pipeline_mode<synchronous>, transform_indices = @transform_2, window_bounds = array<i64: 1, 16>}, {pipeline_mode = #tpu.pipeline_mode<synchronous>, transform_indices = @transform_3, window_bounds = array<i64: 16, 48>}, {pipeline_mode = #tpu.pipeline_mode<synchronous>, transform_indices = @transform_4, window_bounds = array<i64: 1, 48>}, {pipeline_mode = #tpu.pipeline_mode<synchronous>, transform_indices = @transform_5, window_bounds = array<i64: 48, 16>}, {pipeline_mode = #tpu.pipeline_mode<synchronous>, transform_indices = @transform_6, window_bounds = array<i64: 1, 16>}, {transform_indices = @transform_7, window_bounds = array<i64: 256, 16>}]} {
    %c0 = arith.constant 0 : index
    %c0_0 = arith.constant 0 : index
    %0 = vector.load %arg1[%c0, %c0_0] : memref<256x16xf32, #tpu.memory_space<vmem>>, vector<256x16xf32>
    %cst = arith.constant dense<0.000000e+00> : vector<256xf32>
    %1 = vector.multi_reduction <add>, %0, %cst [1] : vector<256x16xf32> to vector<256xf32>
    %2 = vector.shape_cast %1 : vector<256xf32> to vector<256x1xf32>
    %cst_1 = arith.constant 1.600000e+01 : f32
    %3 = vector.broadcast %cst_1 : f32 to vector<256x1xf32>
    %4 = arith.divf %2, %3 : vector<256x1xf32>
    %5 = vector.broadcast %4 : vector<256x1xf32> to vector<256x16xf32>
    %6 = arith.subf %0, %5 : vector<256x16xf32>
    %7 = arith.mulf %6, %6 : vector<256x16xf32>
    %cst_2 = arith.constant dense<0.000000e+00> : vector<256xf32>
    %8 = vector.multi_reduction <add>, %7, %cst_2 [1] : vector<256x16xf32> to vector<256xf32>
    %9 = vector.shape_cast %8 : vector<256xf32> to vector<256x1xf32>
    %cst_3 = arith.constant 1.600000e+01 : f32
    %10 = vector.broadcast %cst_3 : f32 to vector<256x1xf32>
    %11 = arith.divf %9, %10 : vector<256x1xf32>
    %cst_4 = arith.constant 9.99999974E-6 : f32
    %12 = vector.broadcast %cst_4 : f32 to vector<256x1xf32>
    %13 = arith.addf %11, %12 : vector<256x1xf32>
    %14 = math.rsqrt %13 : vector<256x1xf32>
    %15 = vector.broadcast %14 : vector<256x1xf32> to vector<256x16xf32>
    %16 = arith.mulf %6, %15 : vector<256x16xf32>
    %c0_5 = arith.constant 0 : index
    %c0_6 = arith.constant 0 : index
    %17 = vector.load %arg2[%c0_5, %c0_6] : memref<1x16xf32, #tpu.memory_space<vmem>>, vector<1x16xf32>
    %18 = vector.broadcast %17 : vector<1x16xf32> to vector<256x16xf32>
    %19 = arith.mulf %16, %18 : vector<256x16xf32>
    %c0_7 = arith.constant 0 : index
    %c0_8 = arith.constant 0 : index
    %20 = vector.load %arg3[%c0_7, %c0_8] : memref<1x16xf32, #tpu.memory_space<vmem>>, vector<1x16xf32>
    %21 = vector.broadcast %20 : vector<1x16xf32> to vector<256x16xf32>
    %22 = arith.addf %19, %21 : vector<256x16xf32>
    %23 = arith.truncf %22 : vector<256x16xf32> to vector<256x16xbf16>
    %c0_9 = arith.constant 0 : index
    %c0_10 = arith.constant 0 : index
    %24 = vector.load %arg4[%c0_9, %c0_10] : memref<16x48xbf16, #tpu.memory_space<vmem>>, vector<16x48xbf16>
    %cst_11 = arith.constant dense<0.000000e+00> : vector<256x48xf32>
    %25 = tpu.matmul %23, %24, %cst_11 {dimension_numbers = #tpu.dot_dimension_numbers<[1], [0], [0], [1], [0, 0, 1, 1], [], []>} : vector<256x16xbf16>, vector<16x48xbf16>, vector<256x48xf32> -> vector<256x48xf32>
    %c0_12 = arith.constant 0 : index
    %c0_13 = arith.constant 0 : index
    %26 = vector.load %arg5[%c0_12, %c0_13] : memref<1x48xf32, #tpu.memory_space<vmem>>, vector<1x48xf32>
    %27 = vector.broadcast %26 : vector<1x48xf32> to vector<256x48xf32>
    %28 = arith.addf %25, %27 : vector<256x48xf32>
    %cst_14 = arith.constant 5.000000e-01 : f32
    %29 = vector.broadcast %cst_14 : f32 to vector<256x48xf32>
    %30 = arith.mulf %29, %28 : vector<256x48xf32>
    %cst_15 = arith.constant 0.707106769 : f32
    %31 = vector.broadcast %cst_15 : f32 to vector<256x48xf32>
    %32 = arith.mulf %28, %31 : vector<256x48xf32>
    %33 = math.absf %32 : vector<256x48xf32>
    %cst_16 = arith.constant 0.327591091 : f32
    %34 = vector.broadcast %cst_16 : f32 to vector<256x48xf32>
    %35 = arith.mulf %34, %33 : vector<256x48xf32>
    %cst_17 = arith.constant 1.000000e+00 : f32
    %36 = vector.broadcast %cst_17 : f32 to vector<256x48xf32>
    %37 = arith.addf %36, %35 : vector<256x48xf32>
    %38 = tpu.reciprocal %37 {approx = true} : vector<256x48xf32> -> vector<256x48xf32>
    %cst_18 = arith.constant 1.06140542 : f32
    %39 = vector.broadcast %cst_18 : f32 to vector<256x48xf32>
    %40 = arith.mulf %39, %38 : vector<256x48xf32>
    %cst_19 = arith.constant -1.45315206 : f32
    %41 = vector.broadcast %cst_19 : f32 to vector<256x48xf32>
    %42 = arith.addf %40, %41 : vector<256x48xf32>
    %43 = arith.mulf %42, %38 : vector<256x48xf32>
    %cst_20 = arith.constant 1.42141378 : f32
    %44 = vector.broadcast %cst_20 : f32 to vector<256x48xf32>
    %45 = arith.addf %43, %44 : vector<256x48xf32>
    %46 = arith.mulf %45, %38 : vector<256x48xf32>
    %cst_21 = arith.constant -0.284496725 : f32
    %47 = vector.broadcast %cst_21 : f32 to vector<256x48xf32>
    %48 = arith.addf %46, %47 : vector<256x48xf32>
    %49 = arith.mulf %48, %38 : vector<256x48xf32>
    %cst_22 = arith.constant 0.254829586 : f32
    %50 = vector.broadcast %cst_22 : f32 to vector<256x48xf32>
    %51 = arith.addf %49, %50 : vector<256x48xf32>
    %52 = arith.mulf %51, %38 : vector<256x48xf32>
    %cst_23 = arith.constant 0.000000e+00 : f32
    %53 = vector.broadcast %cst_23 : f32 to vector<256x48xf32>
    %54 = arith.subf %53, %33 : vector<256x48xf32>
    %55 = arith.mulf %54, %33 : vector<256x48xf32>
    %56 = math.exp %55 : vector<256x48xf32>
    %57 = arith.mulf %52, %56 : vector<256x48xf32>
    %cst_24 = arith.constant 1.000000e+00 : f32
    %58 = vector.broadcast %cst_24 : f32 to vector<256x48xf32>
    %59 = arith.subf %58, %57 : vector<256x48xf32>
    %cst_25 = arith.constant 0.000000e+00 : f32
    %60 = vector.broadcast %cst_25 : f32 to vector<256x48xf32>
    %61 = arith.cmpf olt, %32, %60 : vector<256x48xf32>
    %cst_26 = arith.constant 0.000000e+00 : f32
    %62 = vector.broadcast %cst_26 : f32 to vector<256x48xf32>
    %63 = arith.subf %62, %59 : vector<256x48xf32>
    %64 = arith.select %61, %63, %59 : vector<256x48xi1>, vector<256x48xf32>
    %cst_27 = arith.constant 1.000000e+00 : f32
    %65 = vector.broadcast %cst_27 : f32 to vector<256x48xf32>
    %66 = arith.addf %65, %64 : vector<256x48xf32>
    %67 = arith.mulf %30, %66 : vector<256x48xf32>
    %68 = arith.truncf %67 : vector<256x48xf32> to vector<256x48xbf16>
    %c0_28 = arith.constant 0 : index
    %c0_29 = arith.constant 0 : index
    %69 = vector.load %arg6[%c0_28, %c0_29] : memref<48x16xbf16, #tpu.memory_space<vmem>>, vector<48x16xbf16>
    %cst_30 = arith.constant dense<0.000000e+00> : vector<256x16xf32>
    %70 = tpu.matmul %68, %69, %cst_30 {dimension_numbers = #tpu.dot_dimension_numbers<[1], [0], [0], [1], [0, 0, 1, 1], [], []>} : vector<256x48xbf16>, vector<48x16xbf16>, vector<256x16xf32> -> vector<256x16xf32>
    %c0_31 = arith.constant 0 : index
    %c0_32 = arith.constant 0 : index
    %71 = vector.load %arg7[%c0_31, %c0_32] : memref<1x16xf32, #tpu.memory_space<vmem>>, vector<1x16xf32>
    %72 = vector.broadcast %71 : vector<1x16xf32> to vector<256x16xf32>
    %73 = arith.addf %70, %72 : vector<256x16xf32>
    %74 = arith.addf %0, %73 : vector<256x16xf32>
    %c0_33 = arith.constant 0 : index
    %c0_34 = arith.constant 0 : index
    %75 = vector.load %arg8[%c0_33, %c0_34] : memref<256x16xf32, #tpu.memory_space<vmem>>, vector<256x16xf32>
    tpu.vector_store %arg8[%c0_33, %c0_34], %74 {strides = array<i32>} : memref<256x16xf32, #tpu.memory_space<vmem>>, vector<256x16xf32>,
    return
  }
  func.func @transform_0(%arg0: i32) -> (i32, i32) {
    %c0_i32 = arith.constant 0 : i32
    %c0_i32_0 = arith.constant 0 : i32
    return %arg0, %c0_i32 : i32, i32
  }
  func.func @transform_1(%arg0: i32) -> (i32, i32) {
    %c0_i32 = arith.constant 0 : i32
    %c0_i32_0 = arith.constant 0 : i32
    %c0_i32_1 = arith.constant 0 : i32
    return %c0_i32, %c0_i32_0 : i32, i32
  }
  func.func @transform_2(%arg0: i32) -> (i32, i32) {
    %c0_i32 = arith.constant 0 : i32
    %c0_i32_0 = arith.constant 0 : i32
    %c0_i32_1 = arith.constant 0 : i32
    return %c0_i32, %c0_i32_0 : i32, i32
  }
  func.func @transform_3(%arg0: i32) -> (i32, i32) {
    %c0_i32 = arith.constant 0 : i32
    %c0_i32_0 = arith.constant 0 : i32
    %c0_i32_1 = arith.constant 0 : i32
    return %c0_i32, %c0_i32_0 : i32, i32
  }
  func.func @transform_4(%arg0: i32) -> (i32, i32) {
    %c0_i32 = arith.constant 0 : i32
    %c0_i32_0 = arith.constant 0 : i32
    %c0_i32_1 = arith.constant 0 : i32
    return %c0_i32, %c0_i32_0 : i32, i32
  }
  func.func @transform_5(%arg0: i32) -> (i32, i32) {
    %c0_i32 = arith.constant 0 : i32
    %c0_i32_0 = arith.constant 0 : i32
    %c0_i32_1 = arith.constant 0 : i32
    return %c0_i32, %c0_i32_0 : i32, i32
  }
  func.func @transform_6(%arg0: i32) -> (i32, i32) {
    %c0_i32 = arith.constant 0 : i32
    %c0_i32_0 = arith.constant 0 : i32
    %c0_i32_1 = arith.constant 0 : i32
    return %c0_i32, %c0_i32_0 : i32, i32
  }
  func.func @transform_7(%arg0: i32) -> (i32, i32) {
    %c0_i32 = arith.constant 0 : i32
    %c0_i32_0 = arith.constant 0 : i32
    return %arg0, %c0_i32 : i32, i32
  }
}

module attributes {stable_mosaic.version = 11 : i64} {
  func.func @_final_kernel(%arg0: i32, %arg1: memref<2x128x16xf32, #tpu.memory_space<vmem>>, %arg2: memref<1x16xf32, #tpu.memory_space<vmem>>, %arg3: memref<1x16xf32, #tpu.memory_space<vmem>>, %arg4: memref<16x5xbf16, #tpu.memory_space<vmem>>, %arg5: memref<1x5xf32, #tpu.memory_space<vmem>>, %arg6: memref<2x16xf32, #tpu.memory_space<vmem>>, %arg7: memref<2x5xf32, #tpu.memory_space<vmem>>, %arg8: memref<2x16xf32, #tpu.memory_space<vmem>>) attributes {dimension_semantics = [#tpu.dimension_semantics<arbitrary>], iteration_bounds = array<i64: 1>, scalar_prefetch = 0 : i64, scratch_operands = 1 : i64, tpu.core_type = #tpu.core_type<tc>, window_params = [{transform_indices = @transform_0, window_bounds = array<i64: 2, 128, 16>}, {pipeline_mode = #tpu.pipeline_mode<synchronous>, transform_indices = @transform_1, window_bounds = array<i64: 1, 16>}, {pipeline_mode = #tpu.pipeline_mode<synchronous>, transform_indices = @transform_2, window_bounds = array<i64: 1, 16>}, {pipeline_mode = #tpu.pipeline_mode<synchronous>, transform_indices = @transform_3, window_bounds = array<i64: 16, 5>}, {pipeline_mode = #tpu.pipeline_mode<synchronous>, transform_indices = @transform_4, window_bounds = array<i64: 1, 5>}, {pipeline_mode = #tpu.pipeline_mode<synchronous>, transform_indices = @transform_5, window_bounds = array<i64: 2, 16>}, {pipeline_mode = #tpu.pipeline_mode<synchronous>, transform_indices = @transform_6, window_bounds = array<i64: 2, 5>}]} {
    %c0_i32 = arith.constant 0 : i32
    %0 = arith.cmpi eq, %arg0, %c0_i32 : i32
    %1 = arith.extui %0 : i1 to i32
    %c0_i32_0 = arith.constant 0 : i32
    %2 = arith.cmpi ne, %1, %c0_i32_0 : i32
    scf.if %2 {
      %cst_18 = arith.constant 0.000000e+00 : f32
      %35 = vector.broadcast %cst_18 : f32 to vector<2x16xf32>
      %c0_19 = arith.constant 0 : index
      %c0_20 = arith.constant 0 : index
      %36 = vector.load %arg8[%c0_19, %c0_20] : memref<2x16xf32, #tpu.memory_space<vmem>>, vector<2x16xf32>
      tpu.vector_store %arg8[%c0_19, %c0_20], %35 {strides = array<i32>} : memref<2x16xf32, #tpu.memory_space<vmem>>, vector<2x16xf32>,
    } else {
    }
    %c0 = arith.constant 0 : index
    %c0_1 = arith.constant 0 : index
    %c0_2 = arith.constant 0 : index
    %3 = vector.load %arg1[%c0, %c0_1, %c0_2] : memref<2x128x16xf32, #tpu.memory_space<vmem>>, vector<2x128x16xf32>
    %cst = arith.constant dense<0.000000e+00> : vector<2x128xf32>
    %4 = vector.multi_reduction <add>, %3, %cst [2] : vector<2x128x16xf32> to vector<2x128xf32>
    %5 = vector.shape_cast %4 : vector<2x128xf32> to vector<2x128x1xf32>
    %cst_3 = arith.constant 1.600000e+01 : f32
    %6 = vector.broadcast %cst_3 : f32 to vector<2x128x1xf32>
    %7 = arith.divf %5, %6 : vector<2x128x1xf32>
    %8 = vector.broadcast %7 : vector<2x128x1xf32> to vector<2x128x16xf32>
    %9 = arith.subf %3, %8 : vector<2x128x16xf32>
    %10 = arith.mulf %9, %9 : vector<2x128x16xf32>
    %cst_4 = arith.constant dense<0.000000e+00> : vector<2x128xf32>
    %11 = vector.multi_reduction <add>, %10, %cst_4 [2] : vector<2x128x16xf32> to vector<2x128xf32>
    %12 = vector.shape_cast %11 : vector<2x128xf32> to vector<2x128x1xf32>
    %cst_5 = arith.constant 1.600000e+01 : f32
    %13 = vector.broadcast %cst_5 : f32 to vector<2x128x1xf32>
    %14 = arith.divf %12, %13 : vector<2x128x1xf32>
    %cst_6 = arith.constant 9.99999974E-6 : f32
    %15 = vector.broadcast %cst_6 : f32 to vector<2x128x1xf32>
    %16 = arith.addf %14, %15 : vector<2x128x1xf32>
    %17 = math.rsqrt %16 : vector<2x128x1xf32>
    %18 = vector.broadcast %17 : vector<2x128x1xf32> to vector<2x128x16xf32>
    %19 = arith.mulf %9, %18 : vector<2x128x16xf32>
    %c0_7 = arith.constant 0 : index
    %c0_8 = arith.constant 0 : index
    %20 = vector.load %arg2[%c0_7, %c0_8] : memref<1x16xf32, #tpu.memory_space<vmem>>, vector<1x16xf32>
    %21 = vector.shape_cast %20 : vector<1x16xf32> to vector<1x1x16xf32>
    %22 = vector.broadcast %21 : vector<1x1x16xf32> to vector<2x128x16xf32>
    %23 = arith.mulf %19, %22 : vector<2x128x16xf32>
    %c0_9 = arith.constant 0 : index
    %c0_10 = arith.constant 0 : index
    %24 = vector.load %arg3[%c0_9, %c0_10] : memref<1x16xf32, #tpu.memory_space<vmem>>, vector<1x16xf32>
    %25 = vector.shape_cast %24 : vector<1x16xf32> to vector<1x1x16xf32>
    %26 = vector.broadcast %25 : vector<1x1x16xf32> to vector<2x128x16xf32>
    %27 = arith.addf %23, %26 : vector<2x128x16xf32>
    %c0_11 = arith.constant 0 : index
    %c0_12 = arith.constant 0 : index
    %28 = vector.load %arg8[%c0_11, %c0_12] : memref<2x16xf32, #tpu.memory_space<vmem>>, vector<2x16xf32>
    %cst_13 = arith.constant dense<0.000000e+00> : vector<2x16xf32>
    %29 = vector.multi_reduction <add>, %27, %cst_13 [1] : vector<2x128x16xf32> to vector<2x16xf32>
    %30 = arith.addf %28, %29 : vector<2x16xf32>
    %c0_14 = arith.constant 0 : index
    %c0_15 = arith.constant 0 : index
    %31 = vector.load %arg8[%c0_14, %c0_15] : memref<2x16xf32, #tpu.memory_space<vmem>>, vector<2x16xf32>
    tpu.vector_store %arg8[%c0_14, %c0_15], %30 {strides = array<i32>} : memref<2x16xf32, #tpu.memory_space<vmem>>, vector<2x16xf32>,
    %c0_i32_16 = arith.constant 0 : i32
    %32 = arith.cmpi eq, %arg0, %c0_i32_16 : i32
    %33 = arith.extui %32 : i1 to i32
    %c0_i32_17 = arith.constant 0 : i32
    %34 = arith.cmpi ne, %33, %c0_i32_17 : i32
    scf.if %34 {
      %c0_18 = arith.constant 0 : index
      %c0_19 = arith.constant 0 : index
      %35 = vector.load %arg8[%c0_18, %c0_19] : memref<2x16xf32, #tpu.memory_space<vmem>>, vector<2x16xf32>
      %cst_20 = arith.constant 7.812500e-03 : f32
      %36 = vector.broadcast %cst_20 : f32 to vector<2x16xf32>
      %37 = arith.mulf %35, %36 : vector<2x16xf32>
      %c0_21 = arith.constant 0 : index
      %c0_22 = arith.constant 0 : index
      %38 = vector.load %arg6[%c0_21, %c0_22] : memref<2x16xf32, #tpu.memory_space<vmem>>, vector<2x16xf32>
      tpu.vector_store %arg6[%c0_21, %c0_22], %37 {strides = array<i32>} : memref<2x16xf32, #tpu.memory_space<vmem>>, vector<2x16xf32>,
      %39 = arith.truncf %37 : vector<2x16xf32> to vector<2x16xbf16>
      %c0_23 = arith.constant 0 : index
      %c0_24 = arith.constant 0 : index
      %40 = vector.load %arg4[%c0_23, %c0_24] : memref<16x5xbf16, #tpu.memory_space<vmem>>, vector<16x5xbf16>
      %cst_25 = arith.constant dense<0.000000e+00> : vector<2x5xf32>
      %41 = tpu.matmul %39, %40, %cst_25 {dimension_numbers = #tpu.dot_dimension_numbers<[1], [0], [0], [1], [0, 0, 1, 1], [], []>} : vector<2x16xbf16>, vector<16x5xbf16>, vector<2x5xf32> -> vector<2x5xf32>
      %c0_26 = arith.constant 0 : index
      %c0_27 = arith.constant 0 : index
      %42 = vector.load %arg5[%c0_26, %c0_27] : memref<1x5xf32, #tpu.memory_space<vmem>>, vector<1x5xf32>
      %43 = vector.broadcast %42 : vector<1x5xf32> to vector<2x5xf32>
      %44 = arith.addf %41, %43 : vector<2x5xf32>
      %c0_28 = arith.constant 0 : index
      %c0_29 = arith.constant 0 : index
      %45 = vector.load %arg7[%c0_28, %c0_29] : memref<2x5xf32, #tpu.memory_space<vmem>>, vector<2x5xf32>
      tpu.vector_store %arg7[%c0_28, %c0_29], %44 {strides = array<i32>} : memref<2x5xf32, #tpu.memory_space<vmem>>, vector<2x5xf32>,
    } else {
    }
    return
  }
  func.func @transform_0(%arg0: i32) -> (i32, i32, i32) {
    %c0_i32 = arith.constant 0 : i32
    %c0_i32_0 = arith.constant 0 : i32
    %c0_i32_1 = arith.constant 0 : i32
    return %c0_i32, %arg0, %c0_i32_0 : i32, i32, i32
  }
  func.func @transform_1(%arg0: i32) -> (i32, i32) {
    %c0_i32 = arith.constant 0 : i32
    %c0_i32_0 = arith.constant 0 : i32
    %c0_i32_1 = arith.constant 0 : i32
    return %c0_i32, %c0_i32_0 : i32, i32
  }
  func.func @transform_2(%arg0: i32) -> (i32, i32) {
    %c0_i32 = arith.constant 0 : i32
    %c0_i32_0 = arith.constant 0 : i32
    %c0_i32_1 = arith.constant 0 : i32
    return %c0_i32, %c0_i32_0 : i32, i32
  }
  func.func @transform_3(%arg0: i32) -> (i32, i32) {
    %c0_i32 = arith.constant 0 : i32
    %c0_i32_0 = arith.constant 0 : i32
    %c0_i32_1 = arith.constant 0 : i32
    return %c0_i32, %c0_i32_0 : i32, i32
  }
  func.func @transform_4(%arg0: i32) -> (i32, i32) {
    %c0_i32 = arith.constant 0 : i32
    %c0_i32_0 = arith.constant 0 : i32
    %c0_i32_1 = arith.constant 0 : i32
    return %c0_i32, %c0_i32_0 : i32, i32
  }
  func.func @transform_5(%arg0: i32) -> (i32, i32) {
    %c0_i32 = arith.constant 0 : i32
    %c0_i32_0 = arith.constant 0 : i32
    %c0_i32_1 = arith.constant 0 : i32
    return %c0_i32, %c0_i32_0 : i32, i32
  }
  func.func @transform_6(%arg0: i32) -> (i32, i32) {
    %c0_i32 = arith.constant 0 : i32
    %c0_i32_0 = arith.constant 0 : i32
    %c0_i32_1 = arith.constant 0 : i32
    return %c0_i32, %c0_i32_0 : i32, i32
  }
}

</mosaic_0001>

<llo_original>
// kernel: tile.8
$region0: #{tile.8}
  #allocation0 [shape = 's32[1]{0}', space=sflag, size = 0x4, scoped, tag = 'scoped memory for tile.8']
  %s0 = inlined_call_operand.vmem [shape: f32[16], index: 0, kind: input, shape index: {}]
  %s1 = inlined_call_operand.vmem [shape: f32[4,16], index: 1, kind: output, shape index: {}]
  // Predicated region
  $region2: #{tile.8} parent=0 // pred_check
    _
  $region3: #{tile.8} parent=0 // pred_check_branch
    %3 = sbr.rel (0) target = $region5
  $region4: #{tile.8} parent=0 // pred_region
    _
  $region5: #{tile.8} parent=0 // pred_fallthru
    _
  %v4 = vld [vmem:[%s0] ss:$0 sm:$0xff]
  %5 = vst [vmem:[%s1] sm:$0xf] %v4

// kernel: tile.9
$region0: #{tile.9}
  %s0 = inlined_call_operand.vmem [shape: f32[4,16], index: 0, kind: input, shape index: {}]
  %s1 = inlined_call_operand.vmem [shape: f32[1,64], index: 1, kind: output, shape index: {}]
  $region1: #{tile.9} parent=0
    #allocation0 [shape = 'u8[4096]{0}', space=vmem, size = 0x1000, scoped, tag = 'scoped mem for output reshape']
    #allocation1 [shape = 'u8[4096]{0}', space=vmem, size = 0x1000, scoped, tag = 'scoped mem for input reshape']
    %s3 = sshllo.u32 0, 4
    %v4 = vld [vmem:[%s0] sm:%s3]
    %5 = vst [vmem:[#allocation1] sm:%s3] %v4
    %v6 = vld [vmem:[#allocation1] sm:$0x1]
    %vm7 = vcmask 130048
    %8 = vst.msk [vmem:[#allocation0] sm:$0x1] %vm7, %v6
    %s9 = scalar_lea.vmem [#allocation1], 3
    %v10 = vld [vmem:[%s9] sm:$0x1]
    %11 = vrot.lane.b32.xlu0 %v10, 48
    %v12 = vpop.permute.xlu0 %11
    %vm13 = vcmask 523648
    %14 = vst.msk [vmem:[#allocation0] sm:$0x1] %vm13, %v12
    %s15 = scalar_lea.vmem [#allocation1], 2
    %v16 = vld [vmem:[%s15] sm:$0x1]
    %17 = vrot.lane.b32.xlu0 %v16, 32
    %v18 = vpop.permute.xlu0 %17
    %vm19 = vcmask 392448
    %20 = vst.msk [vmem:[#allocation0] sm:$0x1] %vm19, %v18
    %s21 = scalar_lea.vmem [#allocation1], 1
    %v22 = vld [vmem:[%s21] sm:$0x1]
    %23 = vrot.lane.b32.xlu0 %v22, 16
    %v24 = vpop.permute.xlu0 %23
    %vm25 = vcmask 261248
    %26 = vst.msk [vmem:[#allocation0] sm:$0x1] %vm25, %v24
    %s28 = sshllo.u32 0, 1
    %v30 = vld [vmem:[#allocation0] sm:%s28]
    %s31 = sshllo.u32 0, 1
    %32 = vst [vmem:[%s1] sm:%s31] %v30

// kernel: ssmlp_forward.22
$region0: #{ssmlp_forward.22}
  #allocation0 [shape = 'u32[]', space=smem, size = 0x4, offset = 0x4, fixed_abs, tag = 'smem constant byte address 0x4 - core index']
  #allocation1 [shape = 'u32[144,128]{1,0:T(1,128)}', space=vmem, size = 0x12000, scoped, tag = 'internal scratch']
  %s0 = inlined_call_operand.vmem [shape: f32[16,6,48], index: 0, kind: input, shape index: {}]
  %s1 = inlined_call_operand.vmem [shape: bf16[3,48,64], index: 1, kind: input, shape index: {}]
  %s2 = inlined_call_operand.vmem [shape: f32[1,64], index: 2, kind: input, shape index: {}]
  %s3 = inlined_call_operand.vmem [shape: f32[16,4,64], index: 3, kind: output, shape index: {}]
  %s4 = sld [smem:[#allocation0]]
  $region45: #{ssmlp_forward.22} parent=0
    _
  %s6 = ssub.s32 1, %s4
  %s7 = scalar_select 0, %s6, %s4
  loop: start=0, step=1, limit=18
  $region2: #{ssmlp_forward.22} parent=0 // loop_pre_header
    _
  $region3: #{ssmlp_forward.22} parent=0 // loop_header
    %s9 = sphi 0, %s13
    %p10 = scmp.ge.s32.totalorder %s9, 18
    %s19 = sphi 0, %s21
    %s22 = sphi 0, %s19
    %s23 = sphi 0, %s22
    %s39 = sphi 0, %s23
    %s43 = sphi 0, %s43
    %s45 = sphi 0, %s43
    %s46 = sphi 0, %s45
    %s60 = sphi 0, %s46
    %s64 = sphi 0, %s64
    %s66 = sphi 0, %s64
    %s67 = sphi 0, %s66
    %s81 = sphi 0, %s67
    %s87 = sphi 0, %s89
    %s90 = sphi 0, %s87
    %s91 = sphi 0, %s90
    %s107 = sphi 0, %s91
  $region4: #{ssmlp_forward.22} parent=0 // loop_header_branch
    %12 = sbr.rel (%p10) target = $region8
  $region5: #{ssmlp_forward.22} parent=0 // loop_body
    %s14 = ssub.s32 %s9, 1
    %s15 = ssub.s32 %s9, 2
    %s16 = sadd.s32 %s9, 1
    %s17 = ssub.s32 %s9, %s16
    %p18 = scmp.eq.s32.totalorder %s17, 0
    %s20 = sadd.s32 %s19, 1
    %s21 = scalar_select %p18, %s19, %s20
    %p24 = pneg %p18
    %p25 = scmp.eq.s32.totalorder %s9, 15
    %p26 = por %p24, %p25
    %p27 = scmp.ne.s32.totalorder %s19, %s22
    %p28 = scmp.eq.s32.totalorder %s9, 0
    %p29 = por %p27, %p28
    %p30 = scmp.ne.s32.totalorder %s19, %s22
    %p31 = scmp.eq.s32.totalorder %s14, 15
    %p32 = por %p30, %p31
    %p33 = scmp.ne.s32.totalorder %s22, %s23
    %p34 = scmp.eq.s32.totalorder %s14, 0
    %p35 = por %p33, %p34
    %p36 = scmp.ne.s32.totalorder %s22, %s23
    %p37 = scmp.eq.s32.totalorder %s15, 15
    %p38 = por %p36, %p37
    %p40 = scmp.ne.s32.totalorder %s23, %s39
    %p41 = scmp.eq.s32.totalorder %s15, 0
    %p42 = por %p40, %p41
    %s44 = sadd.s32 %s43, 1
    %p47 = scmp.eq.s32.totalorder %s9, 15
    %p48 = scmp.ne.s32.totalorder %s43, %s45
    %p49 = scmp.eq.s32.totalorder %s9, 0
    %p50 = por %p48, %p49
    %p51 = scmp.ne.s32.totalorder %s43, %s45
    %p52 = scmp.eq.s32.totalorder %s14, 15
    %p53 = por %p51, %p52
    %p54 = scmp.ne.s32.totalorder %s45, %s46
    %p55 = scmp.eq.s32.totalorder %s14, 0
    %p56 = por %p54, %p55
    %p57 = scmp.ne.s32.totalorder %s45, %s46
    %p58 = scmp.eq.s32.totalorder %s15, 15
    %p59 = por %p57, %p58
    %p61 = scmp.ne.s32.totalorder %s46, %s60
    %p62 = scmp.eq.s32.totalorder %s15, 0
    %p63 = por %p61, %p62
    %s65 = sadd.s32 %s64, 1
    %p68 = scmp.eq.s32.totalorder %s9, 15
    %p69 = scmp.ne.s32.totalorder %s64, %s66
    %p70 = scmp.eq.s32.totalorder %s9, 0
    %p71 = por %p69, %p70
    %p72 = scmp.ne.s32.totalorder %s64, %s66
    %p73 = scmp.eq.s32.totalorder %s14, 15
    %p74 = por %p72, %p73
    %p75 = scmp.ne.s32.totalorder %s66, %s67
    %p76 = scmp.eq.s32.totalorder %s14, 0
    %p77 = por %p75, %p76
    %p78 = scmp.ne.s32.totalorder %s66, %s67
    %p79 = scmp.eq.s32.totalorder %s15, 15
    %p80 = por %p78, %p79
    %p82 = scmp.ne.s32.totalorder %s67, %s81
    %p83 = scmp.eq.s32.totalorder %s15, 0
    %p84 = por %p82, %p83
    %s85 = ssub.s32 %s9, %s16
    %p86 = scmp.eq.s32.totalorder %s85, 0
    %s88 = sadd.s32 %s87, 1
    %s89 = scalar_select %p86, %s87, %s88
    %p92 = pneg %p86
    %p93 = scmp.eq.s32.totalorder %s9, 15
    %p94 = por %p92, %p93
    %p95 = scmp.ne.s32.totalorder %s87, %s90
    %p96 = scmp.eq.s32.totalorder %s9, 0
    %p97 = por %p95, %p96
    %p98 = scmp.ne.s32.totalorder %s87, %s90
    %p99 = scmp.eq.s32.totalorder %s14, 15
    %p100 = por %p98, %p99
    %p101 = scmp.ne.s32.totalorder %s90, %s91
    %p102 = scmp.eq.s32.totalorder %s14, 0
    %p103 = por %p101, %p102
    %p104 = scmp.ne.s32.totalorder %s90, %s91
    %p105 = scmp.eq.s32.totalorder %s15, 15
    %p106 = por %p104, %p105
    %p108 = scmp.ne.s32.totalorder %s91, %s107
    %p109 = scmp.eq.s32.totalorder %s15, 0
    %p110 = por %p108, %p109
    %p111 = scmp.le.s32.totalorder 1, %s9
    %p112 = scmp.lt.s32.totalorder %s9, 17
    %p113 = pnand %p111, %p112
    %p114 = pneg %p113
    // Predicated region
    $region9: #{ssmlp_forward.22} parent=5 // pred_check
      _
    $region10: #{ssmlp_forward.22} parent=5 // pred_check_branch
      %116 = sbr.rel (%p113) target = $region12
    $region11: #{ssmlp_forward.22} parent=5 // pred_region
      %s117 = ssub.s32 %s9, 1
      // Predicated region
      $region13: #{ssmlp_forward.22} parent=11 // pred_check
        %p118 = pneg %p56
      $region14: #{ssmlp_forward.22} parent=11 // pred_check_branch
        %120 = sbr.rel (%p118) target = $region16
      $region15: #{ssmlp_forward.22} parent=11 // pred_region
        _
      $region16: #{ssmlp_forward.22} parent=11 // pred_fallthru
        _
      // Predicated region
      $region17: #{ssmlp_forward.22} parent=11 // pred_check
        %p121 = pneg %p77
      $region18: #{ssmlp_forward.22} parent=11 // pred_check_branch
        %123 = sbr.rel (%p121) target = $region20
      $region19: #{ssmlp_forward.22} parent=11 // pred_region
        _
      $region20: #{ssmlp_forward.22} parent=11 // pred_fallthru
        _
    $region12: #{ssmlp_forward.22} parent=5 // pred_fallthru
      _
    %p124 = scmp.lt.s32.totalorder %s9, 16
    // Predicated region
    $region21: #{ssmlp_forward.22} parent=5 // pred_check
      %p125 = pneg %p124
    $region22: #{ssmlp_forward.22} parent=5 // pred_check_branch
      %127 = sbr.rel (%p125) target = $region24
    $region23: #{ssmlp_forward.22} parent=5 // pred_region
      // Predicated region
      $region25: #{ssmlp_forward.22} parent=23 // pred_check
        %p128 = pneg %p29
      $region26: #{ssmlp_forward.22} parent=23 // pred_check_branch
        %130 = sbr.rel (%p128) target = $region28
      $region27: #{ssmlp_forward.22} parent=23 // pred_region
        %p131 = scmp.lt.s32.totalorder %s9, 15
        %s132 = scalar_select %p131, %s9, 15
        %s133 = smul.addr %s132, 8
        %s134 = scalar_lea.vmem %s0, %s133
      $region28: #{ssmlp_forward.22} parent=23 // pred_fallthru
        _
    $region24: #{ssmlp_forward.22} parent=5 // pred_fallthru
      _
    %p135 = scmp.le.s32.totalorder 1, %s9
    %p136 = scmp.lt.s32.totalorder %s9, 17
    %p137 = pnand %p135, %p136
    %p138 = pneg %p137
    // Predicated region
    $region29: #{ssmlp_forward.22} parent=5 // pred_check
      _
    $region30: #{ssmlp_forward.22} parent=5 // pred_check_branch
      %140 = sbr.rel (%p137) target = $region32
    $region31: #{ssmlp_forward.22} parent=5 // pred_region
      %s141 = ssub.s32 %s9, 1
      %p142 = scmp.lt.s32.totalorder %s14, 15
      %s143 = scalar_select %p142, %s14, 15
      %s144 = smul.addr %s143, 8
      %s145 = scalar_lea.vmem %s0, %s144
      %p146 = pneg %p35
      %p147 = pneg %p32
      %p148 = pneg %p56
      %p149 = pneg %p53
      %p150 = pneg %p77
      %p151 = pneg %p74
      %p152 = pneg %p103
      %p153 = pneg %p100
      %p154 = scmp.lt.s32.totalorder %s14, 15
      %s155 = scalar_select %p154, %s14, 15
      %s156 = smul.addr %s155, 4
      %s157 = scalar_lea.vmem %s3, %s156
      %p158 = scmp.lt.s32.totalorder %s14, 15
      %s159 = scalar_select %p158, %s14, 15
      %s160 = smul.addr %s159, 8
      %s161 = scalar_lea.vmem %s0, %s160
      %p162 = scmp.lt.s32.totalorder %s14, 15
      %s163 = scalar_select %p162, %s14, 15
      %s164 = smul.addr %s163, 4
      %s165 = scalar_lea.vmem %s3, %s164
      %v167 = vld [vmem:[%s161] sm:$0xf]
      %v168 = vpack.c.bf16 %v167, %v167
      %v169 = vld [vmem:[%s1] sm:$0xf]
      %v170 = vld [vmem:[%s1 + $0x4] sm:$0xf]
      %v171 = vld [vmem:[%s1 + $0x8] sm:$0xf]
      %v172 = vld [vmem:[%s1 + $0xc] sm:$0xf]
      %v173 = vld [vmem:[%s1 + $0x10] sm:$0xf]
      %v174 = vld [vmem:[%s1 + $0x14] sm:$0xf]
      %v175 = vld [vmem:[%s161 + $0x1] sm:$0xf]
      %v176 = vpack.c.bf16 %v175, %v175
      %s177 = scalar_lea.vmem %s1, 24
      %v178 = vld [vmem:[%s177] sm:$0xf]
      %v179 = vld [vmem:[%s177 + $0x4] sm:$0xf]
      %v180 = vld [vmem:[%s177 + $0x8] sm:$0xf]
      %v181 = vld [vmem:[%s177 + $0xc] sm:$0xf]
      %v182 = vld [vmem:[%s177 + $0x10] sm:$0xf]
      %v183 = vld [vmem:[%s177 + $0x14] sm:$0xf]
      %v190 = vunpack.c.l.b16 %v178
      %v191 = vunpack.c.l.b16 %v179
      %v192 = vunpack.c.l.b16 %v180
      %v193 = vunpack.c.l.b16 %v181
      %v194 = vunpack.c.l.b16 %v182
      %v195 = vunpack.c.l.b16 %v183
      %v196 = vpack.c.b16 %v191, %v190
      %v197 = vpack.c.b16 %v193, %v192
      %v198 = vpack.c.b16 %v195, %v194
      %vm202 = vcmask 392192
      %v204 = vsel %vm202, %v176, 0
      %206 = vmatprep.subr.bf16.mxu0 0
      %207 = vmatpush1.bf16.msra.mxu0 %v196
      %208 = vmatprep.subr.bf16.mxu0 0
      %209 = vmatpush1.bf16.msra.mxu0 %v197
      %210 = vmatprep.subr.bf16.mxu0 0
      %211 = vmatpush1.bf16.msra.mxu0 %v198
      %212 = vmatprep.subr.bf16.mxu0 0
      %213 = vmatpush1.bf16.msra.mxu0 0
      %214 = vmatprep.subr.bf16.mxu0 0
      %215 = vmatpush1.bf16.msra.mxu0 0
      %216 = vmatprep.subr.bf16.mxu0 0
      %217 = vmatpush1.bf16.msra.mxu0 0
      %218 = vmatprep.subr.bf16.mxu0 0
      %219 = vmatpush1.bf16.msra.mxu0 0
      %220 = vmatprep.subr.bf16.mxu0 0
      %221 = vmatpush1.bf16.msra.mxu0 0
      %222 = vmatprep.subr.bf16.mxu0 0
      %223 = vmatpush1.bf16.msra.mxu0 0
      %224 = vmatprep.subr.bf16.mxu0 0
      %225 = vmatpush1.bf16.msra.mxu0 0
      %226 = vmatprep.subr.bf16.mxu0 0
      %227 = vmatpush1.bf16.msra.mxu0 0
      %228 = vmatprep.subr.bf16.mxu0 0
      %229 = vmatpush1.bf16.msra.mxu0 0
      %230 = vmatprep.subr.bf16.mxu0 0
      %231 = vmatpush1.bf16.msra.mxu0 0
      %232 = vmatprep.subr.bf16.mxu0 0
      %233 = vmatpush1.bf16.msra.mxu0 0
      %234 = vmatprep.subr.bf16.mxu0 0
      %235 = vmatpush1.bf16.msra.mxu0 0
      %236 = vmatprep.subr.bf16.mxu0 0
      %237 = vmatpush1.bf16.msra.mxu0 0
      %238 = vmatprep.mubr.bf16.mxu0 0
      %239 = vmatmul.mubr.bf16.gmra.mrb[0].mxu0 %v204
      %v240 = vpop.f32.mrb[0].mxu0
      %v241 = vadd.f32 0.0, %v240
      %v242 = vpop.f32.mrb[0].mxu0
      %v243 = vpop.f32.mrb[0].mxu0
      %v244 = vpop.f32.mrb[0].mxu0
      %245 = vdwg.mxu0
      %v252 = vunpack.c.l.b16 %v169
      %v253 = vunpack.c.l.b16 %v170
      %v254 = vunpack.c.l.b16 %v171
      %v255 = vunpack.c.l.b16 %v172
      %v256 = vunpack.c.l.b16 %v173
      %v257 = vunpack.c.l.b16 %v174
      %v258 = vpack.c.b16 %v253, %v252
      %v259 = vpack.c.b16 %v255, %v254
      %v260 = vpack.c.b16 %v257, %v256
      %v265 = vsel %vm202, %v168, 0
      %267 = vmatprep.subr.bf16.mxu0 0
      %268 = vmatpush1.bf16.msra.mxu0 %v258
      %269 = vmatprep.subr.bf16.mxu0 0
      %270 = vmatpush1.bf16.msra.mxu0 %v259
      %271 = vmatprep.subr.bf16.mxu0 0
      %272 = vmatpush1.bf16.msra.mxu0 %v260
      %273 = vmatprep.subr.bf16.mxu0 0
      %274 = vmatpush1.bf16.msra.mxu0 0
      %275 = vmatprep.subr.bf16.mxu0 0
      %276 = vmatpush1.bf16.msra.mxu0 0
      %277 = vmatprep.subr.bf16.mxu0 0
      %278 = vmatpush1.bf16.msra.mxu0 0
      %279 = vmatprep.subr.bf16.mxu0 0
      %280 = vmatpush1.bf16.msra.mxu0 0
      %281 = vmatprep.subr.bf16.mxu0 0
      %282 = vmatpush1.bf16.msra.mxu0 0
      %283 = vmatprep.subr.bf16.mxu0 0
      %284 = vmatpush1.bf16.msra.mxu0 0
      %285 = vmatprep.subr.bf16.mxu0 0
      %286 = vmatpush1.bf16.msra.mxu0 0
      %287 = vmatprep.subr.bf16.mxu0 0
      %288 = vmatpush1.bf16.msra.mxu0 0
      %289 = vmatprep.subr.bf16.mxu0 0
      %290 = vmatpush1.bf16.msra.mxu0 0
      %291 = vmatprep.subr.bf16.mxu0 0
      %292 = vmatpush1.bf16.msra.mxu0 0
      %293 = vmatprep.subr.bf16.mxu0 0
      %294 = vmatpush1.bf16.msra.mxu0 0
      %295 = vmatprep.subr.bf16.mxu0 0
      %296 = vmatpush1.bf16.msra.mxu0 0
      %297 = vmatprep.subr.bf16.mxu0 0
      %298 = vmatpush1.bf16.msra.mxu0 0
      %299 = vmatprep.mubr.bf16.mxu0 0
      %300 = vmatmul.mubr.bf16.gmra.mrb[0].mxu0 %v265
      %v301 = vpop.f32.mrb[0].mxu0
      %v302 = vadd.f32 %v241, %v301
      %v303 = vpop.f32.mrb[0].mxu0
      %v304 = vpop.f32.mrb[0].mxu0
      %v305 = vpop.f32.mrb[0].mxu0
      %306 = vdwg.mxu0
      %v307 = vld [vmem:[%s161 + $0x2] sm:$0xf]
      %v308 = vpack.c.bf16 %v307, %v307
      %s309 = scalar_lea.vmem %s1, 48
      %v310 = vld [vmem:[%s309] sm:$0xf]
      %v311 = vld [vmem:[%s309 + $0x4] sm:$0xf]
      %v312 = vld [vmem:[%s309 + $0x8] sm:$0xf]
      %v313 = vld [vmem:[%s309 + $0xc] sm:$0xf]
      %v314 = vld [vmem:[%s309 + $0x10] sm:$0xf]
      %v315 = vld [vmem:[%s309 + $0x14] sm:$0xf]
      %v322 = vunpack.c.l.b16 %v310
      %v323 = vunpack.c.l.b16 %v311
      %v324 = vunpack.c.l.b16 %v312
      %v325 = vunpack.c.l.b16 %v313
      %v326 = vunpack.c.l.b16 %v314
      %v327 = vunpack.c.l.b16 %v315
      %v328 = vpack.c.b16 %v323, %v322
      %v329 = vpack.c.b16 %v325, %v324
      %v330 = vpack.c.b16 %v327, %v326
      %v335 = vsel %vm202, %v308, 0
      %337 = vmatprep.subr.bf16.mxu0 0
      %338 = vmatpush1.bf16.msra.mxu0 %v328
      %339 = vmatprep.subr.bf16.mxu0 0
      %340 = vmatpush1.bf16.msra.mxu0 %v329
      %341 = vmatprep.subr.bf16.mxu0 0
      %342 = vmatpush1.bf16.msra.mxu0 %v330
      %343 = vmatprep.subr.bf16.mxu0 0
      %344 = vmatpush1.bf16.msra.mxu0 0
      %345 = vmatprep.subr.bf16.mxu0 0
      %346 = vmatpush1.bf16.msra.mxu0 0
      %347 = vmatprep.subr.bf16.mxu0 0
      %348 = vmatpush1.bf16.msra.mxu0 0
      %349 = vmatprep.subr.bf16.mxu0 0
      %350 = vmatpush1.bf16.msra.mxu0 0
      %351 = vmatprep.subr.bf16.mxu0 0
      %352 = vmatpush1.bf16.msra.mxu0 0
      %353 = vmatprep.subr.bf16.mxu0 0
      %354 = vmatpush1.bf16.msra.mxu0 0
      %355 = vmatprep.subr.bf16.mxu0 0
      %356 = vmatpush1.bf16.msra.mxu0 0
      %357 = vmatprep.subr.bf16.mxu0 0
      %358 = vmatpush1.bf16.msra.mxu0 0
      %359 = vmatprep.subr.bf16.mxu0 0
      %360 = vmatpush1.bf16.msra.mxu0 0
      %361 = vmatprep.subr.bf16.mxu0 0
      %362 = vmatpush1.bf16.msra.mxu0 0
      %363 = vmatprep.subr.bf16.mxu0 0
      %364 = vmatpush1.bf16.msra.mxu0 0
      %365 = vmatprep.subr.bf16.mxu0 0
      %366 = vmatpush1.bf16.msra.mxu0 0
      %367 = vmatprep.subr.bf16.mxu0 0
      %368 = vmatpush1.bf16.msra.mxu0 0
      %369 = vmatprep.mubr.bf16.mxu0 0
      %370 = vmatmul.mubr.bf16.gmra.mrb[0].mxu0 %v335
      %v371 = vpop.f32.mrb[0].mxu0
      %v372 = vadd.f32 0.0, %v371
      %v373 = vpop.f32.mrb[0].mxu0
      %v374 = vpop.f32.mrb[0].mxu0
      %v375 = vpop.f32.mrb[0].mxu0
      %376 = vdwg.mxu0
      %v377 = vadd.f32 %v302, %v372
      %v378 = vld [vmem:[%s2] sm:$0x1]
      %v380 = vlaneseq
      %v381 = vshrl.u32 %v380, 7
      %v382 = vsub.s32 0, %v381
      %v383 = vrot.slane %v378, %v382
      %v385 = vadd.f32 %v377, %v383
      %vm386 = vcmask 519168
      %387 = vst.msk [vmem:[%s165] sm:$0xf] %vm386, %v385
      %p388 = scmp.lt.s32.totalorder %s14, 15
      %s389 = scalar_select %p388, %s14, 15
      %s390 = smul.addr %s389, 4
      %s391 = scalar_lea.vmem %s3, %s390
      // Predicated region
      $region33: #{ssmlp_forward.22} parent=31 // pred_check
        %p392 = pneg %p100
      $region34: #{ssmlp_forward.22} parent=31 // pred_check_branch
        %394 = sbr.rel (%p392) target = $region36
      $region35: #{ssmlp_forward.22} parent=31 // pred_region
        _
      $region36: #{ssmlp_forward.22} parent=31 // pred_fallthru
        _
    $region32: #{ssmlp_forward.22} parent=5 // pred_fallthru
      _
    %p395 = scmp.le.s32.totalorder 2, %s9
    // Predicated region
    $region37: #{ssmlp_forward.22} parent=5 // pred_check
      %p396 = pneg %p395
    $region38: #{ssmlp_forward.22} parent=5 // pred_check_branch
      %398 = sbr.rel (%p396) target = $region40
    $region39: #{ssmlp_forward.22} parent=5 // pred_region
      %s399 = ssub.s32 %s9, 2
      // Predicated region
      $region41: #{ssmlp_forward.22} parent=39 // pred_check
        %p400 = pneg %p106
      $region42: #{ssmlp_forward.22} parent=39 // pred_check_branch
        %402 = sbr.rel (%p400) target = $region44
      $region43: #{ssmlp_forward.22} parent=39 // pred_region
        %p403 = scmp.lt.s32.totalorder %s15, 15
        %s404 = scalar_select %p403, %s15, 15
        %s405 = smul.addr %s404, 4
        %s406 = scalar_lea.vmem %s3, %s405
      $region44: #{ssmlp_forward.22} parent=39 // pred_fallthru
        _
    $region40: #{ssmlp_forward.22} parent=5 // pred_fallthru
      _
  $region6: #{ssmlp_forward.22} parent=0 // loop_footer
    %s13 = sadd.s32 1, %s9
  $region7: #{ssmlp_forward.22} parent=0 // loop_footer_branch
    %8 = sbr.rel target = $region3
  $region8: #{ssmlp_forward.22} parent=0 // loop_exit
    _

// kernel: ssmlp_forward.23
$region0: #{ssmlp_forward.23}
  #allocation0 [shape = 'u32[]', space=smem, size = 0x4, offset = 0x4, fixed_abs, tag = 'smem constant byte address 0x4 - core index']
  #allocation1 [shape = 'u32[144,128]{1,0:T(1,128)}', space=vmem, size = 0x12000, scoped, tag = 'internal scratch']
  %s0 = inlined_call_operand.vmem [shape: f32[256,16], index: 0, kind: input, shape index: {}]
  %s1 = inlined_call_operand.vmem [shape: f32[1,16], index: 1, kind: input, shape index: {}]
  %s2 = inlined_call_operand.vmem [shape: f32[1,16], index: 2, kind: input, shape index: {}]
  %s3 = inlined_call_operand.vmem [shape: f32[256,16], index: 3, kind: output, shape index: {}]
  %s4 = sld [smem:[#allocation0]]
  $region22: #{ssmlp_forward.23} parent=0
    _
  %s6 = ssub.s32 1, %s4
  %s7 = scalar_select 0, %s6, %s4
  // Predicated region
  $region2: #{ssmlp_forward.23} parent=0 // pred_check
    _
  $region3: #{ssmlp_forward.23} parent=0 // pred_check_branch
    %9 = sbr.rel (0) target = $region5
  $region4: #{ssmlp_forward.23} parent=0 // pred_region
    _
  $region5: #{ssmlp_forward.23} parent=0 // pred_fallthru
    _
  // Predicated region
  $region6: #{ssmlp_forward.23} parent=0 // pred_check
    _
  $region7: #{ssmlp_forward.23} parent=0 // pred_check_branch
    %11 = sbr.rel (0) target = $region9
  $region8: #{ssmlp_forward.23} parent=0 // pred_region
    _
  $region9: #{ssmlp_forward.23} parent=0 // pred_fallthru
    _
  // Predicated region
  $region10: #{ssmlp_forward.23} parent=0 // pred_check
    _
  $region11: #{ssmlp_forward.23} parent=0 // pred_check_branch
    %13 = sbr.rel (0) target = $region13
  $region12: #{ssmlp_forward.23} parent=0 // pred_region
    _
  $region13: #{ssmlp_forward.23} parent=0 // pred_fallthru
    _
  %v14 = vld [vmem:[%s0] sm:$0xff]
  %v15 = vld [vmem:[%s0 + $0x8] sm:$0xff]
  %v16 = vld [vmem:[%s0 + $0x10] sm:$0xff]
  %v17 = vld [vmem:[%s0 + $0x18] sm:$0xff]
  %v18 = vld [vmem:[%s0 + $0x20] sm:$0xff]
  %v19 = vld [vmem:[%s0 + $0x28] sm:$0xff]
  %v20 = vld [vmem:[%s0 + $0x30] sm:$0xff]
  %v21 = vld [vmem:[%s0 + $0x38] sm:$0xff]
  %v22 = vld [vmem:[%s0 + $0x40] sm:$0xff]
  %v23 = vld [vmem:[%s0 + $0x48] sm:$0xff]
  %v24 = vld [vmem:[%s0 + $0x50] sm:$0xff]
  %v25 = vld [vmem:[%s0 + $0x58] sm:$0xff]
  %v26 = vld [vmem:[%s0 + $0x60] sm:$0xff]
  %v27 = vld [vmem:[%s0 + $0x68] sm:$0xff]
  %v28 = vld [vmem:[%s0 + $0x70] sm:$0xff]
  %v29 = vld [vmem:[%s0 + $0x78] sm:$0xff]
  %v30 = vld [vmem:[%s0 + $0x80] sm:$0xff]
  %v31 = vld [vmem:[%s0 + $0x88] sm:$0xff]
  %v32 = vld [vmem:[%s0 + $0x90] sm:$0xff]
  %v33 = vld [vmem:[%s0 + $0x98] sm:$0xff]
  %v34 = vld [vmem:[%s0 + $0xa0] sm:$0xff]
  %v35 = vld [vmem:[%s0 + $0xa8] sm:$0xff]
  %v36 = vld [vmem:[%s0 + $0xb0] sm:$0xff]
  %v37 = vld [vmem:[%s0 + $0xb8] sm:$0xff]
  %v38 = vld [vmem:[%s0 + $0xc0] sm:$0xff]
  %v39 = vld [vmem:[%s0 + $0xc8] sm:$0xff]
  %v40 = vld [vmem:[%s0 + $0xd0] sm:$0xff]
  %v41 = vld [vmem:[%s0 + $0xd8] sm:$0xff]
  %v42 = vld [vmem:[%s0 + $0xe0] sm:$0xff]
  %v43 = vld [vmem:[%s0 + $0xe8] sm:$0xff]
  %v44 = vld [vmem:[%s0 + $0xf0] sm:$0xff]
  %v45 = vld [vmem:[%s0 + $0xf8] sm:$0xff]
  %vm46 = vcmask 130048
  %v47 = vsel %vm46, %v14, 0.0
  %48 = vadd.xlane.f32.xlu0 %v47
  %v49 = vpop.xlane.xlu0 %48
  %v50 = vsel %vm46, %v15, 0.0
  %51 = vadd.xlane.f32.xlu0 %v50
  %v52 = vpop.xlane.xlu0 %51
  %v53 = vsel %vm46, %v16, 0.0
  %54 = vadd.xlane.f32.xlu0 %v53
  %v55 = vpop.xlane.xlu0 %54
  %v56 = vsel %vm46, %v17, 0.0
  %57 = vadd.xlane.f32.xlu0 %v56
  %v58 = vpop.xlane.xlu0 %57
  %v59 = vsel %vm46, %v18, 0.0
  %60 = vadd.xlane.f32.xlu0 %v59
  %v61 = vpop.xlane.xlu0 %60
  %v62 = vsel %vm46, %v19, 0.0
  %63 = vadd.xlane.f32.xlu0 %v62
  %v64 = vpop.xlane.xlu0 %63
  %v65 = vsel %vm46, %v20, 0.0
  %66 = vadd.xlane.f32.xlu0 %v65
  %v67 = vpop.xlane.xlu0 %66
  %v68 = vsel %vm46, %v21, 0.0
  %69 = vadd.xlane.f32.xlu0 %v68
  %v70 = vpop.xlane.xlu0 %69
  %v71 = vsel %vm46, %v22, 0.0
  %72 = vadd.xlane.f32.xlu0 %v71
  %v73 = vpop.xlane.xlu0 %72
  %v74 = vsel %vm46, %v23, 0.0
  %75 = vadd.xlane.f32.xlu0 %v74
  %v76 = vpop.xlane.xlu0 %75
  %v77 = vsel %vm46, %v24, 0.0
  %78 = vadd.xlane.f32.xlu0 %v77
  %v79 = vpop.xlane.xlu0 %78
  %v80 = vsel %vm46, %v25, 0.0
  %81 = vadd.xlane.f32.xlu0 %v80
  %v82 = vpop.xlane.xlu0 %81
  %v83 = vsel %vm46, %v26, 0.0
  %84 = vadd.xlane.f32.xlu0 %v83
  %v85 = vpop.xlane.xlu0 %84
  %v86 = vsel %vm46, %v27, 0.0
  %87 = vadd.xlane.f32.xlu0 %v86
  %v88 = vpop.xlane.xlu0 %87
  %v89 = vsel %vm46, %v28, 0.0
  %90 = vadd.xlane.f32.xlu0 %v89
  %v91 = vpop.xlane.xlu0 %90
  %v92 = vsel %vm46, %v29, 0.0
  %93 = vadd.xlane.f32.xlu0 %v92
  %v94 = vpop.xlane.xlu0 %93
  %v95 = vsel %vm46, %v30, 0.0
  %96 = vadd.xlane.f32.xlu0 %v95
  %v97 = vpop.xlane.xlu0 %96
  %v98 = vsel %vm46, %v31, 0.0
  %99 = vadd.xlane.f32.xlu0 %v98
  %v100 = vpop.xlane.xlu0 %99
  %v101 = vsel %vm46, %v32, 0.0
  %102 = vadd.xlane.f32.xlu0 %v101
  %v103 = vpop.xlane.xlu0 %102
  %v104 = vsel %vm46, %v33, 0.0
  %105 = vadd.xlane.f32.xlu0 %v104
  %v106 = vpop.xlane.xlu0 %105
  %v107 = vsel %vm46, %v34, 0.0
  %108 = vadd.xlane.f32.xlu0 %v107
  %v109 = vpop.xlane.xlu0 %108
  %v110 = vsel %vm46, %v35, 0.0
  %111 = vadd.xlane.f32.xlu0 %v110
  %v112 = vpop.xlane.xlu0 %111
  %v113 = vsel %vm46, %v36, 0.0
  %114 = vadd.xlane.f32.xlu0 %v113
  %v115 = vpop.xlane.xlu0 %114
  %v116 = vsel %vm46, %v37, 0.0
  %117 = vadd.xlane.f32.xlu0 %v116
  %v118 = vpop.xlane.xlu0 %117
  %v119 = vsel %vm46, %v38, 0.0
  %120 = vadd.xlane.f32.xlu0 %v119
  %v121 = vpop.xlane.xlu0 %120
  %v122 = vsel %vm46, %v39, 0.0
  %123 = vadd.xlane.f32.xlu0 %v122
  %v124 = vpop.xlane.xlu0 %123
  %v125 = vsel %vm46, %v40, 0.0
  %126 = vadd.xlane.f32.xlu0 %v125
  %v127 = vpop.xlane.xlu0 %126
  %v128 = vsel %vm46, %v41, 0.0
  %129 = vadd.xlane.f32.xlu0 %v128
  %v130 = vpop.xlane.xlu0 %129
  %v131 = vsel %vm46, %v42, 0.0
  %132 = vadd.xlane.f32.xlu0 %v131
  %v133 = vpop.xlane.xlu0 %132
  %v134 = vsel %vm46, %v43, 0.0
  %135 = vadd.xlane.f32.xlu0 %v134
  %v136 = vpop.xlane.xlu0 %135
  %v137 = vsel %vm46, %v44, 0.0
  %138 = vadd.xlane.f32.xlu0 %v137
  %v139 = vpop.xlane.xlu0 %138
  %v140 = vsel %vm46, %v45, 0.0
  %141 = vadd.xlane.f32.xlu0 %v140
  %v142 = vpop.xlane.xlu0 %141
  %v143 = vrcp.pop 16.0
  %v144 = vmul.f32 %v49, %v143
  %v145 = vmul.f32 %v52, %v143
  %v146 = vmul.f32 %v55, %v143
  %v147 = vmul.f32 %v58, %v143
  %v148 = vmul.f32 %v61, %v143
  %v149 = vmul.f32 %v64, %v143
  %v150 = vmul.f32 %v67, %v143
  %v151 = vmul.f32 %v70, %v143
  %v152 = vmul.f32 %v73, %v143
  %v153 = vmul.f32 %v76, %v143
  %v154 = vmul.f32 %v79, %v143
  %v155 = vmul.f32 %v82, %v143
  %v156 = vmul.f32 %v85, %v143
  %v157 = vmul.f32 %v88, %v143
  %v158 = vmul.f32 %v91, %v143
  %v159 = vmul.f32 %v94, %v143
  %v160 = vmul.f32 %v97, %v143
  %v161 = vmul.f32 %v100, %v143
  %v162 = vmul.f32 %v103, %v143
  %v163 = vmul.f32 %v106, %v143
  %v164 = vmul.f32 %v109, %v143
  %v165 = vmul.f32 %v112, %v143
  %v166 = vmul.f32 %v115, %v143
  %v167 = vmul.f32 %v118, %v143
  %v168 = vmul.f32 %v121, %v143
  %v169 = vmul.f32 %v124, %v143
  %v170 = vmul.f32 %v127, %v143
  %v171 = vmul.f32 %v130, %v143
  %v172 = vmul.f32 %v133, %v143
  %v173 = vmul.f32 %v136, %v143
  %v174 = vmul.f32 %v139, %v143
  %v175 = vmul.f32 %v142, %v143
  %v176 = vsub.f32 %v14, %v144
  %v177 = vsub.f32 %v15, %v145
  %v178 = vsub.f32 %v16, %v146
  %v179 = vsub.f32 %v17, %v147
  %v180 = vsub.f32 %v18, %v148
  %v181 = vsub.f32 %v19, %v149
  %v182 = vsub.f32 %v20, %v150
  %v183 = vsub.f32 %v21, %v151
  %v184 = vsub.f32 %v22, %v152
  %v185 = vsub.f32 %v23, %v153
  %v186 = vsub.f32 %v24, %v154
  %v187 = vsub.f32 %v25, %v155
  %v188 = vsub.f32 %v26, %v156
  %v189 = vsub.f32 %v27, %v157
  %v190 = vsub.f32 %v28, %v158
  %v191 = vsub.f32 %v29, %v159
  %v192 = vsub.f32 %v30, %v160
  %v193 = vsub.f32 %v31, %v161
  %v194 = vsub.f32 %v32, %v162
  %v195 = vsub.f32 %v33, %v163
  %v196 = vsub.f32 %v34, %v164
  %v197 = vsub.f32 %v35, %v165
  %v198 = vsub.f32 %v36, %v166
  %v199 = vsub.f32 %v37, %v167
  %v200 = vsub.f32 %v38, %v168
  %v201 = vsub.f32 %v39, %v169
  %v202 = vsub.f32 %v40, %v170
  %v203 = vsub.f32 %v41, %v171
  %v204 = vsub.f32 %v42, %v172
  %v205 = vsub.f32 %v43, %v173
  %v206 = vsub.f32 %v44, %v174
  %v207 = vsub.f32 %v45, %v175
  %v208 = vmul.f32 %v176, %v176
  %v209 = vmul.f32 %v177, %v177
  %v210 = vmul.f32 %v178, %v178
  %v211 = vmul.f32 %v179, %v179
  %v212 = vmul.f32 %v180, %v180
  %v213 = vmul.f32 %v181, %v181
  %v214 = vmul.f32 %v182, %v182
  %v215 = vmul.f32 %v183, %v183
  %v216 = vmul.f32 %v184, %v184
  %v217 = vmul.f32 %v185, %v185
  %v218 = vmul.f32 %v186, %v186
  %v219 = vmul.f32 %v187, %v187
  %v220 = vmul.f32 %v188, %v188
  %v221 = vmul.f32 %v189, %v189
  %v222 = vmul.f32 %v190, %v190
  %v223 = vmul.f32 %v191, %v191
  %v224 = vmul.f32 %v192, %v192
  %v225 = vmul.f32 %v193, %v193
  %v226 = vmul.f32 %v194, %v194
  %v227 = vmul.f32 %v195, %v195
  %v228 = vmul.f32 %v196, %v196
  %v229 = vmul.f32 %v197, %v197
  %v230 = vmul.f32 %v198, %v198
  %v231 = vmul.f32 %v199, %v199
  %v232 = vmul.f32 %v200, %v200
  %v233 = vmul.f32 %v201, %v201
  %v234 = vmul.f32 %v202, %v202
  %v235 = vmul.f32 %v203, %v203
  %v236 = vmul.f32 %v204, %v204
  %v237 = vmul.f32 %v205, %v205
  %v238 = vmul.f32 %v206, %v206
  %v239 = vmul.f32 %v207, %v207
  %v240 = vsel %vm46, %v208, 0.0
  %241 = vadd.xlane.f32.xlu0 %v240
  %v242 = vpop.xlane.xlu0 %241
  %v243 = vsel %vm46, %v209, 0.0
  %244 = vadd.xlane.f32.xlu0 %v243
  %v245 = vpop.xlane.xlu0 %244
  %v246 = vsel %vm46, %v210, 0.0
  %247 = vadd.xlane.f32.xlu0 %v246
  %v248 = vpop.xlane.xlu0 %247
  %v249 = vsel %vm46, %v211, 0.0
  %250 = vadd.xlane.f32.xlu0 %v249
  %v251 = vpop.xlane.xlu0 %250
  %v252 = vsel %vm46, %v212, 0.0
  %253 = vadd.xlane.f32.xlu0 %v252
  %v254 = vpop.xlane.xlu0 %253
  %v255 = vsel %vm46, %v213, 0.0
  %256 = vadd.xlane.f32.xlu0 %v255
  %v257 = vpop.xlane.xlu0 %256
  %v258 = vsel %vm46, %v214, 0.0
  %259 = vadd.xlane.f32.xlu0 %v258
  %v260 = vpop.xlane.xlu0 %259
  %v261 = vsel %vm46, %v215, 0.0
  %262 = vadd.xlane.f32.xlu0 %v261
  %v263 = vpop.xlane.xlu0 %262
  %v264 = vsel %vm46, %v216, 0.0
  %265 = vadd.xlane.f32.xlu0 %v264
  %v266 = vpop.xlane.xlu0 %265
  %v267 = vsel %vm46, %v217, 0.0
  %268 = vadd.xlane.f32.xlu0 %v267
  %v269 = vpop.xlane.xlu0 %268
  %v270 = vsel %vm46, %v218, 0.0
  %271 = vadd.xlane.f32.xlu0 %v270
  %v272 = vpop.xlane.xlu0 %271
  %v273 = vsel %vm46, %v219, 0.0
  %274 = vadd.xlane.f32.xlu0 %v273
  %v275 = vpop.xlane.xlu0 %274
  %v276 = vsel %vm46, %v220, 0.0
  %277 = vadd.xlane.f32.xlu0 %v276
  %v278 = vpop.xlane.xlu0 %277
  %v279 = vsel %vm46, %v221, 0.0
  %280 = vadd.xlane.f32.xlu0 %v279
  %v281 = vpop.xlane.xlu0 %280
  %v282 = vsel %vm46, %v222, 0.0
  %283 = vadd.xlane.f32.xlu0 %v282
  %v284 = vpop.xlane.xlu0 %283
  %v285 = vsel %vm46, %v223, 0.0
  %286 = vadd.xlane.f32.xlu0 %v285
  %v287 = vpop.xlane.xlu0 %286
  %v288 = vsel %vm46, %v224, 0.0
  %289 = vadd.xlane.f32.xlu0 %v288
  %v290 = vpop.xlane.xlu0 %289
  %v291 = vsel %vm46, %v225, 0.0
  %292 = vadd.xlane.f32.xlu0 %v291
  %v293 = vpop.xlane.xlu0 %292
  %v294 = vsel %vm46, %v226, 0.0
  %295 = vadd.xlane.f32.xlu0 %v294
  %v296 = vpop.xlane.xlu0 %295
  %v297 = vsel %vm46, %v227, 0.0
  %298 = vadd.xlane.f32.xlu0 %v297
  %v299 = vpop.xlane.xlu0 %298
  %v300 = vsel %vm46, %v228, 0.0
  %301 = vadd.xlane.f32.xlu0 %v300
  %v302 = vpop.xlane.xlu0 %301
  %v303 = vsel %vm46, %v229, 0.0
  %304 = vadd.xlane.f32.xlu0 %v303
  %v305 = vpop.xlane.xlu0 %304
  %v306 = vsel %vm46, %v230, 0.0
  %307 = vadd.xlane.f32.xlu0 %v306
  %v308 = vpop.xlane.xlu0 %307
  %v309 = vsel %vm46, %v231, 0.0
  %310 = vadd.xlane.f32.xlu0 %v309
  %v311 = vpop.xlane.xlu0 %310
  %v312 = vsel %vm46, %v232, 0.0
  %313 = vadd.xlane.f32.xlu0 %v312
  %v314 = vpop.xlane.xlu0 %313
  %v315 = vsel %vm46, %v233, 0.0
  %316 = vadd.xlane.f32.xlu0 %v315
  %v317 = vpop.xlane.xlu0 %316
  %v318 = vsel %vm46, %v234, 0.0
  %319 = vadd.xlane.f32.xlu0 %v318
  %v320 = vpop.xlane.xlu0 %319
  %v321 = vsel %vm46, %v235, 0.0
  %322 = vadd.xlane.f32.xlu0 %v321
  %v323 = vpop.xlane.xlu0 %322
  %v324 = vsel %vm46, %v236, 0.0
  %325 = vadd.xlane.f32.xlu0 %v324
  %v326 = vpop.xlane.xlu0 %325
  %v327 = vsel %vm46, %v237, 0.0
  %328 = vadd.xlane.f32.xlu0 %v327
  %v329 = vpop.xlane.xlu0 %328
  %v330 = vsel %vm46, %v238, 0.0
  %331 = vadd.xlane.f32.xlu0 %v330
  %v332 = vpop.xlane.xlu0 %331
  %v333 = vsel %vm46, %v239, 0.0
  %334 = vadd.xlane.f32.xlu0 %v333
  %v335 = vpop.xlane.xlu0 %334
  %v336 = vmul.f32 %v242, %v143
  %v337 = vmul.f32 %v245, %v143
  %v338 = vmul.f32 %v248, %v143
  %v339 = vmul.f32 %v251, %v143
  %v340 = vmul.f32 %v254, %v143
  %v341 = vmul.f32 %v257, %v143
  %v342 = vmul.f32 %v260, %v143
  %v343 = vmul.f32 %v263, %v143
  %v344 = vmul.f32 %v266, %v143
  %v345 = vmul.f32 %v269, %v143
  %v346 = vmul.f32 %v272, %v143
  %v347 = vmul.f32 %v275, %v143
  %v348 = vmul.f32 %v278, %v143
  %v349 = vmul.f32 %v281, %v143
  %v350 = vmul.f32 %v284, %v143
  %v351 = vmul.f32 %v287, %v143
  %v352 = vmul.f32 %v290, %v143
  %v353 = vmul.f32 %v293, %v143
  %v354 = vmul.f32 %v296, %v143
  %v355 = vmul.f32 %v299, %v143
  %v356 = vmul.f32 %v302, %v143
  %v357 = vmul.f32 %v305, %v143
  %v358 = vmul.f32 %v308, %v143
  %v359 = vmul.f32 %v311, %v143
  %v360 = vmul.f32 %v314, %v143
  %v361 = vmul.f32 %v317, %v143
  %v362 = vmul.f32 %v320, %v143
  %v363 = vmul.f32 %v323, %v143
  %v364 = vmul.f32 %v326, %v143
  %v365 = vmul.f32 %v329, %v143
  %v366 = vmul.f32 %v332, %v143
  %v367 = vmul.f32 %v335, %v143
  %v368 = vadd.f32 %v336, 1e-05
  %v369 = vadd.f32 %v337, 1e-05
  %v370 = vadd.f32 %v338, 1e-05
  %v371 = vadd.f32 %v339, 1e-05
  %v372 = vadd.f32 %v340, 1e-05
  %v373 = vadd.f32 %v341, 1e-05
  %v374 = vadd.f32 %v342, 1e-05
  %v375 = vadd.f32 %v343, 1e-05
  %v376 = vadd.f32 %v344, 1e-05
  %v377 = vadd.f32 %v345, 1e-05
  %v378 = vadd.f32 %v346, 1e-05
  %v379 = vadd.f32 %v347, 1e-05
  %v380 = vadd.f32 %v348, 1e-05
  %v381 = vadd.f32 %v349, 1e-05
  %v382 = vadd.f32 %v350, 1e-05
  %v383 = vadd.f32 %v351, 1e-05
  %v384 = vadd.f32 %v352, 1e-05
  %v385 = vadd.f32 %v353, 1e-05
  %v386 = vadd.f32 %v354, 1e-05
  %v387 = vadd.f32 %v355, 1e-05
  %v388 = vadd.f32 %v356, 1e-05
  %v389 = vadd.f32 %v357, 1e-05
  %v390 = vadd.f32 %v358, 1e-05
  %v391 = vadd.f32 %v359, 1e-05
  %v392 = vadd.f32 %v360, 1e-05
  %v393 = vadd.f32 %v361, 1e-05
  %v394 = vadd.f32 %v362, 1e-05
  %v395 = vadd.f32 %v363, 1e-05
  %v396 = vadd.f32 %v364, 1e-05
  %v397 = vadd.f32 %v365, 1e-05
  %v398 = vadd.f32 %v366, 1e-05
  %v399 = vadd.f32 %v367, 1e-05
  %v400 = vrsqrt.pop %v368
  %v401 = vrsqrt.pop %v369
  %v402 = vrsqrt.pop %v370
  %v403 = vrsqrt.pop %v371
  %v404 = vrsqrt.pop %v372
  %v405 = vrsqrt.pop %v373
  %v406 = vrsqrt.pop %v374
  %v407 = vrsqrt.pop %v375
  %v408 = vrsqrt.pop %v376
  %v409 = vrsqrt.pop %v377
  %v410 = vrsqrt.pop %v378
  %v411 = vrsqrt.pop %v379
  %v412 = vrsqrt.pop %v380
  %v413 = vrsqrt.pop %v381
  %v414 = vrsqrt.pop %v382
  %v415 = vrsqrt.pop %v383
  %v416 = vrsqrt.pop %v384
  %v417 = vrsqrt.pop %v385
  %v418 = vrsqrt.pop %v386
  %v419 = vrsqrt.pop %v387
  %v420 = vrsqrt.pop %v388
  %v421 = vrsqrt.pop %v389
  %v422 = vrsqrt.pop %v390
  %v423 = vrsqrt.pop %v391
  %v424 = vrsqrt.pop %v392
  %v425 = vrsqrt.pop %v393
  %v426 = vrsqrt.pop %v394
  %v427 = vrsqrt.pop %v395
  %v428 = vrsqrt.pop %v396
  %v429 = vrsqrt.pop %v397
  %v430 = vrsqrt.pop %v398
  %v431 = vrsqrt.pop %v399
  %v432 = vmul.f32 %v176, %v400
  %v433 = vmul.f32 %v177, %v401
  %v434 = vmul.f32 %v178, %v402
  %v435 = vmul.f32 %v179, %v403
  %v436 = vmul.f32 %v180, %v404
  %v437 = vmul.f32 %v181, %v405
  %v438 = vmul.f32 %v182, %v406
  %v439 = vmul.f32 %v183, %v407
  %v440 = vmul.f32 %v184, %v408
  %v441 = vmul.f32 %v185, %v409
  %v442 = vmul.f32 %v186, %v410
  %v443 = vmul.f32 %v187, %v411
  %v444 = vmul.f32 %v188, %v412
  %v445 = vmul.f32 %v189, %v413
  %v446 = vmul.f32 %v190, %v414
  %v447 = vmul.f32 %v191, %v415
  %v448 = vmul.f32 %v192, %v416
  %v449 = vmul.f32 %v193, %v417
  %v450 = vmul.f32 %v194, %v418
  %v451 = vmul.f32 %v195, %v419
  %v452 = vmul.f32 %v196, %v420
  %v453 = vmul.f32 %v197, %v421
  %v454 = vmul.f32 %v198, %v422
  %v455 = vmul.f32 %v199, %v423
  %v456 = vmul.f32 %v200, %v424
  %v457 = vmul.f32 %v201, %v425
  %v458 = vmul.f32 %v202, %v426
  %v459 = vmul.f32 %v203, %v427
  %v460 = vmul.f32 %v204, %v428
  %v461 = vmul.f32 %v205, %v429
  %v462 = vmul.f32 %v206, %v430
  %v463 = vmul.f32 %v207, %v431
  %v464 = vld [vmem:[%s1] sm:$0x1]
  %v466 = vlaneseq
  %v467 = vshrl.u32 %v466, 7
  %v468 = vsub.s32 0, %v467
  %v469 = vrot.slane %v464, %v468
  %v471 = vmul.f32 %v432, %v469
  %v472 = vmul.f32 %v433, %v469
  %v473 = vmul.f32 %v434, %v469
  %v474 = vmul.f32 %v435, %v469
  %v475 = vmul.f32 %v436, %v469
  %v476 = vmul.f32 %v437, %v469
  %v477 = vmul.f32 %v438, %v469
  %v478 = vmul.f32 %v439, %v469
  %v479 = vmul.f32 %v440, %v469
  %v480 = vmul.f32 %v441, %v469
  %v481 = vmul.f32 %v442, %v469
  %v482 = vmul.f32 %v443, %v469
  %v483 = vmul.f32 %v444, %v469
  %v484 = vmul.f32 %v445, %v469
  %v485 = vmul.f32 %v446, %v469
  %v486 = vmul.f32 %v447, %v469
  %v487 = vmul.f32 %v448, %v469
  %v488 = vmul.f32 %v449, %v469
  %v489 = vmul.f32 %v450, %v469
  %v490 = vmul.f32 %v451, %v469
  %v491 = vmul.f32 %v452, %v469
  %v492 = vmul.f32 %v453, %v469
  %v493 = vmul.f32 %v454, %v469
  %v494 = vmul.f32 %v455, %v469
  %v495 = vmul.f32 %v456, %v469
  %v496 = vmul.f32 %v457, %v469
  %v497 = vmul.f32 %v458, %v469
  %v498 = vmul.f32 %v459, %v469
  %v499 = vmul.f32 %v460, %v469
  %v500 = vmul.f32 %v461, %v469
  %v501 = vmul.f32 %v462, %v469
  %v502 = vmul.f32 %v463, %v469
  %v503 = vld [vmem:[%s2] sm:$0x1]
  %v505 = vlaneseq
  %v506 = vshrl.u32 %v505, 7
  %v507 = vsub.s32 0, %v506
  %v508 = vrot.slane %v503, %v507
  %v510 = vadd.f32 %v471, %v508
  %v511 = vadd.f32 %v472, %v508
  %v512 = vadd.f32 %v473, %v508
  %v513 = vadd.f32 %v474, %v508
  %v514 = vadd.f32 %v475, %v508
  %v515 = vadd.f32 %v476, %v508
  %v516 = vadd.f32 %v477, %v508
  %v517 = vadd.f32 %v478, %v508
  %v518 = vadd.f32 %v479, %v508
  %v519 = vadd.f32 %v480, %v508
  %v520 = vadd.f32 %v481, %v508
  %v521 = vadd.f32 %v482, %v508
  %v522 = vadd.f32 %v483, %v508
  %v523 = vadd.f32 %v484, %v508
  %v524 = vadd.f32 %v485, %v508
  %v525 = vadd.f32 %v486, %v508
  %v526 = vadd.f32 %v487, %v508
  %v527 = vadd.f32 %v488, %v508
  %v528 = vadd.f32 %v489, %v508
  %v529 = vadd.f32 %v490, %v508
  %v530 = vadd.f32 %v491, %v508
  %v531 = vadd.f32 %v492, %v508
  %v532 = vadd.f32 %v493, %v508
  %v533 = vadd.f32 %v494, %v508
  %v534 = vadd.f32 %v495, %v508
  %v535 = vadd.f32 %v496, %v508
  %v536 = vadd.f32 %v497, %v508
  %v537 = vadd.f32 %v498, %v508
  %v538 = vadd.f32 %v499, %v508
  %v539 = vadd.f32 %v500, %v508
  %v540 = vadd.f32 %v501, %v508
  %v541 = vadd.f32 %v502, %v508
  %542 = vst.msk [vmem:[%s3] sm:$0xff] %vm46, %v510
  %543 = vst.msk [vmem:[%s3 + $0x8] sm:$0xff] %vm46, %v511
  %544 = vst.msk [vmem:[%s3 + $0x10] sm:$0xff] %vm46, %v512
  %545 = vst.msk [vmem:[%s3 + $0x18] sm:$0xff] %vm46, %v513
  %546 = vst.msk [vmem:[%s3 + $0x20] sm:$0xff] %vm46, %v514
  %547 = vst.msk [vmem:[%s3 + $0x28] sm:$0xff] %vm46, %v515
  %548 = vst.msk [vmem:[%s3 + $0x30] sm:$0xff] %vm46, %v516
  %549 = vst.msk [vmem:[%s3 + $0x38] sm:$0xff] %vm46, %v517
  %550 = vst.msk [vmem:[%s3 + $0x40] sm:$0xff] %vm46, %v518
  %551 = vst.msk [vmem:[%s3 + $0x48] sm:$0xff] %vm46, %v519
  %552 = vst.msk [vmem:[%s3 + $0x50] sm:$0xff] %vm46, %v520
  %553 = vst.msk [vmem:[%s3 + $0x58] sm:$0xff] %vm46, %v521
  %554 = vst.msk [vmem:[%s3 + $0x60] sm:$0xff] %vm46, %v522
  %555 = vst.msk [vmem:[%s3 + $0x68] sm:$0xff] %vm46, %v523
  %556 = vst.msk [vmem:[%s3 + $0x70] sm:$0xff] %vm46, %v524
  %557 = vst.msk [vmem:[%s3 + $0x78] sm:$0xff] %vm46, %v525
  %558 = vst.msk [vmem:[%s3 + $0x80] sm:$0xff] %vm46, %v526
  %559 = vst.msk [vmem:[%s3 + $0x88] sm:$0xff] %vm46, %v527
  %560 = vst.msk [vmem:[%s3 + $0x90] sm:$0xff] %vm46, %v528
  %561 = vst.msk [vmem:[%s3 + $0x98] sm:$0xff] %vm46, %v529
  %562 = vst.msk [vmem:[%s3 + $0xa0] sm:$0xff] %vm46, %v530
  %563 = vst.msk [vmem:[%s3 + $0xa8] sm:$0xff] %vm46, %v531
  %564 = vst.msk [vmem:[%s3 + $0xb0] sm:$0xff] %vm46, %v532
  %565 = vst.msk [vmem:[%s3 + $0xb8] sm:$0xff] %vm46, %v533
  %566 = vst.msk [vmem:[%s3 + $0xc0] sm:$0xff] %vm46, %v534
  %567 = vst.msk [vmem:[%s3 + $0xc8] sm:$0xff] %vm46, %v535
  %568 = vst.msk [vmem:[%s3 + $0xd0] sm:$0xff] %vm46, %v536
  %569 = vst.msk [vmem:[%s3 + $0xd8] sm:$0xff] %vm46, %v537
  %570 = vst.msk [vmem:[%s3 + $0xe0] sm:$0xff] %vm46, %v538
  %571 = vst.msk [vmem:[%s3 + $0xe8] sm:$0xff] %vm46, %v539
  %572 = vst.msk [vmem:[%s3 + $0xf0] sm:$0xff] %vm46, %v540
  %573 = vst.msk [vmem:[%s3 + $0xf8] sm:$0xff] %vm46, %v541
  // Predicated region
  $region14: #{ssmlp_forward.23} parent=0 // pred_check
    _
  $region15: #{ssmlp_forward.23} parent=0 // pred_check_branch
    %575 = sbr.rel (0) target = $region17
  $region16: #{ssmlp_forward.23} parent=0 // pred_region
    _
  $region17: #{ssmlp_forward.23} parent=0 // pred_fallthru
    _
  // Predicated region
  $region18: #{ssmlp_forward.23} parent=0 // pred_check
    _
  $region19: #{ssmlp_forward.23} parent=0 // pred_check_branch
    %577 = sbr.rel (0) target = $region21
  $region20: #{ssmlp_forward.23} parent=0 // pred_region
    _
  $region21: #{ssmlp_forward.23} parent=0 // pred_fallthru
    _

// kernel: ssmlp_forward.21
$region0: #{ssmlp_forward.21}
  #allocation0 [shape = 'u32[]', space=smem, size = 0x4, offset = 0x4, fixed_abs, tag = 'smem constant byte address 0x4 - core index']
  #allocation1 [shape = 'u32[144,128]{1,0:T(1,128)}', space=vmem, size = 0x12000, scoped, tag = 'internal scratch']
  %s0 = inlined_call_operand.vmem [shape: f32[256,3], index: 0, kind: input, shape index: {}]
  %s1 = inlined_call_operand.vmem [shape: bf16[3,8], index: 1, kind: input, shape index: {}]
  %s2 = inlined_call_operand.vmem [shape: f32[1,8], index: 2, kind: input, shape index: {}]
  %s3 = inlined_call_operand.vmem [shape: f32[256,8], index: 3, kind: output, shape index: {}]
  %s4 = sld [smem:[#allocation0]]
  $region22: #{ssmlp_forward.21} parent=0
    _
  %s6 = ssub.s32 1, %s4
  %s7 = scalar_select 0, %s6, %s4
  // Predicated region
  $region2: #{ssmlp_forward.21} parent=0 // pred_check
    _
  $region3: #{ssmlp_forward.21} parent=0 // pred_check_branch
    %9 = sbr.rel (0) target = $region5
  $region4: #{ssmlp_forward.21} parent=0 // pred_region
    _
  $region5: #{ssmlp_forward.21} parent=0 // pred_fallthru
    _
  // Predicated region
  $region6: #{ssmlp_forward.21} parent=0 // pred_check
    _
  $region7: #{ssmlp_forward.21} parent=0 // pred_check_branch
    %11 = sbr.rel (0) target = $region9
  $region8: #{ssmlp_forward.21} parent=0 // pred_region
    _
  $region9: #{ssmlp_forward.21} parent=0 // pred_fallthru
    _
  // Predicated region
  $region10: #{ssmlp_forward.21} parent=0 // pred_check
    _
  $region11: #{ssmlp_forward.21} parent=0 // pred_check_branch
    %13 = sbr.rel (0) target = $region13
  $region12: #{ssmlp_forward.21} parent=0 // pred_region
    _
  $region13: #{ssmlp_forward.21} parent=0 // pred_fallthru
    _
  %v15 = vld [vmem:[%s0] sm:$0xff]
  %v16 = vld [vmem:[%s0 + $0x8] sm:$0xff]
  %v17 = vld [vmem:[%s0 + $0x10] sm:$0xff]
  %v18 = vld [vmem:[%s0 + $0x18] sm:$0xff]
  %v19 = vld [vmem:[%s0 + $0x20] sm:$0xff]
  %v20 = vld [vmem:[%s0 + $0x28] sm:$0xff]
  %v21 = vld [vmem:[%s0 + $0x30] sm:$0xff]
  %v22 = vld [vmem:[%s0 + $0x38] sm:$0xff]
  %v23 = vld [vmem:[%s0 + $0x40] sm:$0xff]
  %v24 = vld [vmem:[%s0 + $0x48] sm:$0xff]
  %v25 = vld [vmem:[%s0 + $0x50] sm:$0xff]
  %v26 = vld [vmem:[%s0 + $0x58] sm:$0xff]
  %v27 = vld [vmem:[%s0 + $0x60] sm:$0xff]
  %v28 = vld [vmem:[%s0 + $0x68] sm:$0xff]
  %v29 = vld [vmem:[%s0 + $0x70] sm:$0xff]
  %v30 = vld [vmem:[%s0 + $0x78] sm:$0xff]
  %v31 = vld [vmem:[%s0 + $0x80] sm:$0xff]
  %v32 = vld [vmem:[%s0 + $0x88] sm:$0xff]
  %v33 = vld [vmem:[%s0 + $0x90] sm:$0xff]
  %v34 = vld [vmem:[%s0 + $0x98] sm:$0xff]
  %v35 = vld [vmem:[%s0 + $0xa0] sm:$0xff]
  %v36 = vld [vmem:[%s0 + $0xa8] sm:$0xff]
  %v37 = vld [vmem:[%s0 + $0xb0] sm:$0xff]
  %v38 = vld [vmem:[%s0 + $0xb8] sm:$0xff]
  %v39 = vld [vmem:[%s0 + $0xc0] sm:$0xff]
  %v40 = vld [vmem:[%s0 + $0xc8] sm:$0xff]
  %v41 = vld [vmem:[%s0 + $0xd0] sm:$0xff]
  %v42 = vld [vmem:[%s0 + $0xd8] sm:$0xff]
  %v43 = vld [vmem:[%s0 + $0xe0] sm:$0xff]
  %v44 = vld [vmem:[%s0 + $0xe8] sm:$0xff]
  %v45 = vld [vmem:[%s0 + $0xf0] sm:$0xff]
  %v46 = vld [vmem:[%s0 + $0xf8] sm:$0xff]
  %v47 = vpack.c.bf16 %v16, %v15
  %v48 = vpack.c.bf16 %v18, %v17
  %v49 = vpack.c.bf16 %v20, %v19
  %v50 = vpack.c.bf16 %v22, %v21
  %v51 = vpack.c.bf16 %v24, %v23
  %v52 = vpack.c.bf16 %v26, %v25
  %v53 = vpack.c.bf16 %v28, %v27
  %v54 = vpack.c.bf16 %v30, %v29
  %v55 = vpack.c.bf16 %v32, %v31
  %v56 = vpack.c.bf16 %v34, %v33
  %v57 = vpack.c.bf16 %v36, %v35
  %v58 = vpack.c.bf16 %v38, %v37
  %v59 = vpack.c.bf16 %v40, %v39
  %v60 = vpack.c.bf16 %v42, %v41
  %v61 = vpack.c.bf16 %v44, %v43
  %v62 = vpack.c.bf16 %v46, %v45
  %v63 = vld [vmem:[%s1] sm:$0x3]
  %v64 = vld [vmem:[%s2] sm:$0x1]
  %v66 = vlaneseq
  %v67 = vshrl.u32 %v66, 7
  %v68 = vsub.s32 0, %v67
  %v69 = vrot.slane %v64, %v68
  %vm71 = vcmask 23552
  %v73 = vsel %vm71, %v47, 0
  %v76 = vsel %vm71, %v48, 0
  %v79 = vsel %vm71, %v49, 0
  %v82 = vsel %vm71, %v50, 0
  %v85 = vsel %vm71, %v51, 0
  %v88 = vsel %vm71, %v52, 0
  %v91 = vsel %vm71, %v53, 0
  %v94 = vsel %vm71, %v54, 0
  %v97 = vsel %vm71, %v55, 0
  %v100 = vsel %vm71, %v56, 0
  %v103 = vsel %vm71, %v57, 0
  %v106 = vsel %vm71, %v58, 0
  %v109 = vsel %vm71, %v59, 0
  %v112 = vsel %vm71, %v60, 0
  %v115 = vsel %vm71, %v61, 0
  %v118 = vsel %vm71, %v62, 0
  %vm120 = vcmask 1040384
  %vm121 = vcmask 1041408
  %v122 = vsel %vm120, 4294967295, 65535
  %v123 = vsel %vm121, %v122, 0
  %v125 = vand.u32 %v63, %v123
  %127 = vmatprep.subr.bf16.mxu0 0
  %128 = vmatpush1.bf16.msra.mxu0 %v125
  %129 = vmatprep.subr.bf16.mxu0 0
  %130 = vmatpush1.bf16.msra.mxu0 0
  %131 = vmatprep.subr.bf16.mxu0 0
  %132 = vmatpush1.bf16.msra.mxu0 0
  %133 = vmatprep.subr.bf16.mxu0 0
  %134 = vmatpush1.bf16.msra.mxu0 0
  %135 = vmatprep.subr.bf16.mxu0 0
  %136 = vmatpush1.bf16.msra.mxu0 0
  %137 = vmatprep.subr.bf16.mxu0 0
  %138 = vmatpush1.bf16.msra.mxu0 0
  %139 = vmatprep.subr.bf16.mxu0 0
  %140 = vmatpush1.bf16.msra.mxu0 0
  %141 = vmatprep.subr.bf16.mxu0 0
  %142 = vmatpush1.bf16.msra.mxu0 0
  %143 = vmatprep.subr.bf16.mxu0 0
  %144 = vmatpush1.bf16.msra.mxu0 0
  %145 = vmatprep.subr.bf16.mxu0 0
  %146 = vmatpush1.bf16.msra.mxu0 0
  %147 = vmatprep.subr.bf16.mxu0 0
  %148 = vmatpush1.bf16.msra.mxu0 0
  %149 = vmatprep.subr.bf16.mxu0 0
  %150 = vmatpush1.bf16.msra.mxu0 0
  %151 = vmatprep.subr.bf16.mxu0 0
  %152 = vmatpush1.bf16.msra.mxu0 0
  %153 = vmatprep.subr.bf16.mxu0 0
  %154 = vmatpush1.bf16.msra.mxu0 0
  %155 = vmatprep.subr.bf16.mxu0 0
  %156 = vmatpush1.bf16.msra.mxu0 0
  %157 = vmatprep.subr.bf16.mxu0 0
  %158 = vmatpush1.bf16.msra.mxu0 0
  %159 = vmatprep.mubr.bf16.mxu0 0
  %160 = vmatmul.mubr.bf16.gmra.mrb[0].mxu0 %v73
  %v161 = vpop.f32.mrb[0].mxu0
  %v162 = vadd.f32 %v69, %v161
  %v163 = vpop.f32.mrb[0].mxu0
  %v164 = vpop.f32.mrb[0].mxu0
  %v165 = vadd.f32 %v69, %v164
  %v166 = vpop.f32.mrb[0].mxu0
  %167 = vmatprep.mubr.bf16.mxu0 0
  %168 = vmatmul.mubr.bf16.gmra.mrb[0].mxu0 %v76
  %v169 = vpop.f32.mrb[0].mxu0
  %v170 = vadd.f32 %v69, %v169
  %v171 = vpop.f32.mrb[0].mxu0
  %v172 = vpop.f32.mrb[0].mxu0
  %v173 = vadd.f32 %v69, %v172
  %v174 = vpop.f32.mrb[0].mxu0
  %175 = vmatprep.mubr.bf16.mxu0 0
  %176 = vmatmul.mubr.bf16.gmra.mrb[0].mxu0 %v79
  %v177 = vpop.f32.mrb[0].mxu0
  %v178 = vadd.f32 %v69, %v177
  %v179 = vpop.f32.mrb[0].mxu0
  %v180 = vpop.f32.mrb[0].mxu0
  %v181 = vadd.f32 %v69, %v180
  %v182 = vpop.f32.mrb[0].mxu0
  %183 = vmatprep.mubr.bf16.mxu0 0
  %184 = vmatmul.mubr.bf16.gmra.mrb[0].mxu0 %v82
  %v185 = vpop.f32.mrb[0].mxu0
  %v186 = vadd.f32 %v69, %v185
  %v187 = vpop.f32.mrb[0].mxu0
  %v188 = vpop.f32.mrb[0].mxu0
  %v189 = vadd.f32 %v69, %v188
  %v190 = vpop.f32.mrb[0].mxu0
  %191 = vmatprep.mubr.bf16.mxu0 0
  %192 = vmatmul.mubr.bf16.gmra.mrb[0].mxu0 %v85
  %v193 = vpop.f32.mrb[0].mxu0
  %v194 = vadd.f32 %v69, %v193
  %v195 = vpop.f32.mrb[0].mxu0
  %v196 = vpop.f32.mrb[0].mxu0
  %v197 = vadd.f32 %v69, %v196
  %v198 = vpop.f32.mrb[0].mxu0
  %199 = vmatprep.mubr.bf16.mxu0 0
  %200 = vmatmul.mubr.bf16.gmra.mrb[0].mxu0 %v88
  %v201 = vpop.f32.mrb[0].mxu0
  %v202 = vadd.f32 %v69, %v201
  %v203 = vpop.f32.mrb[0].mxu0
  %v204 = vpop.f32.mrb[0].mxu0
  %v205 = vadd.f32 %v69, %v204
  %v206 = vpop.f32.mrb[0].mxu0
  %207 = vmatprep.mubr.bf16.mxu0 0
  %208 = vmatmul.mubr.bf16.gmra.mrb[0].mxu0 %v91
  %v209 = vpop.f32.mrb[0].mxu0
  %v210 = vadd.f32 %v69, %v209
  %v211 = vpop.f32.mrb[0].mxu0
  %v212 = vpop.f32.mrb[0].mxu0
  %v213 = vadd.f32 %v69, %v212
  %v214 = vpop.f32.mrb[0].mxu0
  %215 = vmatprep.mubr.bf16.mxu0 0
  %216 = vmatmul.mubr.bf16.gmra.mrb[0].mxu0 %v94
  %v217 = vpop.f32.mrb[0].mxu0
  %v218 = vadd.f32 %v69, %v217
  %v219 = vpop.f32.mrb[0].mxu0
  %v220 = vpop.f32.mrb[0].mxu0
  %v221 = vadd.f32 %v69, %v220
  %v222 = vpop.f32.mrb[0].mxu0
  %223 = vmatprep.mubr.bf16.mxu0 0
  %224 = vmatmul.mubr.bf16.gmra.mrb[0].mxu0 %v97
  %v225 = vpop.f32.mrb[0].mxu0
  %v226 = vadd.f32 %v69, %v225
  %v227 = vpop.f32.mrb[0].mxu0
  %v228 = vpop.f32.mrb[0].mxu0
  %v229 = vadd.f32 %v69, %v228
  %v230 = vpop.f32.mrb[0].mxu0
  %231 = vmatprep.mubr.bf16.mxu0 0
  %232 = vmatmul.mubr.bf16.gmra.mrb[0].mxu0 %v100
  %v233 = vpop.f32.mrb[0].mxu0
  %v234 = vadd.f32 %v69, %v233
  %v235 = vpop.f32.mrb[0].mxu0
  %v236 = vpop.f32.mrb[0].mxu0
  %v237 = vadd.f32 %v69, %v236
  %v238 = vpop.f32.mrb[0].mxu0
  %239 = vmatprep.mubr.bf16.mxu0 0
  %240 = vmatmul.mubr.bf16.gmra.mrb[0].mxu0 %v103
  %v241 = vpop.f32.mrb[0].mxu0
  %v242 = vadd.f32 %v69, %v241
  %v243 = vpop.f32.mrb[0].mxu0
  %v244 = vpop.f32.mrb[0].mxu0
  %v245 = vadd.f32 %v69, %v244
  %v246 = vpop.f32.mrb[0].mxu0
  %247 = vmatprep.mubr.bf16.mxu0 0
  %248 = vmatmul.mubr.bf16.gmra.mrb[0].mxu0 %v106
  %v249 = vpop.f32.mrb[0].mxu0
  %v250 = vadd.f32 %v69, %v249
  %v251 = vpop.f32.mrb[0].mxu0
  %v252 = vpop.f32.mrb[0].mxu0
  %v253 = vadd.f32 %v69, %v252
  %v254 = vpop.f32.mrb[0].mxu0
  %255 = vmatprep.mubr.bf16.mxu0 0
  %256 = vmatmul.mubr.bf16.gmra.mrb[0].mxu0 %v109
  %v257 = vpop.f32.mrb[0].mxu0
  %v258 = vadd.f32 %v69, %v257
  %v259 = vpop.f32.mrb[0].mxu0
  %v260 = vpop.f32.mrb[0].mxu0
  %v261 = vadd.f32 %v69, %v260
  %v262 = vpop.f32.mrb[0].mxu0
  %263 = vmatprep.mubr.bf16.mxu0 0
  %264 = vmatmul.mubr.bf16.gmra.mrb[0].mxu0 %v112
  %v265 = vpop.f32.mrb[0].mxu0
  %v266 = vadd.f32 %v69, %v265
  %v267 = vpop.f32.mrb[0].mxu0
  %v268 = vpop.f32.mrb[0].mxu0
  %v269 = vadd.f32 %v69, %v268
  %v270 = vpop.f32.mrb[0].mxu0
  %271 = vmatprep.mubr.bf16.mxu0 0
  %272 = vmatmul.mubr.bf16.gmra.mrb[0].mxu0 %v115
  %v273 = vpop.f32.mrb[0].mxu0
  %v274 = vadd.f32 %v69, %v273
  %v275 = vpop.f32.mrb[0].mxu0
  %v276 = vpop.f32.mrb[0].mxu0
  %v277 = vadd.f32 %v69, %v276
  %v278 = vpop.f32.mrb[0].mxu0
  %279 = vmatprep.mubr.bf16.mxu0 0
  %280 = vmatmul.mubr.bf16.gmra.mrb[0].mxu0 %v118
  %v281 = vpop.f32.mrb[0].mxu0
  %v282 = vadd.f32 %v69, %v281
  %v283 = vpop.f32.mrb[0].mxu0
  %v284 = vpop.f32.mrb[0].mxu0
  %v285 = vadd.f32 %v69, %v284
  %v286 = vpop.f32.mrb[0].mxu0
  %287 = vdwg.mxu0
  %v288 = vmul.f32 %v162, 0.5
  %v289 = vmul.f32 %v165, 0.5
  %v290 = vmul.f32 %v170, 0.5
  %v291 = vmul.f32 %v173, 0.5
  %v292 = vmul.f32 %v178, 0.5
  %v293 = vmul.f32 %v181, 0.5
  %v294 = vmul.f32 %v186, 0.5
  %v295 = vmul.f32 %v189, 0.5
  %v296 = vmul.f32 %v194, 0.5
  %v297 = vmul.f32 %v197, 0.5
  %v298 = vmul.f32 %v202, 0.5
  %v299 = vmul.f32 %v205, 0.5
  %v300 = vmul.f32 %v210, 0.5
  %v301 = vmul.f32 %v213, 0.5
  %v302 = vmul.f32 %v218, 0.5
  %v303 = vmul.f32 %v221, 0.5
  %v304 = vmul.f32 %v226, 0.5
  %v305 = vmul.f32 %v229, 0.5
  %v306 = vmul.f32 %v234, 0.5
  %v307 = vmul.f32 %v237, 0.5
  %v308 = vmul.f32 %v242, 0.5
  %v309 = vmul.f32 %v245, 0.5
  %v310 = vmul.f32 %v250, 0.5
  %v311 = vmul.f32 %v253, 0.5
  %v312 = vmul.f32 %v258, 0.5
  %v313 = vmul.f32 %v261, 0.5
  %v314 = vmul.f32 %v266, 0.5
  %v315 = vmul.f32 %v269, 0.5
  %v316 = vmul.f32 %v274, 0.5
  %v317 = vmul.f32 %v277, 0.5
  %v318 = vmul.f32 %v282, 0.5
  %v319 = vmul.f32 %v285, 0.5
  %v320 = vmul.f32 %v162, 0.70710677
  %v321 = vmul.f32 %v165, 0.70710677
  %v322 = vmul.f32 %v170, 0.70710677
  %v323 = vmul.f32 %v173, 0.70710677
  %v324 = vmul.f32 %v178, 0.70710677
  %v325 = vmul.f32 %v181, 0.70710677
  %v326 = vmul.f32 %v186, 0.70710677
  %v327 = vmul.f32 %v189, 0.70710677
  %v328 = vmul.f32 %v194, 0.70710677
  %v329 = vmul.f32 %v197, 0.70710677
  %v330 = vmul.f32 %v202, 0.70710677
  %v331 = vmul.f32 %v205, 0.70710677
  %v332 = vmul.f32 %v210, 0.70710677
  %v333 = vmul.f32 %v213, 0.70710677
  %v334 = vmul.f32 %v218, 0.70710677
  %v335 = vmul.f32 %v221, 0.70710677
  %v336 = vmul.f32 %v226, 0.70710677
  %v337 = vmul.f32 %v229, 0.70710677
  %v338 = vmul.f32 %v234, 0.70710677
  %v339 = vmul.f32 %v237, 0.70710677
  %v340 = vmul.f32 %v242, 0.70710677
  %v341 = vmul.f32 %v245, 0.70710677
  %v342 = vmul.f32 %v250, 0.70710677
  %v343 = vmul.f32 %v253, 0.70710677
  %v344 = vmul.f32 %v258, 0.70710677
  %v345 = vmul.f32 %v261, 0.70710677
  %v346 = vmul.f32 %v266, 0.70710677
  %v347 = vmul.f32 %v269, 0.70710677
  %v348 = vmul.f32 %v274, 0.70710677
  %v349 = vmul.f32 %v277, 0.70710677
  %v350 = vmul.f32 %v282, 0.70710677
  %v351 = vmul.f32 %v285, 0.70710677
  %v352 = vand.u32 2147483647, %v320
  %v353 = vand.u32 2147483647, %v321
  %v354 = vand.u32 2147483647, %v322
  %v355 = vand.u32 2147483647, %v323
  %v356 = vand.u32 2147483647, %v324
  %v357 = vand.u32 2147483647, %v325
  %v358 = vand.u32 2147483647, %v326
  %v359 = vand.u32 2147483647, %v327
  %v360 = vand.u32 2147483647, %v328
  %v361 = vand.u32 2147483647, %v329
  %v362 = vand.u32 2147483647, %v330
  %v363 = vand.u32 2147483647, %v331
  %v364 = vand.u32 2147483647, %v332
  %v365 = vand.u32 2147483647, %v333
  %v366 = vand.u32 2147483647, %v334
  %v367 = vand.u32 2147483647, %v335
  %v368 = vand.u32 2147483647, %v336
  %v369 = vand.u32 2147483647, %v337
  %v370 = vand.u32 2147483647, %v338
  %v371 = vand.u32 2147483647, %v339
  %v372 = vand.u32 2147483647, %v340
  %v373 = vand.u32 2147483647, %v341
  %v374 = vand.u32 2147483647, %v342
  %v375 = vand.u32 2147483647, %v343
  %v376 = vand.u32 2147483647, %v344
  %v377 = vand.u32 2147483647, %v345
  %v378 = vand.u32 2147483647, %v346
  %v379 = vand.u32 2147483647, %v347
  %v380 = vand.u32 2147483647, %v348
  %v381 = vand.u32 2147483647, %v349
  %v382 = vand.u32 2147483647, %v350
  %v383 = vand.u32 2147483647, %v351
  %v384 = vmul.f32 %v352, 0.3275911
  %v385 = vmul.f32 %v353, 0.3275911
  %v386 = vmul.f32 %v354, 0.3275911
  %v387 = vmul.f32 %v355, 0.3275911
  %v388 = vmul.f32 %v356, 0.3275911
  %v389 = vmul.f32 %v357, 0.3275911
  %v390 = vmul.f32 %v358, 0.3275911
  %v391 = vmul.f32 %v359, 0.3275911
  %v392 = vmul.f32 %v360, 0.3275911
  %v393 = vmul.f32 %v361, 0.3275911
  %v394 = vmul.f32 %v362, 0.3275911
  %v395 = vmul.f32 %v363, 0.3275911
  %v396 = vmul.f32 %v364, 0.3275911
  %v397 = vmul.f32 %v365, 0.3275911
  %v398 = vmul.f32 %v366, 0.3275911
  %v399 = vmul.f32 %v367, 0.3275911
  %v400 = vmul.f32 %v368, 0.3275911
  %v401 = vmul.f32 %v369, 0.3275911
  %v402 = vmul.f32 %v370, 0.3275911
  %v403 = vmul.f32 %v371, 0.3275911
  %v404 = vmul.f32 %v372, 0.3275911
  %v405 = vmul.f32 %v373, 0.3275911
  %v406 = vmul.f32 %v374, 0.3275911
  %v407 = vmul.f32 %v375, 0.3275911
  %v408 = vmul.f32 %v376, 0.3275911
  %v409 = vmul.f32 %v377, 0.3275911
  %v410 = vmul.f32 %v378, 0.3275911
  %v411 = vmul.f32 %v379, 0.3275911
  %v412 = vmul.f32 %v380, 0.3275911
  %v413 = vmul.f32 %v381, 0.3275911
  %v414 = vmul.f32 %v382, 0.3275911
  %v415 = vmul.f32 %v383, 0.3275911
  %v416 = vadd.f32 %v384, 1.0
  %v417 = vadd.f32 %v385, 1.0
  %v418 = vadd.f32 %v386, 1.0
  %v419 = vadd.f32 %v387, 1.0
  %v420 = vadd.f32 %v388, 1.0
  %v421 = vadd.f32 %v389, 1.0
  %v422 = vadd.f32 %v390, 1.0
  %v423 = vadd.f32 %v391, 1.0
  %v424 = vadd.f32 %v392, 1.0
  %v425 = vadd.f32 %v393, 1.0
  %v426 = vadd.f32 %v394, 1.0
  %v427 = vadd.f32 %v395, 1.0
  %v428 = vadd.f32 %v396, 1.0
  %v429 = vadd.f32 %v397, 1.0
  %v430 = vadd.f32 %v398, 1.0
  %v431 = vadd.f32 %v399, 1.0
  %v432 = vadd.f32 %v400, 1.0
  %v433 = vadd.f32 %v401, 1.0
  %v434 = vadd.f32 %v402, 1.0
  %v435 = vadd.f32 %v403, 1.0
  %v436 = vadd.f32 %v404, 1.0
  %v437 = vadd.f32 %v405, 1.0
  %v438 = vadd.f32 %v406, 1.0
  %v439 = vadd.f32 %v407, 1.0
  %v440 = vadd.f32 %v408, 1.0
  %v441 = vadd.f32 %v409, 1.0
  %v442 = vadd.f32 %v410, 1.0
  %v443 = vadd.f32 %v411, 1.0
  %v444 = vadd.f32 %v412, 1.0
  %v445 = vadd.f32 %v413, 1.0
  %v446 = vadd.f32 %v414, 1.0
  %v447 = vadd.f32 %v415, 1.0
  %v448 = vrcp.pop %v416
  %v449 = vrcp.pop %v417
  %v450 = vrcp.pop %v418
  %v451 = vrcp.pop %v419
  %v452 = vrcp.pop %v420
  %v453 = vrcp.pop %v421
  %v454 = vrcp.pop %v422
  %v455 = vrcp.pop %v423
  %v456 = vrcp.pop %v424
  %v457 = vrcp.pop %v425
  %v458 = vrcp.pop %v426
  %v459 = vrcp.pop %v427
  %v460 = vrcp.pop %v428
  %v461 = vrcp.pop %v429
  %v462 = vrcp.pop %v430
  %v463 = vrcp.pop %v431
  %v464 = vrcp.pop %v432
  %v465 = vrcp.pop %v433
  %v466 = vrcp.pop %v434
  %v467 = vrcp.pop %v435
  %v468 = vrcp.pop %v436
  %v469 = vrcp.pop %v437
  %v470 = vrcp.pop %v438
  %v471 = vrcp.pop %v439
  %v472 = vrcp.pop %v440
  %v473 = vrcp.pop %v441
  %v474 = vrcp.pop %v442
  %v475 = vrcp.pop %v443
  %v476 = vrcp.pop %v444
  %v477 = vrcp.pop %v445
  %v478 = vrcp.pop %v446
  %v479 = vrcp.pop %v447
  %v480 = vmul.f32 %v448, 1.0614054
  %v481 = vmul.f32 %v449, 1.0614054
  %v482 = vmul.f32 %v450, 1.0614054
  %v483 = vmul.f32 %v451, 1.0614054
  %v484 = vmul.f32 %v452, 1.0614054
  %v485 = vmul.f32 %v453, 1.0614054
  %v486 = vmul.f32 %v454, 1.0614054
  %v487 = vmul.f32 %v455, 1.0614054
  %v488 = vmul.f32 %v456, 1.0614054
  %v489 = vmul.f32 %v457, 1.0614054
  %v490 = vmul.f32 %v458, 1.0614054
  %v491 = vmul.f32 %v459, 1.0614054
  %v492 = vmul.f32 %v460, 1.0614054
  %v493 = vmul.f32 %v461, 1.0614054
  %v494 = vmul.f32 %v462, 1.0614054
  %v495 = vmul.f32 %v463, 1.0614054
  %v496 = vmul.f32 %v464, 1.0614054
  %v497 = vmul.f32 %v465, 1.0614054
  %v498 = vmul.f32 %v466, 1.0614054
  %v499 = vmul.f32 %v467, 1.0614054
  %v500 = vmul.f32 %v468, 1.0614054
  %v501 = vmul.f32 %v469, 1.0614054
  %v502 = vmul.f32 %v470, 1.0614054
  %v503 = vmul.f32 %v471, 1.0614054
  %v504 = vmul.f32 %v472, 1.0614054
  %v505 = vmul.f32 %v473, 1.0614054
  %v506 = vmul.f32 %v474, 1.0614054
  %v507 = vmul.f32 %v475, 1.0614054
  %v508 = vmul.f32 %v476, 1.0614054
  %v509 = vmul.f32 %v477, 1.0614054
  %v510 = vmul.f32 %v478, 1.0614054
  %v511 = vmul.f32 %v479, 1.0614054
  %v512 = vadd.f32 %v480, -1.4531521
  %v513 = vadd.f32 %v481, -1.4531521
  %v514 = vadd.f32 %v482, -1.4531521
  %v515 = vadd.f32 %v483, -1.4531521
  %v516 = vadd.f32 %v484, -1.4531521
  %v517 = vadd.f32 %v485, -1.4531521
  %v518 = vadd.f32 %v486, -1.4531521
  %v519 = vadd.f32 %v487, -1.4531521
  %v520 = vadd.f32 %v488, -1.4531521
  %v521 = vadd.f32 %v489, -1.4531521
  %v522 = vadd.f32 %v490, -1.4531521
  %v523 = vadd.f32 %v491, -1.4531521
  %v524 = vadd.f32 %v492, -1.4531521
  %v525 = vadd.f32 %v493, -1.4531521
  %v526 = vadd.f32 %v494, -1.4531521
  %v527 = vadd.f32 %v495, -1.4531521
  %v528 = vadd.f32 %v496, -1.4531521
  %v529 = vadd.f32 %v497, -1.4531521
  %v530 = vadd.f32 %v498, -1.4531521
  %v531 = vadd.f32 %v499, -1.4531521
  %v532 = vadd.f32 %v500, -1.4531521
  %v533 = vadd.f32 %v501, -1.4531521
  %v534 = vadd.f32 %v502, -1.4531521
  %v535 = vadd.f32 %v503, -1.4531521
  %v536 = vadd.f32 %v504, -1.4531521
  %v537 = vadd.f32 %v505, -1.4531521
  %v538 = vadd.f32 %v506, -1.4531521
  %v539 = vadd.f32 %v507, -1.4531521
  %v540 = vadd.f32 %v508, -1.4531521
  %v541 = vadd.f32 %v509, -1.4531521
  %v542 = vadd.f32 %v510, -1.4531521
  %v543 = vadd.f32 %v511, -1.4531521
  %v544 = vmul.f32 %v512, %v448
  %v545 = vmul.f32 %v513, %v449
  %v546 = vmul.f32 %v514, %v450
  %v547 = vmul.f32 %v515, %v451
  %v548 = vmul.f32 %v516, %v452
  %v549 = vmul.f32 %v517, %v453
  %v550 = vmul.f32 %v518, %v454
  %v551 = vmul.f32 %v519, %v455
  %v552 = vmul.f32 %v520, %v456
  %v553 = vmul.f32 %v521, %v457
  %v554 = vmul.f32 %v522, %v458
  %v555 = vmul.f32 %v523, %v459
  %v556 = vmul.f32 %v524, %v460
  %v557 = vmul.f32 %v525, %v461
  %v558 = vmul.f32 %v526, %v462
  %v559 = vmul.f32 %v527, %v463
  %v560 = vmul.f32 %v528, %v464
  %v561 = vmul.f32 %v529, %v465
  %v562 = vmul.f32 %v530, %v466
  %v563 = vmul.f32 %v531, %v467
  %v564 = vmul.f32 %v532, %v468
  %v565 = vmul.f32 %v533, %v469
  %v566 = vmul.f32 %v534, %v470
  %v567 = vmul.f32 %v535, %v471
  %v568 = vmul.f32 %v536, %v472
  %v569 = vmul.f32 %v537, %v473
  %v570 = vmul.f32 %v538, %v474
  %v571 = vmul.f32 %v539, %v475
  %v572 = vmul.f32 %v540, %v476
  %v573 = vmul.f32 %v541, %v477
  %v574 = vmul.f32 %v542, %v478
  %v575 = vmul.f32 %v543, %v479
  %v576 = vadd.f32 %v544, 1.4214138
  %v577 = vadd.f32 %v545, 1.4214138
  %v578 = vadd.f32 %v546, 1.4214138
  %v579 = vadd.f32 %v547, 1.4214138
  %v580 = vadd.f32 %v548, 1.4214138
  %v581 = vadd.f32 %v549, 1.4214138
  %v582 = vadd.f32 %v550, 1.4214138
  %v583 = vadd.f32 %v551, 1.4214138
  %v584 = vadd.f32 %v552, 1.4214138
  %v585 = vadd.f32 %v553, 1.4214138
  %v586 = vadd.f32 %v554, 1.4214138
  %v587 = vadd.f32 %v555, 1.4214138
  %v588 = vadd.f32 %v556, 1.4214138
  %v589 = vadd.f32 %v557, 1.4214138
  %v590 = vadd.f32 %v558, 1.4214138
  %v591 = vadd.f32 %v559, 1.4214138
  %v592 = vadd.f32 %v560, 1.4214138
  %v593 = vadd.f32 %v561, 1.4214138
  %v594 = vadd.f32 %v562, 1.4214138
  %v595 = vadd.f32 %v563, 1.4214138
  %v596 = vadd.f32 %v564, 1.4214138
  %v597 = vadd.f32 %v565, 1.4214138
  %v598 = vadd.f32 %v566, 1.4214138
  %v599 = vadd.f32 %v567, 1.4214138
  %v600 = vadd.f32 %v568, 1.4214138
  %v601 = vadd.f32 %v569, 1.4214138
  %v602 = vadd.f32 %v570, 1.4214138
  %v603 = vadd.f32 %v571, 1.4214138
  %v604 = vadd.f32 %v572, 1.4214138
  %v605 = vadd.f32 %v573, 1.4214138
  %v606 = vadd.f32 %v574, 1.4214138
  %v607 = vadd.f32 %v575, 1.4214138
  %v608 = vmul.f32 %v576, %v448
  %v609 = vmul.f32 %v577, %v449
  %v610 = vmul.f32 %v578, %v450
  %v611 = vmul.f32 %v579, %v451
  %v612 = vmul.f32 %v580, %v452
  %v613 = vmul.f32 %v581, %v453
  %v614 = vmul.f32 %v582, %v454
  %v615 = vmul.f32 %v583, %v455
  %v616 = vmul.f32 %v584, %v456
  %v617 = vmul.f32 %v585, %v457
  %v618 = vmul.f32 %v586, %v458
  %v619 = vmul.f32 %v587, %v459
  %v620 = vmul.f32 %v588, %v460
  %v621 = vmul.f32 %v589, %v461
  %v622 = vmul.f32 %v590, %v462
  %v623 = vmul.f32 %v591, %v463
  %v624 = vmul.f32 %v592, %v464
  %v625 = vmul.f32 %v593, %v465
  %v626 = vmul.f32 %v594, %v466
  %v627 = vmul.f32 %v595, %v467
  %v628 = vmul.f32 %v596, %v468
  %v629 = vmul.f32 %v597, %v469
  %v630 = vmul.f32 %v598, %v470
  %v631 = vmul.f32 %v599, %v471
  %v632 = vmul.f32 %v600, %v472
  %v633 = vmul.f32 %v601, %v473
  %v634 = vmul.f32 %v602, %v474
  %v635 = vmul.f32 %v603, %v475
  %v636 = vmul.f32 %v604, %v476
  %v637 = vmul.f32 %v605, %v477
  %v638 = vmul.f32 %v606, %v478
  %v639 = vmul.f32 %v607, %v479
  %v640 = vadd.f32 %v608, -0.28449672
  %v641 = vadd.f32 %v609, -0.28449672
  %v642 = vadd.f32 %v610, -0.28449672
  %v643 = vadd.f32 %v611, -0.28449672
  %v644 = vadd.f32 %v612, -0.28449672
  %v645 = vadd.f32 %v613, -0.28449672
  %v646 = vadd.f32 %v614, -0.28449672
  %v647 = vadd.f32 %v615, -0.28449672
  %v648 = vadd.f32 %v616, -0.28449672
  %v649 = vadd.f32 %v617, -0.28449672
  %v650 = vadd.f32 %v618, -0.28449672
  %v651 = vadd.f32 %v619, -0.28449672
  %v652 = vadd.f32 %v620, -0.28449672
  %v653 = vadd.f32 %v621, -0.28449672
  %v654 = vadd.f32 %v622, -0.28449672
  %v655 = vadd.f32 %v623, -0.28449672
  %v656 = vadd.f32 %v624, -0.28449672
  %v657 = vadd.f32 %v625, -0.28449672
  %v658 = vadd.f32 %v626, -0.28449672
  %v659 = vadd.f32 %v627, -0.28449672
  %v660 = vadd.f32 %v628, -0.28449672
  %v661 = vadd.f32 %v629, -0.28449672
  %v662 = vadd.f32 %v630, -0.28449672
  %v663 = vadd.f32 %v631, -0.28449672
  %v664 = vadd.f32 %v632, -0.28449672
  %v665 = vadd.f32 %v633, -0.28449672
  %v666 = vadd.f32 %v634, -0.28449672
  %v667 = vadd.f32 %v635, -0.28449672
  %v668 = vadd.f32 %v636, -0.28449672
  %v669 = vadd.f32 %v637, -0.28449672
  %v670 = vadd.f32 %v638, -0.28449672
  %v671 = vadd.f32 %v639, -0.28449672
  %v672 = vmul.f32 %v640, %v448
  %v673 = vmul.f32 %v641, %v449
  %v674 = vmul.f32 %v642, %v450
  %v675 = vmul.f32 %v643, %v451
  %v676 = vmul.f32 %v644, %v452
  %v677 = vmul.f32 %v645, %v453
  %v678 = vmul.f32 %v646, %v454
  %v679 = vmul.f32 %v647, %v455
  %v680 = vmul.f32 %v648, %v456
  %v681 = vmul.f32 %v649, %v457
  %v682 = vmul.f32 %v650, %v458
  %v683 = vmul.f32 %v651, %v459
  %v684 = vmul.f32 %v652, %v460
  %v685 = vmul.f32 %v653, %v461
  %v686 = vmul.f32 %v654, %v462
  %v687 = vmul.f32 %v655, %v463
  %v688 = vmul.f32 %v656, %v464
  %v689 = vmul.f32 %v657, %v465
  %v690 = vmul.f32 %v658, %v466
  %v691 = vmul.f32 %v659, %v467
  %v692 = vmul.f32 %v660, %v468
  %v693 = vmul.f32 %v661, %v469
  %v694 = vmul.f32 %v662, %v470
  %v695 = vmul.f32 %v663, %v471
  %v696 = vmul.f32 %v664, %v472
  %v697 = vmul.f32 %v665, %v473
  %v698 = vmul.f32 %v666, %v474
  %v699 = vmul.f32 %v667, %v475
  %v700 = vmul.f32 %v668, %v476
  %v701 = vmul.f32 %v669, %v477
  %v702 = vmul.f32 %v670, %v478
  %v703 = vmul.f32 %v671, %v479
  %v704 = vadd.f32 %v672, 0.2548296
  %v705 = vadd.f32 %v673, 0.2548296
  %v706 = vadd.f32 %v674, 0.2548296
  %v707 = vadd.f32 %v675, 0.2548296
  %v708 = vadd.f32 %v676, 0.2548296
  %v709 = vadd.f32 %v677, 0.2548296
  %v710 = vadd.f32 %v678, 0.2548296
  %v711 = vadd.f32 %v679, 0.2548296
  %v712 = vadd.f32 %v680, 0.2548296
  %v713 = vadd.f32 %v681, 0.2548296
  %v714 = vadd.f32 %v682, 0.2548296
  %v715 = vadd.f32 %v683, 0.2548296
  %v716 = vadd.f32 %v684, 0.2548296
  %v717 = vadd.f32 %v685, 0.2548296
  %v718 = vadd.f32 %v686, 0.2548296
  %v719 = vadd.f32 %v687, 0.2548296
  %v720 = vadd.f32 %v688, 0.2548296
  %v721 = vadd.f32 %v689, 0.2548296
  %v722 = vadd.f32 %v690, 0.2548296
  %v723 = vadd.f32 %v691, 0.2548296
  %v724 = vadd.f32 %v692, 0.2548296
  %v725 = vadd.f32 %v693, 0.2548296
  %v726 = vadd.f32 %v694, 0.2548296
  %v727 = vadd.f32 %v695, 0.2548296
  %v728 = vadd.f32 %v696, 0.2548296
  %v729 = vadd.f32 %v697, 0.2548296
  %v730 = vadd.f32 %v698, 0.2548296
  %v731 = vadd.f32 %v699, 0.2548296
  %v732 = vadd.f32 %v700, 0.2548296
  %v733 = vadd.f32 %v701, 0.2548296
  %v734 = vadd.f32 %v702, 0.2548296
  %v735 = vadd.f32 %v703, 0.2548296
  %v736 = vmul.f32 %v704, %v448
  %v737 = vmul.f32 %v705, %v449
  %v738 = vmul.f32 %v706, %v450
  %v739 = vmul.f32 %v707, %v451
  %v740 = vmul.f32 %v708, %v452
  %v741 = vmul.f32 %v709, %v453
  %v742 = vmul.f32 %v710, %v454
  %v743 = vmul.f32 %v711, %v455
  %v744 = vmul.f32 %v712, %v456
  %v745 = vmul.f32 %v713, %v457
  %v746 = vmul.f32 %v714, %v458
  %v747 = vmul.f32 %v715, %v459
  %v748 = vmul.f32 %v716, %v460
  %v749 = vmul.f32 %v717, %v461
  %v750 = vmul.f32 %v718, %v462
  %v751 = vmul.f32 %v719, %v463
  %v752 = vmul.f32 %v720, %v464
  %v753 = vmul.f32 %v721, %v465
  %v754 = vmul.f32 %v722, %v466
  %v755 = vmul.f32 %v723, %v467
  %v756 = vmul.f32 %v724, %v468
  %v757 = vmul.f32 %v725, %v469
  %v758 = vmul.f32 %v726, %v470
  %v759 = vmul.f32 %v727, %v471
  %v760 = vmul.f32 %v728, %v472
  %v761 = vmul.f32 %v729, %v473
  %v762 = vmul.f32 %v730, %v474
  %v763 = vmul.f32 %v731, %v475
  %v764 = vmul.f32 %v732, %v476
  %v765 = vmul.f32 %v733, %v477
  %v766 = vmul.f32 %v734, %v478
  %v767 = vmul.f32 %v735, %v479
  %v768 = vsub.f32 0.0, %v352
  %v769 = vsub.f32 0.0, %v353
  %v770 = vsub.f32 0.0, %v354
  %v771 = vsub.f32 0.0, %v355
  %v772 = vsub.f32 0.0, %v356
  %v773 = vsub.f32 0.0, %v357
  %v774 = vsub.f32 0.0, %v358
  %v775 = vsub.f32 0.0, %v359
  %v776 = vsub.f32 0.0, %v360
  %v777 = vsub.f32 0.0, %v361
  %v778 = vsub.f32 0.0, %v362
  %v779 = vsub.f32 0.0, %v363
  %v780 = vsub.f32 0.0, %v364
  %v781 = vsub.f32 0.0, %v365
  %v782 = vsub.f32 0.0, %v366
  %v783 = vsub.f32 0.0, %v367
  %v784 = vsub.f32 0.0, %v368
  %v785 = vsub.f32 0.0, %v369
  %v786 = vsub.f32 0.0, %v370
  %v787 = vsub.f32 0.0, %v371
  %v788 = vsub.f32 0.0, %v372
  %v789 = vsub.f32 0.0, %v373
  %v790 = vsub.f32 0.0, %v374
  %v791 = vsub.f32 0.0, %v375
  %v792 = vsub.f32 0.0, %v376
  %v793 = vsub.f32 0.0, %v377
  %v794 = vsub.f32 0.0, %v378
  %v795 = vsub.f32 0.0, %v379
  %v796 = vsub.f32 0.0, %v380
  %v797 = vsub.f32 0.0, %v381
  %v798 = vsub.f32 0.0, %v382
  %v799 = vsub.f32 0.0, %v383
  %v800 = vmul.f32 %v768, %v352
  %v801 = vmul.f32 %v769, %v353
  %v802 = vmul.f32 %v770, %v354
  %v803 = vmul.f32 %v771, %v355
  %v804 = vmul.f32 %v772, %v356
  %v805 = vmul.f32 %v773, %v357
  %v806 = vmul.f32 %v774, %v358
  %v807 = vmul.f32 %v775, %v359
  %v808 = vmul.f32 %v776, %v360
  %v809 = vmul.f32 %v777, %v361
  %v810 = vmul.f32 %v778, %v362
  %v811 = vmul.f32 %v779, %v363
  %v812 = vmul.f32 %v780, %v364
  %v813 = vmul.f32 %v781, %v365
  %v814 = vmul.f32 %v782, %v366
  %v815 = vmul.f32 %v783, %v367
  %v816 = vmul.f32 %v784, %v368
  %v817 = vmul.f32 %v785, %v369
  %v818 = vmul.f32 %v786, %v370
  %v819 = vmul.f32 %v787, %v371
  %v820 = vmul.f32 %v788, %v372
  %v821 = vmul.f32 %v789, %v373
  %v822 = vmul.f32 %v790, %v374
  %v823 = vmul.f32 %v791, %v375
  %v824 = vmul.f32 %v792, %v376
  %v825 = vmul.f32 %v793, %v377
  %v826 = vmul.f32 %v794, %v378
  %v827 = vmul.f32 %v795, %v379
  %v828 = vmul.f32 %v796, %v380
  %v829 = vmul.f32 %v797, %v381
  %v830 = vmul.f32 %v798, %v382
  %v831 = vmul.f32 %v799, %v383
  %v832 = vmul.f32 %v800, 1.442695
  %v833 = vpow.pop %v832
  %v834 = vmul.f32 %v801, 1.442695
  %v835 = vpow.pop %v834
  %v836 = vmul.f32 %v802, 1.442695
  %v837 = vpow.pop %v836
  %v838 = vmul.f32 %v803, 1.442695
  %v839 = vpow.pop %v838
  %v840 = vmul.f32 %v804, 1.442695
  %v841 = vpow.pop %v840
  %v842 = vmul.f32 %v805, 1.442695
  %v843 = vpow.pop %v842
  %v844 = vmul.f32 %v806, 1.442695
  %v845 = vpow.pop %v844
  %v846 = vmul.f32 %v807, 1.442695
  %v847 = vpow.pop %v846
  %v848 = vmul.f32 %v808, 1.442695
  %v849 = vpow.pop %v848
  %v850 = vmul.f32 %v809, 1.442695
  %v851 = vpow.pop %v850
  %v852 = vmul.f32 %v810, 1.442695
  %v853 = vpow.pop %v852
  %v854 = vmul.f32 %v811, 1.442695
  %v855 = vpow.pop %v854
  %v856 = vmul.f32 %v812, 1.442695
  %v857 = vpow.pop %v856
  %v858 = vmul.f32 %v813, 1.442695
  %v859 = vpow.pop %v858
  %v860 = vmul.f32 %v814, 1.442695
  %v861 = vpow.pop %v860
  %v862 = vmul.f32 %v815, 1.442695
  %v863 = vpow.pop %v862
  %v864 = vmul.f32 %v816, 1.442695
  %v865 = vpow.pop %v864
  %v866 = vmul.f32 %v817, 1.442695
  %v867 = vpow.pop %v866
  %v868 = vmul.f32 %v818, 1.442695
  %v869 = vpow.pop %v868
  %v870 = vmul.f32 %v819, 1.442695
  %v871 = vpow.pop %v870
  %v872 = vmul.f32 %v820, 1.442695
  %v873 = vpow.pop %v872
  %v874 = vmul.f32 %v821, 1.442695
  %v875 = vpow.pop %v874
  %v876 = vmul.f32 %v822, 1.442695
  %v877 = vpow.pop %v876
  %v878 = vmul.f32 %v823, 1.442695
  %v879 = vpow.pop %v878
  %v880 = vmul.f32 %v824, 1.442695
  %v881 = vpow.pop %v880
  %v882 = vmul.f32 %v825, 1.442695
  %v883 = vpow.pop %v882
  %v884 = vmul.f32 %v826, 1.442695
  %v885 = vpow.pop %v884
  %v886 = vmul.f32 %v827, 1.442695
  %v887 = vpow.pop %v886
  %v888 = vmul.f32 %v828, 1.442695
  %v889 = vpow.pop %v888
  %v890 = vmul.f32 %v829, 1.442695
  %v891 = vpow.pop %v890
  %v892 = vmul.f32 %v830, 1.442695
  %v893 = vpow.pop %v892
  %v894 = vmul.f32 %v831, 1.442695
  %v895 = vpow.pop %v894
  %v896 = vmul.f32 %v736, %v833
  %v897 = vmul.f32 %v737, %v835
  %v898 = vmul.f32 %v738, %v837
  %v899 = vmul.f32 %v739, %v839
  %v900 = vmul.f32 %v740, %v841
  %v901 = vmul.f32 %v741, %v843
  %v902 = vmul.f32 %v742, %v845
  %v903 = vmul.f32 %v743, %v847
  %v904 = vmul.f32 %v744, %v849
  %v905 = vmul.f32 %v745, %v851
  %v906 = vmul.f32 %v746, %v853
  %v907 = vmul.f32 %v747, %v855
  %v908 = vmul.f32 %v748, %v857
  %v909 = vmul.f32 %v749, %v859
  %v910 = vmul.f32 %v750, %v861
  %v911 = vmul.f32 %v751, %v863
  %v912 = vmul.f32 %v752, %v865
  %v913 = vmul.f32 %v753, %v867
  %v914 = vmul.f32 %v754, %v869
  %v915 = vmul.f32 %v755, %v871
  %v916 = vmul.f32 %v756, %v873
  %v917 = vmul.f32 %v757, %v875
  %v918 = vmul.f32 %v758, %v877
  %v919 = vmul.f32 %v759, %v879
  %v920 = vmul.f32 %v760, %v881
  %v921 = vmul.f32 %v761, %v883
  %v922 = vmul.f32 %v762, %v885
  %v923 = vmul.f32 %v763, %v887
  %v924 = vmul.f32 %v764, %v889
  %v925 = vmul.f32 %v765, %v891
  %v926 = vmul.f32 %v766, %v893
  %v927 = vmul.f32 %v767, %v895
  %v928 = vsub.f32 1.0, %v896
  %v929 = vsub.f32 1.0, %v897
  %v930 = vsub.f32 1.0, %v898
  %v931 = vsub.f32 1.0, %v899
  %v932 = vsub.f32 1.0, %v900
  %v933 = vsub.f32 1.0, %v901
  %v934 = vsub.f32 1.0, %v902
  %v935 = vsub.f32 1.0, %v903
  %v936 = vsub.f32 1.0, %v904
  %v937 = vsub.f32 1.0, %v905
  %v938 = vsub.f32 1.0, %v906
  %v939 = vsub.f32 1.0, %v907
  %v940 = vsub.f32 1.0, %v908
  %v941 = vsub.f32 1.0, %v909
  %v942 = vsub.f32 1.0, %v910
  %v943 = vsub.f32 1.0, %v911
  %v944 = vsub.f32 1.0, %v912
  %v945 = vsub.f32 1.0, %v913
  %v946 = vsub.f32 1.0, %v914
  %v947 = vsub.f32 1.0, %v915
  %v948 = vsub.f32 1.0, %v916
  %v949 = vsub.f32 1.0, %v917
  %v950 = vsub.f32 1.0, %v918
  %v951 = vsub.f32 1.0, %v919
  %v952 = vsub.f32 1.0, %v920
  %v953 = vsub.f32 1.0, %v921
  %v954 = vsub.f32 1.0, %v922
  %v955 = vsub.f32 1.0, %v923
  %v956 = vsub.f32 1.0, %v924
  %v957 = vsub.f32 1.0, %v925
  %v958 = vsub.f32 1.0, %v926
  %v959 = vsub.f32 1.0, %v927
  %vm960 = vcmp.lt.f32.partialorder %v320, 0.0
  %vm961 = vcmp.lt.f32.partialorder %v321, 0.0
  %vm962 = vcmp.lt.f32.partialorder %v322, 0.0
  %vm963 = vcmp.lt.f32.partialorder %v323, 0.0
  %vm964 = vcmp.lt.f32.partialorder %v324, 0.0
  %vm965 = vcmp.lt.f32.partialorder %v325, 0.0
  %vm966 = vcmp.lt.f32.partialorder %v326, 0.0
  %vm967 = vcmp.lt.f32.partialorder %v327, 0.0
  %vm968 = vcmp.lt.f32.partialorder %v328, 0.0
  %vm969 = vcmp.lt.f32.partialorder %v329, 0.0
  %vm970 = vcmp.lt.f32.partialorder %v330, 0.0
  %vm971 = vcmp.lt.f32.partialorder %v331, 0.0
  %vm972 = vcmp.lt.f32.partialorder %v332, 0.0
  %vm973 = vcmp.lt.f32.partialorder %v333, 0.0
  %vm974 = vcmp.lt.f32.partialorder %v334, 0.0
  %vm975 = vcmp.lt.f32.partialorder %v335, 0.0
  %vm976 = vcmp.lt.f32.partialorder %v336, 0.0
  %vm977 = vcmp.lt.f32.partialorder %v337, 0.0
  %vm978 = vcmp.lt.f32.partialorder %v338, 0.0
  %vm979 = vcmp.lt.f32.partialorder %v339, 0.0
  %vm980 = vcmp.lt.f32.partialorder %v340, 0.0
  %vm981 = vcmp.lt.f32.partialorder %v341, 0.0
  %vm982 = vcmp.lt.f32.partialorder %v342, 0.0
  %vm983 = vcmp.lt.f32.partialorder %v343, 0.0
  %vm984 = vcmp.lt.f32.partialorder %v344, 0.0
  %vm985 = vcmp.lt.f32.partialorder %v345, 0.0
  %vm986 = vcmp.lt.f32.partialorder %v346, 0.0
  %vm987 = vcmp.lt.f32.partialorder %v347, 0.0
  %vm988 = vcmp.lt.f32.partialorder %v348, 0.0
  %vm989 = vcmp.lt.f32.partialorder %v349, 0.0
  %vm990 = vcmp.lt.f32.partialorder %v350, 0.0
  %vm991 = vcmp.lt.f32.partialorder %v351, 0.0
  %v992 = vsub.f32 0.0, %v928
  %v993 = vsub.f32 0.0, %v929
  %v994 = vsub.f32 0.0, %v930
  %v995 = vsub.f32 0.0, %v931
  %v996 = vsub.f32 0.0, %v932
  %v997 = vsub.f32 0.0, %v933
  %v998 = vsub.f32 0.0, %v934
  %v999 = vsub.f32 0.0, %v935
  %v1000 = vsub.f32 0.0, %v936
  %v1001 = vsub.f32 0.0, %v937
  %v1002 = vsub.f32 0.0, %v938
  %v1003 = vsub.f32 0.0, %v939
  %v1004 = vsub.f32 0.0, %v940
  %v1005 = vsub.f32 0.0, %v941
  %v1006 = vsub.f32 0.0, %v942
  %v1007 = vsub.f32 0.0, %v943
  %v1008 = vsub.f32 0.0, %v944
  %v1009 = vsub.f32 0.0, %v945
  %v1010 = vsub.f32 0.0, %v946
  %v1011 = vsub.f32 0.0, %v947
  %v1012 = vsub.f32 0.0, %v948
  %v1013 = vsub.f32 0.0, %v949
  %v1014 = vsub.f32 0.0, %v950
  %v1015 = vsub.f32 0.0, %v951
  %v1016 = vsub.f32 0.0, %v952
  %v1017 = vsub.f32 0.0, %v953
  %v1018 = vsub.f32 0.0, %v954
  %v1019 = vsub.f32 0.0, %v955
  %v1020 = vsub.f32 0.0, %v956
  %v1021 = vsub.f32 0.0, %v957
  %v1022 = vsub.f32 0.0, %v958
  %v1023 = vsub.f32 0.0, %v959
  %v1024 = vsel %vm960, %v992, %v928
  %v1025 = vsel %vm961, %v993, %v929
  %v1026 = vsel %vm962, %v994, %v930
  %v1027 = vsel %vm963, %v995, %v931
  %v1028 = vsel %vm964, %v996, %v932
  %v1029 = vsel %vm965, %v997, %v933
  %v1030 = vsel %vm966, %v998, %v934
  %v1031 = vsel %vm967, %v999, %v935
  %v1032 = vsel %vm968, %v1000, %v936
  %v1033 = vsel %vm969, %v1001, %v937
  %v1034 = vsel %vm970, %v1002, %v938
  %v1035 = vsel %vm971, %v1003, %v939
  %v1036 = vsel %vm972, %v1004, %v940
  %v1037 = vsel %vm973, %v1005, %v941
  %v1038 = vsel %vm974, %v1006, %v942
  %v1039 = vsel %vm975, %v1007, %v943
  %v1040 = vsel %vm976, %v1008, %v944
  %v1041 = vsel %vm977, %v1009, %v945
  %v1042 = vsel %vm978, %v1010, %v946
  %v1043 = vsel %vm979, %v1011, %v947
  %v1044 = vsel %vm980, %v1012, %v948
  %v1045 = vsel %vm981, %v1013, %v949
  %v1046 = vsel %vm982, %v1014, %v950
  %v1047 = vsel %vm983, %v1015, %v951
  %v1048 = vsel %vm984, %v1016, %v952
  %v1049 = vsel %vm985, %v1017, %v953
  %v1050 = vsel %vm986, %v1018, %v954
  %v1051 = vsel %vm987, %v1019, %v955
  %v1052 = vsel %vm988, %v1020, %v956
  %v1053 = vsel %vm989, %v1021, %v957
  %v1054 = vsel %vm990, %v1022, %v958
  %v1055 = vsel %vm991, %v1023, %v959
  %v1056 = vadd.f32 %v1024, 1.0
  %v1057 = vadd.f32 %v1025, 1.0
  %v1058 = vadd.f32 %v1026, 1.0
  %v1059 = vadd.f32 %v1027, 1.0
  %v1060 = vadd.f32 %v1028, 1.0
  %v1061 = vadd.f32 %v1029, 1.0
  %v1062 = vadd.f32 %v1030, 1.0
  %v1063 = vadd.f32 %v1031, 1.0
  %v1064 = vadd.f32 %v1032, 1.0
  %v1065 = vadd.f32 %v1033, 1.0
  %v1066 = vadd.f32 %v1034, 1.0
  %v1067 = vadd.f32 %v1035, 1.0
  %v1068 = vadd.f32 %v1036, 1.0
  %v1069 = vadd.f32 %v1037, 1.0
  %v1070 = vadd.f32 %v1038, 1.0
  %v1071 = vadd.f32 %v1039, 1.0
  %v1072 = vadd.f32 %v1040, 1.0
  %v1073 = vadd.f32 %v1041, 1.0
  %v1074 = vadd.f32 %v1042, 1.0
  %v1075 = vadd.f32 %v1043, 1.0
  %v1076 = vadd.f32 %v1044, 1.0
  %v1077 = vadd.f32 %v1045, 1.0
  %v1078 = vadd.f32 %v1046, 1.0
  %v1079 = vadd.f32 %v1047, 1.0
  %v1080 = vadd.f32 %v1048, 1.0
  %v1081 = vadd.f32 %v1049, 1.0
  %v1082 = vadd.f32 %v1050, 1.0
  %v1083 = vadd.f32 %v1051, 1.0
  %v1084 = vadd.f32 %v1052, 1.0
  %v1085 = vadd.f32 %v1053, 1.0
  %v1086 = vadd.f32 %v1054, 1.0
  %v1087 = vadd.f32 %v1055, 1.0
  %v1088 = vmul.f32 %v288, %v1056
  %v1089 = vmul.f32 %v289, %v1057
  %v1090 = vmul.f32 %v290, %v1058
  %v1091 = vmul.f32 %v291, %v1059
  %v1092 = vmul.f32 %v292, %v1060
  %v1093 = vmul.f32 %v293, %v1061
  %v1094 = vmul.f32 %v294, %v1062
  %v1095 = vmul.f32 %v295, %v1063
  %v1096 = vmul.f32 %v296, %v1064
  %v1097 = vmul.f32 %v297, %v1065
  %v1098 = vmul.f32 %v298, %v1066
  %v1099 = vmul.f32 %v299, %v1067
  %v1100 = vmul.f32 %v300, %v1068
  %v1101 = vmul.f32 %v301, %v1069
  %v1102 = vmul.f32 %v302, %v1070
  %v1103 = vmul.f32 %v303, %v1071
  %v1104 = vmul.f32 %v304, %v1072
  %v1105 = vmul.f32 %v305, %v1073
  %v1106 = vmul.f32 %v306, %v1074
  %v1107 = vmul.f32 %v307, %v1075
  %v1108 = vmul.f32 %v308, %v1076
  %v1109 = vmul.f32 %v309, %v1077
  %v1110 = vmul.f32 %v310, %v1078
  %v1111 = vmul.f32 %v311, %v1079
  %v1112 = vmul.f32 %v312, %v1080
  %v1113 = vmul.f32 %v313, %v1081
  %v1114 = vmul.f32 %v314, %v1082
  %v1115 = vmul.f32 %v315, %v1083
  %v1116 = vmul.f32 %v316, %v1084
  %v1117 = vmul.f32 %v317, %v1085
  %v1118 = vmul.f32 %v318, %v1086
  %v1119 = vmul.f32 %v319, %v1087
  %vm1120 = vcmask 64512
  %1121 = vst.msk [vmem:[%s3] sm:$0xff] %vm1120, %v1088
  %1122 = vst.msk [vmem:[%s3 + $0x8] sm:$0xff] %vm1120, %v1089
  %1123 = vst.msk [vmem:[%s3 + $0x10] sm:$0xff] %vm1120, %v1090
  %1124 = vst.msk [vmem:[%s3 + $0x18] sm:$0xff] %vm1120, %v1091
  %1125 = vst.msk [vmem:[%s3 + $0x20] sm:$0xff] %vm1120, %v1092
  %1126 = vst.msk [vmem:[%s3 + $0x28] sm:$0xff] %vm1120, %v1093
  %1127 = vst.msk [vmem:[%s3 + $0x30] sm:$0xff] %vm1120, %v1094
  %1128 = vst.msk [vmem:[%s3 + $0x38] sm:$0xff] %vm1120, %v1095
  %1129 = vst.msk [vmem:[%s3 + $0x40] sm:$0xff] %vm1120, %v1096
  %1130 = vst.msk [vmem:[%s3 + $0x48] sm:$0xff] %vm1120, %v1097
  %1131 = vst.msk [vmem:[%s3 + $0x50] sm:$0xff] %vm1120, %v1098
  %1132 = vst.msk [vmem:[%s3 + $0x58] sm:$0xff] %vm1120, %v1099
  %1133 = vst.msk [vmem:[%s3 + $0x60] sm:$0xff] %vm1120, %v1100
  %1134 = vst.msk [vmem:[%s3 + $0x68] sm:$0xff] %vm1120, %v1101
  %1135 = vst.msk [vmem:[%s3 + $0x70] sm:$0xff] %vm1120, %v1102
  %1136 = vst.msk [vmem:[%s3 + $0x78] sm:$0xff] %vm1120, %v1103
  %1137 = vst.msk [vmem:[%s3 + $0x80] sm:$0xff] %vm1120, %v1104
  %1138 = vst.msk [vmem:[%s3 + $0x88] sm:$0xff] %vm1120, %v1105
  %1139 = vst.msk [vmem:[%s3 + $0x90] sm:$0xff] %vm1120, %v1106
  %1140 = vst.msk [vmem:[%s3 + $0x98] sm:$0xff] %vm1120, %v1107
  %1141 = vst.msk [vmem:[%s3 + $0xa0] sm:$0xff] %vm1120, %v1108
  %1142 = vst.msk [vmem:[%s3 + $0xa8] sm:$0xff] %vm1120, %v1109
  %1143 = vst.msk [vmem:[%s3 + $0xb0] sm:$0xff] %vm1120, %v1110
  %1144 = vst.msk [vmem:[%s3 + $0xb8] sm:$0xff] %vm1120, %v1111
  %1145 = vst.msk [vmem:[%s3 + $0xc0] sm:$0xff] %vm1120, %v1112
  %1146 = vst.msk [vmem:[%s3 + $0xc8] sm:$0xff] %vm1120, %v1113
  %1147 = vst.msk [vmem:[%s3 + $0xd0] sm:$0xff] %vm1120, %v1114
  %1148 = vst.msk [vmem:[%s3 + $0xd8] sm:$0xff] %vm1120, %v1115
  %1149 = vst.msk [vmem:[%s3 + $0xe0] sm:$0xff] %vm1120, %v1116
  %1150 = vst.msk [vmem:[%s3 + $0xe8] sm:$0xff] %vm1120, %v1117
  %1151 = vst.msk [vmem:[%s3 + $0xf0] sm:$0xff] %vm1120, %v1118
  %1152 = vst.msk [vmem:[%s3 + $0xf8] sm:$0xff] %vm1120, %v1119
  // Predicated region
  $region14: #{ssmlp_forward.21} parent=0 // pred_check
    _
  $region15: #{ssmlp_forward.21} parent=0 // pred_check_branch
    %1154 = sbr.rel (0) target = $region17
  $region16: #{ssmlp_forward.21} parent=0 // pred_region
    _
  $region17: #{ssmlp_forward.21} parent=0 // pred_fallthru
    _
  // Predicated region
  $region18: #{ssmlp_forward.21} parent=0 // pred_check
    _
  $region19: #{ssmlp_forward.21} parent=0 // pred_check_branch
    %1156 = sbr.rel (0) target = $region21
  $region20: #{ssmlp_forward.21} parent=0 // pred_region
    _
  $region21: #{ssmlp_forward.21} parent=0 // pred_fallthru
    _

// kernel: ssmlp_forward.24
$region0: #{ssmlp_forward.24}
  #allocation0 [shape = 'u32[]', space=smem, size = 0x4, offset = 0x4, fixed_abs, tag = 'smem constant byte address 0x4 - core index']
  #allocation1 [shape = 'u32[144,128]{1,0:T(1,128)}', space=vmem, size = 0x12000, scoped, tag = 'internal scratch']
  %s0 = inlined_call_operand.vmem [shape: f32[128,32], index: 0, kind: input, shape index: {}]
  %s1 = inlined_call_operand.vmem [shape: bf16[32,32], index: 1, kind: input, shape index: {}]
  %s2 = inlined_call_operand.vmem [shape: f32[1,32], index: 2, kind: input, shape index: {}]
  %s3 = inlined_call_operand.vmem [shape: f32[128,32], index: 3, kind: output, shape index: {}]
  %s4 = sld [smem:[#allocation0]]
  $region22: #{ssmlp_forward.24} parent=0
    _
  %s6 = ssub.s32 1, %s4
  %s7 = scalar_select 0, %s6, %s4
  // Predicated region
  $region2: #{ssmlp_forward.24} parent=0 // pred_check
    _
  $region3: #{ssmlp_forward.24} parent=0 // pred_check_branch
    %9 = sbr.rel (0) target = $region5
  $region4: #{ssmlp_forward.24} parent=0 // pred_region
    _
  $region5: #{ssmlp_forward.24} parent=0 // pred_fallthru
    _
  // Predicated region
  $region6: #{ssmlp_forward.24} parent=0 // pred_check
    _
  $region7: #{ssmlp_forward.24} parent=0 // pred_check_branch
    %11 = sbr.rel (0) target = $region9
  $region8: #{ssmlp_forward.24} parent=0 // pred_region
    _
  $region9: #{ssmlp_forward.24} parent=0 // pred_fallthru
    _
  // Predicated region
  $region10: #{ssmlp_forward.24} parent=0 // pred_check
    _
  $region11: #{ssmlp_forward.24} parent=0 // pred_check_branch
    %13 = sbr.rel (0) target = $region13
  $region12: #{ssmlp_forward.24} parent=0 // pred_region
    _
  $region13: #{ssmlp_forward.24} parent=0 // pred_fallthru
    _
  %v15 = vld [vmem:[%s0] sm:$0xff]
  %v16 = vld [vmem:[%s0 + $0x8] sm:$0xff]
  %v17 = vld [vmem:[%s0 + $0x10] sm:$0xff]
  %v18 = vld [vmem:[%s0 + $0x18] sm:$0xff]
  %v19 = vld [vmem:[%s0 + $0x20] sm:$0xff]
  %v20 = vld [vmem:[%s0 + $0x28] sm:$0xff]
  %v21 = vld [vmem:[%s0 + $0x30] sm:$0xff]
  %v22 = vld [vmem:[%s0 + $0x38] sm:$0xff]
  %v23 = vld [vmem:[%s0 + $0x40] sm:$0xff]
  %v24 = vld [vmem:[%s0 + $0x48] sm:$0xff]
  %v25 = vld [vmem:[%s0 + $0x50] sm:$0xff]
  %v26 = vld [vmem:[%s0 + $0x58] sm:$0xff]
  %v27 = vld [vmem:[%s0 + $0x60] sm:$0xff]
  %v28 = vld [vmem:[%s0 + $0x68] sm:$0xff]
  %v29 = vld [vmem:[%s0 + $0x70] sm:$0xff]
  %v30 = vld [vmem:[%s0 + $0x78] sm:$0xff]
  %v31 = vpack.c.bf16 %v16, %v15
  %v32 = vpack.c.bf16 %v18, %v17
  %v33 = vpack.c.bf16 %v20, %v19
  %v34 = vpack.c.bf16 %v22, %v21
  %v35 = vpack.c.bf16 %v24, %v23
  %v36 = vpack.c.bf16 %v26, %v25
  %v37 = vpack.c.bf16 %v28, %v27
  %v38 = vpack.c.bf16 %v30, %v29
  %v39 = vld [vmem:[%s1] sm:$0xf]
  %v40 = vld [vmem:[%s1 + $0x4] sm:$0xf]
  %v41 = vld [vmem:[%s1 + $0x8] sm:$0xf]
  %v42 = vld [vmem:[%s1 + $0xc] sm:$0xf]
  %v43 = vld [vmem:[%s2] sm:$0x1]
  %v45 = vlaneseq
  %v46 = vshrl.u32 %v45, 7
  %v47 = vsub.s32 0, %v46
  %v48 = vrot.slane %v43, %v47
  %v54 = vunpack.c.l.b16 %v39
  %v55 = vunpack.c.l.b16 %v40
  %v56 = vunpack.c.l.b16 %v41
  %v57 = vunpack.c.l.b16 %v42
  %v58 = vpack.c.b16 %v55, %v54
  %v59 = vpack.c.b16 %v57, %v56
  %vm62 = vcmask 261120
  %v64 = vsel %vm62, %v31, 0
  %v67 = vsel %vm62, %v32, 0
  %v70 = vsel %vm62, %v33, 0
  %v73 = vsel %vm62, %v34, 0
  %v76 = vsel %vm62, %v35, 0
  %v79 = vsel %vm62, %v36, 0
  %v82 = vsel %vm62, %v37, 0
  %v85 = vsel %vm62, %v38, 0
  %87 = vmatprep.subr.bf16.mxu0 0
  %88 = vmatpush1.bf16.msra.mxu0 %v58
  %89 = vmatprep.subr.bf16.mxu0 0
  %90 = vmatpush1.bf16.msra.mxu0 %v59
  %91 = vmatprep.subr.bf16.mxu0 0
  %92 = vmatpush1.bf16.msra.mxu0 0
  %93 = vmatprep.subr.bf16.mxu0 0
  %94 = vmatpush1.bf16.msra.mxu0 0
  %95 = vmatprep.subr.bf16.mxu0 0
  %96 = vmatpush1.bf16.msra.mxu0 0
  %97 = vmatprep.subr.bf16.mxu0 0
  %98 = vmatpush1.bf16.msra.mxu0 0
  %99 = vmatprep.subr.bf16.mxu0 0
  %100 = vmatpush1.bf16.msra.mxu0 0
  %101 = vmatprep.subr.bf16.mxu0 0
  %102 = vmatpush1.bf16.msra.mxu0 0
  %103 = vmatprep.subr.bf16.mxu0 0
  %104 = vmatpush1.bf16.msra.mxu0 0
  %105 = vmatprep.subr.bf16.mxu0 0
  %106 = vmatpush1.bf16.msra.mxu0 0
  %107 = vmatprep.subr.bf16.mxu0 0
  %108 = vmatpush1.bf16.msra.mxu0 0
  %109 = vmatprep.subr.bf16.mxu0 0
  %110 = vmatpush1.bf16.msra.mxu0 0
  %111 = vmatprep.subr.bf16.mxu0 0
  %112 = vmatpush1.bf16.msra.mxu0 0
  %113 = vmatprep.subr.bf16.mxu0 0
  %114 = vmatpush1.bf16.msra.mxu0 0
  %115 = vmatprep.subr.bf16.mxu0 0
  %116 = vmatpush1.bf16.msra.mxu0 0
  %117 = vmatprep.subr.bf16.mxu0 0
  %118 = vmatpush1.bf16.msra.mxu0 0
  %119 = vmatprep.mubr.bf16.mxu0 0
  %120 = vmatmul.mubr.bf16.gmra.mrb[0].mxu0 %v64
  %v121 = vpop.f32.mrb[0].mxu0
  %v122 = vadd.f32 %v48, %v121
  %v123 = vpop.f32.mrb[0].mxu0
  %v124 = vpop.f32.mrb[0].mxu0
  %v125 = vadd.f32 %v48, %v124
  %v126 = vpop.f32.mrb[0].mxu0
  %127 = vmatprep.mubr.bf16.mxu0 0
  %128 = vmatmul.mubr.bf16.gmra.mrb[0].mxu0 %v67
  %v129 = vpop.f32.mrb[0].mxu0
  %v130 = vadd.f32 %v48, %v129
  %v131 = vpop.f32.mrb[0].mxu0
  %v132 = vpop.f32.mrb[0].mxu0
  %v133 = vadd.f32 %v48, %v132
  %v134 = vpop.f32.mrb[0].mxu0
  %135 = vmatprep.mubr.bf16.mxu0 0
  %136 = vmatmul.mubr.bf16.gmra.mrb[0].mxu0 %v70
  %v137 = vpop.f32.mrb[0].mxu0
  %v138 = vadd.f32 %v48, %v137
  %v139 = vpop.f32.mrb[0].mxu0
  %v140 = vpop.f32.mrb[0].mxu0
  %v141 = vadd.f32 %v48, %v140
  %v142 = vpop.f32.mrb[0].mxu0
  %143 = vmatprep.mubr.bf16.mxu0 0
  %144 = vmatmul.mubr.bf16.gmra.mrb[0].mxu0 %v73
  %v145 = vpop.f32.mrb[0].mxu0
  %v146 = vadd.f32 %v48, %v145
  %v147 = vpop.f32.mrb[0].mxu0
  %v148 = vpop.f32.mrb[0].mxu0
  %v149 = vadd.f32 %v48, %v148
  %v150 = vpop.f32.mrb[0].mxu0
  %151 = vmatprep.mubr.bf16.mxu0 0
  %152 = vmatmul.mubr.bf16.gmra.mrb[0].mxu0 %v76
  %v153 = vpop.f32.mrb[0].mxu0
  %v154 = vadd.f32 %v48, %v153
  %v155 = vpop.f32.mrb[0].mxu0
  %v156 = vpop.f32.mrb[0].mxu0
  %v157 = vadd.f32 %v48, %v156
  %v158 = vpop.f32.mrb[0].mxu0
  %159 = vmatprep.mubr.bf16.mxu0 0
  %160 = vmatmul.mubr.bf16.gmra.mrb[0].mxu0 %v79
  %v161 = vpop.f32.mrb[0].mxu0
  %v162 = vadd.f32 %v48, %v161
  %v163 = vpop.f32.mrb[0].mxu0
  %v164 = vpop.f32.mrb[0].mxu0
  %v165 = vadd.f32 %v48, %v164
  %v166 = vpop.f32.mrb[0].mxu0
  %167 = vmatprep.mubr.bf16.mxu0 0
  %168 = vmatmul.mubr.bf16.gmra.mrb[0].mxu0 %v82
  %v169 = vpop.f32.mrb[0].mxu0
  %v170 = vadd.f32 %v48, %v169
  %v171 = vpop.f32.mrb[0].mxu0
  %v172 = vpop.f32.mrb[0].mxu0
  %v173 = vadd.f32 %v48, %v172
  %v174 = vpop.f32.mrb[0].mxu0
  %175 = vmatprep.mubr.bf16.mxu0 0
  %176 = vmatmul.mubr.bf16.gmra.mrb[0].mxu0 %v85
  %v177 = vpop.f32.mrb[0].mxu0
  %v178 = vadd.f32 %v48, %v177
  %v179 = vpop.f32.mrb[0].mxu0
  %v180 = vpop.f32.mrb[0].mxu0
  %v181 = vadd.f32 %v48, %v180
  %v182 = vpop.f32.mrb[0].mxu0
  %183 = vdwg.mxu0
  %184 = vst.msk [vmem:[%s3] sm:$0xff] %vm62, %v122
  %185 = vst.msk [vmem:[%s3 + $0x8] sm:$0xff] %vm62, %v125
  %186 = vst.msk [vmem:[%s3 + $0x10] sm:$0xff] %vm62, %v130
  %187 = vst.msk [vmem:[%s3 + $0x18] sm:$0xff] %vm62, %v133
  %188 = vst.msk [vmem:[%s3 + $0x20] sm:$0xff] %vm62, %v138
  %189 = vst.msk [vmem:[%s3 + $0x28] sm:$0xff] %vm62, %v141
  %190 = vst.msk [vmem:[%s3 + $0x30] sm:$0xff] %vm62, %v146
  %191 = vst.msk [vmem:[%s3 + $0x38] sm:$0xff] %vm62, %v149
  %192 = vst.msk [vmem:[%s3 + $0x40] sm:$0xff] %vm62, %v154
  %193 = vst.msk [vmem:[%s3 + $0x48] sm:$0xff] %vm62, %v157
  %194 = vst.msk [vmem:[%s3 + $0x50] sm:$0xff] %vm62, %v162
  %195 = vst.msk [vmem:[%s3 + $0x58] sm:$0xff] %vm62, %v165
  %196 = vst.msk [vmem:[%s3 + $0x60] sm:$0xff] %vm62, %v170
  %197 = vst.msk [vmem:[%s3 + $0x68] sm:$0xff] %vm62, %v173
  %198 = vst.msk [vmem:[%s3 + $0x70] sm:$0xff] %vm62, %v178
  %199 = vst.msk [vmem:[%s3 + $0x78] sm:$0xff] %vm62, %v181
  // Predicated region
  $region14: #{ssmlp_forward.24} parent=0 // pred_check
    _
  $region15: #{ssmlp_forward.24} parent=0 // pred_check_branch
    %201 = sbr.rel (0) target = $region17
  $region16: #{ssmlp_forward.24} parent=0 // pred_region
    _
  $region17: #{ssmlp_forward.24} parent=0 // pred_fallthru
    _
  // Predicated region
  $region18: #{ssmlp_forward.24} parent=0 // pred_check
    _
  $region19: #{ssmlp_forward.24} parent=0 // pred_check_branch
    %203 = sbr.rel (0) target = $region21
  $region20: #{ssmlp_forward.24} parent=0 // pred_region
    _
  $region21: #{ssmlp_forward.24} parent=0 // pred_fallthru
    _

// kernel: ssmlp_forward.25
$region0: #{ssmlp_forward.25}
  #allocation0 [shape = 'u32[]', space=smem, size = 0x4, offset = 0x4, fixed_abs, tag = 'smem constant byte address 0x4 - core index']
  #allocation1 [shape = 'u32[144,128]{1,0:T(1,128)}', space=vmem, size = 0x12000, scoped, tag = 'internal scratch']
  %s0 = inlined_call_operand.vmem [shape: f32[256,16], index: 0, kind: input, shape index: {}]
  %s1 = inlined_call_operand.vmem [shape: bf16[16,16], index: 1, kind: input, shape index: {}]
  %s2 = inlined_call_operand.vmem [shape: f32[1,16], index: 2, kind: input, shape index: {}]
  %s3 = inlined_call_operand.vmem [shape: f32[256,16], index: 3, kind: input, shape index: {}]
  %s4 = inlined_call_operand.vmem [shape: f32[256,16], index: 4, kind: output, shape index: {}]
  %s5 = sld [smem:[#allocation0]]
  $region26: #{ssmlp_forward.25} parent=0
    _
  %s7 = ssub.s32 1, %s5
  %s8 = scalar_select 0, %s7, %s5
  // Predicated region
  $region2: #{ssmlp_forward.25} parent=0 // pred_check
    _
  $region3: #{ssmlp_forward.25} parent=0 // pred_check_branch
    %10 = sbr.rel (0) target = $region5
  $region4: #{ssmlp_forward.25} parent=0 // pred_region
    _
  $region5: #{ssmlp_forward.25} parent=0 // pred_fallthru
    _
  // Predicated region
  $region6: #{ssmlp_forward.25} parent=0 // pred_check
    _
  $region7: #{ssmlp_forward.25} parent=0 // pred_check_branch
    %12 = sbr.rel (0) target = $region9
  $region8: #{ssmlp_forward.25} parent=0 // pred_region
    _
  $region9: #{ssmlp_forward.25} parent=0 // pred_fallthru
    _
  // Predicated region
  $region10: #{ssmlp_forward.25} parent=0 // pred_check
    _
  $region11: #{ssmlp_forward.25} parent=0 // pred_check_branch
    %14 = sbr.rel (0) target = $region13
  $region12: #{ssmlp_forward.25} parent=0 // pred_region
    _
  $region13: #{ssmlp_forward.25} parent=0 // pred_fallthru
    _
  // Predicated region
  $region14: #{ssmlp_forward.25} parent=0 // pred_check
    _
  $region15: #{ssmlp_forward.25} parent=0 // pred_check_branch
    %16 = sbr.rel (0) target = $region17
  $region16: #{ssmlp_forward.25} parent=0 // pred_region
    _
  $region17: #{ssmlp_forward.25} parent=0 // pred_fallthru
    _
  %v18 = vld [vmem:[%s0] sm:$0xff]
  %v19 = vld [vmem:[%s0 + $0x8] sm:$0xff]
  %v20 = vld [vmem:[%s0 + $0x10] sm:$0xff]
  %v21 = vld [vmem:[%s0 + $0x18] sm:$0xff]
  %v22 = vld [vmem:[%s0 + $0x20] sm:$0xff]
  %v23 = vld [vmem:[%s0 + $0x28] sm:$0xff]
  %v24 = vld [vmem:[%s0 + $0x30] sm:$0xff]
  %v25 = vld [vmem:[%s0 + $0x38] sm:$0xff]
  %v26 = vld [vmem:[%s0 + $0x40] sm:$0xff]
  %v27 = vld [vmem:[%s0 + $0x48] sm:$0xff]
  %v28 = vld [vmem:[%s0 + $0x50] sm:$0xff]
  %v29 = vld [vmem:[%s0 + $0x58] sm:$0xff]
  %v30 = vld [vmem:[%s0 + $0x60] sm:$0xff]
  %v31 = vld [vmem:[%s0 + $0x68] sm:$0xff]
  %v32 = vld [vmem:[%s0 + $0x70] sm:$0xff]
  %v33 = vld [vmem:[%s0 + $0x78] sm:$0xff]
  %v34 = vld [vmem:[%s0 + $0x80] sm:$0xff]
  %v35 = vld [vmem:[%s0 + $0x88] sm:$0xff]
  %v36 = vld [vmem:[%s0 + $0x90] sm:$0xff]
  %v37 = vld [vmem:[%s0 + $0x98] sm:$0xff]
  %v38 = vld [vmem:[%s0 + $0xa0] sm:$0xff]
  %v39 = vld [vmem:[%s0 + $0xa8] sm:$0xff]
  %v40 = vld [vmem:[%s0 + $0xb0] sm:$0xff]
  %v41 = vld [vmem:[%s0 + $0xb8] sm:$0xff]
  %v42 = vld [vmem:[%s0 + $0xc0] sm:$0xff]
  %v43 = vld [vmem:[%s0 + $0xc8] sm:$0xff]
  %v44 = vld [vmem:[%s0 + $0xd0] sm:$0xff]
  %v45 = vld [vmem:[%s0 + $0xd8] sm:$0xff]
  %v46 = vld [vmem:[%s0 + $0xe0] sm:$0xff]
  %v47 = vld [vmem:[%s0 + $0xe8] sm:$0xff]
  %v48 = vld [vmem:[%s0 + $0xf0] sm:$0xff]
  %v49 = vld [vmem:[%s0 + $0xf8] sm:$0xff]
  %v50 = vpack.c.bf16 %v19, %v18
  %v51 = vpack.c.bf16 %v21, %v20
  %v52 = vpack.c.bf16 %v23, %v22
  %v53 = vpack.c.bf16 %v25, %v24
  %v54 = vpack.c.bf16 %v27, %v26
  %v55 = vpack.c.bf16 %v29, %v28
  %v56 = vpack.c.bf16 %v31, %v30
  %v57 = vpack.c.bf16 %v33, %v32
  %v58 = vpack.c.bf16 %v35, %v34
  %v59 = vpack.c.bf16 %v37, %v36
  %v60 = vpack.c.bf16 %v39, %v38
  %v61 = vpack.c.bf16 %v41, %v40
  %v62 = vpack.c.bf16 %v43, %v42
  %v63 = vpack.c.bf16 %v45, %v44
  %v64 = vpack.c.bf16 %v47, %v46
  %v65 = vpack.c.bf16 %v49, %v48
  %v66 = vld [vmem:[%s1] sm:$0xf]
  %v67 = vld [vmem:[%s1 + $0x4] sm:$0xf]
  %v68 = vld [vmem:[%s2] sm:$0x1]
  %v70 = vlaneseq
  %v71 = vshrl.u32 %v70, 7
  %v72 = vsub.s32 0, %v71
  %v73 = vrot.slane %v68, %v72
  %v77 = vunpack.c.l.b16 %v66
  %v78 = vunpack.c.l.b16 %v67
  %v79 = vpack.c.b16 %v78, %v77
  %vm81 = vcmask 130048
  %v83 = vsel %vm81, %v50, 0
  %v86 = vsel %vm81, %v51, 0
  %v89 = vsel %vm81, %v52, 0
  %v92 = vsel %vm81, %v53, 0
  %v95 = vsel %vm81, %v54, 0
  %v98 = vsel %vm81, %v55, 0
  %v101 = vsel %vm81, %v56, 0
  %v104 = vsel %vm81, %v57, 0
  %v107 = vsel %vm81, %v58, 0
  %v110 = vsel %vm81, %v59, 0
  %v113 = vsel %vm81, %v60, 0
  %v116 = vsel %vm81, %v61, 0
  %v119 = vsel %vm81, %v62, 0
  %v122 = vsel %vm81, %v63, 0
  %v125 = vsel %vm81, %v64, 0
  %v128 = vsel %vm81, %v65, 0
  %130 = vmatprep.subr.bf16.mxu0 0
  %131 = vmatpush1.bf16.msra.mxu0 %v79
  %132 = vmatprep.subr.bf16.mxu0 0
  %133 = vmatpush1.bf16.msra.mxu0 0
  %134 = vmatprep.subr.bf16.mxu0 0
  %135 = vmatpush1.bf16.msra.mxu0 0
  %136 = vmatprep.subr.bf16.mxu0 0
  %137 = vmatpush1.bf16.msra.mxu0 0
  %138 = vmatprep.subr.bf16.mxu0 0
  %139 = vmatpush1.bf16.msra.mxu0 0
  %140 = vmatprep.subr.bf16.mxu0 0
  %141 = vmatpush1.bf16.msra.mxu0 0
  %142 = vmatprep.subr.bf16.mxu0 0
  %143 = vmatpush1.bf16.msra.mxu0 0
  %144 = vmatprep.subr.bf16.mxu0 0
  %145 = vmatpush1.bf16.msra.mxu0 0
  %146 = vmatprep.subr.bf16.mxu0 0
  %147 = vmatpush1.bf16.msra.mxu0 0
  %148 = vmatprep.subr.bf16.mxu0 0
  %149 = vmatpush1.bf16.msra.mxu0 0
  %150 = vmatprep.subr.bf16.mxu0 0
  %151 = vmatpush1.bf16.msra.mxu0 0
  %152 = vmatprep.subr.bf16.mxu0 0
  %153 = vmatpush1.bf16.msra.mxu0 0
  %154 = vmatprep.subr.bf16.mxu0 0
  %155 = vmatpush1.bf16.msra.mxu0 0
  %156 = vmatprep.subr.bf16.mxu0 0
  %157 = vmatpush1.bf16.msra.mxu0 0
  %158 = vmatprep.subr.bf16.mxu0 0
  %159 = vmatpush1.bf16.msra.mxu0 0
  %160 = vmatprep.subr.bf16.mxu0 0
  %161 = vmatpush1.bf16.msra.mxu0 0
  %162 = vmatprep.mubr.bf16.mxu0 0
  %163 = vmatmul.mubr.bf16.gmra.mrb[0].mxu0 %v83
  %v164 = vpop.f32.mrb[0].mxu0
  %v165 = vadd.f32 %v73, %v164
  %v166 = vpop.f32.mrb[0].mxu0
  %v167 = vpop.f32.mrb[0].mxu0
  %v168 = vadd.f32 %v73, %v167
  %v169 = vpop.f32.mrb[0].mxu0
  %170 = vmatprep.mubr.bf16.mxu0 0
  %171 = vmatmul.mubr.bf16.gmra.mrb[0].mxu0 %v86
  %v172 = vpop.f32.mrb[0].mxu0
  %v173 = vadd.f32 %v73, %v172
  %v174 = vpop.f32.mrb[0].mxu0
  %v175 = vpop.f32.mrb[0].mxu0
  %v176 = vadd.f32 %v73, %v175
  %v177 = vpop.f32.mrb[0].mxu0
  %178 = vmatprep.mubr.bf16.mxu0 0
  %179 = vmatmul.mubr.bf16.gmra.mrb[0].mxu0 %v89
  %v180 = vpop.f32.mrb[0].mxu0
  %v181 = vadd.f32 %v73, %v180
  %v182 = vpop.f32.mrb[0].mxu0
  %v183 = vpop.f32.mrb[0].mxu0
  %v184 = vadd.f32 %v73, %v183
  %v185 = vpop.f32.mrb[0].mxu0
  %186 = vmatprep.mubr.bf16.mxu0 0
  %187 = vmatmul.mubr.bf16.gmra.mrb[0].mxu0 %v92
  %v188 = vpop.f32.mrb[0].mxu0
  %v189 = vadd.f32 %v73, %v188
  %v190 = vpop.f32.mrb[0].mxu0
  %v191 = vpop.f32.mrb[0].mxu0
  %v192 = vadd.f32 %v73, %v191
  %v193 = vpop.f32.mrb[0].mxu0
  %194 = vmatprep.mubr.bf16.mxu0 0
  %195 = vmatmul.mubr.bf16.gmra.mrb[0].mxu0 %v95
  %v196 = vpop.f32.mrb[0].mxu0
  %v197 = vadd.f32 %v73, %v196
  %v198 = vpop.f32.mrb[0].mxu0
  %v199 = vpop.f32.mrb[0].mxu0
  %v200 = vadd.f32 %v73, %v199
  %v201 = vpop.f32.mrb[0].mxu0
  %202 = vmatprep.mubr.bf16.mxu0 0
  %203 = vmatmul.mubr.bf16.gmra.mrb[0].mxu0 %v98
  %v204 = vpop.f32.mrb[0].mxu0
  %v205 = vadd.f32 %v73, %v204
  %v206 = vpop.f32.mrb[0].mxu0
  %v207 = vpop.f32.mrb[0].mxu0
  %v208 = vadd.f32 %v73, %v207
  %v209 = vpop.f32.mrb[0].mxu0
  %210 = vmatprep.mubr.bf16.mxu0 0
  %211 = vmatmul.mubr.bf16.gmra.mrb[0].mxu0 %v101
  %v212 = vpop.f32.mrb[0].mxu0
  %v213 = vadd.f32 %v73, %v212
  %v214 = vpop.f32.mrb[0].mxu0
  %v215 = vpop.f32.mrb[0].mxu0
  %v216 = vadd.f32 %v73, %v215
  %v217 = vpop.f32.mrb[0].mxu0
  %218 = vmatprep.mubr.bf16.mxu0 0
  %219 = vmatmul.mubr.bf16.gmra.mrb[0].mxu0 %v104
  %v220 = vpop.f32.mrb[0].mxu0
  %v221 = vadd.f32 %v73, %v220
  %v222 = vpop.f32.mrb[0].mxu0
  %v223 = vpop.f32.mrb[0].mxu0
  %v224 = vadd.f32 %v73, %v223
  %v225 = vpop.f32.mrb[0].mxu0
  %226 = vmatprep.mubr.bf16.mxu0 0
  %227 = vmatmul.mubr.bf16.gmra.mrb[0].mxu0 %v107
  %v228 = vpop.f32.mrb[0].mxu0
  %v229 = vadd.f32 %v73, %v228
  %v230 = vpop.f32.mrb[0].mxu0
  %v231 = vpop.f32.mrb[0].mxu0
  %v232 = vadd.f32 %v73, %v231
  %v233 = vpop.f32.mrb[0].mxu0
  %234 = vmatprep.mubr.bf16.mxu0 0
  %235 = vmatmul.mubr.bf16.gmra.mrb[0].mxu0 %v110
  %v236 = vpop.f32.mrb[0].mxu0
  %v237 = vadd.f32 %v73, %v236
  %v238 = vpop.f32.mrb[0].mxu0
  %v239 = vpop.f32.mrb[0].mxu0
  %v240 = vadd.f32 %v73, %v239
  %v241 = vpop.f32.mrb[0].mxu0
  %242 = vmatprep.mubr.bf16.mxu0 0
  %243 = vmatmul.mubr.bf16.gmra.mrb[0].mxu0 %v113
  %v244 = vpop.f32.mrb[0].mxu0
  %v245 = vadd.f32 %v73, %v244
  %v246 = vpop.f32.mrb[0].mxu0
  %v247 = vpop.f32.mrb[0].mxu0
  %v248 = vadd.f32 %v73, %v247
  %v249 = vpop.f32.mrb[0].mxu0
  %250 = vmatprep.mubr.bf16.mxu0 0
  %251 = vmatmul.mubr.bf16.gmra.mrb[0].mxu0 %v116
  %v252 = vpop.f32.mrb[0].mxu0
  %v253 = vadd.f32 %v73, %v252
  %v254 = vpop.f32.mrb[0].mxu0
  %v255 = vpop.f32.mrb[0].mxu0
  %v256 = vadd.f32 %v73, %v255
  %v257 = vpop.f32.mrb[0].mxu0
  %258 = vmatprep.mubr.bf16.mxu0 0
  %259 = vmatmul.mubr.bf16.gmra.mrb[0].mxu0 %v119
  %v260 = vpop.f32.mrb[0].mxu0
  %v261 = vadd.f32 %v73, %v260
  %v262 = vpop.f32.mrb[0].mxu0
  %v263 = vpop.f32.mrb[0].mxu0
  %v264 = vadd.f32 %v73, %v263
  %v265 = vpop.f32.mrb[0].mxu0
  %266 = vmatprep.mubr.bf16.mxu0 0
  %267 = vmatmul.mubr.bf16.gmra.mrb[0].mxu0 %v122
  %v268 = vpop.f32.mrb[0].mxu0
  %v269 = vadd.f32 %v73, %v268
  %v270 = vpop.f32.mrb[0].mxu0
  %v271 = vpop.f32.mrb[0].mxu0
  %v272 = vadd.f32 %v73, %v271
  %v273 = vpop.f32.mrb[0].mxu0
  %274 = vmatprep.mubr.bf16.mxu0 0
  %275 = vmatmul.mubr.bf16.gmra.mrb[0].mxu0 %v125
  %v276 = vpop.f32.mrb[0].mxu0
  %v277 = vadd.f32 %v73, %v276
  %v278 = vpop.f32.mrb[0].mxu0
  %v279 = vpop.f32.mrb[0].mxu0
  %v280 = vadd.f32 %v73, %v279
  %v281 = vpop.f32.mrb[0].mxu0
  %282 = vmatprep.mubr.bf16.mxu0 0
  %283 = vmatmul.mubr.bf16.gmra.mrb[0].mxu0 %v128
  %v284 = vpop.f32.mrb[0].mxu0
  %v285 = vadd.f32 %v73, %v284
  %v286 = vpop.f32.mrb[0].mxu0
  %v287 = vpop.f32.mrb[0].mxu0
  %v288 = vadd.f32 %v73, %v287
  %v289 = vpop.f32.mrb[0].mxu0
  %290 = vdwg.mxu0
  %v291 = vld [vmem:[%s3] sm:$0xff]
  %v292 = vld [vmem:[%s3 + $0x8] sm:$0xff]
  %v293 = vld [vmem:[%s3 + $0x10] sm:$0xff]
  %v294 = vld [vmem:[%s3 + $0x18] sm:$0xff]
  %v295 = vld [vmem:[%s3 + $0x20] sm:$0xff]
  %v296 = vld [vmem:[%s3 + $0x28] sm:$0xff]
  %v297 = vld [vmem:[%s3 + $0x30] sm:$0xff]
  %v298 = vld [vmem:[%s3 + $0x38] sm:$0xff]
  %v299 = vld [vmem:[%s3 + $0x40] sm:$0xff]
  %v300 = vld [vmem:[%s3 + $0x48] sm:$0xff]
  %v301 = vld [vmem:[%s3 + $0x50] sm:$0xff]
  %v302 = vld [vmem:[%s3 + $0x58] sm:$0xff]
  %v303 = vld [vmem:[%s3 + $0x60] sm:$0xff]
  %v304 = vld [vmem:[%s3 + $0x68] sm:$0xff]
  %v305 = vld [vmem:[%s3 + $0x70] sm:$0xff]
  %v306 = vld [vmem:[%s3 + $0x78] sm:$0xff]
  %v307 = vld [vmem:[%s3 + $0x80] sm:$0xff]
  %v308 = vld [vmem:[%s3 + $0x88] sm:$0xff]
  %v309 = vld [vmem:[%s3 + $0x90] sm:$0xff]
  %v310 = vld [vmem:[%s3 + $0x98] sm:$0xff]
  %v311 = vld [vmem:[%s3 + $0xa0] sm:$0xff]
  %v312 = vld [vmem:[%s3 + $0xa8] sm:$0xff]
  %v313 = vld [vmem:[%s3 + $0xb0] sm:$0xff]
  %v314 = vld [vmem:[%s3 + $0xb8] sm:$0xff]
  %v315 = vld [vmem:[%s3 + $0xc0] sm:$0xff]
  %v316 = vld [vmem:[%s3 + $0xc8] sm:$0xff]
  %v317 = vld [vmem:[%s3 + $0xd0] sm:$0xff]
  %v318 = vld [vmem:[%s3 + $0xd8] sm:$0xff]
  %v319 = vld [vmem:[%s3 + $0xe0] sm:$0xff]
  %v320 = vld [vmem:[%s3 + $0xe8] sm:$0xff]
  %v321 = vld [vmem:[%s3 + $0xf0] sm:$0xff]
  %v322 = vld [vmem:[%s3 + $0xf8] sm:$0xff]
  %v323 = vadd.f32 %v165, %v291
  %v324 = vadd.f32 %v168, %v292
  %v325 = vadd.f32 %v173, %v293
  %v326 = vadd.f32 %v176, %v294
  %v327 = vadd.f32 %v181, %v295
  %v328 = vadd.f32 %v184, %v296
  %v329 = vadd.f32 %v189, %v297
  %v330 = vadd.f32 %v192, %v298
  %v331 = vadd.f32 %v197, %v299
  %v332 = vadd.f32 %v200, %v300
  %v333 = vadd.f32 %v205, %v301
  %v334 = vadd.f32 %v208, %v302
  %v335 = vadd.f32 %v213, %v303
  %v336 = vadd.f32 %v216, %v304
  %v337 = vadd.f32 %v221, %v305
  %v338 = vadd.f32 %v224, %v306
  %v339 = vadd.f32 %v229, %v307
  %v340 = vadd.f32 %v232, %v308
  %v341 = vadd.f32 %v237, %v309
  %v342 = vadd.f32 %v240, %v310
  %v343 = vadd.f32 %v245, %v311
  %v344 = vadd.f32 %v248, %v312
  %v345 = vadd.f32 %v253, %v313
  %v346 = vadd.f32 %v256, %v314
  %v347 = vadd.f32 %v261, %v315
  %v348 = vadd.f32 %v264, %v316
  %v349 = vadd.f32 %v269, %v317
  %v350 = vadd.f32 %v272, %v318
  %v351 = vadd.f32 %v277, %v319
  %v352 = vadd.f32 %v280, %v320
  %v353 = vadd.f32 %v285, %v321
  %v354 = vadd.f32 %v288, %v322
  %355 = vst.msk [vmem:[%s4] sm:$0xff] %vm81, %v323
  %356 = vst.msk [vmem:[%s4 + $0x8] sm:$0xff] %vm81, %v324
  %357 = vst.msk [vmem:[%s4 + $0x10] sm:$0xff] %vm81, %v325
  %358 = vst.msk [vmem:[%s4 + $0x18] sm:$0xff] %vm81, %v326
  %359 = vst.msk [vmem:[%s4 + $0x20] sm:$0xff] %vm81, %v327
  %360 = vst.msk [vmem:[%s4 + $0x28] sm:$0xff] %vm81, %v328
  %361 = vst.msk [vmem:[%s4 + $0x30] sm:$0xff] %vm81, %v329
  %362 = vst.msk [vmem:[%s4 + $0x38] sm:$0xff] %vm81, %v330
  %363 = vst.msk [vmem:[%s4 + $0x40] sm:$0xff] %vm81, %v331
  %364 = vst.msk [vmem:[%s4 + $0x48] sm:$0xff] %vm81, %v332
  %365 = vst.msk [vmem:[%s4 + $0x50] sm:$0xff] %vm81, %v333
  %366 = vst.msk [vmem:[%s4 + $0x58] sm:$0xff] %vm81, %v334
  %367 = vst.msk [vmem:[%s4 + $0x60] sm:$0xff] %vm81, %v335
  %368 = vst.msk [vmem:[%s4 + $0x68] sm:$0xff] %vm81, %v336
  %369 = vst.msk [vmem:[%s4 + $0x70] sm:$0xff] %vm81, %v337
  %370 = vst.msk [vmem:[%s4 + $0x78] sm:$0xff] %vm81, %v338
  %371 = vst.msk [vmem:[%s4 + $0x80] sm:$0xff] %vm81, %v339
  %372 = vst.msk [vmem:[%s4 + $0x88] sm:$0xff] %vm81, %v340
  %373 = vst.msk [vmem:[%s4 + $0x90] sm:$0xff] %vm81, %v341
  %374 = vst.msk [vmem:[%s4 + $0x98] sm:$0xff] %vm81, %v342
  %375 = vst.msk [vmem:[%s4 + $0xa0] sm:$0xff] %vm81, %v343
  %376 = vst.msk [vmem:[%s4 + $0xa8] sm:$0xff] %vm81, %v344
  %377 = vst.msk [vmem:[%s4 + $0xb0] sm:$0xff] %vm81, %v345
  %378 = vst.msk [vmem:[%s4 + $0xb8] sm:$0xff] %vm81, %v346
  %379 = vst.msk [vmem:[%s4 + $0xc0] sm:$0xff] %vm81, %v347
  %380 = vst.msk [vmem:[%s4 + $0xc8] sm:$0xff] %vm81, %v348
  %381 = vst.msk [vmem:[%s4 + $0xd0] sm:$0xff] %vm81, %v349
  %382 = vst.msk [vmem:[%s4 + $0xd8] sm:$0xff] %vm81, %v350
  %383 = vst.msk [vmem:[%s4 + $0xe0] sm:$0xff] %vm81, %v351
  %384 = vst.msk [vmem:[%s4 + $0xe8] sm:$0xff] %vm81, %v352
  %385 = vst.msk [vmem:[%s4 + $0xf0] sm:$0xff] %vm81, %v353
  %386 = vst.msk [vmem:[%s4 + $0xf8] sm:$0xff] %vm81, %v354
  // Predicated region
  $region18: #{ssmlp_forward.25} parent=0 // pred_check
    _
  $region19: #{ssmlp_forward.25} parent=0 // pred_check_branch
    %388 = sbr.rel (0) target = $region21
  $region20: #{ssmlp_forward.25} parent=0 // pred_region
    _
  $region21: #{ssmlp_forward.25} parent=0 // pred_fallthru
    _
  // Predicated region
  $region22: #{ssmlp_forward.25} parent=0 // pred_check
    _
  $region23: #{ssmlp_forward.25} parent=0 // pred_check_branch
    %390 = sbr.rel (0) target = $region25
  $region24: #{ssmlp_forward.25} parent=0 // pred_region
    _
  $region25: #{ssmlp_forward.25} parent=0 // pred_fallthru
    _

// kernel: ssmlp_forward.28
$region0: #{ssmlp_forward.28}
  #allocation0 [shape = 'u32[]', space=smem, size = 0x4, offset = 0x4, fixed_abs, tag = 'smem constant byte address 0x4 - core index']
  #allocation1 [shape = 'u32[144,128]{1,0:T(1,128)}', space=vmem, size = 0x12000, scoped, tag = 'internal scratch']
  %s0 = inlined_call_operand.vmem [shape: f32[256,16], index: 0, kind: input, shape index: {}]
  %s1 = inlined_call_operand.vmem [shape: bf16[16,16], index: 1, kind: input, shape index: {}]
  %s2 = inlined_call_operand.vmem [shape: f32[1,16], index: 2, kind: input, shape index: {}]
  %s3 = inlined_call_operand.vmem [shape: f32[256,16], index: 3, kind: output, shape index: {}]
  %s4 = sld [smem:[#allocation0]]
  $region22: #{ssmlp_forward.28} parent=0
    _
  %s6 = ssub.s32 1, %s4
  %s7 = scalar_select 0, %s6, %s4
  // Predicated region
  $region2: #{ssmlp_forward.28} parent=0 // pred_check
    _
  $region3: #{ssmlp_forward.28} parent=0 // pred_check_branch
    %9 = sbr.rel (0) target = $region5
  $region4: #{ssmlp_forward.28} parent=0 // pred_region
    _
  $region5: #{ssmlp_forward.28} parent=0 // pred_fallthru
    _
  // Predicated region
  $region6: #{ssmlp_forward.28} parent=0 // pred_check
    _
  $region7: #{ssmlp_forward.28} parent=0 // pred_check_branch
    %11 = sbr.rel (0) target = $region9
  $region8: #{ssmlp_forward.28} parent=0 // pred_region
    _
  $region9: #{ssmlp_forward.28} parent=0 // pred_fallthru
    _
  // Predicated region
  $region10: #{ssmlp_forward.28} parent=0 // pred_check
    _
  $region11: #{ssmlp_forward.28} parent=0 // pred_check_branch
    %13 = sbr.rel (0) target = $region13
  $region12: #{ssmlp_forward.28} parent=0 // pred_region
    _
  $region13: #{ssmlp_forward.28} parent=0 // pred_fallthru
    _
  %v15 = vld [vmem:[%s0] sm:$0xff]
  %v16 = vld [vmem:[%s0 + $0x8] sm:$0xff]
  %v17 = vld [vmem:[%s0 + $0x10] sm:$0xff]
  %v18 = vld [vmem:[%s0 + $0x18] sm:$0xff]
  %v19 = vld [vmem:[%s0 + $0x20] sm:$0xff]
  %v20 = vld [vmem:[%s0 + $0x28] sm:$0xff]
  %v21 = vld [vmem:[%s0 + $0x30] sm:$0xff]
  %v22 = vld [vmem:[%s0 + $0x38] sm:$0xff]
  %v23 = vld [vmem:[%s0 + $0x40] sm:$0xff]
  %v24 = vld [vmem:[%s0 + $0x48] sm:$0xff]
  %v25 = vld [vmem:[%s0 + $0x50] sm:$0xff]
  %v26 = vld [vmem:[%s0 + $0x58] sm:$0xff]
  %v27 = vld [vmem:[%s0 + $0x60] sm:$0xff]
  %v28 = vld [vmem:[%s0 + $0x68] sm:$0xff]
  %v29 = vld [vmem:[%s0 + $0x70] sm:$0xff]
  %v30 = vld [vmem:[%s0 + $0x78] sm:$0xff]
  %v31 = vld [vmem:[%s0 + $0x80] sm:$0xff]
  %v32 = vld [vmem:[%s0 + $0x88] sm:$0xff]
  %v33 = vld [vmem:[%s0 + $0x90] sm:$0xff]
  %v34 = vld [vmem:[%s0 + $0x98] sm:$0xff]
  %v35 = vld [vmem:[%s0 + $0xa0] sm:$0xff]
  %v36 = vld [vmem:[%s0 + $0xa8] sm:$0xff]
  %v37 = vld [vmem:[%s0 + $0xb0] sm:$0xff]
  %v38 = vld [vmem:[%s0 + $0xb8] sm:$0xff]
  %v39 = vld [vmem:[%s0 + $0xc0] sm:$0xff]
  %v40 = vld [vmem:[%s0 + $0xc8] sm:$0xff]
  %v41 = vld [vmem:[%s0 + $0xd0] sm:$0xff]
  %v42 = vld [vmem:[%s0 + $0xd8] sm:$0xff]
  %v43 = vld [vmem:[%s0 + $0xe0] sm:$0xff]
  %v44 = vld [vmem:[%s0 + $0xe8] sm:$0xff]
  %v45 = vld [vmem:[%s0 + $0xf0] sm:$0xff]
  %v46 = vld [vmem:[%s0 + $0xf8] sm:$0xff]
  %v47 = vpack.c.bf16 %v16, %v15
  %v48 = vpack.c.bf16 %v18, %v17
  %v49 = vpack.c.bf16 %v20, %v19
  %v50 = vpack.c.bf16 %v22, %v21
  %v51 = vpack.c.bf16 %v24, %v23
  %v52 = vpack.c.bf16 %v26, %v25
  %v53 = vpack.c.bf16 %v28, %v27
  %v54 = vpack.c.bf16 %v30, %v29
  %v55 = vpack.c.bf16 %v32, %v31
  %v56 = vpack.c.bf16 %v34, %v33
  %v57 = vpack.c.bf16 %v36, %v35
  %v58 = vpack.c.bf16 %v38, %v37
  %v59 = vpack.c.bf16 %v40, %v39
  %v60 = vpack.c.bf16 %v42, %v41
  %v61 = vpack.c.bf16 %v44, %v43
  %v62 = vpack.c.bf16 %v46, %v45
  %v63 = vld [vmem:[%s1] sm:$0xf]
  %v64 = vld [vmem:[%s1 + $0x4] sm:$0xf]
  %v65 = vld [vmem:[%s2] sm:$0x1]
  %v67 = vlaneseq
  %v68 = vshrl.u32 %v67, 7
  %v69 = vsub.s32 0, %v68
  %v70 = vrot.slane %v65, %v69
  %v74 = vunpack.c.l.b16 %v63
  %v75 = vunpack.c.l.b16 %v64
  %v76 = vpack.c.b16 %v75, %v74
  %vm78 = vcmask 130048
  %v80 = vsel %vm78, %v47, 0
  %v83 = vsel %vm78, %v48, 0
  %v86 = vsel %vm78, %v49, 0
  %v89 = vsel %vm78, %v50, 0
  %v92 = vsel %vm78, %v51, 0
  %v95 = vsel %vm78, %v52, 0
  %v98 = vsel %vm78, %v53, 0
  %v101 = vsel %vm78, %v54, 0
  %v104 = vsel %vm78, %v55, 0
  %v107 = vsel %vm78, %v56, 0
  %v110 = vsel %vm78, %v57, 0
  %v113 = vsel %vm78, %v58, 0
  %v116 = vsel %vm78, %v59, 0
  %v119 = vsel %vm78, %v60, 0
  %v122 = vsel %vm78, %v61, 0
  %v125 = vsel %vm78, %v62, 0
  %127 = vmatprep.subr.bf16.mxu0 0
  %128 = vmatpush1.bf16.msra.mxu0 %v76
  %129 = vmatprep.subr.bf16.mxu0 0
  %130 = vmatpush1.bf16.msra.mxu0 0
  %131 = vmatprep.subr.bf16.mxu0 0
  %132 = vmatpush1.bf16.msra.mxu0 0
  %133 = vmatprep.subr.bf16.mxu0 0
  %134 = vmatpush1.bf16.msra.mxu0 0
  %135 = vmatprep.subr.bf16.mxu0 0
  %136 = vmatpush1.bf16.msra.mxu0 0
  %137 = vmatprep.subr.bf16.mxu0 0
  %138 = vmatpush1.bf16.msra.mxu0 0
  %139 = vmatprep.subr.bf16.mxu0 0
  %140 = vmatpush1.bf16.msra.mxu0 0
  %141 = vmatprep.subr.bf16.mxu0 0
  %142 = vmatpush1.bf16.msra.mxu0 0
  %143 = vmatprep.subr.bf16.mxu0 0
  %144 = vmatpush1.bf16.msra.mxu0 0
  %145 = vmatprep.subr.bf16.mxu0 0
  %146 = vmatpush1.bf16.msra.mxu0 0
  %147 = vmatprep.subr.bf16.mxu0 0
  %148 = vmatpush1.bf16.msra.mxu0 0
  %149 = vmatprep.subr.bf16.mxu0 0
  %150 = vmatpush1.bf16.msra.mxu0 0
  %151 = vmatprep.subr.bf16.mxu0 0
  %152 = vmatpush1.bf16.msra.mxu0 0
  %153 = vmatprep.subr.bf16.mxu0 0
  %154 = vmatpush1.bf16.msra.mxu0 0
  %155 = vmatprep.subr.bf16.mxu0 0
  %156 = vmatpush1.bf16.msra.mxu0 0
  %157 = vmatprep.subr.bf16.mxu0 0
  %158 = vmatpush1.bf16.msra.mxu0 0
  %159 = vmatprep.mubr.bf16.mxu0 0
  %160 = vmatmul.mubr.bf16.gmra.mrb[0].mxu0 %v80
  %v161 = vpop.f32.mrb[0].mxu0
  %v162 = vadd.f32 %v70, %v161
  %v163 = vpop.f32.mrb[0].mxu0
  %v164 = vpop.f32.mrb[0].mxu0
  %v165 = vadd.f32 %v70, %v164
  %v166 = vpop.f32.mrb[0].mxu0
  %167 = vmatprep.mubr.bf16.mxu0 0
  %168 = vmatmul.mubr.bf16.gmra.mrb[0].mxu0 %v83
  %v169 = vpop.f32.mrb[0].mxu0
  %v170 = vadd.f32 %v70, %v169
  %v171 = vpop.f32.mrb[0].mxu0
  %v172 = vpop.f32.mrb[0].mxu0
  %v173 = vadd.f32 %v70, %v172
  %v174 = vpop.f32.mrb[0].mxu0
  %175 = vmatprep.mubr.bf16.mxu0 0
  %176 = vmatmul.mubr.bf16.gmra.mrb[0].mxu0 %v86
  %v177 = vpop.f32.mrb[0].mxu0
  %v178 = vadd.f32 %v70, %v177
  %v179 = vpop.f32.mrb[0].mxu0
  %v180 = vpop.f32.mrb[0].mxu0
  %v181 = vadd.f32 %v70, %v180
  %v182 = vpop.f32.mrb[0].mxu0
  %183 = vmatprep.mubr.bf16.mxu0 0
  %184 = vmatmul.mubr.bf16.gmra.mrb[0].mxu0 %v89
  %v185 = vpop.f32.mrb[0].mxu0
  %v186 = vadd.f32 %v70, %v185
  %v187 = vpop.f32.mrb[0].mxu0
  %v188 = vpop.f32.mrb[0].mxu0
  %v189 = vadd.f32 %v70, %v188
  %v190 = vpop.f32.mrb[0].mxu0
  %191 = vmatprep.mubr.bf16.mxu0 0
  %192 = vmatmul.mubr.bf16.gmra.mrb[0].mxu0 %v92
  %v193 = vpop.f32.mrb[0].mxu0
  %v194 = vadd.f32 %v70, %v193
  %v195 = vpop.f32.mrb[0].mxu0
  %v196 = vpop.f32.mrb[0].mxu0
  %v197 = vadd.f32 %v70, %v196
  %v198 = vpop.f32.mrb[0].mxu0
  %199 = vmatprep.mubr.bf16.mxu0 0
  %200 = vmatmul.mubr.bf16.gmra.mrb[0].mxu0 %v95
  %v201 = vpop.f32.mrb[0].mxu0
  %v202 = vadd.f32 %v70, %v201
  %v203 = vpop.f32.mrb[0].mxu0
  %v204 = vpop.f32.mrb[0].mxu0
  %v205 = vadd.f32 %v70, %v204
  %v206 = vpop.f32.mrb[0].mxu0
  %207 = vmatprep.mubr.bf16.mxu0 0
  %208 = vmatmul.mubr.bf16.gmra.mrb[0].mxu0 %v98
  %v209 = vpop.f32.mrb[0].mxu0
  %v210 = vadd.f32 %v70, %v209
  %v211 = vpop.f32.mrb[0].mxu0
  %v212 = vpop.f32.mrb[0].mxu0
  %v213 = vadd.f32 %v70, %v212
  %v214 = vpop.f32.mrb[0].mxu0
  %215 = vmatprep.mubr.bf16.mxu0 0
  %216 = vmatmul.mubr.bf16.gmra.mrb[0].mxu0 %v101
  %v217 = vpop.f32.mrb[0].mxu0
  %v218 = vadd.f32 %v70, %v217
  %v219 = vpop.f32.mrb[0].mxu0
  %v220 = vpop.f32.mrb[0].mxu0
  %v221 = vadd.f32 %v70, %v220
  %v222 = vpop.f32.mrb[0].mxu0
  %223 = vmatprep.mubr.bf16.mxu0 0
  %224 = vmatmul.mubr.bf16.gmra.mrb[0].mxu0 %v104
  %v225 = vpop.f32.mrb[0].mxu0
  %v226 = vadd.f32 %v70, %v225
  %v227 = vpop.f32.mrb[0].mxu0
  %v228 = vpop.f32.mrb[0].mxu0
  %v229 = vadd.f32 %v70, %v228
  %v230 = vpop.f32.mrb[0].mxu0
  %231 = vmatprep.mubr.bf16.mxu0 0
  %232 = vmatmul.mubr.bf16.gmra.mrb[0].mxu0 %v107
  %v233 = vpop.f32.mrb[0].mxu0
  %v234 = vadd.f32 %v70, %v233
  %v235 = vpop.f32.mrb[0].mxu0
  %v236 = vpop.f32.mrb[0].mxu0
  %v237 = vadd.f32 %v70, %v236
  %v238 = vpop.f32.mrb[0].mxu0
  %239 = vmatprep.mubr.bf16.mxu0 0
  %240 = vmatmul.mubr.bf16.gmra.mrb[0].mxu0 %v110
  %v241 = vpop.f32.mrb[0].mxu0
  %v242 = vadd.f32 %v70, %v241
  %v243 = vpop.f32.mrb[0].mxu0
  %v244 = vpop.f32.mrb[0].mxu0
  %v245 = vadd.f32 %v70, %v244
  %v246 = vpop.f32.mrb[0].mxu0
  %247 = vmatprep.mubr.bf16.mxu0 0
  %248 = vmatmul.mubr.bf16.gmra.mrb[0].mxu0 %v113
  %v249 = vpop.f32.mrb[0].mxu0
  %v250 = vadd.f32 %v70, %v249
  %v251 = vpop.f32.mrb[0].mxu0
  %v252 = vpop.f32.mrb[0].mxu0
  %v253 = vadd.f32 %v70, %v252
  %v254 = vpop.f32.mrb[0].mxu0
  %255 = vmatprep.mubr.bf16.mxu0 0
  %256 = vmatmul.mubr.bf16.gmra.mrb[0].mxu0 %v116
  %v257 = vpop.f32.mrb[0].mxu0
  %v258 = vadd.f32 %v70, %v257
  %v259 = vpop.f32.mrb[0].mxu0
  %v260 = vpop.f32.mrb[0].mxu0
  %v261 = vadd.f32 %v70, %v260
  %v262 = vpop.f32.mrb[0].mxu0
  %263 = vmatprep.mubr.bf16.mxu0 0
  %264 = vmatmul.mubr.bf16.gmra.mrb[0].mxu0 %v119
  %v265 = vpop.f32.mrb[0].mxu0
  %v266 = vadd.f32 %v70, %v265
  %v267 = vpop.f32.mrb[0].mxu0
  %v268 = vpop.f32.mrb[0].mxu0
  %v269 = vadd.f32 %v70, %v268
  %v270 = vpop.f32.mrb[0].mxu0
  %271 = vmatprep.mubr.bf16.mxu0 0
  %272 = vmatmul.mubr.bf16.gmra.mrb[0].mxu0 %v122
  %v273 = vpop.f32.mrb[0].mxu0
  %v274 = vadd.f32 %v70, %v273
  %v275 = vpop.f32.mrb[0].mxu0
  %v276 = vpop.f32.mrb[0].mxu0
  %v277 = vadd.f32 %v70, %v276
  %v278 = vpop.f32.mrb[0].mxu0
  %279 = vmatprep.mubr.bf16.mxu0 0
  %280 = vmatmul.mubr.bf16.gmra.mrb[0].mxu0 %v125
  %v281 = vpop.f32.mrb[0].mxu0
  %v282 = vadd.f32 %v70, %v281
  %v283 = vpop.f32.mrb[0].mxu0
  %v284 = vpop.f32.mrb[0].mxu0
  %v285 = vadd.f32 %v70, %v284
  %v286 = vpop.f32.mrb[0].mxu0
  %287 = vdwg.mxu0
  %288 = vst.msk [vmem:[%s3] sm:$0xff] %vm78, %v162
  %289 = vst.msk [vmem:[%s3 + $0x8] sm:$0xff] %vm78, %v165
  %290 = vst.msk [vmem:[%s3 + $0x10] sm:$0xff] %vm78, %v170
  %291 = vst.msk [vmem:[%s3 + $0x18] sm:$0xff] %vm78, %v173
  %292 = vst.msk [vmem:[%s3 + $0x20] sm:$0xff] %vm78, %v178
  %293 = vst.msk [vmem:[%s3 + $0x28] sm:$0xff] %vm78, %v181
  %294 = vst.msk [vmem:[%s3 + $0x30] sm:$0xff] %vm78, %v186
  %295 = vst.msk [vmem:[%s3 + $0x38] sm:$0xff] %vm78, %v189
  %296 = vst.msk [vmem:[%s3 + $0x40] sm:$0xff] %vm78, %v194
  %297 = vst.msk [vmem:[%s3 + $0x48] sm:$0xff] %vm78, %v197
  %298 = vst.msk [vmem:[%s3 + $0x50] sm:$0xff] %vm78, %v202
  %299 = vst.msk [vmem:[%s3 + $0x58] sm:$0xff] %vm78, %v205
  %300 = vst.msk [vmem:[%s3 + $0x60] sm:$0xff] %vm78, %v210
  %301 = vst.msk [vmem:[%s3 + $0x68] sm:$0xff] %vm78, %v213
  %302 = vst.msk [vmem:[%s3 + $0x70] sm:$0xff] %vm78, %v218
  %303 = vst.msk [vmem:[%s3 + $0x78] sm:$0xff] %vm78, %v221
  %304 = vst.msk [vmem:[%s3 + $0x80] sm:$0xff] %vm78, %v226
  %305 = vst.msk [vmem:[%s3 + $0x88] sm:$0xff] %vm78, %v229
  %306 = vst.msk [vmem:[%s3 + $0x90] sm:$0xff] %vm78, %v234
  %307 = vst.msk [vmem:[%s3 + $0x98] sm:$0xff] %vm78, %v237
  %308 = vst.msk [vmem:[%s3 + $0xa0] sm:$0xff] %vm78, %v242
  %309 = vst.msk [vmem:[%s3 + $0xa8] sm:$0xff] %vm78, %v245
  %310 = vst.msk [vmem:[%s3 + $0xb0] sm:$0xff] %vm78, %v250
  %311 = vst.msk [vmem:[%s3 + $0xb8] sm:$0xff] %vm78, %v253
  %312 = vst.msk [vmem:[%s3 + $0xc0] sm:$0xff] %vm78, %v258
  %313 = vst.msk [vmem:[%s3 + $0xc8] sm:$0xff] %vm78, %v261
  %314 = vst.msk [vmem:[%s3 + $0xd0] sm:$0xff] %vm78, %v266
  %315 = vst.msk [vmem:[%s3 + $0xd8] sm:$0xff] %vm78, %v269
  %316 = vst.msk [vmem:[%s3 + $0xe0] sm:$0xff] %vm78, %v274
  %317 = vst.msk [vmem:[%s3 + $0xe8] sm:$0xff] %vm78, %v277
  %318 = vst.msk [vmem:[%s3 + $0xf0] sm:$0xff] %vm78, %v282
  %319 = vst.msk [vmem:[%s3 + $0xf8] sm:$0xff] %vm78, %v285
  // Predicated region
  $region14: #{ssmlp_forward.28} parent=0 // pred_check
    _
  $region15: #{ssmlp_forward.28} parent=0 // pred_check_branch
    %321 = sbr.rel (0) target = $region17
  $region16: #{ssmlp_forward.28} parent=0 // pred_region
    _
  $region17: #{ssmlp_forward.28} parent=0 // pred_fallthru
    _
  // Predicated region
  $region18: #{ssmlp_forward.28} parent=0 // pred_check
    _
  $region19: #{ssmlp_forward.28} parent=0 // pred_check_branch
    %323 = sbr.rel (0) target = $region21
  $region20: #{ssmlp_forward.28} parent=0 // pred_region
    _
  $region21: #{ssmlp_forward.28} parent=0 // pred_fallthru
    _

// kernel: ssmlp_forward.41
$region0: #{ssmlp_forward.41}
  #allocation0 [shape = 'u32[]', space=smem, size = 0x4, offset = 0x4, fixed_abs, tag = 'smem constant byte address 0x4 - core index']
  #allocation1 [shape = 'u32[144,128]{1,0:T(1,128)}', space=vmem, size = 0x12000, scoped, tag = 'internal scratch']
  #allocation2 [shape = 'f32[2,16]{1,0:T(2,128)}', space=vmem, size = 0x400, scoped, tag = 'scratch operand']
  %s0 = inlined_call_operand.vmem [shape: f32[2,128,16], index: 0, kind: input, shape index: {}]
  %s1 = inlined_call_operand.vmem [shape: f32[1,16], index: 1, kind: input, shape index: {}]
  %s2 = inlined_call_operand.vmem [shape: f32[1,16], index: 2, kind: input, shape index: {}]
  %s3 = inlined_call_operand.vmem [shape: bf16[16,5], index: 3, kind: input, shape index: {}]
  %s4 = inlined_call_operand.vmem [shape: f32[1,5], index: 4, kind: input, shape index: {}]
  %s5 = inlined_call_operand.hbm [shape: f32[2,16], index: 5, kind: output, shape index: {0}]
  %s6 = inlined_call_operand.hbm [shape: f32[2,5], index: 6, kind: output, shape index: {1}]
  %7 = xla_tuple %s5, %s6
  %s8 = sld [smem:[#allocation0]]
  $region46: #{ssmlp_forward.41} parent=0
    _
  %s10 = ssub.s32 1, %s8
  %s11 = scalar_select 0, %s10, %s8
  $region1: #{ssmlp_forward.41} parent=0
    #allocation3 [shape = 'u8[1024]{0}', space=vmem, size = 0x400, scoped, tag = 'output window, operand 0, single buffered']
    #allocation4 [shape = 's32[1]{0}', space=sflag, size = 0x4, scoped, tag = 'scoped memory for ssmlp_forward.41']
    #allocation5 [shape = 'u8[1024]{0}', space=vmem, size = 0x400, scoped, tag = 'output window, operand 1, single buffered']
    #allocation6 [shape = 's32[1]{0}', space=sflag, size = 0x4, scoped, tag = 'scoped memory for ssmlp_forward.41']
    %12 = vsyncpa [#allocation4], 0
    %13 = vsyncpa [#allocation6], 0
    // Predicated region
    $region2: #{ssmlp_forward.41} parent=1 // pred_check
      _
    $region3: #{ssmlp_forward.41} parent=1 // pred_check_branch
      %15 = sbr.rel (0) target = $region5
    $region4: #{ssmlp_forward.41} parent=1 // pred_region
      _
    $region5: #{ssmlp_forward.41} parent=1 // pred_fallthru
      _
    // Predicated region
    $region6: #{ssmlp_forward.41} parent=1 // pred_check
      _
    $region7: #{ssmlp_forward.41} parent=1 // pred_check_branch
      %17 = sbr.rel (0) target = $region9
    $region8: #{ssmlp_forward.41} parent=1 // pred_region
      _
    $region9: #{ssmlp_forward.41} parent=1 // pred_fallthru
      _
    // Predicated region
    $region10: #{ssmlp_forward.41} parent=1 // pred_check
      _
    $region11: #{ssmlp_forward.41} parent=1 // pred_check_branch
      %19 = sbr.rel (0) target = $region13
    $region12: #{ssmlp_forward.41} parent=1 // pred_region
      _
    $region13: #{ssmlp_forward.41} parent=1 // pred_fallthru
      _
    // Predicated region
    $region14: #{ssmlp_forward.41} parent=1 // pred_check
      _
    $region15: #{ssmlp_forward.41} parent=1 // pred_check_branch
      %21 = sbr.rel (0) target = $region17
    $region16: #{ssmlp_forward.41} parent=1 // pred_region
      _
    $region17: #{ssmlp_forward.41} parent=1 // pred_fallthru
      _
    // Predicated region
    $region18: #{ssmlp_forward.41} parent=1 // pred_check
      _
    $region19: #{ssmlp_forward.41} parent=1 // pred_check_branch
      %23 = sbr.rel (0) target = $region21
    $region20: #{ssmlp_forward.41} parent=1 // pred_region
      _
    $region21: #{ssmlp_forward.41} parent=1 // pred_fallthru
      _
    %p25 = scmp.eq.s32.totalorder 0, 0
    // Predicated region
    $region22: #{ssmlp_forward.41} parent=1 // pred_check
      %p26 = pneg %p25
    $region23: #{ssmlp_forward.41} parent=1 // pred_check_branch
      %28 = sbr.rel (%p26) target = $region25
    $region24: #{ssmlp_forward.41} parent=1 // pred_region
      %vm29 = vcmask 123904
      %30 = vst.msk [vmem:[#allocation2] sm:$0x3] %vm29, 0.0
    $region25: #{ssmlp_forward.41} parent=1 // pred_fallthru
      _
    %v31 = vld [vmem:[%s0] sm:$0xff]
    %v32 = vld [vmem:[%s0 + $0x8] sm:$0xff]
    %v33 = vld [vmem:[%s0 + $0x10] sm:$0xff]
    %v34 = vld [vmem:[%s0 + $0x18] sm:$0xff]
    %v35 = vld [vmem:[%s0 + $0x20] sm:$0xff]
    %v36 = vld [vmem:[%s0 + $0x28] sm:$0xff]
    %v37 = vld [vmem:[%s0 + $0x30] sm:$0xff]
    %v38 = vld [vmem:[%s0 + $0x38] sm:$0xff]
    %v39 = vld [vmem:[%s0 + $0x40] sm:$0xff]
    %v40 = vld [vmem:[%s0 + $0x48] sm:$0xff]
    %v41 = vld [vmem:[%s0 + $0x50] sm:$0xff]
    %v42 = vld [vmem:[%s0 + $0x58] sm:$0xff]
    %v43 = vld [vmem:[%s0 + $0x60] sm:$0xff]
    %v44 = vld [vmem:[%s0 + $0x68] sm:$0xff]
    %v45 = vld [vmem:[%s0 + $0x70] sm:$0xff]
    %v46 = vld [vmem:[%s0 + $0x78] sm:$0xff]
    %v47 = vld [vmem:[%s0 + $0x80] sm:$0xff]
    %v48 = vld [vmem:[%s0 + $0x88] sm:$0xff]
    %v49 = vld [vmem:[%s0 + $0x90] sm:$0xff]
    %v50 = vld [vmem:[%s0 + $0x98] sm:$0xff]
    %v51 = vld [vmem:[%s0 + $0xa0] sm:$0xff]
    %v52 = vld [vmem:[%s0 + $0xa8] sm:$0xff]
    %v53 = vld [vmem:[%s0 + $0xb0] sm:$0xff]
    %v54 = vld [vmem:[%s0 + $0xb8] sm:$0xff]
    %v55 = vld [vmem:[%s0 + $0xc0] sm:$0xff]
    %v56 = vld [vmem:[%s0 + $0xc8] sm:$0xff]
    %v57 = vld [vmem:[%s0 + $0xd0] sm:$0xff]
    %v58 = vld [vmem:[%s0 + $0xd8] sm:$0xff]
    %v59 = vld [vmem:[%s0 + $0xe0] sm:$0xff]
    %v60 = vld [vmem:[%s0 + $0xe8] sm:$0xff]
    %v61 = vld [vmem:[%s0 + $0xf0] sm:$0xff]
    %v62 = vld [vmem:[%s0 + $0xf8] sm:$0xff]
    %vm63 = vcmask 130048
    %v64 = vsel %vm63, %v31, 0.0
    %65 = vadd.xlane.f32.xlu0 %v64
    %v66 = vpop.xlane.xlu0 %65
    %v67 = vsel %vm63, %v32, 0.0
    %68 = vadd.xlane.f32.xlu0 %v67
    %v69 = vpop.xlane.xlu0 %68
    %v70 = vsel %vm63, %v33, 0.0
    %71 = vadd.xlane.f32.xlu0 %v70
    %v72 = vpop.xlane.xlu0 %71
    %v73 = vsel %vm63, %v34, 0.0
    %74 = vadd.xlane.f32.xlu0 %v73
    %v75 = vpop.xlane.xlu0 %74
    %v76 = vsel %vm63, %v35, 0.0
    %77 = vadd.xlane.f32.xlu0 %v76
    %v78 = vpop.xlane.xlu0 %77
    %v79 = vsel %vm63, %v36, 0.0
    %80 = vadd.xlane.f32.xlu0 %v79
    %v81 = vpop.xlane.xlu0 %80
    %v82 = vsel %vm63, %v37, 0.0
    %83 = vadd.xlane.f32.xlu0 %v82
    %v84 = vpop.xlane.xlu0 %83
    %v85 = vsel %vm63, %v38, 0.0
    %86 = vadd.xlane.f32.xlu0 %v85
    %v87 = vpop.xlane.xlu0 %86
    %v88 = vsel %vm63, %v39, 0.0
    %89 = vadd.xlane.f32.xlu0 %v88
    %v90 = vpop.xlane.xlu0 %89
    %v91 = vsel %vm63, %v40, 0.0
    %92 = vadd.xlane.f32.xlu0 %v91
    %v93 = vpop.xlane.xlu0 %92
    %v94 = vsel %vm63, %v41, 0.0
    %95 = vadd.xlane.f32.xlu0 %v94
    %v96 = vpop.xlane.xlu0 %95
    %v97 = vsel %vm63, %v42, 0.0
    %98 = vadd.xlane.f32.xlu0 %v97
    %v99 = vpop.xlane.xlu0 %98
    %v100 = vsel %vm63, %v43, 0.0
    %101 = vadd.xlane.f32.xlu0 %v100
    %v102 = vpop.xlane.xlu0 %101
    %v103 = vsel %vm63, %v44, 0.0
    %104 = vadd.xlane.f32.xlu0 %v103
    %v105 = vpop.xlane.xlu0 %104
    %v106 = vsel %vm63, %v45, 0.0
    %107 = vadd.xlane.f32.xlu0 %v106
    %v108 = vpop.xlane.xlu0 %107
    %v109 = vsel %vm63, %v46, 0.0
    %110 = vadd.xlane.f32.xlu0 %v109
    %v111 = vpop.xlane.xlu0 %110
    %v112 = vsel %vm63, %v47, 0.0
    %113 = vadd.xlane.f32.xlu0 %v112
    %v114 = vpop.xlane.xlu0 %113
    %v115 = vsel %vm63, %v48, 0.0
    %116 = vadd.xlane.f32.xlu0 %v115
    %v117 = vpop.xlane.xlu0 %116
    %v118 = vsel %vm63, %v49, 0.0
    %119 = vadd.xlane.f32.xlu0 %v118
    %v120 = vpop.xlane.xlu0 %119
    %v121 = vsel %vm63, %v50, 0.0
    %122 = vadd.xlane.f32.xlu0 %v121
    %v123 = vpop.xlane.xlu0 %122
    %v124 = vsel %vm63, %v51, 0.0
    %125 = vadd.xlane.f32.xlu0 %v124
    %v126 = vpop.xlane.xlu0 %125
    %v127 = vsel %vm63, %v52, 0.0
    %128 = vadd.xlane.f32.xlu0 %v127
    %v129 = vpop.xlane.xlu0 %128
    %v130 = vsel %vm63, %v53, 0.0
    %131 = vadd.xlane.f32.xlu0 %v130
    %v132 = vpop.xlane.xlu0 %131
    %v133 = vsel %vm63, %v54, 0.0
    %134 = vadd.xlane.f32.xlu0 %v133
    %v135 = vpop.xlane.xlu0 %134
    %v136 = vsel %vm63, %v55, 0.0
    %137 = vadd.xlane.f32.xlu0 %v136
    %v138 = vpop.xlane.xlu0 %137
    %v139 = vsel %vm63, %v56, 0.0
    %140 = vadd.xlane.f32.xlu0 %v139
    %v141 = vpop.xlane.xlu0 %140
    %v142 = vsel %vm63, %v57, 0.0
    %143 = vadd.xlane.f32.xlu0 %v142
    %v144 = vpop.xlane.xlu0 %143
    %v145 = vsel %vm63, %v58, 0.0
    %146 = vadd.xlane.f32.xlu0 %v145
    %v147 = vpop.xlane.xlu0 %146
    %v148 = vsel %vm63, %v59, 0.0
    %149 = vadd.xlane.f32.xlu0 %v148
    %v150 = vpop.xlane.xlu0 %149
    %v151 = vsel %vm63, %v60, 0.0
    %152 = vadd.xlane.f32.xlu0 %v151
    %v153 = vpop.xlane.xlu0 %152
    %v154 = vsel %vm63, %v61, 0.0
    %155 = vadd.xlane.f32.xlu0 %v154
    %v156 = vpop.xlane.xlu0 %155
    %v157 = vsel %vm63, %v62, 0.0
    %158 = vadd.xlane.f32.xlu0 %v157
    %v159 = vpop.xlane.xlu0 %158
    %v160 = vrcp.pop 16.0
    %v161 = vmul.f32 %v66, %v160
    %v162 = vmul.f32 %v69, %v160
    %v163 = vmul.f32 %v72, %v160
    %v164 = vmul.f32 %v75, %v160
    %v165 = vmul.f32 %v78, %v160
    %v166 = vmul.f32 %v81, %v160
    %v167 = vmul.f32 %v84, %v160
    %v168 = vmul.f32 %v87, %v160
    %v169 = vmul.f32 %v90, %v160
    %v170 = vmul.f32 %v93, %v160
    %v171 = vmul.f32 %v96, %v160
    %v172 = vmul.f32 %v99, %v160
    %v173 = vmul.f32 %v102, %v160
    %v174 = vmul.f32 %v105, %v160
    %v175 = vmul.f32 %v108, %v160
    %v176 = vmul.f32 %v111, %v160
    %v177 = vmul.f32 %v114, %v160
    %v178 = vmul.f32 %v117, %v160
    %v179 = vmul.f32 %v120, %v160
    %v180 = vmul.f32 %v123, %v160
    %v181 = vmul.f32 %v126, %v160
    %v182 = vmul.f32 %v129, %v160
    %v183 = vmul.f32 %v132, %v160
    %v184 = vmul.f32 %v135, %v160
    %v185 = vmul.f32 %v138, %v160
    %v186 = vmul.f32 %v141, %v160
    %v187 = vmul.f32 %v144, %v160
    %v188 = vmul.f32 %v147, %v160
    %v189 = vmul.f32 %v150, %v160
    %v190 = vmul.f32 %v153, %v160
    %v191 = vmul.f32 %v156, %v160
    %v192 = vmul.f32 %v159, %v160
    %v193 = vsub.f32 %v31, %v161
    %v194 = vsub.f32 %v32, %v162
    %v195 = vsub.f32 %v33, %v163
    %v196 = vsub.f32 %v34, %v164
    %v197 = vsub.f32 %v35, %v165
    %v198 = vsub.f32 %v36, %v166
    %v199 = vsub.f32 %v37, %v167
    %v200 = vsub.f32 %v38, %v168
    %v201 = vsub.f32 %v39, %v169
    %v202 = vsub.f32 %v40, %v170
    %v203 = vsub.f32 %v41, %v171
    %v204 = vsub.f32 %v42, %v172
    %v205 = vsub.f32 %v43, %v173
    %v206 = vsub.f32 %v44, %v174
    %v207 = vsub.f32 %v45, %v175
    %v208 = vsub.f32 %v46, %v176
    %v209 = vsub.f32 %v47, %v177
    %v210 = vsub.f32 %v48, %v178
    %v211 = vsub.f32 %v49, %v179
    %v212 = vsub.f32 %v50, %v180
    %v213 = vsub.f32 %v51, %v181
    %v214 = vsub.f32 %v52, %v182
    %v215 = vsub.f32 %v53, %v183
    %v216 = vsub.f32 %v54, %v184
    %v217 = vsub.f32 %v55, %v185
    %v218 = vsub.f32 %v56, %v186
    %v219 = vsub.f32 %v57, %v187
    %v220 = vsub.f32 %v58, %v188
    %v221 = vsub.f32 %v59, %v189
    %v222 = vsub.f32 %v60, %v190
    %v223 = vsub.f32 %v61, %v191
    %v224 = vsub.f32 %v62, %v192
    %v225 = vmul.f32 %v193, %v193
    %v226 = vmul.f32 %v194, %v194
    %v227 = vmul.f32 %v195, %v195
    %v228 = vmul.f32 %v196, %v196
    %v229 = vmul.f32 %v197, %v197
    %v230 = vmul.f32 %v198, %v198
    %v231 = vmul.f32 %v199, %v199
    %v232 = vmul.f32 %v200, %v200
    %v233 = vmul.f32 %v201, %v201
    %v234 = vmul.f32 %v202, %v202
    %v235 = vmul.f32 %v203, %v203
    %v236 = vmul.f32 %v204, %v204
    %v237 = vmul.f32 %v205, %v205
    %v238 = vmul.f32 %v206, %v206
    %v239 = vmul.f32 %v207, %v207
    %v240 = vmul.f32 %v208, %v208
    %v241 = vmul.f32 %v209, %v209
    %v242 = vmul.f32 %v210, %v210
    %v243 = vmul.f32 %v211, %v211
    %v244 = vmul.f32 %v212, %v212
    %v245 = vmul.f32 %v213, %v213
    %v246 = vmul.f32 %v214, %v214
    %v247 = vmul.f32 %v215, %v215
    %v248 = vmul.f32 %v216, %v216
    %v249 = vmul.f32 %v217, %v217
    %v250 = vmul.f32 %v218, %v218
    %v251 = vmul.f32 %v219, %v219
    %v252 = vmul.f32 %v220, %v220
    %v253 = vmul.f32 %v221, %v221
    %v254 = vmul.f32 %v222, %v222
    %v255 = vmul.f32 %v223, %v223
    %v256 = vmul.f32 %v224, %v224
    %v257 = vsel %vm63, %v225, 0.0
    %258 = vadd.xlane.f32.xlu0 %v257
    %v259 = vpop.xlane.xlu0 %258
    %v260 = vsel %vm63, %v226, 0.0
    %261 = vadd.xlane.f32.xlu0 %v260
    %v262 = vpop.xlane.xlu0 %261
    %v263 = vsel %vm63, %v227, 0.0
    %264 = vadd.xlane.f32.xlu0 %v263
    %v265 = vpop.xlane.xlu0 %264
    %v266 = vsel %vm63, %v228, 0.0
    %267 = vadd.xlane.f32.xlu0 %v266
    %v268 = vpop.xlane.xlu0 %267
    %v269 = vsel %vm63, %v229, 0.0
    %270 = vadd.xlane.f32.xlu0 %v269
    %v271 = vpop.xlane.xlu0 %270
    %v272 = vsel %vm63, %v230, 0.0
    %273 = vadd.xlane.f32.xlu0 %v272
    %v274 = vpop.xlane.xlu0 %273
    %v275 = vsel %vm63, %v231, 0.0
    %276 = vadd.xlane.f32.xlu0 %v275
    %v277 = vpop.xlane.xlu0 %276
    %v278 = vsel %vm63, %v232, 0.0
    %279 = vadd.xlane.f32.xlu0 %v278
    %v280 = vpop.xlane.xlu0 %279
    %v281 = vsel %vm63, %v233, 0.0
    %282 = vadd.xlane.f32.xlu0 %v281
    %v283 = vpop.xlane.xlu0 %282
    %v284 = vsel %vm63, %v234, 0.0
    %285 = vadd.xlane.f32.xlu0 %v284
    %v286 = vpop.xlane.xlu0 %285
    %v287 = vsel %vm63, %v235, 0.0
    %288 = vadd.xlane.f32.xlu0 %v287
    %v289 = vpop.xlane.xlu0 %288
    %v290 = vsel %vm63, %v236, 0.0
    %291 = vadd.xlane.f32.xlu0 %v290
    %v292 = vpop.xlane.xlu0 %291
    %v293 = vsel %vm63, %v237, 0.0
    %294 = vadd.xlane.f32.xlu0 %v293
    %v295 = vpop.xlane.xlu0 %294
    %v296 = vsel %vm63, %v238, 0.0
    %297 = vadd.xlane.f32.xlu0 %v296
    %v298 = vpop.xlane.xlu0 %297
    %v299 = vsel %vm63, %v239, 0.0
    %300 = vadd.xlane.f32.xlu0 %v299
    %v301 = vpop.xlane.xlu0 %300
    %v302 = vsel %vm63, %v240, 0.0
    %303 = vadd.xlane.f32.xlu0 %v302
    %v304 = vpop.xlane.xlu0 %303
    %v305 = vsel %vm63, %v241, 0.0
    %306 = vadd.xlane.f32.xlu0 %v305
    %v307 = vpop.xlane.xlu0 %306
    %v308 = vsel %vm63, %v242, 0.0
    %309 = vadd.xlane.f32.xlu0 %v308
    %v310 = vpop.xlane.xlu0 %309
    %v311 = vsel %vm63, %v243, 0.0
    %312 = vadd.xlane.f32.xlu0 %v311
    %v313 = vpop.xlane.xlu0 %312
    %v314 = vsel %vm63, %v244, 0.0
    %315 = vadd.xlane.f32.xlu0 %v314
    %v316 = vpop.xlane.xlu0 %315
    %v317 = vsel %vm63, %v245, 0.0
    %318 = vadd.xlane.f32.xlu0 %v317
    %v319 = vpop.xlane.xlu0 %318
    %v320 = vsel %vm63, %v246, 0.0
    %321 = vadd.xlane.f32.xlu0 %v320
    %v322 = vpop.xlane.xlu0 %321
    %v323 = vsel %vm63, %v247, 0.0
    %324 = vadd.xlane.f32.xlu0 %v323
    %v325 = vpop.xlane.xlu0 %324
    %v326 = vsel %vm63, %v248, 0.0
    %327 = vadd.xlane.f32.xlu0 %v326
    %v328 = vpop.xlane.xlu0 %327
    %v329 = vsel %vm63, %v249, 0.0
    %330 = vadd.xlane.f32.xlu0 %v329
    %v331 = vpop.xlane.xlu0 %330
    %v332 = vsel %vm63, %v250, 0.0
    %333 = vadd.xlane.f32.xlu0 %v332
    %v334 = vpop.xlane.xlu0 %333
    %v335 = vsel %vm63, %v251, 0.0
    %336 = vadd.xlane.f32.xlu0 %v335
    %v337 = vpop.xlane.xlu0 %336
    %v338 = vsel %vm63, %v252, 0.0
    %339 = vadd.xlane.f32.xlu0 %v338
    %v340 = vpop.xlane.xlu0 %339
    %v341 = vsel %vm63, %v253, 0.0
    %342 = vadd.xlane.f32.xlu0 %v341
    %v343 = vpop.xlane.xlu0 %342
    %v344 = vsel %vm63, %v254, 0.0
    %345 = vadd.xlane.f32.xlu0 %v344
    %v346 = vpop.xlane.xlu0 %345
    %v347 = vsel %vm63, %v255, 0.0
    %348 = vadd.xlane.f32.xlu0 %v347
    %v349 = vpop.xlane.xlu0 %348
    %v350 = vsel %vm63, %v256, 0.0
    %351 = vadd.xlane.f32.xlu0 %v350
    %v352 = vpop.xlane.xlu0 %351
    %v353 = vmul.f32 %v259, %v160
    %v354 = vmul.f32 %v262, %v160
    %v355 = vmul.f32 %v265, %v160
    %v356 = vmul.f32 %v268, %v160
    %v357 = vmul.f32 %v271, %v160
    %v358 = vmul.f32 %v274, %v160
    %v359 = vmul.f32 %v277, %v160
    %v360 = vmul.f32 %v280, %v160
    %v361 = vmul.f32 %v283, %v160
    %v362 = vmul.f32 %v286, %v160
    %v363 = vmul.f32 %v289, %v160
    %v364 = vmul.f32 %v292, %v160
    %v365 = vmul.f32 %v295, %v160
    %v366 = vmul.f32 %v298, %v160
    %v367 = vmul.f32 %v301, %v160
    %v368 = vmul.f32 %v304, %v160
    %v369 = vmul.f32 %v307, %v160
    %v370 = vmul.f32 %v310, %v160
    %v371 = vmul.f32 %v313, %v160
    %v372 = vmul.f32 %v316, %v160
    %v373 = vmul.f32 %v319, %v160
    %v374 = vmul.f32 %v322, %v160
    %v375 = vmul.f32 %v325, %v160
    %v376 = vmul.f32 %v328, %v160
    %v377 = vmul.f32 %v331, %v160
    %v378 = vmul.f32 %v334, %v160
    %v379 = vmul.f32 %v337, %v160
    %v380 = vmul.f32 %v340, %v160
    %v381 = vmul.f32 %v343, %v160
    %v382 = vmul.f32 %v346, %v160
    %v383 = vmul.f32 %v349, %v160
    %v384 = vmul.f32 %v352, %v160
    %v385 = vadd.f32 %v353, 1e-05
    %v386 = vadd.f32 %v354, 1e-05
    %v387 = vadd.f32 %v355, 1e-05
    %v388 = vadd.f32 %v356, 1e-05
    %v389 = vadd.f32 %v357, 1e-05
    %v390 = vadd.f32 %v358, 1e-05
    %v391 = vadd.f32 %v359, 1e-05
    %v392 = vadd.f32 %v360, 1e-05
    %v393 = vadd.f32 %v361, 1e-05
    %v394 = vadd.f32 %v362, 1e-05
    %v395 = vadd.f32 %v363, 1e-05
    %v396 = vadd.f32 %v364, 1e-05
    %v397 = vadd.f32 %v365, 1e-05
    %v398 = vadd.f32 %v366, 1e-05
    %v399 = vadd.f32 %v367, 1e-05
    %v400 = vadd.f32 %v368, 1e-05
    %v401 = vadd.f32 %v369, 1e-05
    %v402 = vadd.f32 %v370, 1e-05
    %v403 = vadd.f32 %v371, 1e-05
    %v404 = vadd.f32 %v372, 1e-05
    %v405 = vadd.f32 %v373, 1e-05
    %v406 = vadd.f32 %v374, 1e-05
    %v407 = vadd.f32 %v375, 1e-05
    %v408 = vadd.f32 %v376, 1e-05
    %v409 = vadd.f32 %v377, 1e-05
    %v410 = vadd.f32 %v378, 1e-05
    %v411 = vadd.f32 %v379, 1e-05
    %v412 = vadd.f32 %v380, 1e-05
    %v413 = vadd.f32 %v381, 1e-05
    %v414 = vadd.f32 %v382, 1e-05
    %v415 = vadd.f32 %v383, 1e-05
    %v416 = vadd.f32 %v384, 1e-05
    %v417 = vrsqrt.pop %v385
    %v418 = vrsqrt.pop %v386
    %v419 = vrsqrt.pop %v387
    %v420 = vrsqrt.pop %v388
    %v421 = vrsqrt.pop %v389
    %v422 = vrsqrt.pop %v390
    %v423 = vrsqrt.pop %v391
    %v424 = vrsqrt.pop %v392
    %v425 = vrsqrt.pop %v393
    %v426 = vrsqrt.pop %v394
    %v427 = vrsqrt.pop %v395
    %v428 = vrsqrt.pop %v396
    %v429 = vrsqrt.pop %v397
    %v430 = vrsqrt.pop %v398
    %v431 = vrsqrt.pop %v399
    %v432 = vrsqrt.pop %v400
    %v433 = vrsqrt.pop %v401
    %v434 = vrsqrt.pop %v402
    %v435 = vrsqrt.pop %v403
    %v436 = vrsqrt.pop %v404
    %v437 = vrsqrt.pop %v405
    %v438 = vrsqrt.pop %v406
    %v439 = vrsqrt.pop %v407
    %v440 = vrsqrt.pop %v408
    %v441 = vrsqrt.pop %v409
    %v442 = vrsqrt.pop %v410
    %v443 = vrsqrt.pop %v411
    %v444 = vrsqrt.pop %v412
    %v445 = vrsqrt.pop %v413
    %v446 = vrsqrt.pop %v414
    %v447 = vrsqrt.pop %v415
    %v448 = vrsqrt.pop %v416
    %v449 = vmul.f32 %v193, %v417
    %v450 = vmul.f32 %v194, %v418
    %v451 = vmul.f32 %v195, %v419
    %v452 = vmul.f32 %v196, %v420
    %v453 = vmul.f32 %v197, %v421
    %v454 = vmul.f32 %v198, %v422
    %v455 = vmul.f32 %v199, %v423
    %v456 = vmul.f32 %v200, %v424
    %v457 = vmul.f32 %v201, %v425
    %v458 = vmul.f32 %v202, %v426
    %v459 = vmul.f32 %v203, %v427
    %v460 = vmul.f32 %v204, %v428
    %v461 = vmul.f32 %v205, %v429
    %v462 = vmul.f32 %v206, %v430
    %v463 = vmul.f32 %v207, %v431
    %v464 = vmul.f32 %v208, %v432
    %v465 = vmul.f32 %v209, %v433
    %v466 = vmul.f32 %v210, %v434
    %v467 = vmul.f32 %v211, %v435
    %v468 = vmul.f32 %v212, %v436
    %v469 = vmul.f32 %v213, %v437
    %v470 = vmul.f32 %v214, %v438
    %v471 = vmul.f32 %v215, %v439
    %v472 = vmul.f32 %v216, %v440
    %v473 = vmul.f32 %v217, %v441
    %v474 = vmul.f32 %v218, %v442
    %v475 = vmul.f32 %v219, %v443
    %v476 = vmul.f32 %v220, %v444
    %v477 = vmul.f32 %v221, %v445
    %v478 = vmul.f32 %v222, %v446
    %v479 = vmul.f32 %v223, %v447
    %v480 = vmul.f32 %v224, %v448
    %v481 = vld [vmem:[%s1] sm:$0x1]
    %v483 = vlaneseq
    %v484 = vshrl.u32 %v483, 7
    %v485 = vsub.s32 0, %v484
    %v486 = vrot.slane %v481, %v485
    %v488 = vmul.f32 %v449, %v486
    %v489 = vmul.f32 %v450, %v486
    %v490 = vmul.f32 %v451, %v486
    %v491 = vmul.f32 %v452, %v486
    %v492 = vmul.f32 %v453, %v486
    %v493 = vmul.f32 %v454, %v486
    %v494 = vmul.f32 %v455, %v486
    %v495 = vmul.f32 %v456, %v486
    %v496 = vmul.f32 %v457, %v486
    %v497 = vmul.f32 %v458, %v486
    %v498 = vmul.f32 %v459, %v486
    %v499 = vmul.f32 %v460, %v486
    %v500 = vmul.f32 %v461, %v486
    %v501 = vmul.f32 %v462, %v486
    %v502 = vmul.f32 %v463, %v486
    %v503 = vmul.f32 %v464, %v486
    %v504 = vmul.f32 %v465, %v486
    %v505 = vmul.f32 %v466, %v486
    %v506 = vmul.f32 %v467, %v486
    %v507 = vmul.f32 %v468, %v486
    %v508 = vmul.f32 %v469, %v486
    %v509 = vmul.f32 %v470, %v486
    %v510 = vmul.f32 %v471, %v486
    %v511 = vmul.f32 %v472, %v486
    %v512 = vmul.f32 %v473, %v486
    %v513 = vmul.f32 %v474, %v486
    %v514 = vmul.f32 %v475, %v486
    %v515 = vmul.f32 %v476, %v486
    %v516 = vmul.f32 %v477, %v486
    %v517 = vmul.f32 %v478, %v486
    %v518 = vmul.f32 %v479, %v486
    %v519 = vmul.f32 %v480, %v486
    %v520 = vld [vmem:[%s2] sm:$0x1]
    %v522 = vlaneseq
    %v523 = vshrl.u32 %v522, 7
    %v524 = vsub.s32 0, %v523
    %v525 = vrot.slane %v520, %v524
    %v527 = vadd.f32 %v488, %v525
    %v528 = vadd.f32 %v489, %v525
    %v529 = vadd.f32 %v490, %v525
    %v530 = vadd.f32 %v491, %v525
    %v531 = vadd.f32 %v492, %v525
    %v532 = vadd.f32 %v493, %v525
    %v533 = vadd.f32 %v494, %v525
    %v534 = vadd.f32 %v495, %v525
    %v535 = vadd.f32 %v496, %v525
    %v536 = vadd.f32 %v497, %v525
    %v537 = vadd.f32 %v498, %v525
    %v538 = vadd.f32 %v499, %v525
    %v539 = vadd.f32 %v500, %v525
    %v540 = vadd.f32 %v501, %v525
    %v541 = vadd.f32 %v502, %v525
    %v542 = vadd.f32 %v503, %v525
    %v543 = vadd.f32 %v504, %v525
    %v544 = vadd.f32 %v505, %v525
    %v545 = vadd.f32 %v506, %v525
    %v546 = vadd.f32 %v507, %v525
    %v547 = vadd.f32 %v508, %v525
    %v548 = vadd.f32 %v509, %v525
    %v549 = vadd.f32 %v510, %v525
    %v550 = vadd.f32 %v511, %v525
    %v551 = vadd.f32 %v512, %v525
    %v552 = vadd.f32 %v513, %v525
    %v553 = vadd.f32 %v514, %v525
    %v554 = vadd.f32 %v515, %v525
    %v555 = vadd.f32 %v516, %v525
    %v556 = vadd.f32 %v517, %v525
    %v557 = vadd.f32 %v518, %v525
    %v558 = vadd.f32 %v519, %v525
    %v559 = vld [vmem:[#allocation2] sm:$0x3]
    %v560 = vsel %vm63, %v527, 0.0
    %v561 = vsel %vm63, %v528, 0.0
    %v562 = vadd.f32 %v560, %v561
    %v563 = vsel %vm63, %v529, 0.0
    %v564 = vadd.f32 %v562, %v563
    %v565 = vsel %vm63, %v530, 0.0
    %v566 = vadd.f32 %v564, %v565
    %v567 = vsel %vm63, %v531, 0.0
    %v568 = vadd.f32 %v566, %v567
    %v569 = vsel %vm63, %v532, 0.0
    %v570 = vadd.f32 %v568, %v569
    %v571 = vsel %vm63, %v533, 0.0
    %v572 = vadd.f32 %v570, %v571
    %v573 = vsel %vm63, %v534, 0.0
    %v574 = vadd.f32 %v572, %v573
    %v575 = vsel %vm63, %v535, 0.0
    %v576 = vadd.f32 %v574, %v575
    %v577 = vsel %vm63, %v536, 0.0
    %v578 = vadd.f32 %v576, %v577
    %v579 = vsel %vm63, %v537, 0.0
    %v580 = vadd.f32 %v578, %v579
    %v581 = vsel %vm63, %v538, 0.0
    %v582 = vadd.f32 %v580, %v581
    %v583 = vsel %vm63, %v539, 0.0
    %v584 = vadd.f32 %v582, %v583
    %v585 = vsel %vm63, %v540, 0.0
    %v586 = vadd.f32 %v584, %v585
    %v587 = vsel %vm63, %v541, 0.0
    %v588 = vadd.f32 %v586, %v587
    %v589 = vsel %vm63, %v542, 0.0
    %v590 = vadd.f32 %v588, %v589
    %v591 = vrot.slane %v590, 4
    %v592 = vadd.f32 %v590, %v591
    %v593 = vrot.slane %v592, 2
    %v594 = vadd.f32 %v592, %v593
    %v595 = vrot.slane %v594, 1
    %v596 = vadd.f32 %v594, %v595
    %v597 = vsel %vm63, %v543, 0.0
    %v598 = vsel %vm63, %v544, 0.0
    %v599 = vadd.f32 %v597, %v598
    %v600 = vsel %vm63, %v545, 0.0
    %v601 = vadd.f32 %v599, %v600
    %v602 = vsel %vm63, %v546, 0.0
    %v603 = vadd.f32 %v601, %v602
    %v604 = vsel %vm63, %v547, 0.0
    %v605 = vadd.f32 %v603, %v604
    %v606 = vsel %vm63, %v548, 0.0
    %v607 = vadd.f32 %v605, %v606
    %v608 = vsel %vm63, %v549, 0.0
    %v609 = vadd.f32 %v607, %v608
    %v610 = vsel %vm63, %v550, 0.0
    %v611 = vadd.f32 %v609, %v610
    %v612 = vsel %vm63, %v551, 0.0
    %v613 = vadd.f32 %v611, %v612
    %v614 = vsel %vm63, %v552, 0.0
    %v615 = vadd.f32 %v613, %v614
    %v616 = vsel %vm63, %v553, 0.0
    %v617 = vadd.f32 %v615, %v616
    %v618 = vsel %vm63, %v554, 0.0
    %v619 = vadd.f32 %v617, %v618
    %v620 = vsel %vm63, %v555, 0.0
    %v621 = vadd.f32 %v619, %v620
    %v622 = vsel %vm63, %v556, 0.0
    %v623 = vadd.f32 %v621, %v622
    %v624 = vsel %vm63, %v557, 0.0
    %v625 = vadd.f32 %v623, %v624
    %v626 = vsel %vm63, %v558, 0.0
    %v627 = vadd.f32 %v625, %v626
    %v628 = vrot.slane %v627, 4
    %v629 = vadd.f32 %v627, %v628
    %v630 = vrot.slane %v629, 2
    %v631 = vadd.f32 %v629, %v630
    %v632 = vrot.slane %v631, 1
    %v633 = vadd.f32 %v631, %v632
    %vm636 = vcmask 1041409
    %v637 = vsel %vm636, %v633, %v596
    %v639 = vadd.f32 %v559, %v637
    %vm640 = vcmask 123904
    %641 = vst.msk [vmem:[#allocation2] sm:$0x3] %vm640, %v639
    // Predicated region
    $region26: #{ssmlp_forward.41} parent=1 // pred_check
      %p642 = pneg %p25
    $region27: #{ssmlp_forward.41} parent=1 // pred_check_branch
      %644 = sbr.rel (%p642) target = $region29
    $region28: #{ssmlp_forward.41} parent=1 // pred_region
      %v645 = vld [vmem:[#allocation2] sm:$0x3]
      %v646 = vmul.f32 %v645, 0.0078125
      %647 = vst.msk [vmem:[#allocation3] sm:$0x3] %vm640, %v646
      %v648 = vpack.c.bf16 %v646, %v646
      %v649 = vld [vmem:[%s3] sm:$0xf]
      %v650 = vld [vmem:[%s3 + $0x4] sm:$0xf]
      %v651 = vld [vmem:[%s4] sm:$0x1]
      %v653 = vlaneseq
      %v654 = vshrl.u32 %v653, 7
      %v655 = vsub.s32 0, %v654
      %v656 = vrot.slane %v651, %v655
      %v660 = vunpack.c.l.b16 %v649
      %v661 = vunpack.c.l.b16 %v650
      %v662 = vpack.c.b16 %v661, %v660
      %v665 = vsel %vm63, %v648, 0
      %667 = vmatprep.subr.bf16.mxu0 0
      %668 = vmatpush1.bf16.msra.mxu0 %v662
      %669 = vmatprep.subr.bf16.mxu0 0
      %670 = vmatpush1.bf16.msra.mxu0 0
      %671 = vmatprep.subr.bf16.mxu0 0
      %672 = vmatpush1.bf16.msra.mxu0 0
      %673 = vmatprep.subr.bf16.mxu0 0
      %674 = vmatpush1.bf16.msra.mxu0 0
      %675 = vmatprep.subr.bf16.mxu0 0
      %676 = vmatpush1.bf16.msra.mxu0 0
      %677 = vmatprep.subr.bf16.mxu0 0
      %678 = vmatpush1.bf16.msra.mxu0 0
      %679 = vmatprep.subr.bf16.mxu0 0
      %680 = vmatpush1.bf16.msra.mxu0 0
      %681 = vmatprep.subr.bf16.mxu0 0
      %682 = vmatpush1.bf16.msra.mxu0 0
      %683 = vmatprep.subr.bf16.mxu0 0
      %684 = vmatpush1.bf16.msra.mxu0 0
      %685 = vmatprep.subr.bf16.mxu0 0
      %686 = vmatpush1.bf16.msra.mxu0 0
      %687 = vmatprep.subr.bf16.mxu0 0
      %688 = vmatpush1.bf16.msra.mxu0 0
      %689 = vmatprep.subr.bf16.mxu0 0
      %690 = vmatpush1.bf16.msra.mxu0 0
      %691 = vmatprep.subr.bf16.mxu0 0
      %692 = vmatpush1.bf16.msra.mxu0 0
      %693 = vmatprep.subr.bf16.mxu0 0
      %694 = vmatpush1.bf16.msra.mxu0 0
      %695 = vmatprep.subr.bf16.mxu0 0
      %696 = vmatpush1.bf16.msra.mxu0 0
      %697 = vmatprep.subr.bf16.mxu0 0
      %698 = vmatpush1.bf16.msra.mxu0 0
      %699 = vmatprep.mubr.bf16.mxu0 0
      %700 = vmatmul.mubr.bf16.gmra.mrb[0].mxu0 %v665
      %v701 = vpop.f32.mrb[0].mxu0
      %v702 = vadd.f32 %v656, %v701
      %v703 = vpop.f32.mrb[0].mxu0
      %v704 = vpop.f32.mrb[0].mxu0
      %v705 = vpop.f32.mrb[0].mxu0
      %706 = vdwg.mxu0
      %vm707 = vcmask 33792
      %708 = vst.msk [vmem:[#allocation5] sm:$0x3] %vm707, %v702
    $region29: #{ssmlp_forward.41} parent=1 // pred_fallthru
      _
    // Predicated region
    $region30: #{ssmlp_forward.41} parent=1 // pred_check
      _
    $region31: #{ssmlp_forward.41} parent=1 // pred_check_branch
      %710 = sbr.rel (0) target = $region33
    $region32: #{ssmlp_forward.41} parent=1 // pred_region
      %s712 = ssub.s32 32, 32
      %713 = vsyncadd [#allocation4], %s712
      %s715 = sshll.u32 [#allocation3], 4
      %s716 = int_to_ptr.vmem [resolvable:$true] %s715
      %718 = dma.vmem_to_hbm [thread:$0]  %s716, 32, %s5, [#allocation4]
    $region33: #{ssmlp_forward.41} parent=1 // pred_fallthru
      _
    // Predicated region
    $region34: #{ssmlp_forward.41} parent=1 // pred_check
      _
    $region35: #{ssmlp_forward.41} parent=1 // pred_check_branch
      %720 = sbr.rel (0) target = $region37
    $region36: #{ssmlp_forward.41} parent=1 // pred_region
      %s722 = ssub.s32 32, 32
      %723 = vsyncadd [#allocation6], %s722
      %s725 = sshll.u32 [#allocation5], 4
      %s726 = int_to_ptr.vmem [resolvable:$true] %s725
      %728 = dma.vmem_to_hbm [thread:$0]  %s726, 32, %s6, [#allocation6]
    $region37: #{ssmlp_forward.41} parent=1 // pred_fallthru
      _
    // Predicated region
    $region38: #{ssmlp_forward.41} parent=1 // pred_check
      _
    $region39: #{ssmlp_forward.41} parent=1 // pred_check_branch
      %730 = sbr.rel (0) target = $region41
    $region40: #{ssmlp_forward.41} parent=1 // pred_region
      %731 = dma.done [#allocation4], 32
    $region41: #{ssmlp_forward.41} parent=1 // pred_fallthru
      _
    // Predicated region
    $region42: #{ssmlp_forward.41} parent=1 // pred_check
      _
    $region43: #{ssmlp_forward.41} parent=1 // pred_check_branch
      %733 = sbr.rel (0) target = $region45
    $region44: #{ssmlp_forward.41} parent=1 // pred_region
      %734 = dma.done [#allocation6], 32
    $region45: #{ssmlp_forward.41} parent=1 // pred_fallthru
      _
    %735 = vsyncpa [#allocation4], 1
    %736 = vsyncpa [#allocation6], 1

// kernel: ssmlp_forward.31
$region0: #{ssmlp_forward.31}
  #allocation0 [shape = 'u32[]', space=smem, size = 0x4, offset = 0x4, fixed_abs, tag = 'smem constant byte address 0x4 - core index']
  #allocation1 [shape = 'u32[144,128]{1,0:T(1,128)}', space=vmem, size = 0x12000, scoped, tag = 'internal scratch']
  %s0 = inlined_call_operand.vmem [shape: f32[256,16], index: 0, kind: input, shape index: {}]
  %s1 = inlined_call_operand.vmem [shape: f32[1,16], index: 1, kind: input, shape index: {}]
  %s2 = inlined_call_operand.vmem [shape: f32[1,16], index: 2, kind: input, shape index: {}]
  %s3 = inlined_call_operand.vmem [shape: bf16[16,48], index: 3, kind: input, shape index: {}]
  %s4 = inlined_call_operand.vmem [shape: f32[1,48], index: 4, kind: input, shape index: {}]
  %s5 = inlined_call_operand.vmem [shape: bf16[48,16], index: 5, kind: input, shape index: {}]
  %s6 = inlined_call_operand.vmem [shape: f32[1,16], index: 6, kind: input, shape index: {}]
  %s7 = inlined_call_operand.vmem [shape: f32[256,16], index: 7, kind: output, shape index: {}]
  %s8 = sld [smem:[#allocation0]]
  $region38: #{ssmlp_forward.31} parent=0
    _
  %s10 = ssub.s32 1, %s8
  %s11 = scalar_select 0, %s10, %s8
  // Predicated region
  $region2: #{ssmlp_forward.31} parent=0 // pred_check
    _
  $region3: #{ssmlp_forward.31} parent=0 // pred_check_branch
    %13 = sbr.rel (0) target = $region5
  $region4: #{ssmlp_forward.31} parent=0 // pred_region
    _
  $region5: #{ssmlp_forward.31} parent=0 // pred_fallthru
    _
  // Predicated region
  $region6: #{ssmlp_forward.31} parent=0 // pred_check
    _
  $region7: #{ssmlp_forward.31} parent=0 // pred_check_branch
    %15 = sbr.rel (0) target = $region9
  $region8: #{ssmlp_forward.31} parent=0 // pred_region
    _
  $region9: #{ssmlp_forward.31} parent=0 // pred_fallthru
    _
  // Predicated region
  $region10: #{ssmlp_forward.31} parent=0 // pred_check
    _
  $region11: #{ssmlp_forward.31} parent=0 // pred_check_branch
    %17 = sbr.rel (0) target = $region13
  $region12: #{ssmlp_forward.31} parent=0 // pred_region
    _
  $region13: #{ssmlp_forward.31} parent=0 // pred_fallthru
    _
  // Predicated region
  $region14: #{ssmlp_forward.31} parent=0 // pred_check
    _
  $region15: #{ssmlp_forward.31} parent=0 // pred_check_branch
    %19 = sbr.rel (0) target = $region17
  $region16: #{ssmlp_forward.31} parent=0 // pred_region
    _
  $region17: #{ssmlp_forward.31} parent=0 // pred_fallthru
    _
  // Predicated region
  $region18: #{ssmlp_forward.31} parent=0 // pred_check
    _
  $region19: #{ssmlp_forward.31} parent=0 // pred_check_branch
    %21 = sbr.rel (0) target = $region21
  $region20: #{ssmlp_forward.31} parent=0 // pred_region
    _
  $region21: #{ssmlp_forward.31} parent=0 // pred_fallthru
    _
  // Predicated region
  $region22: #{ssmlp_forward.31} parent=0 // pred_check
    _
  $region23: #{ssmlp_forward.31} parent=0 // pred_check_branch
    %23 = sbr.rel (0) target = $region25
  $region24: #{ssmlp_forward.31} parent=0 // pred_region
    _
  $region25: #{ssmlp_forward.31} parent=0 // pred_fallthru
    _
  // Predicated region
  $region26: #{ssmlp_forward.31} parent=0 // pred_check
    _
  $region27: #{ssmlp_forward.31} parent=0 // pred_check_branch
    %25 = sbr.rel (0) target = $region29
  $region28: #{ssmlp_forward.31} parent=0 // pred_region
    _
  $region29: #{ssmlp_forward.31} parent=0 // pred_fallthru
    _
  %v27 = vld [vmem:[%s0] sm:$0xff]
  %v28 = vld [vmem:[%s0 + $0x8] sm:$0xff]
  %v29 = vld [vmem:[%s0 + $0x10] sm:$0xff]
  %v30 = vld [vmem:[%s0 + $0x18] sm:$0xff]
  %v31 = vld [vmem:[%s0 + $0x20] sm:$0xff]
  %v32 = vld [vmem:[%s0 + $0x28] sm:$0xff]
  %v33 = vld [vmem:[%s0 + $0x30] sm:$0xff]
  %v34 = vld [vmem:[%s0 + $0x38] sm:$0xff]
  %v35 = vld [vmem:[%s0 + $0x40] sm:$0xff]
  %v36 = vld [vmem:[%s0 + $0x48] sm:$0xff]
  %v37 = vld [vmem:[%s0 + $0x50] sm:$0xff]
  %v38 = vld [vmem:[%s0 + $0x58] sm:$0xff]
  %v39 = vld [vmem:[%s0 + $0x60] sm:$0xff]
  %v40 = vld [vmem:[%s0 + $0x68] sm:$0xff]
  %v41 = vld [vmem:[%s0 + $0x70] sm:$0xff]
  %v42 = vld [vmem:[%s0 + $0x78] sm:$0xff]
  %v43 = vld [vmem:[%s0 + $0x80] sm:$0xff]
  %v44 = vld [vmem:[%s0 + $0x88] sm:$0xff]
  %v45 = vld [vmem:[%s0 + $0x90] sm:$0xff]
  %v46 = vld [vmem:[%s0 + $0x98] sm:$0xff]
  %v47 = vld [vmem:[%s0 + $0xa0] sm:$0xff]
  %v48 = vld [vmem:[%s0 + $0xa8] sm:$0xff]
  %v49 = vld [vmem:[%s0 + $0xb0] sm:$0xff]
  %v50 = vld [vmem:[%s0 + $0xb8] sm:$0xff]
  %v51 = vld [vmem:[%s0 + $0xc0] sm:$0xff]
  %v52 = vld [vmem:[%s0 + $0xc8] sm:$0xff]
  %v53 = vld [vmem:[%s0 + $0xd0] sm:$0xff]
  %v54 = vld [vmem:[%s0 + $0xd8] sm:$0xff]
  %v55 = vld [vmem:[%s0 + $0xe0] sm:$0xff]
  %v56 = vld [vmem:[%s0 + $0xe8] sm:$0xff]
  %v57 = vld [vmem:[%s0 + $0xf0] sm:$0xff]
  %v58 = vld [vmem:[%s0 + $0xf8] sm:$0xff]
  %vm59 = vcmask 130048
  %v60 = vsel %vm59, %v27, 0.0
  %61 = vadd.xlane.f32.xlu0 %v60
  %v62 = vpop.xlane.xlu0 %61
  %v63 = vsel %vm59, %v28, 0.0
  %64 = vadd.xlane.f32.xlu0 %v63
  %v65 = vpop.xlane.xlu0 %64
  %v66 = vsel %vm59, %v29, 0.0
  %67 = vadd.xlane.f32.xlu0 %v66
  %v68 = vpop.xlane.xlu0 %67
  %v69 = vsel %vm59, %v30, 0.0
  %70 = vadd.xlane.f32.xlu0 %v69
  %v71 = vpop.xlane.xlu0 %70
  %v72 = vsel %vm59, %v31, 0.0
  %73 = vadd.xlane.f32.xlu0 %v72
  %v74 = vpop.xlane.xlu0 %73
  %v75 = vsel %vm59, %v32, 0.0
  %76 = vadd.xlane.f32.xlu0 %v75
  %v77 = vpop.xlane.xlu0 %76
  %v78 = vsel %vm59, %v33, 0.0
  %79 = vadd.xlane.f32.xlu0 %v78
  %v80 = vpop.xlane.xlu0 %79
  %v81 = vsel %vm59, %v34, 0.0
  %82 = vadd.xlane.f32.xlu0 %v81
  %v83 = vpop.xlane.xlu0 %82
  %v84 = vsel %vm59, %v35, 0.0
  %85 = vadd.xlane.f32.xlu0 %v84
  %v86 = vpop.xlane.xlu0 %85
  %v87 = vsel %vm59, %v36, 0.0
  %88 = vadd.xlane.f32.xlu0 %v87
  %v89 = vpop.xlane.xlu0 %88
  %v90 = vsel %vm59, %v37, 0.0
  %91 = vadd.xlane.f32.xlu0 %v90
  %v92 = vpop.xlane.xlu0 %91
  %v93 = vsel %vm59, %v38, 0.0
  %94 = vadd.xlane.f32.xlu0 %v93
  %v95 = vpop.xlane.xlu0 %94
  %v96 = vsel %vm59, %v39, 0.0
  %97 = vadd.xlane.f32.xlu0 %v96
  %v98 = vpop.xlane.xlu0 %97
  %v99 = vsel %vm59, %v40, 0.0
  %100 = vadd.xlane.f32.xlu0 %v99
  %v101 = vpop.xlane.xlu0 %100
  %v102 = vsel %vm59, %v41, 0.0
  %103 = vadd.xlane.f32.xlu0 %v102
  %v104 = vpop.xlane.xlu0 %103
  %v105 = vsel %vm59, %v42, 0.0
  %106 = vadd.xlane.f32.xlu0 %v105
  %v107 = vpop.xlane.xlu0 %106
  %v108 = vsel %vm59, %v43, 0.0
  %109 = vadd.xlane.f32.xlu0 %v108
  %v110 = vpop.xlane.xlu0 %109
  %v111 = vsel %vm59, %v44, 0.0
  %112 = vadd.xlane.f32.xlu0 %v111
  %v113 = vpop.xlane.xlu0 %112
  %v114 = vsel %vm59, %v45, 0.0
  %115 = vadd.xlane.f32.xlu0 %v114
  %v116 = vpop.xlane.xlu0 %115
  %v117 = vsel %vm59, %v46, 0.0
  %118 = vadd.xlane.f32.xlu0 %v117
  %v119 = vpop.xlane.xlu0 %118
  %v120 = vsel %vm59, %v47, 0.0
  %121 = vadd.xlane.f32.xlu0 %v120
  %v122 = vpop.xlane.xlu0 %121
  %v123 = vsel %vm59, %v48, 0.0
  %124 = vadd.xlane.f32.xlu0 %v123
  %v125 = vpop.xlane.xlu0 %124
  %v126 = vsel %vm59, %v49, 0.0
  %127 = vadd.xlane.f32.xlu0 %v126
  %v128 = vpop.xlane.xlu0 %127
  %v129 = vsel %vm59, %v50, 0.0
  %130 = vadd.xlane.f32.xlu0 %v129
  %v131 = vpop.xlane.xlu0 %130
  %v132 = vsel %vm59, %v51, 0.0
  %133 = vadd.xlane.f32.xlu0 %v132
  %v134 = vpop.xlane.xlu0 %133
  %v135 = vsel %vm59, %v52, 0.0
  %136 = vadd.xlane.f32.xlu0 %v135
  %v137 = vpop.xlane.xlu0 %136
  %v138 = vsel %vm59, %v53, 0.0
  %139 = vadd.xlane.f32.xlu0 %v138
  %v140 = vpop.xlane.xlu0 %139
  %v141 = vsel %vm59, %v54, 0.0
  %142 = vadd.xlane.f32.xlu0 %v141
  %v143 = vpop.xlane.xlu0 %142
  %v144 = vsel %vm59, %v55, 0.0
  %145 = vadd.xlane.f32.xlu0 %v144
  %v146 = vpop.xlane.xlu0 %145
  %v147 = vsel %vm59, %v56, 0.0
  %148 = vadd.xlane.f32.xlu0 %v147
  %v149 = vpop.xlane.xlu0 %148
  %v150 = vsel %vm59, %v57, 0.0
  %151 = vadd.xlane.f32.xlu0 %v150
  %v152 = vpop.xlane.xlu0 %151
  %v153 = vsel %vm59, %v58, 0.0
  %154 = vadd.xlane.f32.xlu0 %v153
  %v155 = vpop.xlane.xlu0 %154
  %v156 = vrcp.pop 16.0
  %v157 = vmul.f32 %v62, %v156
  %v158 = vmul.f32 %v65, %v156
  %v159 = vmul.f32 %v68, %v156
  %v160 = vmul.f32 %v71, %v156
  %v161 = vmul.f32 %v74, %v156
  %v162 = vmul.f32 %v77, %v156
  %v163 = vmul.f32 %v80, %v156
  %v164 = vmul.f32 %v83, %v156
  %v165 = vmul.f32 %v86, %v156
  %v166 = vmul.f32 %v89, %v156
  %v167 = vmul.f32 %v92, %v156
  %v168 = vmul.f32 %v95, %v156
  %v169 = vmul.f32 %v98, %v156
  %v170 = vmul.f32 %v101, %v156
  %v171 = vmul.f32 %v104, %v156
  %v172 = vmul.f32 %v107, %v156
  %v173 = vmul.f32 %v110, %v156
  %v174 = vmul.f32 %v113, %v156
  %v175 = vmul.f32 %v116, %v156
  %v176 = vmul.f32 %v119, %v156
  %v177 = vmul.f32 %v122, %v156
  %v178 = vmul.f32 %v125, %v156
  %v179 = vmul.f32 %v128, %v156
  %v180 = vmul.f32 %v131, %v156
  %v181 = vmul.f32 %v134, %v156
  %v182 = vmul.f32 %v137, %v156
  %v183 = vmul.f32 %v140, %v156
  %v184 = vmul.f32 %v143, %v156
  %v185 = vmul.f32 %v146, %v156
  %v186 = vmul.f32 %v149, %v156
  %v187 = vmul.f32 %v152, %v156
  %v188 = vmul.f32 %v155, %v156
  %v189 = vsub.f32 %v27, %v157
  %v190 = vsub.f32 %v28, %v158
  %v191 = vsub.f32 %v29, %v159
  %v192 = vsub.f32 %v30, %v160
  %v193 = vsub.f32 %v31, %v161
  %v194 = vsub.f32 %v32, %v162
  %v195 = vsub.f32 %v33, %v163
  %v196 = vsub.f32 %v34, %v164
  %v197 = vsub.f32 %v35, %v165
  %v198 = vsub.f32 %v36, %v166
  %v199 = vsub.f32 %v37, %v167
  %v200 = vsub.f32 %v38, %v168
  %v201 = vsub.f32 %v39, %v169
  %v202 = vsub.f32 %v40, %v170
  %v203 = vsub.f32 %v41, %v171
  %v204 = vsub.f32 %v42, %v172
  %v205 = vsub.f32 %v43, %v173
  %v206 = vsub.f32 %v44, %v174
  %v207 = vsub.f32 %v45, %v175
  %v208 = vsub.f32 %v46, %v176
  %v209 = vsub.f32 %v47, %v177
  %v210 = vsub.f32 %v48, %v178
  %v211 = vsub.f32 %v49, %v179
  %v212 = vsub.f32 %v50, %v180
  %v213 = vsub.f32 %v51, %v181
  %v214 = vsub.f32 %v52, %v182
  %v215 = vsub.f32 %v53, %v183
  %v216 = vsub.f32 %v54, %v184
  %v217 = vsub.f32 %v55, %v185
  %v218 = vsub.f32 %v56, %v186
  %v219 = vsub.f32 %v57, %v187
  %v220 = vsub.f32 %v58, %v188
  %v221 = vmul.f32 %v189, %v189
  %v222 = vmul.f32 %v190, %v190
  %v223 = vmul.f32 %v191, %v191
  %v224 = vmul.f32 %v192, %v192
  %v225 = vmul.f32 %v193, %v193
  %v226 = vmul.f32 %v194, %v194
  %v227 = vmul.f32 %v195, %v195
  %v228 = vmul.f32 %v196, %v196
  %v229 = vmul.f32 %v197, %v197
  %v230 = vmul.f32 %v198, %v198
  %v231 = vmul.f32 %v199, %v199
  %v232 = vmul.f32 %v200, %v200
  %v233 = vmul.f32 %v201, %v201
  %v234 = vmul.f32 %v202, %v202
  %v235 = vmul.f32 %v203, %v203
  %v236 = vmul.f32 %v204, %v204
  %v237 = vmul.f32 %v205, %v205
  %v238 = vmul.f32 %v206, %v206
  %v239 = vmul.f32 %v207, %v207
  %v240 = vmul.f32 %v208, %v208
  %v241 = vmul.f32 %v209, %v209
  %v242 = vmul.f32 %v210, %v210
  %v243 = vmul.f32 %v211, %v211
  %v244 = vmul.f32 %v212, %v212
  %v245 = vmul.f32 %v213, %v213
  %v246 = vmul.f32 %v214, %v214
  %v247 = vmul.f32 %v215, %v215
  %v248 = vmul.f32 %v216, %v216
  %v249 = vmul.f32 %v217, %v217
  %v250 = vmul.f32 %v218, %v218
  %v251 = vmul.f32 %v219, %v219
  %v252 = vmul.f32 %v220, %v220
  %v253 = vsel %vm59, %v221, 0.0
  %254 = vadd.xlane.f32.xlu0 %v253
  %v255 = vpop.xlane.xlu0 %254
  %v256 = vsel %vm59, %v222, 0.0
  %257 = vadd.xlane.f32.xlu0 %v256
  %v258 = vpop.xlane.xlu0 %257
  %v259 = vsel %vm59, %v223, 0.0
  %260 = vadd.xlane.f32.xlu0 %v259
  %v261 = vpop.xlane.xlu0 %260
  %v262 = vsel %vm59, %v224, 0.0
  %263 = vadd.xlane.f32.xlu0 %v262
  %v264 = vpop.xlane.xlu0 %263
  %v265 = vsel %vm59, %v225, 0.0
  %266 = vadd.xlane.f32.xlu0 %v265
  %v267 = vpop.xlane.xlu0 %266
  %v268 = vsel %vm59, %v226, 0.0
  %269 = vadd.xlane.f32.xlu0 %v268
  %v270 = vpop.xlane.xlu0 %269
  %v271 = vsel %vm59, %v227, 0.0
  %272 = vadd.xlane.f32.xlu0 %v271
  %v273 = vpop.xlane.xlu0 %272
  %v274 = vsel %vm59, %v228, 0.0
  %275 = vadd.xlane.f32.xlu0 %v274
  %v276 = vpop.xlane.xlu0 %275
  %v277 = vsel %vm59, %v229, 0.0
  %278 = vadd.xlane.f32.xlu0 %v277
  %v279 = vpop.xlane.xlu0 %278
  %v280 = vsel %vm59, %v230, 0.0
  %281 = vadd.xlane.f32.xlu0 %v280
  %v282 = vpop.xlane.xlu0 %281
  %v283 = vsel %vm59, %v231, 0.0
  %284 = vadd.xlane.f32.xlu0 %v283
  %v285 = vpop.xlane.xlu0 %284
  %v286 = vsel %vm59, %v232, 0.0
  %287 = vadd.xlane.f32.xlu0 %v286
  %v288 = vpop.xlane.xlu0 %287
  %v289 = vsel %vm59, %v233, 0.0
  %290 = vadd.xlane.f32.xlu0 %v289
  %v291 = vpop.xlane.xlu0 %290
  %v292 = vsel %vm59, %v234, 0.0
  %293 = vadd.xlane.f32.xlu0 %v292
  %v294 = vpop.xlane.xlu0 %293
  %v295 = vsel %vm59, %v235, 0.0
  %296 = vadd.xlane.f32.xlu0 %v295
  %v297 = vpop.xlane.xlu0 %296
  %v298 = vsel %vm59, %v236, 0.0
  %299 = vadd.xlane.f32.xlu0 %v298
  %v300 = vpop.xlane.xlu0 %299
  %v301 = vsel %vm59, %v237, 0.0
  %302 = vadd.xlane.f32.xlu0 %v301
  %v303 = vpop.xlane.xlu0 %302
  %v304 = vsel %vm59, %v238, 0.0
  %305 = vadd.xlane.f32.xlu0 %v304
  %v306 = vpop.xlane.xlu0 %305
  %v307 = vsel %vm59, %v239, 0.0
  %308 = vadd.xlane.f32.xlu0 %v307
  %v309 = vpop.xlane.xlu0 %308
  %v310 = vsel %vm59, %v240, 0.0
  %311 = vadd.xlane.f32.xlu0 %v310
  %v312 = vpop.xlane.xlu0 %311
  %v313 = vsel %vm59, %v241, 0.0
  %314 = vadd.xlane.f32.xlu0 %v313
  %v315 = vpop.xlane.xlu0 %314
  %v316 = vsel %vm59, %v242, 0.0
  %317 = vadd.xlane.f32.xlu0 %v316
  %v318 = vpop.xlane.xlu0 %317
  %v319 = vsel %vm59, %v243, 0.0
  %320 = vadd.xlane.f32.xlu0 %v319
  %v321 = vpop.xlane.xlu0 %320
  %v322 = vsel %vm59, %v244, 0.0
  %323 = vadd.xlane.f32.xlu0 %v322
  %v324 = vpop.xlane.xlu0 %323
  %v325 = vsel %vm59, %v245, 0.0
  %326 = vadd.xlane.f32.xlu0 %v325
  %v327 = vpop.xlane.xlu0 %326
  %v328 = vsel %vm59, %v246, 0.0
  %329 = vadd.xlane.f32.xlu0 %v328
  %v330 = vpop.xlane.xlu0 %329
  %v331 = vsel %vm59, %v247, 0.0
  %332 = vadd.xlane.f32.xlu0 %v331
  %v333 = vpop.xlane.xlu0 %332
  %v334 = vsel %vm59, %v248, 0.0
  %335 = vadd.xlane.f32.xlu0 %v334
  %v336 = vpop.xlane.xlu0 %335
  %v337 = vsel %vm59, %v249, 0.0
  %338 = vadd.xlane.f32.xlu0 %v337
  %v339 = vpop.xlane.xlu0 %338
  %v340 = vsel %vm59, %v250, 0.0
  %341 = vadd.xlane.f32.xlu0 %v340
  %v342 = vpop.xlane.xlu0 %341
  %v343 = vsel %vm59, %v251, 0.0
  %344 = vadd.xlane.f32.xlu0 %v343
  %v345 = vpop.xlane.xlu0 %344
  %v346 = vsel %vm59, %v252, 0.0
  %347 = vadd.xlane.f32.xlu0 %v346
  %v348 = vpop.xlane.xlu0 %347
  %v349 = vmul.f32 %v255, %v156
  %v350 = vmul.f32 %v258, %v156
  %v351 = vmul.f32 %v261, %v156
  %v352 = vmul.f32 %v264, %v156
  %v353 = vmul.f32 %v267, %v156
  %v354 = vmul.f32 %v270, %v156
  %v355 = vmul.f32 %v273, %v156
  %v356 = vmul.f32 %v276, %v156
  %v357 = vmul.f32 %v279, %v156
  %v358 = vmul.f32 %v282, %v156
  %v359 = vmul.f32 %v285, %v156
  %v360 = vmul.f32 %v288, %v156
  %v361 = vmul.f32 %v291, %v156
  %v362 = vmul.f32 %v294, %v156
  %v363 = vmul.f32 %v297, %v156
  %v364 = vmul.f32 %v300, %v156
  %v365 = vmul.f32 %v303, %v156
  %v366 = vmul.f32 %v306, %v156
  %v367 = vmul.f32 %v309, %v156
  %v368 = vmul.f32 %v312, %v156
  %v369 = vmul.f32 %v315, %v156
  %v370 = vmul.f32 %v318, %v156
  %v371 = vmul.f32 %v321, %v156
  %v372 = vmul.f32 %v324, %v156
  %v373 = vmul.f32 %v327, %v156
  %v374 = vmul.f32 %v330, %v156
  %v375 = vmul.f32 %v333, %v156
  %v376 = vmul.f32 %v336, %v156
  %v377 = vmul.f32 %v339, %v156
  %v378 = vmul.f32 %v342, %v156
  %v379 = vmul.f32 %v345, %v156
  %v380 = vmul.f32 %v348, %v156
  %v381 = vadd.f32 %v349, 1e-05
  %v382 = vadd.f32 %v350, 1e-05
  %v383 = vadd.f32 %v351, 1e-05
  %v384 = vadd.f32 %v352, 1e-05
  %v385 = vadd.f32 %v353, 1e-05
  %v386 = vadd.f32 %v354, 1e-05
  %v387 = vadd.f32 %v355, 1e-05
  %v388 = vadd.f32 %v356, 1e-05
  %v389 = vadd.f32 %v357, 1e-05
  %v390 = vadd.f32 %v358, 1e-05
  %v391 = vadd.f32 %v359, 1e-05
  %v392 = vadd.f32 %v360, 1e-05
  %v393 = vadd.f32 %v361, 1e-05
  %v394 = vadd.f32 %v362, 1e-05
  %v395 = vadd.f32 %v363, 1e-05
  %v396 = vadd.f32 %v364, 1e-05
  %v397 = vadd.f32 %v365, 1e-05
  %v398 = vadd.f32 %v366, 1e-05
  %v399 = vadd.f32 %v367, 1e-05
  %v400 = vadd.f32 %v368, 1e-05
  %v401 = vadd.f32 %v369, 1e-05
  %v402 = vadd.f32 %v370, 1e-05
  %v403 = vadd.f32 %v371, 1e-05
  %v404 = vadd.f32 %v372, 1e-05
  %v405 = vadd.f32 %v373, 1e-05
  %v406 = vadd.f32 %v374, 1e-05
  %v407 = vadd.f32 %v375, 1e-05
  %v408 = vadd.f32 %v376, 1e-05
  %v409 = vadd.f32 %v377, 1e-05
  %v410 = vadd.f32 %v378, 1e-05
  %v411 = vadd.f32 %v379, 1e-05
  %v412 = vadd.f32 %v380, 1e-05
  %v413 = vrsqrt.pop %v381
  %v414 = vrsqrt.pop %v382
  %v415 = vrsqrt.pop %v383
  %v416 = vrsqrt.pop %v384
  %v417 = vrsqrt.pop %v385
  %v418 = vrsqrt.pop %v386
  %v419 = vrsqrt.pop %v387
  %v420 = vrsqrt.pop %v388
  %v421 = vrsqrt.pop %v389
  %v422 = vrsqrt.pop %v390
  %v423 = vrsqrt.pop %v391
  %v424 = vrsqrt.pop %v392
  %v425 = vrsqrt.pop %v393
  %v426 = vrsqrt.pop %v394
  %v427 = vrsqrt.pop %v395
  %v428 = vrsqrt.pop %v396
  %v429 = vrsqrt.pop %v397
  %v430 = vrsqrt.pop %v398
  %v431 = vrsqrt.pop %v399
  %v432 = vrsqrt.pop %v400
  %v433 = vrsqrt.pop %v401
  %v434 = vrsqrt.pop %v402
  %v435 = vrsqrt.pop %v403
  %v436 = vrsqrt.pop %v404
  %v437 = vrsqrt.pop %v405
  %v438 = vrsqrt.pop %v406
  %v439 = vrsqrt.pop %v407
  %v440 = vrsqrt.pop %v408
  %v441 = vrsqrt.pop %v409
  %v442 = vrsqrt.pop %v410
  %v443 = vrsqrt.pop %v411
  %v444 = vrsqrt.pop %v412
  %v445 = vmul.f32 %v189, %v413
  %v446 = vmul.f32 %v190, %v414
  %v447 = vmul.f32 %v191, %v415
  %v448 = vmul.f32 %v192, %v416
  %v449 = vmul.f32 %v193, %v417
  %v450 = vmul.f32 %v194, %v418
  %v451 = vmul.f32 %v195, %v419
  %v452 = vmul.f32 %v196, %v420
  %v453 = vmul.f32 %v197, %v421
  %v454 = vmul.f32 %v198, %v422
  %v455 = vmul.f32 %v199, %v423
  %v456 = vmul.f32 %v200, %v424
  %v457 = vmul.f32 %v201, %v425
  %v458 = vmul.f32 %v202, %v426
  %v459 = vmul.f32 %v203, %v427
  %v460 = vmul.f32 %v204, %v428
  %v461 = vmul.f32 %v205, %v429
  %v462 = vmul.f32 %v206, %v430
  %v463 = vmul.f32 %v207, %v431
  %v464 = vmul.f32 %v208, %v432
  %v465 = vmul.f32 %v209, %v433
  %v466 = vmul.f32 %v210, %v434
  %v467 = vmul.f32 %v211, %v435
  %v468 = vmul.f32 %v212, %v436
  %v469 = vmul.f32 %v213, %v437
  %v470 = vmul.f32 %v214, %v438
  %v471 = vmul.f32 %v215, %v439
  %v472 = vmul.f32 %v216, %v440
  %v473 = vmul.f32 %v217, %v441
  %v474 = vmul.f32 %v218, %v442
  %v475 = vmul.f32 %v219, %v443
  %v476 = vmul.f32 %v220, %v444
  %v477 = vld [vmem:[%s1] sm:$0x1]
  %v479 = vlaneseq
  %v480 = vshrl.u32 %v479, 7
  %v481 = vsub.s32 0, %v480
  %v482 = vrot.slane %v477, %v481
  %v484 = vmul.f32 %v445, %v482
  %v485 = vmul.f32 %v446, %v482
  %v486 = vmul.f32 %v447, %v482
  %v487 = vmul.f32 %v448, %v482
  %v488 = vmul.f32 %v449, %v482
  %v489 = vmul.f32 %v450, %v482
  %v490 = vmul.f32 %v451, %v482
  %v491 = vmul.f32 %v452, %v482
  %v492 = vmul.f32 %v453, %v482
  %v493 = vmul.f32 %v454, %v482
  %v494 = vmul.f32 %v455, %v482
  %v495 = vmul.f32 %v456, %v482
  %v496 = vmul.f32 %v457, %v482
  %v497 = vmul.f32 %v458, %v482
  %v498 = vmul.f32 %v459, %v482
  %v499 = vmul.f32 %v460, %v482
  %v500 = vmul.f32 %v461, %v482
  %v501 = vmul.f32 %v462, %v482
  %v502 = vmul.f32 %v463, %v482
  %v503 = vmul.f32 %v464, %v482
  %v504 = vmul.f32 %v465, %v482
  %v505 = vmul.f32 %v466, %v482
  %v506 = vmul.f32 %v467, %v482
  %v507 = vmul.f32 %v468, %v482
  %v508 = vmul.f32 %v469, %v482
  %v509 = vmul.f32 %v470, %v482
  %v510 = vmul.f32 %v471, %v482
  %v511 = vmul.f32 %v472, %v482
  %v512 = vmul.f32 %v473, %v482
  %v513 = vmul.f32 %v474, %v482
  %v514 = vmul.f32 %v475, %v482
  %v515 = vmul.f32 %v476, %v482
  %v516 = vld [vmem:[%s2] sm:$0x1]
  %v518 = vlaneseq
  %v519 = vshrl.u32 %v518, 7
  %v520 = vsub.s32 0, %v519
  %v521 = vrot.slane %v516, %v520
  %v523 = vadd.f32 %v484, %v521
  %v524 = vadd.f32 %v485, %v521
  %v525 = vadd.f32 %v486, %v521
  %v526 = vadd.f32 %v487, %v521
  %v527 = vadd.f32 %v488, %v521
  %v528 = vadd.f32 %v489, %v521
  %v529 = vadd.f32 %v490, %v521
  %v530 = vadd.f32 %v491, %v521
  %v531 = vadd.f32 %v492, %v521
  %v532 = vadd.f32 %v493, %v521
  %v533 = vadd.f32 %v494, %v521
  %v534 = vadd.f32 %v495, %v521
  %v535 = vadd.f32 %v496, %v521
  %v536 = vadd.f32 %v497, %v521
  %v537 = vadd.f32 %v498, %v521
  %v538 = vadd.f32 %v499, %v521
  %v539 = vadd.f32 %v500, %v521
  %v540 = vadd.f32 %v501, %v521
  %v541 = vadd.f32 %v502, %v521
  %v542 = vadd.f32 %v503, %v521
  %v543 = vadd.f32 %v504, %v521
  %v544 = vadd.f32 %v505, %v521
  %v545 = vadd.f32 %v506, %v521
  %v546 = vadd.f32 %v507, %v521
  %v547 = vadd.f32 %v508, %v521
  %v548 = vadd.f32 %v509, %v521
  %v549 = vadd.f32 %v510, %v521
  %v550 = vadd.f32 %v511, %v521
  %v551 = vadd.f32 %v512, %v521
  %v552 = vadd.f32 %v513, %v521
  %v553 = vadd.f32 %v514, %v521
  %v554 = vadd.f32 %v515, %v521
  %v555 = vpack.c.bf16 %v524, %v523
  %v556 = vpack.c.bf16 %v526, %v525
  %v557 = vpack.c.bf16 %v528, %v527
  %v558 = vpack.c.bf16 %v530, %v529
  %v559 = vpack.c.bf16 %v532, %v531
  %v560 = vpack.c.bf16 %v534, %v533
  %v561 = vpack.c.bf16 %v536, %v535
  %v562 = vpack.c.bf16 %v538, %v537
  %v563 = vpack.c.bf16 %v540, %v539
  %v564 = vpack.c.bf16 %v542, %v541
  %v565 = vpack.c.bf16 %v544, %v543
  %v566 = vpack.c.bf16 %v546, %v545
  %v567 = vpack.c.bf16 %v548, %v547
  %v568 = vpack.c.bf16 %v550, %v549
  %v569 = vpack.c.bf16 %v552, %v551
  %v570 = vpack.c.bf16 %v554, %v553
  %v571 = vld [vmem:[%s3] sm:$0xf]
  %v572 = vld [vmem:[%s3 + $0x4] sm:$0xf]
  %v573 = vld [vmem:[%s4] sm:$0x1]
  %v575 = vlaneseq
  %v576 = vshrl.u32 %v575, 7
  %v577 = vsub.s32 0, %v576
  %v578 = vrot.slane %v573, %v577
  %v582 = vunpack.c.l.b16 %v571
  %v583 = vunpack.c.l.b16 %v572
  %v584 = vpack.c.b16 %v583, %v582
  %v587 = vsel %vm59, %v555, 0
  %v590 = vsel %vm59, %v556, 0
  %v593 = vsel %vm59, %v557, 0
  %v596 = vsel %vm59, %v558, 0
  %v599 = vsel %vm59, %v559, 0
  %v602 = vsel %vm59, %v560, 0
  %v605 = vsel %vm59, %v561, 0
  %v608 = vsel %vm59, %v562, 0
  %v611 = vsel %vm59, %v563, 0
  %v614 = vsel %vm59, %v564, 0
  %v617 = vsel %vm59, %v565, 0
  %v620 = vsel %vm59, %v566, 0
  %v623 = vsel %vm59, %v567, 0
  %v626 = vsel %vm59, %v568, 0
  %v629 = vsel %vm59, %v569, 0
  %v632 = vsel %vm59, %v570, 0
  %634 = vmatprep.subr.bf16.mxu0 0
  %635 = vmatpush1.bf16.msra.mxu0 %v584
  %636 = vmatprep.subr.bf16.mxu0 0
  %637 = vmatpush1.bf16.msra.mxu0 0
  %638 = vmatprep.subr.bf16.mxu0 0
  %639 = vmatpush1.bf16.msra.mxu0 0
  %640 = vmatprep.subr.bf16.mxu0 0
  %641 = vmatpush1.bf16.msra.mxu0 0
  %642 = vmatprep.subr.bf16.mxu0 0
  %643 = vmatpush1.bf16.msra.mxu0 0
  %644 = vmatprep.subr.bf16.mxu0 0
  %645 = vmatpush1.bf16.msra.mxu0 0
  %646 = vmatprep.subr.bf16.mxu0 0
  %647 = vmatpush1.bf16.msra.mxu0 0
  %648 = vmatprep.subr.bf16.mxu0 0
  %649 = vmatpush1.bf16.msra.mxu0 0
  %650 = vmatprep.subr.bf16.mxu0 0
  %651 = vmatpush1.bf16.msra.mxu0 0
  %652 = vmatprep.subr.bf16.mxu0 0
  %653 = vmatpush1.bf16.msra.mxu0 0
  %654 = vmatprep.subr.bf16.mxu0 0
  %655 = vmatpush1.bf16.msra.mxu0 0
  %656 = vmatprep.subr.bf16.mxu0 0
  %657 = vmatpush1.bf16.msra.mxu0 0
  %658 = vmatprep.subr.bf16.mxu0 0
  %659 = vmatpush1.bf16.msra.mxu0 0
  %660 = vmatprep.subr.bf16.mxu0 0
  %661 = vmatpush1.bf16.msra.mxu0 0
  %662 = vmatprep.subr.bf16.mxu0 0
  %663 = vmatpush1.bf16.msra.mxu0 0
  %664 = vmatprep.subr.bf16.mxu0 0
  %665 = vmatpush1.bf16.msra.mxu0 0
  %666 = vmatprep.mubr.bf16.mxu0 0
  %667 = vmatmul.mubr.bf16.gmra.mrb[0].mxu0 %v587
  %v668 = vpop.f32.mrb[0].mxu0
  %v669 = vadd.f32 %v578, %v668
  %v670 = vpop.f32.mrb[0].mxu0
  %v671 = vpop.f32.mrb[0].mxu0
  %v672 = vadd.f32 %v578, %v671
  %v673 = vpop.f32.mrb[0].mxu0
  %674 = vmatprep.mubr.bf16.mxu0 0
  %675 = vmatmul.mubr.bf16.gmra.mrb[0].mxu0 %v590
  %v676 = vpop.f32.mrb[0].mxu0
  %v677 = vadd.f32 %v578, %v676
  %v678 = vpop.f32.mrb[0].mxu0
  %v679 = vpop.f32.mrb[0].mxu0
  %v680 = vadd.f32 %v578, %v679
  %v681 = vpop.f32.mrb[0].mxu0
  %682 = vmatprep.mubr.bf16.mxu0 0
  %683 = vmatmul.mubr.bf16.gmra.mrb[0].mxu0 %v593
  %v684 = vpop.f32.mrb[0].mxu0
  %v685 = vadd.f32 %v578, %v684
  %v686 = vpop.f32.mrb[0].mxu0
  %v687 = vpop.f32.mrb[0].mxu0
  %v688 = vadd.f32 %v578, %v687
  %v689 = vpop.f32.mrb[0].mxu0
  %690 = vmatprep.mubr.bf16.mxu0 0
  %691 = vmatmul.mubr.bf16.gmra.mrb[0].mxu0 %v596
  %v692 = vpop.f32.mrb[0].mxu0
  %v693 = vadd.f32 %v578, %v692
  %v694 = vpop.f32.mrb[0].mxu0
  %v695 = vpop.f32.mrb[0].mxu0
  %v696 = vadd.f32 %v578, %v695
  %v697 = vpop.f32.mrb[0].mxu0
  %698 = vmatprep.mubr.bf16.mxu0 0
  %699 = vmatmul.mubr.bf16.gmra.mrb[0].mxu0 %v599
  %v700 = vpop.f32.mrb[0].mxu0
  %v701 = vadd.f32 %v578, %v700
  %v702 = vpop.f32.mrb[0].mxu0
  %v703 = vpop.f32.mrb[0].mxu0
  %v704 = vadd.f32 %v578, %v703
  %v705 = vpop.f32.mrb[0].mxu0
  %706 = vmatprep.mubr.bf16.mxu0 0
  %707 = vmatmul.mubr.bf16.gmra.mrb[0].mxu0 %v602
  %v708 = vpop.f32.mrb[0].mxu0
  %v709 = vadd.f32 %v578, %v708
  %v710 = vpop.f32.mrb[0].mxu0
  %v711 = vpop.f32.mrb[0].mxu0
  %v712 = vadd.f32 %v578, %v711
  %v713 = vpop.f32.mrb[0].mxu0
  %714 = vmatprep.mubr.bf16.mxu0 0
  %715 = vmatmul.mubr.bf16.gmra.mrb[0].mxu0 %v605
  %v716 = vpop.f32.mrb[0].mxu0
  %v717 = vadd.f32 %v578, %v716
  %v718 = vpop.f32.mrb[0].mxu0
  %v719 = vpop.f32.mrb[0].mxu0
  %v720 = vadd.f32 %v578, %v719
  %v721 = vpop.f32.mrb[0].mxu0
  %722 = vmatprep.mubr.bf16.mxu0 0
  %723 = vmatmul.mubr.bf16.gmra.mrb[0].mxu0 %v608
  %v724 = vpop.f32.mrb[0].mxu0
  %v725 = vadd.f32 %v578, %v724
  %v726 = vpop.f32.mrb[0].mxu0
  %v727 = vpop.f32.mrb[0].mxu0
  %v728 = vadd.f32 %v578, %v727
  %v729 = vpop.f32.mrb[0].mxu0
  %730 = vmatprep.mubr.bf16.mxu0 0
  %731 = vmatmul.mubr.bf16.gmra.mrb[0].mxu0 %v611
  %v732 = vpop.f32.mrb[0].mxu0
  %v733 = vadd.f32 %v578, %v732
  %v734 = vpop.f32.mrb[0].mxu0
  %v735 = vpop.f32.mrb[0].mxu0
  %v736 = vadd.f32 %v578, %v735
  %v737 = vpop.f32.mrb[0].mxu0
  %738 = vmatprep.mubr.bf16.mxu0 0
  %739 = vmatmul.mubr.bf16.gmra.mrb[0].mxu0 %v614
  %v740 = vpop.f32.mrb[0].mxu0
  %v741 = vadd.f32 %v578, %v740
  %v742 = vpop.f32.mrb[0].mxu0
  %v743 = vpop.f32.mrb[0].mxu0
  %v744 = vadd.f32 %v578, %v743
  %v745 = vpop.f32.mrb[0].mxu0
  %746 = vmatprep.mubr.bf16.mxu0 0
  %747 = vmatmul.mubr.bf16.gmra.mrb[0].mxu0 %v617
  %v748 = vpop.f32.mrb[0].mxu0
  %v749 = vadd.f32 %v578, %v748
  %v750 = vpop.f32.mrb[0].mxu0
  %v751 = vpop.f32.mrb[0].mxu0
  %v752 = vadd.f32 %v578, %v751
  %v753 = vpop.f32.mrb[0].mxu0
  %754 = vmatprep.mubr.bf16.mxu0 0
  %755 = vmatmul.mubr.bf16.gmra.mrb[0].mxu0 %v620
  %v756 = vpop.f32.mrb[0].mxu0
  %v757 = vadd.f32 %v578, %v756
  %v758 = vpop.f32.mrb[0].mxu0
  %v759 = vpop.f32.mrb[0].mxu0
  %v760 = vadd.f32 %v578, %v759
  %v761 = vpop.f32.mrb[0].mxu0
  %762 = vmatprep.mubr.bf16.mxu0 0
  %763 = vmatmul.mubr.bf16.gmra.mrb[0].mxu0 %v623
  %v764 = vpop.f32.mrb[0].mxu0
  %v765 = vadd.f32 %v578, %v764
  %v766 = vpop.f32.mrb[0].mxu0
  %v767 = vpop.f32.mrb[0].mxu0
  %v768 = vadd.f32 %v578, %v767
  %v769 = vpop.f32.mrb[0].mxu0
  %770 = vmatprep.mubr.bf16.mxu0 0
  %771 = vmatmul.mubr.bf16.gmra.mrb[0].mxu0 %v626
  %v772 = vpop.f32.mrb[0].mxu0
  %v773 = vadd.f32 %v578, %v772
  %v774 = vpop.f32.mrb[0].mxu0
  %v775 = vpop.f32.mrb[0].mxu0
  %v776 = vadd.f32 %v578, %v775
  %v777 = vpop.f32.mrb[0].mxu0
  %778 = vmatprep.mubr.bf16.mxu0 0
  %779 = vmatmul.mubr.bf16.gmra.mrb[0].mxu0 %v629
  %v780 = vpop.f32.mrb[0].mxu0
  %v781 = vadd.f32 %v578, %v780
  %v782 = vpop.f32.mrb[0].mxu0
  %v783 = vpop.f32.mrb[0].mxu0
  %v784 = vadd.f32 %v578, %v783
  %v785 = vpop.f32.mrb[0].mxu0
  %786 = vmatprep.mubr.bf16.mxu0 0
  %787 = vmatmul.mubr.bf16.gmra.mrb[0].mxu0 %v632
  %v788 = vpop.f32.mrb[0].mxu0
  %v789 = vadd.f32 %v578, %v788
  %v790 = vpop.f32.mrb[0].mxu0
  %v791 = vpop.f32.mrb[0].mxu0
  %v792 = vadd.f32 %v578, %v791
  %v793 = vpop.f32.mrb[0].mxu0
  %794 = vdwg.mxu0
  %v795 = vmul.f32 %v669, 0.5
  %v796 = vmul.f32 %v672, 0.5
  %v797 = vmul.f32 %v677, 0.5
  %v798 = vmul.f32 %v680, 0.5
  %v799 = vmul.f32 %v685, 0.5
  %v800 = vmul.f32 %v688, 0.5
  %v801 = vmul.f32 %v693, 0.5
  %v802 = vmul.f32 %v696, 0.5
  %v803 = vmul.f32 %v701, 0.5
  %v804 = vmul.f32 %v704, 0.5
  %v805 = vmul.f32 %v709, 0.5
  %v806 = vmul.f32 %v712, 0.5
  %v807 = vmul.f32 %v717, 0.5
  %v808 = vmul.f32 %v720, 0.5
  %v809 = vmul.f32 %v725, 0.5
  %v810 = vmul.f32 %v728, 0.5
  %v811 = vmul.f32 %v733, 0.5
  %v812 = vmul.f32 %v736, 0.5
  %v813 = vmul.f32 %v741, 0.5
  %v814 = vmul.f32 %v744, 0.5
  %v815 = vmul.f32 %v749, 0.5
  %v816 = vmul.f32 %v752, 0.5
  %v817 = vmul.f32 %v757, 0.5
  %v818 = vmul.f32 %v760, 0.5
  %v819 = vmul.f32 %v765, 0.5
  %v820 = vmul.f32 %v768, 0.5
  %v821 = vmul.f32 %v773, 0.5
  %v822 = vmul.f32 %v776, 0.5
  %v823 = vmul.f32 %v781, 0.5
  %v824 = vmul.f32 %v784, 0.5
  %v825 = vmul.f32 %v789, 0.5
  %v826 = vmul.f32 %v792, 0.5
  %v827 = vmul.f32 %v669, 0.70710677
  %v828 = vmul.f32 %v672, 0.70710677
  %v829 = vmul.f32 %v677, 0.70710677
  %v830 = vmul.f32 %v680, 0.70710677
  %v831 = vmul.f32 %v685, 0.70710677
  %v832 = vmul.f32 %v688, 0.70710677
  %v833 = vmul.f32 %v693, 0.70710677
  %v834 = vmul.f32 %v696, 0.70710677
  %v835 = vmul.f32 %v701, 0.70710677
  %v836 = vmul.f32 %v704, 0.70710677
  %v837 = vmul.f32 %v709, 0.70710677
  %v838 = vmul.f32 %v712, 0.70710677
  %v839 = vmul.f32 %v717, 0.70710677
  %v840 = vmul.f32 %v720, 0.70710677
  %v841 = vmul.f32 %v725, 0.70710677
  %v842 = vmul.f32 %v728, 0.70710677
  %v843 = vmul.f32 %v733, 0.70710677
  %v844 = vmul.f32 %v736, 0.70710677
  %v845 = vmul.f32 %v741, 0.70710677
  %v846 = vmul.f32 %v744, 0.70710677
  %v847 = vmul.f32 %v749, 0.70710677
  %v848 = vmul.f32 %v752, 0.70710677
  %v849 = vmul.f32 %v757, 0.70710677
  %v850 = vmul.f32 %v760, 0.70710677
  %v851 = vmul.f32 %v765, 0.70710677
  %v852 = vmul.f32 %v768, 0.70710677
  %v853 = vmul.f32 %v773, 0.70710677
  %v854 = vmul.f32 %v776, 0.70710677
  %v855 = vmul.f32 %v781, 0.70710677
  %v856 = vmul.f32 %v784, 0.70710677
  %v857 = vmul.f32 %v789, 0.70710677
  %v858 = vmul.f32 %v792, 0.70710677
  %v859 = vand.u32 2147483647, %v827
  %v860 = vand.u32 2147483647, %v828
  %v861 = vand.u32 2147483647, %v829
  %v862 = vand.u32 2147483647, %v830
  %v863 = vand.u32 2147483647, %v831
  %v864 = vand.u32 2147483647, %v832
  %v865 = vand.u32 2147483647, %v833
  %v866 = vand.u32 2147483647, %v834
  %v867 = vand.u32 2147483647, %v835
  %v868 = vand.u32 2147483647, %v836
  %v869 = vand.u32 2147483647, %v837
  %v870 = vand.u32 2147483647, %v838
  %v871 = vand.u32 2147483647, %v839
  %v872 = vand.u32 2147483647, %v840
  %v873 = vand.u32 2147483647, %v841
  %v874 = vand.u32 2147483647, %v842
  %v875 = vand.u32 2147483647, %v843
  %v876 = vand.u32 2147483647, %v844
  %v877 = vand.u32 2147483647, %v845
  %v878 = vand.u32 2147483647, %v846
  %v879 = vand.u32 2147483647, %v847
  %v880 = vand.u32 2147483647, %v848
  %v881 = vand.u32 2147483647, %v849
  %v882 = vand.u32 2147483647, %v850
  %v883 = vand.u32 2147483647, %v851
  %v884 = vand.u32 2147483647, %v852
  %v885 = vand.u32 2147483647, %v853
  %v886 = vand.u32 2147483647, %v854
  %v887 = vand.u32 2147483647, %v855
  %v888 = vand.u32 2147483647, %v856
  %v889 = vand.u32 2147483647, %v857
  %v890 = vand.u32 2147483647, %v858
  %v891 = vmul.f32 %v859, 0.3275911
  %v892 = vmul.f32 %v860, 0.3275911
  %v893 = vmul.f32 %v861, 0.3275911
  %v894 = vmul.f32 %v862, 0.3275911
  %v895 = vmul.f32 %v863, 0.3275911
  %v896 = vmul.f32 %v864, 0.3275911
  %v897 = vmul.f32 %v865, 0.3275911
  %v898 = vmul.f32 %v866, 0.3275911
  %v899 = vmul.f32 %v867, 0.3275911
  %v900 = vmul.f32 %v868, 0.3275911
  %v901 = vmul.f32 %v869, 0.3275911
  %v902 = vmul.f32 %v870, 0.3275911
  %v903 = vmul.f32 %v871, 0.3275911
  %v904 = vmul.f32 %v872, 0.3275911
  %v905 = vmul.f32 %v873, 0.3275911
  %v906 = vmul.f32 %v874, 0.3275911
  %v907 = vmul.f32 %v875, 0.3275911
  %v908 = vmul.f32 %v876, 0.3275911
  %v909 = vmul.f32 %v877, 0.3275911
  %v910 = vmul.f32 %v878, 0.3275911
  %v911 = vmul.f32 %v879, 0.3275911
  %v912 = vmul.f32 %v880, 0.3275911
  %v913 = vmul.f32 %v881, 0.3275911
  %v914 = vmul.f32 %v882, 0.3275911
  %v915 = vmul.f32 %v883, 0.3275911
  %v916 = vmul.f32 %v884, 0.3275911
  %v917 = vmul.f32 %v885, 0.3275911
  %v918 = vmul.f32 %v886, 0.3275911
  %v919 = vmul.f32 %v887, 0.3275911
  %v920 = vmul.f32 %v888, 0.3275911
  %v921 = vmul.f32 %v889, 0.3275911
  %v922 = vmul.f32 %v890, 0.3275911
  %v923 = vadd.f32 %v891, 1.0
  %v924 = vadd.f32 %v892, 1.0
  %v925 = vadd.f32 %v893, 1.0
  %v926 = vadd.f32 %v894, 1.0
  %v927 = vadd.f32 %v895, 1.0
  %v928 = vadd.f32 %v896, 1.0
  %v929 = vadd.f32 %v897, 1.0
  %v930 = vadd.f32 %v898, 1.0
  %v931 = vadd.f32 %v899, 1.0
  %v932 = vadd.f32 %v900, 1.0
  %v933 = vadd.f32 %v901, 1.0
  %v934 = vadd.f32 %v902, 1.0
  %v935 = vadd.f32 %v903, 1.0
  %v936 = vadd.f32 %v904, 1.0
  %v937 = vadd.f32 %v905, 1.0
  %v938 = vadd.f32 %v906, 1.0
  %v939 = vadd.f32 %v907, 1.0
  %v940 = vadd.f32 %v908, 1.0
  %v941 = vadd.f32 %v909, 1.0
  %v942 = vadd.f32 %v910, 1.0
  %v943 = vadd.f32 %v911, 1.0
  %v944 = vadd.f32 %v912, 1.0
  %v945 = vadd.f32 %v913, 1.0
  %v946 = vadd.f32 %v914, 1.0
  %v947 = vadd.f32 %v915, 1.0
  %v948 = vadd.f32 %v916, 1.0
  %v949 = vadd.f32 %v917, 1.0
  %v950 = vadd.f32 %v918, 1.0
  %v951 = vadd.f32 %v919, 1.0
  %v952 = vadd.f32 %v920, 1.0
  %v953 = vadd.f32 %v921, 1.0
  %v954 = vadd.f32 %v922, 1.0
  %v955 = vrcp.pop %v923
  %v956 = vrcp.pop %v924
  %v957 = vrcp.pop %v925
  %v958 = vrcp.pop %v926
  %v959 = vrcp.pop %v927
  %v960 = vrcp.pop %v928
  %v961 = vrcp.pop %v929
  %v962 = vrcp.pop %v930
  %v963 = vrcp.pop %v931
  %v964 = vrcp.pop %v932
  %v965 = vrcp.pop %v933
  %v966 = vrcp.pop %v934
  %v967 = vrcp.pop %v935
  %v968 = vrcp.pop %v936
  %v969 = vrcp.pop %v937
  %v970 = vrcp.pop %v938
  %v971 = vrcp.pop %v939
  %v972 = vrcp.pop %v940
  %v973 = vrcp.pop %v941
  %v974 = vrcp.pop %v942
  %v975 = vrcp.pop %v943
  %v976 = vrcp.pop %v944
  %v977 = vrcp.pop %v945
  %v978 = vrcp.pop %v946
  %v979 = vrcp.pop %v947
  %v980 = vrcp.pop %v948
  %v981 = vrcp.pop %v949
  %v982 = vrcp.pop %v950
  %v983 = vrcp.pop %v951
  %v984 = vrcp.pop %v952
  %v985 = vrcp.pop %v953
  %v986 = vrcp.pop %v954
  %v987 = vmul.f32 %v955, 1.0614054
  %v988 = vmul.f32 %v956, 1.0614054
  %v989 = vmul.f32 %v957, 1.0614054
  %v990 = vmul.f32 %v958, 1.0614054
  %v991 = vmul.f32 %v959, 1.0614054
  %v992 = vmul.f32 %v960, 1.0614054
  %v993 = vmul.f32 %v961, 1.0614054
  %v994 = vmul.f32 %v962, 1.0614054
  %v995 = vmul.f32 %v963, 1.0614054
  %v996 = vmul.f32 %v964, 1.0614054
  %v997 = vmul.f32 %v965, 1.0614054
  %v998 = vmul.f32 %v966, 1.0614054
  %v999 = vmul.f32 %v967, 1.0614054
  %v1000 = vmul.f32 %v968, 1.0614054
  %v1001 = vmul.f32 %v969, 1.0614054
  %v1002 = vmul.f32 %v970, 1.0614054
  %v1003 = vmul.f32 %v971, 1.0614054
  %v1004 = vmul.f32 %v972, 1.0614054
  %v1005 = vmul.f32 %v973, 1.0614054
  %v1006 = vmul.f32 %v974, 1.0614054
  %v1007 = vmul.f32 %v975, 1.0614054
  %v1008 = vmul.f32 %v976, 1.0614054
  %v1009 = vmul.f32 %v977, 1.0614054
  %v1010 = vmul.f32 %v978, 1.0614054
  %v1011 = vmul.f32 %v979, 1.0614054
  %v1012 = vmul.f32 %v980, 1.0614054
  %v1013 = vmul.f32 %v981, 1.0614054
  %v1014 = vmul.f32 %v982, 1.0614054
  %v1015 = vmul.f32 %v983, 1.0614054
  %v1016 = vmul.f32 %v984, 1.0614054
  %v1017 = vmul.f32 %v985, 1.0614054
  %v1018 = vmul.f32 %v986, 1.0614054
  %v1019 = vadd.f32 %v987, -1.4531521
  %v1020 = vadd.f32 %v988, -1.4531521
  %v1021 = vadd.f32 %v989, -1.4531521
  %v1022 = vadd.f32 %v990, -1.4531521
  %v1023 = vadd.f32 %v991, -1.4531521
  %v1024 = vadd.f32 %v992, -1.4531521
  %v1025 = vadd.f32 %v993, -1.4531521
  %v1026 = vadd.f32 %v994, -1.4531521
  %v1027 = vadd.f32 %v995, -1.4531521
  %v1028 = vadd.f32 %v996, -1.4531521
  %v1029 = vadd.f32 %v997, -1.4531521
  %v1030 = vadd.f32 %v998, -1.4531521
  %v1031 = vadd.f32 %v999, -1.4531521
  %v1032 = vadd.f32 %v1000, -1.4531521
  %v1033 = vadd.f32 %v1001, -1.4531521
  %v1034 = vadd.f32 %v1002, -1.4531521
  %v1035 = vadd.f32 %v1003, -1.4531521
  %v1036 = vadd.f32 %v1004, -1.4531521
  %v1037 = vadd.f32 %v1005, -1.4531521
  %v1038 = vadd.f32 %v1006, -1.4531521
  %v1039 = vadd.f32 %v1007, -1.4531521
  %v1040 = vadd.f32 %v1008, -1.4531521
  %v1041 = vadd.f32 %v1009, -1.4531521
  %v1042 = vadd.f32 %v1010, -1.4531521
  %v1043 = vadd.f32 %v1011, -1.4531521
  %v1044 = vadd.f32 %v1012, -1.4531521
  %v1045 = vadd.f32 %v1013, -1.4531521
  %v1046 = vadd.f32 %v1014, -1.4531521
  %v1047 = vadd.f32 %v1015, -1.4531521
  %v1048 = vadd.f32 %v1016, -1.4531521
  %v1049 = vadd.f32 %v1017, -1.4531521
  %v1050 = vadd.f32 %v1018, -1.4531521
  %v1051 = vmul.f32 %v1019, %v955
  %v1052 = vmul.f32 %v1020, %v956
  %v1053 = vmul.f32 %v1021, %v957
  %v1054 = vmul.f32 %v1022, %v958
  %v1055 = vmul.f32 %v1023, %v959
  %v1056 = vmul.f32 %v1024, %v960
  %v1057 = vmul.f32 %v1025, %v961
  %v1058 = vmul.f32 %v1026, %v962
  %v1059 = vmul.f32 %v1027, %v963
  %v1060 = vmul.f32 %v1028, %v964
  %v1061 = vmul.f32 %v1029, %v965
  %v1062 = vmul.f32 %v1030, %v966
  %v1063 = vmul.f32 %v1031, %v967
  %v1064 = vmul.f32 %v1032, %v968
  %v1065 = vmul.f32 %v1033, %v969
  %v1066 = vmul.f32 %v1034, %v970
  %v1067 = vmul.f32 %v1035, %v971
  %v1068 = vmul.f32 %v1036, %v972
  %v1069 = vmul.f32 %v1037, %v973
  %v1070 = vmul.f32 %v1038, %v974
  %v1071 = vmul.f32 %v1039, %v975
  %v1072 = vmul.f32 %v1040, %v976
  %v1073 = vmul.f32 %v1041, %v977
  %v1074 = vmul.f32 %v1042, %v978
  %v1075 = vmul.f32 %v1043, %v979
  %v1076 = vmul.f32 %v1044, %v980
  %v1077 = vmul.f32 %v1045, %v981
  %v1078 = vmul.f32 %v1046, %v982
  %v1079 = vmul.f32 %v1047, %v983
  %v1080 = vmul.f32 %v1048, %v984
  %v1081 = vmul.f32 %v1049, %v985
  %v1082 = vmul.f32 %v1050, %v986
  %v1083 = vadd.f32 %v1051, 1.4214138
  %v1084 = vadd.f32 %v1052, 1.4214138
  %v1085 = vadd.f32 %v1053, 1.4214138
  %v1086 = vadd.f32 %v1054, 1.4214138
  %v1087 = vadd.f32 %v1055, 1.4214138
  %v1088 = vadd.f32 %v1056, 1.4214138
  %v1089 = vadd.f32 %v1057, 1.4214138
  %v1090 = vadd.f32 %v1058, 1.4214138
  %v1091 = vadd.f32 %v1059, 1.4214138
  %v1092 = vadd.f32 %v1060, 1.4214138
  %v1093 = vadd.f32 %v1061, 1.4214138
  %v1094 = vadd.f32 %v1062, 1.4214138
  %v1095 = vadd.f32 %v1063, 1.4214138
  %v1096 = vadd.f32 %v1064, 1.4214138
  %v1097 = vadd.f32 %v1065, 1.4214138
  %v1098 = vadd.f32 %v1066, 1.4214138
  %v1099 = vadd.f32 %v1067, 1.4214138
  %v1100 = vadd.f32 %v1068, 1.4214138
  %v1101 = vadd.f32 %v1069, 1.4214138
  %v1102 = vadd.f32 %v1070, 1.4214138
  %v1103 = vadd.f32 %v1071, 1.4214138
  %v1104 = vadd.f32 %v1072, 1.4214138
  %v1105 = vadd.f32 %v1073, 1.4214138
  %v1106 = vadd.f32 %v1074, 1.4214138
  %v1107 = vadd.f32 %v1075, 1.4214138
  %v1108 = vadd.f32 %v1076, 1.4214138
  %v1109 = vadd.f32 %v1077, 1.4214138
  %v1110 = vadd.f32 %v1078, 1.4214138
  %v1111 = vadd.f32 %v1079, 1.4214138
  %v1112 = vadd.f32 %v1080, 1.4214138
  %v1113 = vadd.f32 %v1081, 1.4214138
  %v1114 = vadd.f32 %v1082, 1.4214138
  %v1115 = vmul.f32 %v1083, %v955
  %v1116 = vmul.f32 %v1084, %v956
  %v1117 = vmul.f32 %v1085, %v957
  %v1118 = vmul.f32 %v1086, %v958
  %v1119 = vmul.f32 %v1087, %v959
  %v1120 = vmul.f32 %v1088, %v960
  %v1121 = vmul.f32 %v1089, %v961
  %v1122 = vmul.f32 %v1090, %v962
  %v1123 = vmul.f32 %v1091, %v963
  %v1124 = vmul.f32 %v1092, %v964
  %v1125 = vmul.f32 %v1093, %v965
  %v1126 = vmul.f32 %v1094, %v966
  %v1127 = vmul.f32 %v1095, %v967
  %v1128 = vmul.f32 %v1096, %v968
  %v1129 = vmul.f32 %v1097, %v969
  %v1130 = vmul.f32 %v1098, %v970
  %v1131 = vmul.f32 %v1099, %v971
  %v1132 = vmul.f32 %v1100, %v972
  %v1133 = vmul.f32 %v1101, %v973
  %v1134 = vmul.f32 %v1102, %v974
  %v1135 = vmul.f32 %v1103, %v975
  %v1136 = vmul.f32 %v1104, %v976
  %v1137 = vmul.f32 %v1105, %v977
  %v1138 = vmul.f32 %v1106, %v978
  %v1139 = vmul.f32 %v1107, %v979
  %v1140 = vmul.f32 %v1108, %v980
  %v1141 = vmul.f32 %v1109, %v981
  %v1142 = vmul.f32 %v1110, %v982
  %v1143 = vmul.f32 %v1111, %v983
  %v1144 = vmul.f32 %v1112, %v984
  %v1145 = vmul.f32 %v1113, %v985
  %v1146 = vmul.f32 %v1114, %v986
  %v1147 = vadd.f32 %v1115, -0.28449672
  %v1148 = vadd.f32 %v1116, -0.28449672
  %v1149 = vadd.f32 %v1117, -0.28449672
  %v1150 = vadd.f32 %v1118, -0.28449672
  %v1151 = vadd.f32 %v1119, -0.28449672
  %v1152 = vadd.f32 %v1120, -0.28449672
  %v1153 = vadd.f32 %v1121, -0.28449672
  %v1154 = vadd.f32 %v1122, -0.28449672
  %v1155 = vadd.f32 %v1123, -0.28449672
  %v1156 = vadd.f32 %v1124, -0.28449672
  %v1157 = vadd.f32 %v1125, -0.28449672
  %v1158 = vadd.f32 %v1126, -0.28449672
  %v1159 = vadd.f32 %v1127, -0.28449672
  %v1160 = vadd.f32 %v1128, -0.28449672
  %v1161 = vadd.f32 %v1129, -0.28449672
  %v1162 = vadd.f32 %v1130, -0.28449672
  %v1163 = vadd.f32 %v1131, -0.28449672
  %v1164 = vadd.f32 %v1132, -0.28449672
  %v1165 = vadd.f32 %v1133, -0.28449672
  %v1166 = vadd.f32 %v1134, -0.28449672
  %v1167 = vadd.f32 %v1135, -0.28449672
  %v1168 = vadd.f32 %v1136, -0.28449672
  %v1169 = vadd.f32 %v1137, -0.28449672
  %v1170 = vadd.f32 %v1138, -0.28449672
  %v1171 = vadd.f32 %v1139, -0.28449672
  %v1172 = vadd.f32 %v1140, -0.28449672
  %v1173 = vadd.f32 %v1141, -0.28449672
  %v1174 = vadd.f32 %v1142, -0.28449672
  %v1175 = vadd.f32 %v1143, -0.28449672
  %v1176 = vadd.f32 %v1144, -0.28449672
  %v1177 = vadd.f32 %v1145, -0.28449672
  %v1178 = vadd.f32 %v1146, -0.28449672
  %v1179 = vmul.f32 %v1147, %v955
  %v1180 = vmul.f32 %v1148, %v956
  %v1181 = vmul.f32 %v1149, %v957
  %v1182 = vmul.f32 %v1150, %v958
  %v1183 = vmul.f32 %v1151, %v959
  %v1184 = vmul.f32 %v1152, %v960
  %v1185 = vmul.f32 %v1153, %v961
  %v1186 = vmul.f32 %v1154, %v962
  %v1187 = vmul.f32 %v1155, %v963
  %v1188 = vmul.f32 %v1156, %v964
  %v1189 = vmul.f32 %v1157, %v965
  %v1190 = vmul.f32 %v1158, %v966
  %v1191 = vmul.f32 %v1159, %v967
  %v1192 = vmul.f32 %v1160, %v968
  %v1193 = vmul.f32 %v1161, %v969
  %v1194 = vmul.f32 %v1162, %v970
  %v1195 = vmul.f32 %v1163, %v971
  %v1196 = vmul.f32 %v1164, %v972
  %v1197 = vmul.f32 %v1165, %v973
  %v1198 = vmul.f32 %v1166, %v974
  %v1199 = vmul.f32 %v1167, %v975
  %v1200 = vmul.f32 %v1168, %v976
  %v1201 = vmul.f32 %v1169, %v977
  %v1202 = vmul.f32 %v1170, %v978
  %v1203 = vmul.f32 %v1171, %v979
  %v1204 = vmul.f32 %v1172, %v980
  %v1205 = vmul.f32 %v1173, %v981
  %v1206 = vmul.f32 %v1174, %v982
  %v1207 = vmul.f32 %v1175, %v983
  %v1208 = vmul.f32 %v1176, %v984
  %v1209 = vmul.f32 %v1177, %v985
  %v1210 = vmul.f32 %v1178, %v986
  %v1211 = vadd.f32 %v1179, 0.2548296
  %v1212 = vadd.f32 %v1180, 0.2548296
  %v1213 = vadd.f32 %v1181, 0.2548296
  %v1214 = vadd.f32 %v1182, 0.2548296
  %v1215 = vadd.f32 %v1183, 0.2548296
  %v1216 = vadd.f32 %v1184, 0.2548296
  %v1217 = vadd.f32 %v1185, 0.2548296
  %v1218 = vadd.f32 %v1186, 0.2548296
  %v1219 = vadd.f32 %v1187, 0.2548296
  %v1220 = vadd.f32 %v1188, 0.2548296
  %v1221 = vadd.f32 %v1189, 0.2548296
  %v1222 = vadd.f32 %v1190, 0.2548296
  %v1223 = vadd.f32 %v1191, 0.2548296
  %v1224 = vadd.f32 %v1192, 0.2548296
  %v1225 = vadd.f32 %v1193, 0.2548296
  %v1226 = vadd.f32 %v1194, 0.2548296
  %v1227 = vadd.f32 %v1195, 0.2548296
  %v1228 = vadd.f32 %v1196, 0.2548296
  %v1229 = vadd.f32 %v1197, 0.2548296
  %v1230 = vadd.f32 %v1198, 0.2548296
  %v1231 = vadd.f32 %v1199, 0.2548296
  %v1232 = vadd.f32 %v1200, 0.2548296
  %v1233 = vadd.f32 %v1201, 0.2548296
  %v1234 = vadd.f32 %v1202, 0.2548296
  %v1235 = vadd.f32 %v1203, 0.2548296
  %v1236 = vadd.f32 %v1204, 0.2548296
  %v1237 = vadd.f32 %v1205, 0.2548296
  %v1238 = vadd.f32 %v1206, 0.2548296
  %v1239 = vadd.f32 %v1207, 0.2548296
  %v1240 = vadd.f32 %v1208, 0.2548296
  %v1241 = vadd.f32 %v1209, 0.2548296
  %v1242 = vadd.f32 %v1210, 0.2548296
  %v1243 = vmul.f32 %v1211, %v955
  %v1244 = vmul.f32 %v1212, %v956
  %v1245 = vmul.f32 %v1213, %v957
  %v1246 = vmul.f32 %v1214, %v958
  %v1247 = vmul.f32 %v1215, %v959
  %v1248 = vmul.f32 %v1216, %v960
  %v1249 = vmul.f32 %v1217, %v961
  %v1250 = vmul.f32 %v1218, %v962
  %v1251 = vmul.f32 %v1219, %v963
  %v1252 = vmul.f32 %v1220, %v964
  %v1253 = vmul.f32 %v1221, %v965
  %v1254 = vmul.f32 %v1222, %v966
  %v1255 = vmul.f32 %v1223, %v967
  %v1256 = vmul.f32 %v1224, %v968
  %v1257 = vmul.f32 %v1225, %v969
  %v1258 = vmul.f32 %v1226, %v970
  %v1259 = vmul.f32 %v1227, %v971
  %v1260 = vmul.f32 %v1228, %v972
  %v1261 = vmul.f32 %v1229, %v973
  %v1262 = vmul.f32 %v1230, %v974
  %v1263 = vmul.f32 %v1231, %v975
  %v1264 = vmul.f32 %v1232, %v976
  %v1265 = vmul.f32 %v1233, %v977
  %v1266 = vmul.f32 %v1234, %v978
  %v1267 = vmul.f32 %v1235, %v979
  %v1268 = vmul.f32 %v1236, %v980
  %v1269 = vmul.f32 %v1237, %v981
  %v1270 = vmul.f32 %v1238, %v982
  %v1271 = vmul.f32 %v1239, %v983
  %v1272 = vmul.f32 %v1240, %v984
  %v1273 = vmul.f32 %v1241, %v985
  %v1274 = vmul.f32 %v1242, %v986
  %v1275 = vsub.f32 0.0, %v859
  %v1276 = vsub.f32 0.0, %v860
  %v1277 = vsub.f32 0.0, %v861
  %v1278 = vsub.f32 0.0, %v862
  %v1279 = vsub.f32 0.0, %v863
  %v1280 = vsub.f32 0.0, %v864
  %v1281 = vsub.f32 0.0, %v865
  %v1282 = vsub.f32 0.0, %v866
  %v1283 = vsub.f32 0.0, %v867
  %v1284 = vsub.f32 0.0, %v868
  %v1285 = vsub.f32 0.0, %v869
  %v1286 = vsub.f32 0.0, %v870
  %v1287 = vsub.f32 0.0, %v871
  %v1288 = vsub.f32 0.0, %v872
  %v1289 = vsub.f32 0.0, %v873
  %v1290 = vsub.f32 0.0, %v874
  %v1291 = vsub.f32 0.0, %v875
  %v1292 = vsub.f32 0.0, %v876
  %v1293 = vsub.f32 0.0, %v877
  %v1294 = vsub.f32 0.0, %v878
  %v1295 = vsub.f32 0.0, %v879
  %v1296 = vsub.f32 0.0, %v880
  %v1297 = vsub.f32 0.0, %v881
  %v1298 = vsub.f32 0.0, %v882
  %v1299 = vsub.f32 0.0, %v883
  %v1300 = vsub.f32 0.0, %v884
  %v1301 = vsub.f32 0.0, %v885
  %v1302 = vsub.f32 0.0, %v886
  %v1303 = vsub.f32 0.0, %v887
  %v1304 = vsub.f32 0.0, %v888
  %v1305 = vsub.f32 0.0, %v889
  %v1306 = vsub.f32 0.0, %v890
  %v1307 = vmul.f32 %v1275, %v859
  %v1308 = vmul.f32 %v1276, %v860
  %v1309 = vmul.f32 %v1277, %v861
  %v1310 = vmul.f32 %v1278, %v862
  %v1311 = vmul.f32 %v1279, %v863
  %v1312 = vmul.f32 %v1280, %v864
  %v1313 = vmul.f32 %v1281, %v865
  %v1314 = vmul.f32 %v1282, %v866
  %v1315 = vmul.f32 %v1283, %v867
  %v1316 = vmul.f32 %v1284, %v868
  %v1317 = vmul.f32 %v1285, %v869
  %v1318 = vmul.f32 %v1286, %v870
  %v1319 = vmul.f32 %v1287, %v871
  %v1320 = vmul.f32 %v1288, %v872
  %v1321 = vmul.f32 %v1289, %v873
  %v1322 = vmul.f32 %v1290, %v874
  %v1323 = vmul.f32 %v1291, %v875
  %v1324 = vmul.f32 %v1292, %v876
  %v1325 = vmul.f32 %v1293, %v877
  %v1326 = vmul.f32 %v1294, %v878
  %v1327 = vmul.f32 %v1295, %v879
  %v1328 = vmul.f32 %v1296, %v880
  %v1329 = vmul.f32 %v1297, %v881
  %v1330 = vmul.f32 %v1298, %v882
  %v1331 = vmul.f32 %v1299, %v883
  %v1332 = vmul.f32 %v1300, %v884
  %v1333 = vmul.f32 %v1301, %v885
  %v1334 = vmul.f32 %v1302, %v886
  %v1335 = vmul.f32 %v1303, %v887
  %v1336 = vmul.f32 %v1304, %v888
  %v1337 = vmul.f32 %v1305, %v889
  %v1338 = vmul.f32 %v1306, %v890
  %v1339 = vmul.f32 %v1307, 1.442695
  %v1340 = vpow.pop %v1339
  %v1341 = vmul.f32 %v1308, 1.442695
  %v1342 = vpow.pop %v1341
  %v1343 = vmul.f32 %v1309, 1.442695
  %v1344 = vpow.pop %v1343
  %v1345 = vmul.f32 %v1310, 1.442695
  %v1346 = vpow.pop %v1345
  %v1347 = vmul.f32 %v1311, 1.442695
  %v1348 = vpow.pop %v1347
  %v1349 = vmul.f32 %v1312, 1.442695
  %v1350 = vpow.pop %v1349
  %v1351 = vmul.f32 %v1313, 1.442695
  %v1352 = vpow.pop %v1351
  %v1353 = vmul.f32 %v1314, 1.442695
  %v1354 = vpow.pop %v1353
  %v1355 = vmul.f32 %v1315, 1.442695
  %v1356 = vpow.pop %v1355
  %v1357 = vmul.f32 %v1316, 1.442695
  %v1358 = vpow.pop %v1357
  %v1359 = vmul.f32 %v1317, 1.442695
  %v1360 = vpow.pop %v1359
  %v1361 = vmul.f32 %v1318, 1.442695
  %v1362 = vpow.pop %v1361
  %v1363 = vmul.f32 %v1319, 1.442695
  %v1364 = vpow.pop %v1363
  %v1365 = vmul.f32 %v1320, 1.442695
  %v1366 = vpow.pop %v1365
  %v1367 = vmul.f32 %v1321, 1.442695
  %v1368 = vpow.pop %v1367
  %v1369 = vmul.f32 %v1322, 1.442695
  %v1370 = vpow.pop %v1369
  %v1371 = vmul.f32 %v1323, 1.442695
  %v1372 = vpow.pop %v1371
  %v1373 = vmul.f32 %v1324, 1.442695
  %v1374 = vpow.pop %v1373
  %v1375 = vmul.f32 %v1325, 1.442695
  %v1376 = vpow.pop %v1375
  %v1377 = vmul.f32 %v1326, 1.442695
  %v1378 = vpow.pop %v1377
  %v1379 = vmul.f32 %v1327, 1.442695
  %v1380 = vpow.pop %v1379
  %v1381 = vmul.f32 %v1328, 1.442695
  %v1382 = vpow.pop %v1381
  %v1383 = vmul.f32 %v1329, 1.442695
  %v1384 = vpow.pop %v1383
  %v1385 = vmul.f32 %v1330, 1.442695
  %v1386 = vpow.pop %v1385
  %v1387 = vmul.f32 %v1331, 1.442695
  %v1388 = vpow.pop %v1387
  %v1389 = vmul.f32 %v1332, 1.442695
  %v1390 = vpow.pop %v1389
  %v1391 = vmul.f32 %v1333, 1.442695
  %v1392 = vpow.pop %v1391
  %v1393 = vmul.f32 %v1334, 1.442695
  %v1394 = vpow.pop %v1393
  %v1395 = vmul.f32 %v1335, 1.442695
  %v1396 = vpow.pop %v1395
  %v1397 = vmul.f32 %v1336, 1.442695
  %v1398 = vpow.pop %v1397
  %v1399 = vmul.f32 %v1337, 1.442695
  %v1400 = vpow.pop %v1399
  %v1401 = vmul.f32 %v1338, 1.442695
  %v1402 = vpow.pop %v1401
  %v1403 = vmul.f32 %v1243, %v1340
  %v1404 = vmul.f32 %v1244, %v1342
  %v1405 = vmul.f32 %v1245, %v1344
  %v1406 = vmul.f32 %v1246, %v1346
  %v1407 = vmul.f32 %v1247, %v1348
  %v1408 = vmul.f32 %v1248, %v1350
  %v1409 = vmul.f32 %v1249, %v1352
  %v1410 = vmul.f32 %v1250, %v1354
  %v1411 = vmul.f32 %v1251, %v1356
  %v1412 = vmul.f32 %v1252, %v1358
  %v1413 = vmul.f32 %v1253, %v1360
  %v1414 = vmul.f32 %v1254, %v1362
  %v1415 = vmul.f32 %v1255, %v1364
  %v1416 = vmul.f32 %v1256, %v1366
  %v1417 = vmul.f32 %v1257, %v1368
  %v1418 = vmul.f32 %v1258, %v1370
  %v1419 = vmul.f32 %v1259, %v1372
  %v1420 = vmul.f32 %v1260, %v1374
  %v1421 = vmul.f32 %v1261, %v1376
  %v1422 = vmul.f32 %v1262, %v1378
  %v1423 = vmul.f32 %v1263, %v1380
  %v1424 = vmul.f32 %v1264, %v1382
  %v1425 = vmul.f32 %v1265, %v1384
  %v1426 = vmul.f32 %v1266, %v1386
  %v1427 = vmul.f32 %v1267, %v1388
  %v1428 = vmul.f32 %v1268, %v1390
  %v1429 = vmul.f32 %v1269, %v1392
  %v1430 = vmul.f32 %v1270, %v1394
  %v1431 = vmul.f32 %v1271, %v1396
  %v1432 = vmul.f32 %v1272, %v1398
  %v1433 = vmul.f32 %v1273, %v1400
  %v1434 = vmul.f32 %v1274, %v1402
  %v1435 = vsub.f32 1.0, %v1403
  %v1436 = vsub.f32 1.0, %v1404
  %v1437 = vsub.f32 1.0, %v1405
  %v1438 = vsub.f32 1.0, %v1406
  %v1439 = vsub.f32 1.0, %v1407
  %v1440 = vsub.f32 1.0, %v1408
  %v1441 = vsub.f32 1.0, %v1409
  %v1442 = vsub.f32 1.0, %v1410
  %v1443 = vsub.f32 1.0, %v1411
  %v1444 = vsub.f32 1.0, %v1412
  %v1445 = vsub.f32 1.0, %v1413
  %v1446 = vsub.f32 1.0, %v1414
  %v1447 = vsub.f32 1.0, %v1415
  %v1448 = vsub.f32 1.0, %v1416
  %v1449 = vsub.f32 1.0, %v1417
  %v1450 = vsub.f32 1.0, %v1418
  %v1451 = vsub.f32 1.0, %v1419
  %v1452 = vsub.f32 1.0, %v1420
  %v1453 = vsub.f32 1.0, %v1421
  %v1454 = vsub.f32 1.0, %v1422
  %v1455 = vsub.f32 1.0, %v1423
  %v1456 = vsub.f32 1.0, %v1424
  %v1457 = vsub.f32 1.0, %v1425
  %v1458 = vsub.f32 1.0, %v1426
  %v1459 = vsub.f32 1.0, %v1427
  %v1460 = vsub.f32 1.0, %v1428
  %v1461 = vsub.f32 1.0, %v1429
  %v1462 = vsub.f32 1.0, %v1430
  %v1463 = vsub.f32 1.0, %v1431
  %v1464 = vsub.f32 1.0, %v1432
  %v1465 = vsub.f32 1.0, %v1433
  %v1466 = vsub.f32 1.0, %v1434
  %vm1467 = vcmp.lt.f32.partialorder %v827, 0.0
  %vm1468 = vcmp.lt.f32.partialorder %v828, 0.0
  %vm1469 = vcmp.lt.f32.partialorder %v829, 0.0
  %vm1470 = vcmp.lt.f32.partialorder %v830, 0.0
  %vm1471 = vcmp.lt.f32.partialorder %v831, 0.0
  %vm1472 = vcmp.lt.f32.partialorder %v832, 0.0
  %vm1473 = vcmp.lt.f32.partialorder %v833, 0.0
  %vm1474 = vcmp.lt.f32.partialorder %v834, 0.0
  %vm1475 = vcmp.lt.f32.partialorder %v835, 0.0
  %vm1476 = vcmp.lt.f32.partialorder %v836, 0.0
  %vm1477 = vcmp.lt.f32.partialorder %v837, 0.0
  %vm1478 = vcmp.lt.f32.partialorder %v838, 0.0
  %vm1479 = vcmp.lt.f32.partialorder %v839, 0.0
  %vm1480 = vcmp.lt.f32.partialorder %v840, 0.0
  %vm1481 = vcmp.lt.f32.partialorder %v841, 0.0
  %vm1482 = vcmp.lt.f32.partialorder %v842, 0.0
  %vm1483 = vcmp.lt.f32.partialorder %v843, 0.0
  %vm1484 = vcmp.lt.f32.partialorder %v844, 0.0
  %vm1485 = vcmp.lt.f32.partialorder %v845, 0.0
  %vm1486 = vcmp.lt.f32.partialorder %v846, 0.0
  %vm1487 = vcmp.lt.f32.partialorder %v847, 0.0
  %vm1488 = vcmp.lt.f32.partialorder %v848, 0.0
  %vm1489 = vcmp.lt.f32.partialorder %v849, 0.0
  %vm1490 = vcmp.lt.f32.partialorder %v850, 0.0
  %vm1491 = vcmp.lt.f32.partialorder %v851, 0.0
  %vm1492 = vcmp.lt.f32.partialorder %v852, 0.0
  %vm1493 = vcmp.lt.f32.partialorder %v853, 0.0
  %vm1494 = vcmp.lt.f32.partialorder %v854, 0.0
  %vm1495 = vcmp.lt.f32.partialorder %v855, 0.0
  %vm1496 = vcmp.lt.f32.partialorder %v856, 0.0
  %vm1497 = vcmp.lt.f32.partialorder %v857, 0.0
  %vm1498 = vcmp.lt.f32.partialorder %v858, 0.0
  %v1499 = vsub.f32 0.0, %v1435
  %v1500 = vsub.f32 0.0, %v1436
  %v1501 = vsub.f32 0.0, %v1437
  %v1502 = vsub.f32 0.0, %v1438
  %v1503 = vsub.f32 0.0, %v1439
  %v1504 = vsub.f32 0.0, %v1440
  %v1505 = vsub.f32 0.0, %v1441
  %v1506 = vsub.f32 0.0, %v1442
  %v1507 = vsub.f32 0.0, %v1443
  %v1508 = vsub.f32 0.0, %v1444
  %v1509 = vsub.f32 0.0, %v1445
  %v1510 = vsub.f32 0.0, %v1446
  %v1511 = vsub.f32 0.0, %v1447
  %v1512 = vsub.f32 0.0, %v1448
  %v1513 = vsub.f32 0.0, %v1449
  %v1514 = vsub.f32 0.0, %v1450
  %v1515 = vsub.f32 0.0, %v1451
  %v1516 = vsub.f32 0.0, %v1452
  %v1517 = vsub.f32 0.0, %v1453
  %v1518 = vsub.f32 0.0, %v1454
  %v1519 = vsub.f32 0.0, %v1455
  %v1520 = vsub.f32 0.0, %v1456
  %v1521 = vsub.f32 0.0, %v1457
  %v1522 = vsub.f32 0.0, %v1458
  %v1523 = vsub.f32 0.0, %v1459
  %v1524 = vsub.f32 0.0, %v1460
  %v1525 = vsub.f32 0.0, %v1461
  %v1526 = vsub.f32 0.0, %v1462
  %v1527 = vsub.f32 0.0, %v1463
  %v1528 = vsub.f32 0.0, %v1464
  %v1529 = vsub.f32 0.0, %v1465
  %v1530 = vsub.f32 0.0, %v1466
  %v1531 = vsel %vm1467, %v1499, %v1435
  %v1532 = vsel %vm1468, %v1500, %v1436
  %v1533 = vsel %vm1469, %v1501, %v1437
  %v1534 = vsel %vm1470, %v1502, %v1438
  %v1535 = vsel %vm1471, %v1503, %v1439
  %v1536 = vsel %vm1472, %v1504, %v1440
  %v1537 = vsel %vm1473, %v1505, %v1441
  %v1538 = vsel %vm1474, %v1506, %v1442
  %v1539 = vsel %vm1475, %v1507, %v1443
  %v1540 = vsel %vm1476, %v1508, %v1444
  %v1541 = vsel %vm1477, %v1509, %v1445
  %v1542 = vsel %vm1478, %v1510, %v1446
  %v1543 = vsel %vm1479, %v1511, %v1447
  %v1544 = vsel %vm1480, %v1512, %v1448
  %v1545 = vsel %vm1481, %v1513, %v1449
  %v1546 = vsel %vm1482, %v1514, %v1450
  %v1547 = vsel %vm1483, %v1515, %v1451
  %v1548 = vsel %vm1484, %v1516, %v1452
  %v1549 = vsel %vm1485, %v1517, %v1453
  %v1550 = vsel %vm1486, %v1518, %v1454
  %v1551 = vsel %vm1487, %v1519, %v1455
  %v1552 = vsel %vm1488, %v1520, %v1456
  %v1553 = vsel %vm1489, %v1521, %v1457
  %v1554 = vsel %vm1490, %v1522, %v1458
  %v1555 = vsel %vm1491, %v1523, %v1459
  %v1556 = vsel %vm1492, %v1524, %v1460
  %v1557 = vsel %vm1493, %v1525, %v1461
  %v1558 = vsel %vm1494, %v1526, %v1462
  %v1559 = vsel %vm1495, %v1527, %v1463
  %v1560 = vsel %vm1496, %v1528, %v1464
  %v1561 = vsel %vm1497, %v1529, %v1465
  %v1562 = vsel %vm1498, %v1530, %v1466
  %v1563 = vadd.f32 %v1531, 1.0
  %v1564 = vadd.f32 %v1532, 1.0
  %v1565 = vadd.f32 %v1533, 1.0
  %v1566 = vadd.f32 %v1534, 1.0
  %v1567 = vadd.f32 %v1535, 1.0
  %v1568 = vadd.f32 %v1536, 1.0
  %v1569 = vadd.f32 %v1537, 1.0
  %v1570 = vadd.f32 %v1538, 1.0
  %v1571 = vadd.f32 %v1539, 1.0
  %v1572 = vadd.f32 %v1540, 1.0
  %v1573 = vadd.f32 %v1541, 1.0
  %v1574 = vadd.f32 %v1542, 1.0
  %v1575 = vadd.f32 %v1543, 1.0
  %v1576 = vadd.f32 %v1544, 1.0
  %v1577 = vadd.f32 %v1545, 1.0
  %v1578 = vadd.f32 %v1546, 1.0
  %v1579 = vadd.f32 %v1547, 1.0
  %v1580 = vadd.f32 %v1548, 1.0
  %v1581 = vadd.f32 %v1549, 1.0
  %v1582 = vadd.f32 %v1550, 1.0
  %v1583 = vadd.f32 %v1551, 1.0
  %v1584 = vadd.f32 %v1552, 1.0
  %v1585 = vadd.f32 %v1553, 1.0
  %v1586 = vadd.f32 %v1554, 1.0
  %v1587 = vadd.f32 %v1555, 1.0
  %v1588 = vadd.f32 %v1556, 1.0
  %v1589 = vadd.f32 %v1557, 1.0
  %v1590 = vadd.f32 %v1558, 1.0
  %v1591 = vadd.f32 %v1559, 1.0
  %v1592 = vadd.f32 %v1560, 1.0
  %v1593 = vadd.f32 %v1561, 1.0
  %v1594 = vadd.f32 %v1562, 1.0
  %v1595 = vmul.f32 %v795, %v1563
  %v1596 = vmul.f32 %v796, %v1564
  %v1597 = vmul.f32 %v797, %v1565
  %v1598 = vmul.f32 %v798, %v1566
  %v1599 = vmul.f32 %v799, %v1567
  %v1600 = vmul.f32 %v800, %v1568
  %v1601 = vmul.f32 %v801, %v1569
  %v1602 = vmul.f32 %v802, %v1570
  %v1603 = vmul.f32 %v803, %v1571
  %v1604 = vmul.f32 %v804, %v1572
  %v1605 = vmul.f32 %v805, %v1573
  %v1606 = vmul.f32 %v806, %v1574
  %v1607 = vmul.f32 %v807, %v1575
  %v1608 = vmul.f32 %v808, %v1576
  %v1609 = vmul.f32 %v809, %v1577
  %v1610 = vmul.f32 %v810, %v1578
  %v1611 = vmul.f32 %v811, %v1579
  %v1612 = vmul.f32 %v812, %v1580
  %v1613 = vmul.f32 %v813, %v1581
  %v1614 = vmul.f32 %v814, %v1582
  %v1615 = vmul.f32 %v815, %v1583
  %v1616 = vmul.f32 %v816, %v1584
  %v1617 = vmul.f32 %v817, %v1585
  %v1618 = vmul.f32 %v818, %v1586
  %v1619 = vmul.f32 %v819, %v1587
  %v1620 = vmul.f32 %v820, %v1588
  %v1621 = vmul.f32 %v821, %v1589
  %v1622 = vmul.f32 %v822, %v1590
  %v1623 = vmul.f32 %v823, %v1591
  %v1624 = vmul.f32 %v824, %v1592
  %v1625 = vmul.f32 %v825, %v1593
  %v1626 = vmul.f32 %v826, %v1594
  %v1627 = vpack.c.bf16 %v1596, %v1595
  %v1628 = vpack.c.bf16 %v1598, %v1597
  %v1629 = vpack.c.bf16 %v1600, %v1599
  %v1630 = vpack.c.bf16 %v1602, %v1601
  %v1631 = vpack.c.bf16 %v1604, %v1603
  %v1632 = vpack.c.bf16 %v1606, %v1605
  %v1633 = vpack.c.bf16 %v1608, %v1607
  %v1634 = vpack.c.bf16 %v1610, %v1609
  %v1635 = vpack.c.bf16 %v1612, %v1611
  %v1636 = vpack.c.bf16 %v1614, %v1613
  %v1637 = vpack.c.bf16 %v1616, %v1615
  %v1638 = vpack.c.bf16 %v1618, %v1617
  %v1639 = vpack.c.bf16 %v1620, %v1619
  %v1640 = vpack.c.bf16 %v1622, %v1621
  %v1641 = vpack.c.bf16 %v1624, %v1623
  %v1642 = vpack.c.bf16 %v1626, %v1625
  %v1643 = vld [vmem:[%s5] sm:$0xf]
  %v1644 = vld [vmem:[%s5 + $0x4] sm:$0xf]
  %v1645 = vld [vmem:[%s5 + $0x8] sm:$0xf]
  %v1646 = vld [vmem:[%s5 + $0xc] sm:$0xf]
  %v1647 = vld [vmem:[%s5 + $0x10] sm:$0xf]
  %v1648 = vld [vmem:[%s5 + $0x14] sm:$0xf]
  %v1649 = vld [vmem:[%s6] sm:$0x1]
  %v1651 = vlaneseq
  %v1652 = vshrl.u32 %v1651, 7
  %v1653 = vsub.s32 0, %v1652
  %v1654 = vrot.slane %v1649, %v1653
  %v1662 = vunpack.c.l.b16 %v1643
  %v1663 = vunpack.c.l.b16 %v1644
  %v1664 = vunpack.c.l.b16 %v1645
  %v1665 = vunpack.c.l.b16 %v1646
  %v1666 = vunpack.c.l.b16 %v1647
  %v1667 = vunpack.c.l.b16 %v1648
  %v1668 = vpack.c.b16 %v1663, %v1662
  %v1669 = vpack.c.b16 %v1665, %v1664
  %v1670 = vpack.c.b16 %v1667, %v1666
  %vm1674 = vcmask 392192
  %v1676 = vsel %vm1674, %v1627, 0
  %v1679 = vsel %vm1674, %v1628, 0
  %v1682 = vsel %vm1674, %v1629, 0
  %v1685 = vsel %vm1674, %v1630, 0
  %v1688 = vsel %vm1674, %v1631, 0
  %v1691 = vsel %vm1674, %v1632, 0
  %v1694 = vsel %vm1674, %v1633, 0
  %v1697 = vsel %vm1674, %v1634, 0
  %v1700 = vsel %vm1674, %v1635, 0
  %v1703 = vsel %vm1674, %v1636, 0
  %v1706 = vsel %vm1674, %v1637, 0
  %v1709 = vsel %vm1674, %v1638, 0
  %v1712 = vsel %vm1674, %v1639, 0
  %v1715 = vsel %vm1674, %v1640, 0
  %v1718 = vsel %vm1674, %v1641, 0
  %v1721 = vsel %vm1674, %v1642, 0
  %1723 = vmatprep.subr.bf16.mxu0 0
  %1724 = vmatpush1.bf16.msra.mxu0 %v1668
  %1725 = vmatprep.subr.bf16.mxu0 0
  %1726 = vmatpush1.bf16.msra.mxu0 %v1669
  %1727 = vmatprep.subr.bf16.mxu0 0
  %1728 = vmatpush1.bf16.msra.mxu0 %v1670
  %1729 = vmatprep.subr.bf16.mxu0 0
  %1730 = vmatpush1.bf16.msra.mxu0 0
  %1731 = vmatprep.subr.bf16.mxu0 0
  %1732 = vmatpush1.bf16.msra.mxu0 0
  %1733 = vmatprep.subr.bf16.mxu0 0
  %1734 = vmatpush1.bf16.msra.mxu0 0
  %1735 = vmatprep.subr.bf16.mxu0 0
  %1736 = vmatpush1.bf16.msra.mxu0 0
  %1737 = vmatprep.subr.bf16.mxu0 0
  %1738 = vmatpush1.bf16.msra.mxu0 0
  %1739 = vmatprep.subr.bf16.mxu0 0
  %1740 = vmatpush1.bf16.msra.mxu0 0
  %1741 = vmatprep.subr.bf16.mxu0 0
  %1742 = vmatpush1.bf16.msra.mxu0 0
  %1743 = vmatprep.subr.bf16.mxu0 0
  %1744 = vmatpush1.bf16.msra.mxu0 0
  %1745 = vmatprep.subr.bf16.mxu0 0
  %1746 = vmatpush1.bf16.msra.mxu0 0
  %1747 = vmatprep.subr.bf16.mxu0 0
  %1748 = vmatpush1.bf16.msra.mxu0 0
  %1749 = vmatprep.subr.bf16.mxu0 0
  %1750 = vmatpush1.bf16.msra.mxu0 0
  %1751 = vmatprep.subr.bf16.mxu0 0
  %1752 = vmatpush1.bf16.msra.mxu0 0
  %1753 = vmatprep.subr.bf16.mxu0 0
  %1754 = vmatpush1.bf16.msra.mxu0 0
  %1755 = vmatprep.mubr.bf16.mxu0 0
  %1756 = vmatmul.mubr.bf16.gmra.mrb[0].mxu0 %v1676
  %v1757 = vpop.f32.mrb[0].mxu0
  %v1758 = vadd.f32 %v1654, %v1757
  %v1759 = vpop.f32.mrb[0].mxu0
  %v1760 = vpop.f32.mrb[0].mxu0
  %v1761 = vadd.f32 %v1654, %v1760
  %v1762 = vpop.f32.mrb[0].mxu0
  %1763 = vmatprep.mubr.bf16.mxu0 0
  %1764 = vmatmul.mubr.bf16.gmra.mrb[0].mxu0 %v1679
  %v1765 = vpop.f32.mrb[0].mxu0
  %v1766 = vadd.f32 %v1654, %v1765
  %v1767 = vpop.f32.mrb[0].mxu0
  %v1768 = vpop.f32.mrb[0].mxu0
  %v1769 = vadd.f32 %v1654, %v1768
  %v1770 = vpop.f32.mrb[0].mxu0
  %1771 = vmatprep.mubr.bf16.mxu0 0
  %1772 = vmatmul.mubr.bf16.gmra.mrb[0].mxu0 %v1682
  %v1773 = vpop.f32.mrb[0].mxu0
  %v1774 = vadd.f32 %v1654, %v1773
  %v1775 = vpop.f32.mrb[0].mxu0
  %v1776 = vpop.f32.mrb[0].mxu0
  %v1777 = vadd.f32 %v1654, %v1776
  %v1778 = vpop.f32.mrb[0].mxu0
  %1779 = vmatprep.mubr.bf16.mxu0 0
  %1780 = vmatmul.mubr.bf16.gmra.mrb[0].mxu0 %v1685
  %v1781 = vpop.f32.mrb[0].mxu0
  %v1782 = vadd.f32 %v1654, %v1781
  %v1783 = vpop.f32.mrb[0].mxu0
  %v1784 = vpop.f32.mrb[0].mxu0
  %v1785 = vadd.f32 %v1654, %v1784
  %v1786 = vpop.f32.mrb[0].mxu0
  %1787 = vmatprep.mubr.bf16.mxu0 0
  %1788 = vmatmul.mubr.bf16.gmra.mrb[0].mxu0 %v1688
  %v1789 = vpop.f32.mrb[0].mxu0
  %v1790 = vadd.f32 %v1654, %v1789
  %v1791 = vpop.f32.mrb[0].mxu0
  %v1792 = vpop.f32.mrb[0].mxu0
  %v1793 = vadd.f32 %v1654, %v1792
  %v1794 = vpop.f32.mrb[0].mxu0
  %1795 = vmatprep.mubr.bf16.mxu0 0
  %1796 = vmatmul.mubr.bf16.gmra.mrb[0].mxu0 %v1691
  %v1797 = vpop.f32.mrb[0].mxu0
  %v1798 = vadd.f32 %v1654, %v1797
  %v1799 = vpop.f32.mrb[0].mxu0
  %v1800 = vpop.f32.mrb[0].mxu0
  %v1801 = vadd.f32 %v1654, %v1800
  %v1802 = vpop.f32.mrb[0].mxu0
  %1803 = vmatprep.mubr.bf16.mxu0 0
  %1804 = vmatmul.mubr.bf16.gmra.mrb[0].mxu0 %v1694
  %v1805 = vpop.f32.mrb[0].mxu0
  %v1806 = vadd.f32 %v1654, %v1805
  %v1807 = vpop.f32.mrb[0].mxu0
  %v1808 = vpop.f32.mrb[0].mxu0
  %v1809 = vadd.f32 %v1654, %v1808
  %v1810 = vpop.f32.mrb[0].mxu0
  %1811 = vmatprep.mubr.bf16.mxu0 0
  %1812 = vmatmul.mubr.bf16.gmra.mrb[0].mxu0 %v1697
  %v1813 = vpop.f32.mrb[0].mxu0
  %v1814 = vadd.f32 %v1654, %v1813
  %v1815 = vpop.f32.mrb[0].mxu0
  %v1816 = vpop.f32.mrb[0].mxu0
  %v1817 = vadd.f32 %v1654, %v1816
  %v1818 = vpop.f32.mrb[0].mxu0
  %1819 = vmatprep.mubr.bf16.mxu0 0
  %1820 = vmatmul.mubr.bf16.gmra.mrb[0].mxu0 %v1700
  %v1821 = vpop.f32.mrb[0].mxu0
  %v1822 = vadd.f32 %v1654, %v1821
  %v1823 = vpop.f32.mrb[0].mxu0
  %v1824 = vpop.f32.mrb[0].mxu0
  %v1825 = vadd.f32 %v1654, %v1824
  %v1826 = vpop.f32.mrb[0].mxu0
  %1827 = vmatprep.mubr.bf16.mxu0 0
  %1828 = vmatmul.mubr.bf16.gmra.mrb[0].mxu0 %v1703
  %v1829 = vpop.f32.mrb[0].mxu0
  %v1830 = vadd.f32 %v1654, %v1829
  %v1831 = vpop.f32.mrb[0].mxu0
  %v1832 = vpop.f32.mrb[0].mxu0
  %v1833 = vadd.f32 %v1654, %v1832
  %v1834 = vpop.f32.mrb[0].mxu0
  %1835 = vmatprep.mubr.bf16.mxu0 0
  %1836 = vmatmul.mubr.bf16.gmra.mrb[0].mxu0 %v1706
  %v1837 = vpop.f32.mrb[0].mxu0
  %v1838 = vadd.f32 %v1654, %v1837
  %v1839 = vpop.f32.mrb[0].mxu0
  %v1840 = vpop.f32.mrb[0].mxu0
  %v1841 = vadd.f32 %v1654, %v1840
  %v1842 = vpop.f32.mrb[0].mxu0
  %1843 = vmatprep.mubr.bf16.mxu0 0
  %1844 = vmatmul.mubr.bf16.gmra.mrb[0].mxu0 %v1709
  %v1845 = vpop.f32.mrb[0].mxu0
  %v1846 = vadd.f32 %v1654, %v1845
  %v1847 = vpop.f32.mrb[0].mxu0
  %v1848 = vpop.f32.mrb[0].mxu0
  %v1849 = vadd.f32 %v1654, %v1848
  %v1850 = vpop.f32.mrb[0].mxu0
  %1851 = vmatprep.mubr.bf16.mxu0 0
  %1852 = vmatmul.mubr.bf16.gmra.mrb[0].mxu0 %v1712
  %v1853 = vpop.f32.mrb[0].mxu0
  %v1854 = vadd.f32 %v1654, %v1853
  %v1855 = vpop.f32.mrb[0].mxu0
  %v1856 = vpop.f32.mrb[0].mxu0
  %v1857 = vadd.f32 %v1654, %v1856
  %v1858 = vpop.f32.mrb[0].mxu0
  %1859 = vmatprep.mubr.bf16.mxu0 0
  %1860 = vmatmul.mubr.bf16.gmra.mrb[0].mxu0 %v1715
  %v1861 = vpop.f32.mrb[0].mxu0
  %v1862 = vadd.f32 %v1654, %v1861
  %v1863 = vpop.f32.mrb[0].mxu0
  %v1864 = vpop.f32.mrb[0].mxu0
  %v1865 = vadd.f32 %v1654, %v1864
  %v1866 = vpop.f32.mrb[0].mxu0
  %1867 = vmatprep.mubr.bf16.mxu0 0
  %1868 = vmatmul.mubr.bf16.gmra.mrb[0].mxu0 %v1718
  %v1869 = vpop.f32.mrb[0].mxu0
  %v1870 = vadd.f32 %v1654, %v1869
  %v1871 = vpop.f32.mrb[0].mxu0
  %v1872 = vpop.f32.mrb[0].mxu0
  %v1873 = vadd.f32 %v1654, %v1872
  %v1874 = vpop.f32.mrb[0].mxu0
  %1875 = vmatprep.mubr.bf16.mxu0 0
  %1876 = vmatmul.mubr.bf16.gmra.mrb[0].mxu0 %v1721
  %v1877 = vpop.f32.mrb[0].mxu0
  %v1878 = vadd.f32 %v1654, %v1877
  %v1879 = vpop.f32.mrb[0].mxu0
  %v1880 = vpop.f32.mrb[0].mxu0
  %v1881 = vadd.f32 %v1654, %v1880
  %v1882 = vpop.f32.mrb[0].mxu0
  %1883 = vdwg.mxu0
  %v1884 = vadd.f32 %v27, %v1758
  %v1885 = vadd.f32 %v28, %v1761
  %v1886 = vadd.f32 %v29, %v1766
  %v1887 = vadd.f32 %v30, %v1769
  %v1888 = vadd.f32 %v31, %v1774
  %v1889 = vadd.f32 %v32, %v1777
  %v1890 = vadd.f32 %v33, %v1782
  %v1891 = vadd.f32 %v34, %v1785
  %v1892 = vadd.f32 %v35, %v1790
  %v1893 = vadd.f32 %v36, %v1793
  %v1894 = vadd.f32 %v37, %v1798
  %v1895 = vadd.f32 %v38, %v1801
  %v1896 = vadd.f32 %v39, %v1806
  %v1897 = vadd.f32 %v40, %v1809
  %v1898 = vadd.f32 %v41, %v1814
  %v1899 = vadd.f32 %v42, %v1817
  %v1900 = vadd.f32 %v43, %v1822
  %v1901 = vadd.f32 %v44, %v1825
  %v1902 = vadd.f32 %v45, %v1830
  %v1903 = vadd.f32 %v46, %v1833
  %v1904 = vadd.f32 %v47, %v1838
  %v1905 = vadd.f32 %v48, %v1841
  %v1906 = vadd.f32 %v49, %v1846
  %v1907 = vadd.f32 %v50, %v1849
  %v1908 = vadd.f32 %v51, %v1854
  %v1909 = vadd.f32 %v52, %v1857
  %v1910 = vadd.f32 %v53, %v1862
  %v1911 = vadd.f32 %v54, %v1865
  %v1912 = vadd.f32 %v55, %v1870
  %v1913 = vadd.f32 %v56, %v1873
  %v1914 = vadd.f32 %v57, %v1878
  %v1915 = vadd.f32 %v58, %v1881
  %1916 = vst.msk [vmem:[%s7] sm:$0xff] %vm59, %v1884
  %1917 = vst.msk [vmem:[%s7 + $0x8] sm:$0xff] %vm59, %v1885
  %1918 = vst.msk [vmem:[%s7 + $0x10] sm:$0xff] %vm59, %v1886
  %1919 = vst.msk [vmem:[%s7 + $0x18] sm:$0xff] %vm59, %v1887
  %1920 = vst.msk [vmem:[%s7 + $0x20] sm:$0xff] %vm59, %v1888
  %1921 = vst.msk [vmem:[%s7 + $0x28] sm:$0xff] %vm59, %v1889
  %1922 = vst.msk [vmem:[%s7 + $0x30] sm:$0xff] %vm59, %v1890
  %1923 = vst.msk [vmem:[%s7 + $0x38] sm:$0xff] %vm59, %v1891
  %1924 = vst.msk [vmem:[%s7 + $0x40] sm:$0xff] %vm59, %v1892
  %1925 = vst.msk [vmem:[%s7 + $0x48] sm:$0xff] %vm59, %v1893
  %1926 = vst.msk [vmem:[%s7 + $0x50] sm:$0xff] %vm59, %v1894
  %1927 = vst.msk [vmem:[%s7 + $0x58] sm:$0xff] %vm59, %v1895
  %1928 = vst.msk [vmem:[%s7 + $0x60] sm:$0xff] %vm59, %v1896
  %1929 = vst.msk [vmem:[%s7 + $0x68] sm:$0xff] %vm59, %v1897
  %1930 = vst.msk [vmem:[%s7 + $0x70] sm:$0xff] %vm59, %v1898
  %1931 = vst.msk [vmem:[%s7 + $0x78] sm:$0xff] %vm59, %v1899
  %1932 = vst.msk [vmem:[%s7 + $0x80] sm:$0xff] %vm59, %v1900
  %1933 = vst.msk [vmem:[%s7 + $0x88] sm:$0xff] %vm59, %v1901
  %1934 = vst.msk [vmem:[%s7 + $0x90] sm:$0xff] %vm59, %v1902
  %1935 = vst.msk [vmem:[%s7 + $0x98] sm:$0xff] %vm59, %v1903
  %1936 = vst.msk [vmem:[%s7 + $0xa0] sm:$0xff] %vm59, %v1904
  %1937 = vst.msk [vmem:[%s7 + $0xa8] sm:$0xff] %vm59, %v1905
  %1938 = vst.msk [vmem:[%s7 + $0xb0] sm:$0xff] %vm59, %v1906
  %1939 = vst.msk [vmem:[%s7 + $0xb8] sm:$0xff] %vm59, %v1907
  %1940 = vst.msk [vmem:[%s7 + $0xc0] sm:$0xff] %vm59, %v1908
  %1941 = vst.msk [vmem:[%s7 + $0xc8] sm:$0xff] %vm59, %v1909
  %1942 = vst.msk [vmem:[%s7 + $0xd0] sm:$0xff] %vm59, %v1910
  %1943 = vst.msk [vmem:[%s7 + $0xd8] sm:$0xff] %vm59, %v1911
  %1944 = vst.msk [vmem:[%s7 + $0xe0] sm:$0xff] %vm59, %v1912
  %1945 = vst.msk [vmem:[%s7 + $0xe8] sm:$0xff] %vm59, %v1913
  %1946 = vst.msk [vmem:[%s7 + $0xf0] sm:$0xff] %vm59, %v1914
  %1947 = vst.msk [vmem:[%s7 + $0xf8] sm:$0xff] %vm59, %v1915
  // Predicated region
  $region30: #{ssmlp_forward.31} parent=0 // pred_check
    _
  $region31: #{ssmlp_forward.31} parent=0 // pred_check_branch
    %1949 = sbr.rel (0) target = $region33
  $region32: #{ssmlp_forward.31} parent=0 // pred_region
    _
  $region33: #{ssmlp_forward.31} parent=0 // pred_fallthru
    _
  // Predicated region
  $region34: #{ssmlp_forward.31} parent=0 // pred_check
    _
  $region35: #{ssmlp_forward.31} parent=0 // pred_check_branch
    %1951 = sbr.rel (0) target = $region37
  $region36: #{ssmlp_forward.31} parent=0 // pred_region
    _
  $region37: #{ssmlp_forward.31} parent=0 // pred_fallthru
    _

</llo_original>
